<compile_context>
chip_gen: v6e
topology: v6e:2x2x1
jax: 0.10.0
libtpu: 0.0.40
codegen_flags: <defaults>
</compile_context>

<pallas_src>
import jax
import jax.numpy as jnp
import numpy as np
from jax import lax
from jax.experimental import pallas as pl
from jax.experimental.pallas import tpu as pltpu

# ---- FeatureEmbed hyper-parameters (FeatureEmbed.__init__ defaults) ----------
EMBED = 32
TABLES = 26
TYPES = 30
JOINS = 1920
COLUMNS = 430
OPS = 7
BIN = 50
OP_E = EMBED // 8             # 4
DF = EMBED + OP_E + 1         # 37  (filter feature width)
DOUT = EMBED * 5 + OP_E + 1   # 165 (use_hist=True projection width)
PROJ_OUT = 256                # lane-dense padded projection output width
SAMPLE = 1000
SLOPE = 0.01                  # F.leaky_relu default negative_slope
FEAT_W = 2 + 9 + 3 + 3 * BIN + 1 + SAMPLE   # 1165

# ---- QueryFormer / AIMAI hyper-parameters (module defaults) ------------------
HID = DOUT                    # 165 = hidden_dim
HEADS = 8
ATT = HID // HEADS            # 20
FFN = 32                      # ffn_dim
N_LAYERS = 8
PRED_HID = 256
LN_EPS = 1e-5


# ---------------------------- small math helpers ------------------------------
def _lrelu(x):
    return jnp.where(x >= 0, x, SLOPE * x)


def _gelu(x):
    # tanh approximation of GELU (see TODO above); same formula used in kernel
    # and reference so the comparison is apples-to-apples.
    c = 0.7978845608028654  # sqrt(2/pi)
    return 0.5 * x * (1.0 + jnp.tanh(c * (x + 0.044715 * x * x * x)))


def _layernorm(v, g, b):
    mu = jnp.mean(v, axis=-1, keepdims=True)
    c = v - mu
    var = jnp.mean(c * c, axis=-1, keepdims=True)
    return c * lax.rsqrt(var + LN_EPS) * g + b


def _dot(a, b):
    # bf16 operands -> single-pass MXU with f32 accumulation;
    # f32 operands  -> HIGHEST path (used for validation).
    prec = lax.Precision.HIGHEST if a.dtype == jnp.float32 else lax.Precision.DEFAULT
    return jnp.dot(a, b, preferred_element_type=jnp.float32, precision=prec)


def _hdot(a, b):
    return jnp.dot(a, b, preferred_element_type=jnp.float32,
                   precision=lax.Precision.HIGHEST)


def _dot_nt(a, b):
    # (m, k) x (n, k) -> (m, n): contract the last dim of both operands.
    return lax.dot_general(a, b, (((1,), (1,)), ((), ())),
                           precision=lax.Precision.HIGHEST,
                           preferred_element_type=jnp.float32)


def _round_up(x, m):
    return ((x + m - 1) // m) * m


# ============================ FeatureEmbed kernel =============================
def feature_embed_kernel(type_ref, join_ref, table_ref, fil_ref, hist_ref,
                         keep_ref, inv_ref, sample_ref,
                         wf_ref, bf_ref, wf2_ref, bf2_ref,
                         wh_ref, bh_ref, ws_ref, bs_ref,
                         wp_ref, bp_ref,
                         out_ref):
    tn = type_ref.shape[0]
    cdt = wf_ref.dtype                       # MXU compute dtype (bf16 or f32)

    keep0 = keep_ref[0]                      # (tn, 1) f32 — precomputed in wrapper
    keep1 = keep_ref[1]
    keep2 = keep_ref[2]
    inv = inv_ref[...]                       # (tn, 1) f32 — 1 / num_filters

    # --- filter MLP: all 3 slots fused into one (3*tn, DF) matmul per layer ---
    fil = jnp.concatenate([fil_ref[0], fil_ref[1], fil_ref[2]], axis=0)
    h = _lrelu(_dot(fil, wf_ref[...]) + bf_ref[...])              # linearFilter
    h = _lrelu(_dot(h.astype(cdt), wf2_ref[...]) + bf2_ref[...])  # linearFilter2
    filt_avg = (h[0:tn] * keep0 + h[tn:2 * tn] * keep1
                + h[2 * tn:3 * tn] * keep2) * inv                 # (tn, DF)

    # --- linearHist: fused likewise ---
    hist = jnp.concatenate([hist_ref[0], hist_ref[1], hist_ref[2]], axis=0)
    he = _dot(hist, wh_ref[...]) + bh_ref[...]                    # (3*tn, EMBED)
    hist_avg = (he[0:tn] * keep0 + he[tn:2 * tn] * keep1
                + he[2 * tn:3 * tn] * keep2) * inv                # (tn, EMBED)

    # --- getTable: tableEmbed + linearSample(sample) ---
    table_emb = (table_ref[...].astype(jnp.float32)
                 + _dot(sample_ref[...], ws_ref[...]) + bs_ref[...])

    # --- project(cat(...)): single (tn, 165) x (165, 256) matmul ---
    final = jnp.concatenate(
        [type_ref[...].astype(jnp.float32), filt_avg,
         join_ref[...].astype(jnp.float32), table_emb, hist_avg], axis=1)
    proj = _dot(final.astype(cdt), wp_ref[...]) + bp_ref[...]     # (tn, 256)
    out_ref[...] = _lrelu(proj)


def feature_embed_forward(feature, fe, *, tile_n=256, compute_dtype=jnp.bfloat16):
    n = feature.shape[0]
    f = feature.astype(jnp.float32)
    cdt = compute_dtype
    itemsize = np.dtype(cdt).itemsize

    # torch.split(feature, (1, 1, 9, 3, 150, 1001), dim=-1)
    type_id = f[:, 0].astype(jnp.int32)
    join_id = f[:, 1].astype(jnp.int32)
    filters_id = f[:, 2:11]
    filters_mask = f[:, 11:14]
    hists = f[:, 14:14 + 3 * BIN]
    table_sample = f[:, 14 + 3 * BIN:]

    # --- embedding gathers (glue, plain JAX) ---
    type_emb = fe["typeEmbed"][type_id].astype(cdt)               # (N, 32)
    join_emb = fe["joinEmbed"][join_id].astype(cdt)               # (N, 32)
    table_id = table_sample[:, 0].astype(jnp.int32)
    table_emb0 = fe["tableEmbed"][table_id].astype(cdt)           # (N, 32)
    sample = table_sample[:, 1:].astype(cdt)                      # (N, 1000)

    # filtersId.view(-1,3,3).transpose(1,2): cols=[:,0:3], ops=[:,3:6], vals=[:,6:9]
    cols_id = filters_id[:, 0:3].astype(jnp.int32)
    ops_id = filters_id[:, 3:6].astype(jnp.int32)
    vals = filters_id[:, 6:9][..., None]
    fil_concat = jnp.concatenate(
        [fe["columnEmbed"][cols_id], fe["opEmbed"][ops_id], vals], axis=-1)  # (N,3,37)
    fil_k = jnp.transpose(fil_concat, (1, 0, 2)).astype(cdt)      # (3, N, 37)

    # hists.view(-1, 50, 3).transpose(1, 2) -> (N, 3, 50); kernel wants (3, N, 50)
    hist_k = jnp.transpose(hists.reshape(n, BIN, 3), (2, 0, 1)).astype(cdt)

    # mask bookkeeping precomputed here (keeps kernel VPU slots free)
    keep_k = jnp.transpose((filters_mask != 0).astype(jnp.float32))[..., None]  # (3,N,1)
    inv = 1.0 / jnp.sum(filters_mask, axis=1, keepdims=True)                    # (N,1)

    # --- tiling: large batch tile (single tiled axis) ---
    tile = max(8, _round_up(min(tile_n, _round_up(n, 8)), 8))
    n_pad = _round_up(n, tile)
    pad = n_pad - n
    grid = (n_pad // tile,)

    def pad_rows(x, axis):
        if pad == 0:
            return x
        w = [(0, 0)] * x.ndim
        w[axis] = (0, pad)
        return jnp.pad(x, w)

    type_p = pad_rows(type_emb, 0)
    join_p = pad_rows(join_emb, 0)
    table_p = pad_rows(table_emb0, 0)
    fil_p = pad_rows(fil_k, 1)
    hist_p = pad_rows(hist_k, 1)
    keep_p = pad_rows(keep_k, 1)
    sample_p = pad_rows(sample, 0)
    inv_p = (jnp.pad(inv, ((0, pad), (0, 0)), constant_values=1.0)
             if pad else inv)                                     # avoid inf in pad rows

    wcast = lambda name: fe[name].astype(cdt)
    b2 = lambda name: fe[name].reshape(1, -1).astype(jnp.float32)

    # W_project / b_project padded to 256 output lanes (lane-dense output slab)
    wp_pad = jnp.zeros((DOUT, PROJ_OUT), jnp.float32).at[:, :DOUT].set(
        fe["W_project"]).astype(cdt)
    bp_pad = jnp.zeros((1, PROJ_OUT), jnp.float32).at[0, :DOUT].set(
        fe["b_project"])

    row = lambda d: pl.BlockSpec((tile, d), lambda i: (i, 0))
    slot = lambda d: pl.BlockSpec((3, tile, d), lambda i: (0, i, 0))
    full = lambda r, c: pl.BlockSpec((r, c), lambda i: (0, 0))

    flops = 2 * n_pad * (2 * 3 * DF * DF + 3 * BIN * EMBED
                         + SAMPLE * EMBED + DOUT * PROJ_OUT)
    bytes_accessed = (
        n_pad * ((3 * EMBED + 3 * DF + 3 * BIN + SAMPLE) * itemsize + 4 * 4)
        + (2 * DF * DF + BIN * EMBED + SAMPLE * EMBED + DOUT * PROJ_OUT) * itemsize
        + n_pad * PROJ_OUT * 4)
    cost = pl.CostEstimate(flops=flops, transcendentals=0,
                           bytes_accessed=bytes_accessed)

    out = pl.pallas_call(
        feature_embed_kernel,
        out_shape=jax.ShapeDtypeStruct((n_pad, PROJ_OUT), jnp.float32),
        grid=grid,
        in_specs=[
            row(EMBED), row(EMBED), row(EMBED),
            slot(DF), slot(BIN), slot(1), row(1), row(SAMPLE),
            full(DF, DF), full(1, DF), full(DF, DF), full(1, DF),
            full(BIN, EMBED), full(1, EMBED),
            full(SAMPLE, EMBED), full(1, EMBED),
            full(DOUT, PROJ_OUT), full(1, PROJ_OUT),
        ],
        out_specs=row(PROJ_OUT),
        compiler_params=pltpu.CompilerParams(
            dimension_semantics=("parallel",),
            vmem_limit_bytes=32 * 1024 * 1024),
        cost_estimate=cost,
    )(type_p, join_p, table_p, fil_p, hist_p, keep_p, inv_p, sample_p,
      wcast("W_filter"), b2("b_filter"), wcast("W_filter2"), b2("b_filter2"),
      wcast("W_hist"), b2("b_hist"), wcast("W_sample"), b2("b_sample"),
      wp_pad, bp_pad)
    return out[:n, :DOUT]


# ====================== Encoder stack (8 layers + final LN) ===================
def encoder_stack_kernel(x_ref, bias_ref,
                         ln1g_ref, ln1b_ref, wq_ref, bq_ref, wk_ref, bk_ref,
                         wv_ref, bv_ref, wo_ref, bo_ref, ln2g_ref, ln2b_ref,
                         wf1_ref, bf1_ref, wf2_ref, bf2_ref,
                         lnfg_ref, lnfb_ref, out_ref):
    # x_ref: (1, S, HID) f32, bias_ref: (1, HEADS, S, S) f32.
    # Weights: wq/wk/wv/wo stored (L, HEADS, ATT, HID) so HID(165) is the lane
    # dim (no 20-lane padding waste, no in-kernel lane slicing).
    x = x_ref[0]                                   # (S, HID)
    scale = ATT ** -0.5

    for l in range(N_LAYERS):
        # --- self-attention block (pre-LN, per-head decomposition) -----------
        y = _layernorm(x, ln1g_ref[l], ln1b_ref[l])
        att = jnp.zeros_like(x)
        for h in range(HEADS):
            qh = _dot_nt(y, wq_ref[l, h]) + bq_ref[l, h]       # (S, ATT)
            kh = _dot_nt(y, wk_ref[l, h]) + bk_ref[l, h]       # (S, ATT)
            vh = _dot_nt(y, wv_ref[l, h]) + bv_ref[l, h]       # (S, ATT)
            s = _dot_nt(qh * scale, kh) + bias_ref[0, h]       # (S, S)
            s = s - jnp.max(s, axis=-1, keepdims=True)
            p = jnp.exp(s)
            p = p / jnp.sum(p, axis=-1, keepdims=True)
            pv = _hdot(p, vh)                                  # (S, ATT)
            att = att + _hdot(pv, wo_ref[l, h])                # (S, HID)
        x = x + att + bo_ref[l]                                # +output_layer bias
        # --- FFN block --------------------------------------------------------
        y = _layernorm(x, ln2g_ref[l], ln2b_ref[l])
        hmid = _gelu(_hdot(y, wf1_ref[l]) + bf1_ref[l])
        x = x + _hdot(hmid, wf2_ref[l]) + bf2_ref[l]

    xf = _layernorm(x, lnfg_ref[...], lnfb_ref[...])           # final_ln
    out_ref[0] = xf[0:1, :]                                    # super-token row


# =========================== AIMAI prediction head ============================
def aimai_pred_kernel(pe_ref, he_ref, w1_ref, b1_ref, wm1_ref, bm1_ref,
                      wm2_ref, bm2_ref, w2_ref, b2_ref, out_ref):
    d = pe_ref[...] - he_ref[...]
    hid = jnp.maximum(_hdot(d, w1_ref[...]) + b1_ref[...], 0.0)
    mid = jnp.maximum(_hdot(hid, wm1_ref[...]) + bm1_ref[...] + hid, 0.0)
    mid = jnp.maximum(_hdot(mid, wm2_ref[...]) + bm2_ref[...] + mid, 0.0)
    logit = _hdot(mid, w2_ref[...]) + b2_ref[...]
    out_ref[...] = 1.0 / (1.0 + jnp.exp(-logit))


def aimai_predict(plan_emb, hypo_emb, pred):
    B = plan_emb.shape[0]
    args = [plan_emb, hypo_emb, pred["w1"], pred["b1"], pred["wm1"], pred["bm1"],
            pred["wm2"], pred["bm2"], pred["w2"], pred["b2"]]
    return pl.pallas_call(
        aimai_pred_kernel,
        out_shape=jax.ShapeDtypeStruct((B, 1), jnp.float32),
        grid=(1,),
        in_specs=[pl.BlockSpec(a.shape, lambda i, nd=a.ndim: (0,) * nd)
                  for a in args],
        out_specs=pl.BlockSpec((B, 1), lambda i: (0, 0)),
        compiler_params=pltpu.CompilerParams(
            dimension_semantics=("arbitrary",)),
    )(*args)


# ---------------------------- parameters -------------------------------------
def init_fe_params(key):
    ks = jax.random.split(key, 15)

    def w(k, shape, scale=0.05):
        return (scale * jax.random.normal(k, shape)).astype(jnp.float32)

    # Linear weights stored as (in, out) so forward is x @ W + b.
    return dict(
        typeEmbed=w(ks[0], (TYPES, EMBED)),
        tableEmbed=w(ks[1], (TABLES, EMBED)),
        columnEmbed=w(ks[2], (COLUMNS, EMBED)),
        opEmbed=w(ks[3], (OPS, OP_E)),
        joinEmbed=w(ks[4], (JOINS, EMBED)),
        W_filter=w(ks[5], (DF, DF)), b_filter=w(ks[6], (DF,)),
        W_filter2=w(ks[7], (DF, DF)), b_filter2=w(ks[8], (DF,)),
        W_hist=w(ks[9], (BIN, EMBED)), b_hist=w(ks[10], (EMBED,)),
        W_sample=w(ks[11], (SAMPLE, EMBED)), b_sample=w(ks[12], (EMBED,)),
        W_project=w(ks[13], (DOUT, DOUT)), b_project=w(ks[14], (DOUT,)),
    )


def init_model_params(key):
    k_fe, k_enc, k_top, k_pred = jax.random.split(key, 4)

    def w(k, shape, scale=0.05):
        return (scale * jax.random.normal(k, shape)).astype(jnp.float32)

    ek = jax.random.split(k_enc, 12)
    enc = dict(
        ln1_g=jnp.ones((N_LAYERS, 1, HID), jnp.float32),
        ln1_b=jnp.zeros((N_LAYERS, 1, HID), jnp.float32),
        wq=w(ek[0], (N_LAYERS, HEADS, ATT, HID)), bq=w(ek[1], (N_LAYERS, HEADS, 1, ATT)),
        wk=w(ek[2], (N_LAYERS, HEADS, ATT, HID)), bk=w(ek[3], (N_LAYERS, HEADS, 1, ATT)),
        wv=w(ek[4], (N_LAYERS, HEADS, ATT, HID)), bv=w(ek[5], (N_LAYERS, HEADS, 1, ATT)),
        wo=w(ek[6], (N_LAYERS, HEADS, ATT, HID)), bo=w(ek[7], (N_LAYERS, 1, HID)),
        ln2_g=jnp.ones((N_LAYERS, 1, HID), jnp.float32),
        ln2_b=jnp.zeros((N_LAYERS, 1, HID), jnp.float32),
        wf1=w(ek[8], (N_LAYERS, HID, FFN)), bf1=w(ek[9], (N_LAYERS, 1, FFN)),
        wf2=w(ek[10], (N_LAYERS, FFN, HID)), bf2=w(ek[11], (N_LAYERS, 1, HID)),
    )

    tk = jax.random.split(k_top, 4)
    pk = jax.random.split(k_pred, 8)
    return dict(
        fe=init_fe_params(k_fe),
        enc=enc,
        # padding_idx=0 embeddings: zero row 0 (matches nn.Embedding init).
        rel_pos_encoder=w(tk[0], (192, HEADS)).at[0].set(0.0),
        height_encoder=w(tk[1], (64, HID)).at[0].set(0.0),
        super_token=w(tk[2], (1, HID)),
        super_token_virtual_distance=w(tk[3], (1, HEADS)),
        final_ln_g=jnp.ones((1, HID), jnp.float32),
        final_ln_b=jnp.zeros((1, HID), jnp.float32),
        pred=dict(
            w1=w(pk[0], (HID, PRED_HID)), b1=w(pk[1], (1, PRED_HID)),
            wm1=w(pk[2], (PRED_HID, PRED_HID)), bm1=w(pk[3], (1, PRED_HID)),
            wm2=w(pk[4], (PRED_HID, PRED_HID)), bm2=w(pk[5], (1, PRED_HID)),
            w2=w(pk[6], (PRED_HID, 1)), b2=w(pk[7], (1, 1)),
        ),
    )


# ------------------------- attention-bias assembly (glue) ---------------------
def _assemble_attn_bias(attn_bias, rel_pos, params):
    B, S = attn_bias.shape[0], attn_bias.shape[1]
    tab = jnp.broadcast_to(attn_bias[:, None, :, :].astype(jnp.float32),
                           (B, HEADS, S, S))
    rel = jnp.transpose(params["rel_pos_encoder"][rel_pos], (0, 3, 1, 2))
    tab = tab.at[:, :, 1:, 1:].add(rel)
    t = params["super_token_virtual_distance"].reshape(1, HEADS, 1)
    tab = tab.at[:, :, 1:, 0].add(t)
    tab = tab.at[:, :, 0, :].add(t)
    return tab


# ---------------------------- QueryFormer branch ------------------------------
def queryformer_embed(x, attn_bias, rel_pos, heights, params, *,
                      compute_dtype=jnp.bfloat16):
    B, n_node = x.shape[:2]
    S = n_node + 1

    # FeatureEmbed over all nodes (Pallas kernel).
    node = feature_embed_forward(x.reshape(-1, FEAT_W), params["fe"],
                                 compute_dtype=compute_dtype)
    node = node.reshape(B, n_node, HID).astype(jnp.float32)

    # Glue: height embedding, super token, attention-bias assembly.
    node = node + params["height_encoder"][heights]
    sup = jnp.broadcast_to(params["super_token"].reshape(1, 1, HID), (B, 1, HID))
    seq = jnp.concatenate([sup, node], axis=1)                   # (B, S, HID)
    tab = _assemble_attn_bias(attn_bias, rel_pos, params)        # (B, HEADS, S, S)

    enc = params["enc"]
    weights = [enc["ln1_g"], enc["ln1_b"], enc["wq"], enc["bq"], enc["wk"],
               enc["bk"], enc["wv"], enc["bv"], enc["wo"], enc["bo"],
               enc["ln2_g"], enc["ln2_b"], enc["wf1"], enc["bf1"],
               enc["wf2"], enc["bf2"], params["final_ln_g"], params["final_ln_b"]]

    out = pl.pallas_call(
        encoder_stack_kernel,
        out_shape=jax.ShapeDtypeStruct((B, 1, HID), jnp.float32),
        grid=(B,),
        in_specs=[pl.BlockSpec((1, S, HID), lambda i: (i, 0, 0)),
                  pl.BlockSpec((1, HEADS, S, S), lambda i: (i, 0, 0, 0))]
                 + [pl.BlockSpec(w_.shape, lambda i, nd=w_.ndim: (0,) * nd)
                    for w_ in weights],
        out_specs=pl.BlockSpec((1, 1, HID), lambda i: (i, 0, 0)),
        compiler_params=pltpu.CompilerParams(
            dimension_semantics=("parallel",),
            vmem_limit_bytes=32 * 1024 * 1024),
    )(seq, tab, *weights)
    return out.reshape(B, HID)


# ----------------------------- full model forward -----------------------------
def queryformer_aimai_forward(batched, params, *, compute_dtype=jnp.bfloat16):
    p_x, h_x = batched["plan_x"], batched["plan_hypo_x"]
    if p_x.shape == h_x.shape:
        # Batch-stack plan + hypo: one FeatureEmbed launch, one encoder launch.
        x = jnp.concatenate([p_x, h_x], axis=0)
        ab = jnp.concatenate([batched["plan_attn_bias"],
                              batched["plan_hypo_attn_bias"]], axis=0)
        rp = jnp.concatenate([batched["plan_rel_pos"],
                              batched["plan_hypo_rel_pos"]], axis=0)
        hh = jnp.concatenate([batched["plan_heights"],
                              batched["plan_hypo_heights"]], axis=0)
        emb = queryformer_embed(x, ab, rp, hh, params, compute_dtype=compute_dtype)
        B = p_x.shape[0]
        plan_emb, hypo_emb = emb[:B], emb[B:]
    else:
        plan_emb = queryformer_embed(p_x, batched["plan_attn_bias"],
                                     batched["plan_rel_pos"],
                                     batched["plan_heights"], params,
                                     compute_dtype=compute_dtype)
        hypo_emb = queryformer_embed(h_x, batched["plan_hypo_attn_bias"],
                                     batched["plan_hypo_rel_pos"],
                                     batched["plan_hypo_heights"], params,
                                     compute_dtype=compute_dtype)
    return aimai_predict(plan_emb, hypo_emb, params["pred"])


# ---------------------------- pure-JAX reference ------------------------------
def reference_feature_embed(feature, fe):
    f = feature.astype(jnp.float32)
    n = f.shape[0]
    hp = lax.Precision.HIGHEST

    type_id = f[:, 0].astype(jnp.int32)
    join_id = f[:, 1].astype(jnp.int32)
    filters_id = f[:, 2:11]
    filters_mask = f[:, 11:14]
    hists = f[:, 14:14 + 3 * BIN]
    table_sample = f[:, 14 + 3 * BIN:]

    type_emb = fe["typeEmbed"][type_id]
    join_emb = fe["joinEmbed"][join_id]

    cols_id = filters_id[:, 0:3].astype(jnp.int32)
    ops_id = filters_id[:, 3:6].astype(jnp.int32)
    vals = filters_id[:, 6:9][..., None]
    concat = jnp.concatenate(
        [fe["columnEmbed"][cols_id], fe["opEmbed"][ops_id], vals], axis=-1)
    h = _lrelu(jnp.einsum("nkc,cd->nkd", concat, fe["W_filter"],
                          precision=hp) + fe["b_filter"])
    h = _lrelu(jnp.einsum("nkc,cd->nkd", h, fe["W_filter2"],
                          precision=hp) + fe["b_filter2"])
    keep = (filters_mask != 0).astype(jnp.float32)[..., None]
    num_f = jnp.sum(filters_mask, axis=1, keepdims=True)
    filt = jnp.sum(h * keep, axis=1) / num_f

    hist_expand = jnp.transpose(hists.reshape(n, BIN, 3), (0, 2, 1))
    he = jnp.einsum("nkc,cd->nkd", hist_expand, fe["W_hist"],
                    precision=hp) + fe["b_hist"]
    hist = jnp.sum(he * keep, axis=1) / num_f

    table_id = table_sample[:, 0].astype(jnp.int32)
    sample = table_sample[:, 1:]
    table_emb = (fe["tableEmbed"][table_id]
                 + jnp.dot(sample, fe["W_sample"], precision=hp)
                 + fe["b_sample"])

    final = jnp.concatenate([type_emb, filt, join_emb, table_emb, hist], axis=1)
    return _lrelu(jnp.dot(final, fe["W_project"], precision=hp)
                  + fe["b_project"])


def reference_model(batched, params):
    hp = lax.Precision.HIGHEST
    enc = params["enc"]
    scale = ATT ** -0.5

    def qf(x, attn_bias, rel_pos, heights):
        B, n_node = x.shape[:2]
        S = n_node + 1
        node = reference_feature_embed(x.reshape(-1, FEAT_W), params["fe"])
        node = node.reshape(B, n_node, HID) + params["height_encoder"][heights]
        sup = jnp.broadcast_to(params["super_token"].reshape(1, 1, HID), (B, 1, HID))
        out = jnp.concatenate([sup, node], axis=1)
        tab = _assemble_attn_bias(attn_bias, rel_pos, params)

        for l in range(N_LAYERS):
            y = _layernorm(out, enc["ln1_g"][l, 0], enc["ln1_b"][l, 0])
            # rebuild torch-style full projection matrices from per-head params
            wq_full = jnp.transpose(enc["wq"][l], (2, 0, 1)).reshape(HID, HEADS * ATT)
            wk_full = jnp.transpose(enc["wk"][l], (2, 0, 1)).reshape(HID, HEADS * ATT)
            wv_full = jnp.transpose(enc["wv"][l], (2, 0, 1)).reshape(HID, HEADS * ATT)
            wo_full = enc["wo"][l].reshape(HEADS * ATT, HID)
            bq_full = enc["bq"][l].reshape(HEADS * ATT)
            bk_full = enc["bk"][l].reshape(HEADS * ATT)
            bv_full = enc["bv"][l].reshape(HEADS * ATT)

            q = jnp.einsum("bsd,df->bsf", y, wq_full, precision=hp) + bq_full
            k = jnp.einsum("bsd,df->bsf", y, wk_full, precision=hp) + bk_full
            v = jnp.einsum("bsd,df->bsf", y, wv_full, precision=hp) + bv_full
            q = q.reshape(B, S, HEADS, ATT).transpose(0, 2, 1, 3) * scale
            k = k.reshape(B, S, HEADS, ATT).transpose(0, 2, 1, 3)
            v = v.reshape(B, S, HEADS, ATT).transpose(0, 2, 1, 3)
            sc = jnp.einsum("bhqd,bhkd->bhqk", q, k, precision=hp) + tab
            p = jax.nn.softmax(sc, axis=-1)
            o = jnp.einsum("bhqk,bhkd->bhqd", p, v, precision=hp)
            o = o.transpose(0, 2, 1, 3).reshape(B, S, HEADS * ATT)
            y = jnp.einsum("bsf,fd->bsd", o, wo_full, precision=hp) + enc["bo"][l, 0]
            out = out + y

            y = _layernorm(out, enc["ln2_g"][l, 0], enc["ln2_b"][l, 0])
            h1 = _gelu(jnp.einsum("bsd,df->bsf", y, enc["wf1"][l], precision=hp)
                       + enc["bf1"][l, 0])
            y = jnp.einsum("bsf,fd->bsd", h1, enc["wf2"][l], precision=hp) + enc["bf2"][l, 0]
            out = out + y

        out = _layernorm(out, params["final_ln_g"][0], params["final_ln_b"][0])
        return out[:, 0, :]

    plan_emb = qf(batched["plan_x"], batched["plan_attn_bias"],
                  batched["plan_rel_pos"], batched["plan_heights"])
    hypo_emb = qf(batched["plan_hypo_x"], batched["plan_hypo_attn_bias"],
                  batched["plan_hypo_rel_pos"], batched["plan_hypo_heights"])
    d = plan_emb - hypo_emb
    pr = params["pred"]
    hid = jax.nn.relu(jnp.dot(d, pr["w1"], precision=hp) + pr["b1"])
    mid = jax.nn.relu(jnp.dot(hid, pr["wm1"], precision=hp) + pr["bm1"] + hid)
    mid = jax.nn.relu(jnp.dot(mid, pr["wm2"], precision=hp) + pr["bm2"] + mid)
    return jax.nn.sigmoid(jnp.dot(mid, pr["w2"], precision=hp) + pr["b2"])


# ---------------------------- demo --------------------------------------------
def make_features(key, n):
    ks = jax.random.split(key, 9)
    type_id = jax.random.randint(ks[0], (n, 1), 0, TYPES).astype(jnp.float32)
    join_id = jax.random.randint(ks[1], (n, 1), 0, JOINS).astype(jnp.float32)
    cols = jax.random.randint(ks[2], (n, 3), 0, COLUMNS).astype(jnp.float32)
    opsv = jax.random.randint(ks[3], (n, 3), 0, OPS).astype(jnp.float32)
    vals = jax.random.uniform(ks[4], (n, 3))
    mask = jnp.concatenate(
        [jnp.ones((n, 1), jnp.float32),
         jax.random.bernoulli(ks[5], 0.6, (n, 2)).astype(jnp.float32)], axis=1)
    hists = jax.random.uniform(ks[6], (n, 3 * BIN))
    table_id = jax.random.randint(ks[7], (n, 1), 0, TABLES).astype(jnp.float32)
    sample = jax.random.normal(ks[8], (n, SAMPLE), jnp.float32)
    feat = jnp.concatenate(
        [type_id, join_id, cols, opsv, vals, mask, hists, table_id, sample], axis=1)
    assert feat.shape == (n, FEAT_W)
    return feat


if __name__ == "__main__":
    key = jax.random.PRNGKey(0)
    kp, kd = jax.random.split(key)
    params = init_model_params(kp)

    B, NODES = 2, 7
    S = NODES + 1
    ks = jax.random.split(kd, 8)
    plan_x = make_features(ks[0], B * NODES).reshape(B, NODES, FEAT_W)
    hypo_x = make_features(ks[1], B * NODES).reshape(B, NODES, FEAT_W)

    batched = dict(
        plan_x=plan_x,
        plan_attn_bias=0.05 * jax.random.normal(ks[2], (B, S, S), jnp.float32),
        plan_rel_pos=jax.random.randint(ks[3], (B, NODES, NODES), 0, 192),
        plan_heights=jax.random.randint(ks[4], (B, NODES), 0, 64),
        plan_hypo_x=hypo_x,
        plan_hypo_attn_bias=0.05 * jax.random.normal(ks[5], (B, S, S), jnp.float32),
        plan_hypo_rel_pos=jax.random.randint(ks[6], (B, NODES, NODES), 0, 192),
        plan_hypo_heights=jax.random.randint(ks[7], (B, NODES), 0, 64),
    )

    # --- reference (pure JAX) --------------------------------------------------
    ref = reference_model(batched, params)

    # 1) Standalone FeatureEmbed check, f32 / HIGHEST path (tight).
    feat_flat = jnp.concatenate([plan_x, hypo_x], axis=0).reshape(-1, FEAT_W)
    fe_ref = reference_feature_embed(feat_flat, params["fe"])
    fe_out = jax.block_until_ready(
        feature_embed_forward(feat_flat, params["fe"], compute_dtype=jnp.float32))
    np.testing.assert_allclose(np.asarray(fe_out), np.asarray(fe_ref),
                               rtol=1e-4, atol=1e-4)

    # 2) Full model, f32 / HIGHEST FeatureEmbed path (tight structural check).
    out_f32 = jax.block_until_ready(
        queryformer_aimai_forward(batched, params, compute_dtype=jnp.float32))
    assert out_f32.shape == (B, 1)
    np.testing.assert_allclose(np.asarray(out_f32), np.asarray(ref),
                               rtol=1e-3, atol=1e-3)

    # 3) Full model, bf16-MXU FeatureEmbed path (performance default).
    out_bf16 = jax.block_until_ready(queryformer_aimai_forward(batched, params))
    assert out_bf16.shape == (B, 1)
    np.testing.assert_allclose(np.asarray(out_bf16), np.asarray(ref),
                               rtol=5e-2, atol=5e-2)

    print("KERNEL_OK")
</pallas_src>

<mosaic_0001>
module attributes {stable_mosaic.version = 11 : i64} {
  func.func @feature_embed_kernel(%arg0: i32, %arg1: memref<32x32xf32, #tpu.memory_space<vmem>>, %arg2: memref<32x32xf32, #tpu.memory_space<vmem>>, %arg3: memref<32x32xf32, #tpu.memory_space<vmem>>, %arg4: memref<3x32x37xf32, #tpu.memory_space<vmem>>, %arg5: memref<3x32x50xf32, #tpu.memory_space<vmem>>, %arg6: memref<3x32x1xf32, #tpu.memory_space<vmem>>, %arg7: memref<32x1xf32, #tpu.memory_space<vmem>>, %arg8: memref<32x1000xf32, #tpu.memory_space<vmem>>, %arg9: memref<37x37xf32, #tpu.memory_space<vmem>>, %arg10: memref<1x37xf32, #tpu.memory_space<vmem>>, %arg11: memref<37x37xf32, #tpu.memory_space<vmem>>, %arg12: memref<1x37xf32, #tpu.memory_space<vmem>>, %arg13: memref<50x32xf32, #tpu.memory_space<vmem>>, %arg14: memref<1x32xf32, #tpu.memory_space<vmem>>, %arg15: memref<1000x32xf32, #tpu.memory_space<vmem>>, %arg16: memref<1x32xf32, #tpu.memory_space<vmem>>, %arg17: memref<165x256xf32, #tpu.memory_space<vmem>>, %arg18: memref<1x256xf32, #tpu.memory_space<vmem>>, %arg19: memref<32x256xf32, #tpu.memory_space<vmem>>) attributes {dimension_semantics = [#tpu.dimension_semantics<parallel>], iteration_bounds = array<i64: 1>, scalar_prefetch = 0 : i64, scratch_operands = 0 : i64, tpu.core_type = #tpu.core_type<tc>, window_params = [{transform_indices = @transform_0, window_bounds = array<i64: 32, 32>}, {transform_indices = @transform_1, window_bounds = array<i64: 32, 32>}, {transform_indices = @transform_2, window_bounds = array<i64: 32, 32>}, {transform_indices = @transform_3, window_bounds = array<i64: 3, 32, 37>}, {transform_indices = @transform_4, window_bounds = array<i64: 3, 32, 50>}, {transform_indices = @transform_5, window_bounds = array<i64: 3, 32, 1>}, {transform_indices = @transform_6, window_bounds = array<i64: 32, 1>}, {transform_indices = @transform_7, window_bounds = array<i64: 32, 1000>}, {pipeline_mode = #tpu.pipeline_mode<synchronous>, transform_indices = @transform_8, window_bounds = array<i64: 37, 37>}, {pipeline_mode = #tpu.pipeline_mode<synchronous>, transform_indices = @transform_9, window_bounds = array<i64: 1, 37>}, {pipeline_mode = #tpu.pipeline_mode<synchronous>, transform_indices = @transform_10, window_bounds = array<i64: 37, 37>}, {pipeline_mode = #tpu.pipeline_mode<synchronous>, transform_indices = @transform_11, window_bounds = array<i64: 1, 37>}, {pipeline_mode = #tpu.pipeline_mode<synchronous>, transform_indices = @transform_12, window_bounds = array<i64: 50, 32>}, {pipeline_mode = #tpu.pipeline_mode<synchronous>, transform_indices = @transform_13, window_bounds = array<i64: 1, 32>}, {pipeline_mode = #tpu.pipeline_mode<synchronous>, transform_indices = @transform_14, window_bounds = array<i64: 1000, 32>}, {pipeline_mode = #tpu.pipeline_mode<synchronous>, transform_indices = @transform_15, window_bounds = array<i64: 1, 32>}, {pipeline_mode = #tpu.pipeline_mode<synchronous>, transform_indices = @transform_16, window_bounds = array<i64: 165, 256>}, {pipeline_mode = #tpu.pipeline_mode<synchronous>, transform_indices = @transform_17, window_bounds = array<i64: 1, 256>}, {transform_indices = @transform_18, window_bounds = array<i64: 32, 256>}]} {
    %c0 = arith.constant 0 : index
    %c0_0 = arith.constant 0 : index
    %c0_1 = arith.constant 0 : index
    %0 = vector.load %arg6[%c0, %c0_0, %c0_1] : memref<3x32x1xf32, #tpu.memory_space<vmem>>, vector<1x32x1xf32>
    %1 = vector.shape_cast %0 : vector<1x32x1xf32> to vector<32x1xf32>
    %c1 = arith.constant 1 : index
    %c0_2 = arith.constant 0 : index
    %c0_3 = arith.constant 0 : index
    %2 = vector.load %arg6[%c1, %c0_2, %c0_3] : memref<3x32x1xf32, #tpu.memory_space<vmem>>, vector<1x32x1xf32>
    %3 = vector.shape_cast %2 : vector<1x32x1xf32> to vector<32x1xf32>
    %c2 = arith.constant 2 : index
    %c0_4 = arith.constant 0 : index
    %c0_5 = arith.constant 0 : index
    %4 = vector.load %arg6[%c2, %c0_4, %c0_5] : memref<3x32x1xf32, #tpu.memory_space<vmem>>, vector<1x32x1xf32>
    %5 = vector.shape_cast %4 : vector<1x32x1xf32> to vector<32x1xf32>
    %c0_6 = arith.constant 0 : index
    %c0_7 = arith.constant 0 : index
    %6 = vector.load %arg7[%c0_6, %c0_7] : memref<32x1xf32, #tpu.memory_space<vmem>>, vector<32x1xf32>
    %c0_8 = arith.constant 0 : index
    %c0_9 = arith.constant 0 : index
    %c0_10 = arith.constant 0 : index
    %7 = vector.load %arg4[%c0_8, %c0_9, %c0_10] : memref<3x32x37xf32, #tpu.memory_space<vmem>>, vector<1x32x37xf32>
    %8 = vector.shape_cast %7 : vector<1x32x37xf32> to vector<32x37xf32>
    %c1_11 = arith.constant 1 : index
    %c0_12 = arith.constant 0 : index
    %c0_13 = arith.constant 0 : index
    %9 = vector.load %arg4[%c1_11, %c0_12, %c0_13] : memref<3x32x37xf32, #tpu.memory_space<vmem>>, vector<1x32x37xf32>
    %10 = vector.shape_cast %9 : vector<1x32x37xf32> to vector<32x37xf32>
    %c2_14 = arith.constant 2 : index
    %c0_15 = arith.constant 0 : index
    %c0_16 = arith.constant 0 : index
    %11 = vector.load %arg4[%c2_14, %c0_15, %c0_16] : memref<3x32x37xf32, #tpu.memory_space<vmem>>, vector<1x32x37xf32>
    %12 = vector.shape_cast %11 : vector<1x32x37xf32> to vector<32x37xf32>
    %13 = tpu.concatenate %8, %10, %12 in 0 : vector<32x37xf32>, vector<32x37xf32>, vector<32x37xf32> -> vector<96x37xf32>
    %c0_17 = arith.constant 0 : index
    %c0_18 = arith.constant 0 : index
    %14 = vector.load %arg9[%c0_17, %c0_18] : memref<37x37xf32, #tpu.memory_space<vmem>>, vector<37x37xf32>
    %cst = arith.constant dense<0.000000e+00> : vector<96x37xf32>
    %15 = tpu.matmul %13, %14, %cst {dimension_numbers = #tpu.dot_dimension_numbers<[1], [0], [0], [1], [0, 0, 1, 1], [], []>, precision = #tpu.contract_precision<fp32>} : vector<96x37xf32>, vector<37x37xf32>, vector<96x37xf32> -> vector<96x37xf32>
    %c0_19 = arith.constant 0 : index
    %c0_20 = arith.constant 0 : index
    %16 = vector.load %arg10[%c0_19, %c0_20] : memref<1x37xf32, #tpu.memory_space<vmem>>, vector<1x37xf32>
    %17 = vector.broadcast %16 : vector<1x37xf32> to vector<96x37xf32>
    %18 = arith.addf %15, %17 : vector<96x37xf32>
    %cst_21 = arith.constant 0.000000e+00 : f32
    %19 = vector.broadcast %cst_21 : f32 to vector<96x37xf32>
    %20 = arith.cmpf oge, %18, %19 : vector<96x37xf32>
    %cst_22 = arith.constant 0.00999999977 : f32
    %21 = vector.broadcast %cst_22 : f32 to vector<96x37xf32>
    %22 = arith.mulf %21, %18 : vector<96x37xf32>
    %23 = arith.select %20, %18, %22 : vector<96x37xi1>, vector<96x37xf32>
    %c0_23 = arith.constant 0 : index
    %c0_24 = arith.constant 0 : index
    %24 = vector.load %arg11[%c0_23, %c0_24] : memref<37x37xf32, #tpu.memory_space<vmem>>, vector<37x37xf32>
    %cst_25 = arith.constant dense<0.000000e+00> : vector<96x37xf32>
    %25 = tpu.matmul %23, %24, %cst_25 {dimension_numbers = #tpu.dot_dimension_numbers<[1], [0], [0], [1], [0, 0, 1, 1], [], []>, precision = #tpu.contract_precision<fp32>} : vector<96x37xf32>, vector<37x37xf32>, vector<96x37xf32> -> vector<96x37xf32>
    %c0_26 = arith.constant 0 : index
    %c0_27 = arith.constant 0 : index
    %26 = vector.load %arg12[%c0_26, %c0_27] : memref<1x37xf32, #tpu.memory_space<vmem>>, vector<1x37xf32>
    %27 = vector.broadcast %26 : vector<1x37xf32> to vector<96x37xf32>
    %28 = arith.addf %25, %27 : vector<96x37xf32>
    %cst_28 = arith.constant 0.000000e+00 : f32
    %29 = vector.broadcast %cst_28 : f32 to vector<96x37xf32>
    %30 = arith.cmpf oge, %28, %29 : vector<96x37xf32>
    %cst_29 = arith.constant 0.00999999977 : f32
    %31 = vector.broadcast %cst_29 : f32 to vector<96x37xf32>
    %32 = arith.mulf %31, %28 : vector<96x37xf32>
    %33 = arith.select %30, %28, %32 : vector<96x37xi1>, vector<96x37xf32>
    %34 = vector.extract_strided_slice %33 {offsets = [0, 0], sizes = [32, 37], strides = [1, 1]} : vector<96x37xf32> to vector<32x37xf32>
    %35 = vector.broadcast %1 : vector<32x1xf32> to vector<32x37xf32>
    %36 = arith.mulf %34, %35 : vector<32x37xf32>
    %37 = vector.extract_strided_slice %33 {offsets = [32, 0], sizes = [32, 37], strides = [1, 1]} : vector<96x37xf32> to vector<32x37xf32>
    %38 = vector.broadcast %3 : vector<32x1xf32> to vector<32x37xf32>
    %39 = arith.mulf %37, %38 : vector<32x37xf32>
    %40 = arith.addf %36, %39 : vector<32x37xf32>
    %41 = vector.extract_strided_slice %33 {offsets = [64, 0], sizes = [32, 37], strides = [1, 1]} : vector<96x37xf32> to vector<32x37xf32>
    %42 = vector.broadcast %5 : vector<32x1xf32> to vector<32x37xf32>
    %43 = arith.mulf %41, %42 : vector<32x37xf32>
    %44 = arith.addf %40, %43 : vector<32x37xf32>
    %45 = vector.broadcast %6 : vector<32x1xf32> to vector<32x37xf32>
    %46 = arith.mulf %44, %45 : vector<32x37xf32>
    %c0_30 = arith.constant 0 : index
    %c0_31 = arith.constant 0 : index
    %c0_32 = arith.constant 0 : index
    %47 = vector.load %arg5[%c0_30, %c0_31, %c0_32] : memref<3x32x50xf32, #tpu.memory_space<vmem>>, vector<1x32x50xf32>
    %48 = vector.shape_cast %47 : vector<1x32x50xf32> to vector<32x50xf32>
    %c1_33 = arith.constant 1 : index
    %c0_34 = arith.constant 0 : index
    %c0_35 = arith.constant 0 : index
    %49 = vector.load %arg5[%c1_33, %c0_34, %c0_35] : memref<3x32x50xf32, #tpu.memory_space<vmem>>, vector<1x32x50xf32>
    %50 = vector.shape_cast %49 : vector<1x32x50xf32> to vector<32x50xf32>
    %c2_36 = arith.constant 2 : index
    %c0_37 = arith.constant 0 : index
    %c0_38 = arith.constant 0 : index
    %51 = vector.load %arg5[%c2_36, %c0_37, %c0_38] : memref<3x32x50xf32, #tpu.memory_space<vmem>>, vector<1x32x50xf32>
    %52 = vector.shape_cast %51 : vector<1x32x50xf32> to vector<32x50xf32>
    %53 = tpu.concatenate %48, %50, %52 in 0 : vector<32x50xf32>, vector<32x50xf32>, vector<32x50xf32> -> vector<96x50xf32>
    %c0_39 = arith.constant 0 : index
    %c0_40 = arith.constant 0 : index
    %54 = vector.load %arg13[%c0_39, %c0_40] : memref<50x32xf32, #tpu.memory_space<vmem>>, vector<50x32xf32>
    %cst_41 = arith.constant dense<0.000000e+00> : vector<96x32xf32>
    %55 = tpu.matmul %53, %54, %cst_41 {dimension_numbers = #tpu.dot_dimension_numbers<[1], [0], [0], [1], [0, 0, 1, 1], [], []>, precision = #tpu.contract_precision<fp32>} : vector<96x50xf32>, vector<50x32xf32>, vector<96x32xf32> -> vector<96x32xf32>
    %c0_42 = arith.constant 0 : index
    %c0_43 = arith.constant 0 : index
    %56 = vector.load %arg14[%c0_42, %c0_43] : memref<1x32xf32, #tpu.memory_space<vmem>>, vector<1x32xf32>
    %57 = vector.broadcast %56 : vector<1x32xf32> to vector<96x32xf32>
    %58 = arith.addf %55, %57 : vector<96x32xf32>
    %59 = vector.extract_strided_slice %58 {offsets = [0, 0], sizes = [32, 32], strides = [1, 1]} : vector<96x32xf32> to vector<32x32xf32>
    %60 = vector.broadcast %1 : vector<32x1xf32> to vector<32x32xf32>
    %61 = arith.mulf %59, %60 : vector<32x32xf32>
    %62 = vector.extract_strided_slice %58 {offsets = [32, 0], sizes = [32, 32], strides = [1, 1]} : vector<96x32xf32> to vector<32x32xf32>
    %63 = vector.broadcast %3 : vector<32x1xf32> to vector<32x32xf32>
    %64 = arith.mulf %62, %63 : vector<32x32xf32>
    %65 = arith.addf %61, %64 : vector<32x32xf32>
    %66 = vector.extract_strided_slice %58 {offsets = [64, 0], sizes = [32, 32], strides = [1, 1]} : vector<96x32xf32> to vector<32x32xf32>
    %67 = vector.broadcast %5 : vector<32x1xf32> to vector<32x32xf32>
    %68 = arith.mulf %66, %67 : vector<32x32xf32>
    %69 = arith.addf %65, %68 : vector<32x32xf32>
    %70 = vector.broadcast %6 : vector<32x1xf32> to vector<32x32xf32>
    %71 = arith.mulf %69, %70 : vector<32x32xf32>
    %c0_44 = arith.constant 0 : index
    %c0_45 = arith.constant 0 : index
    %72 = vector.load %arg3[%c0_44, %c0_45] : memref<32x32xf32, #tpu.memory_space<vmem>>, vector<32x32xf32>
    %c0_46 = arith.constant 0 : index
    %c0_47 = arith.constant 0 : index
    %73 = vector.load %arg8[%c0_46, %c0_47] : memref<32x1000xf32, #tpu.memory_space<vmem>>, vector<32x1000xf32>
    %c0_48 = arith.constant 0 : index
    %c0_49 = arith.constant 0 : index
    %74 = vector.load %arg15[%c0_48, %c0_49] : memref<1000x32xf32, #tpu.memory_space<vmem>>, vector<1000x32xf32>
    %cst_50 = arith.constant dense<0.000000e+00> : vector<32x32xf32>
    %75 = tpu.matmul %73, %74, %cst_50 {dimension_numbers = #tpu.dot_dimension_numbers<[1], [0], [0], [1], [0, 0, 1, 1], [], []>, precision = #tpu.contract_precision<fp32>} : vector<32x1000xf32>, vector<1000x32xf32>, vector<32x32xf32> -> vector<32x32xf32>
    %76 = arith.addf %72, %75 : vector<32x32xf32>
    %c0_51 = arith.constant 0 : index
    %c0_52 = arith.constant 0 : index
    %77 = vector.load %arg16[%c0_51, %c0_52] : memref<1x32xf32, #tpu.memory_space<vmem>>, vector<1x32xf32>
    %78 = vector.broadcast %77 : vector<1x32xf32> to vector<32x32xf32>
    %79 = arith.addf %76, %78 : vector<32x32xf32>
    %c0_53 = arith.constant 0 : index
    %c0_54 = arith.constant 0 : index
    %80 = vector.load %arg1[%c0_53, %c0_54] : memref<32x32xf32, #tpu.memory_space<vmem>>, vector<32x32xf32>
    %c0_55 = arith.constant 0 : index
    %c0_56 = arith.constant 0 : index
    %81 = vector.load %arg2[%c0_55, %c0_56] : memref<32x32xf32, #tpu.memory_space<vmem>>, vector<32x32xf32>
    %82 = tpu.concatenate %80, %46, %81, %79, %71 in 1 : vector<32x32xf32>, vector<32x37xf32>, vector<32x32xf32>, vector<32x32xf32>, vector<32x32xf32> -> vector<32x165xf32>
    %c0_57 = arith.constant 0 : index
    %c0_58 = arith.constant 0 : index
    %83 = vector.load %arg17[%c0_57, %c0_58] : memref<165x256xf32, #tpu.memory_space<vmem>>, vector<165x256xf32>
    %cst_59 = arith.constant dense<0.000000e+00> : vector<32x256xf32>
    %84 = tpu.matmul %82, %83, %cst_59 {dimension_numbers = #tpu.dot_dimension_numbers<[1], [0], [0], [1], [0, 0, 1, 1], [], []>, precision = #tpu.contract_precision<fp32>} : vector<32x165xf32>, vector<165x256xf32>, vector<32x256xf32> -> vector<32x256xf32>
    %c0_60 = arith.constant 0 : index
    %c0_61 = arith.constant 0 : index
    %85 = vector.load %arg18[%c0_60, %c0_61] : memref<1x256xf32, #tpu.memory_space<vmem>>, vector<1x256xf32>
    %86 = vector.broadcast %85 : vector<1x256xf32> to vector<32x256xf32>
    %87 = arith.addf %84, %86 : vector<32x256xf32>
    %cst_62 = arith.constant 0.000000e+00 : f32
    %88 = vector.broadcast %cst_62 : f32 to vector<32x256xf32>
    %89 = arith.cmpf oge, %87, %88 : vector<32x256xf32>
    %cst_63 = arith.constant 0.00999999977 : f32
    %90 = vector.broadcast %cst_63 : f32 to vector<32x256xf32>
    %91 = arith.mulf %90, %87 : vector<32x256xf32>
    %92 = arith.select %89, %87, %91 : vector<32x256xi1>, vector<32x256xf32>
    %c0_64 = arith.constant 0 : index
    %c0_65 = arith.constant 0 : index
    %93 = vector.load %arg19[%c0_64, %c0_65] : memref<32x256xf32, #tpu.memory_space<vmem>>, vector<32x256xf32>
    tpu.vector_store %arg19[%c0_64, %c0_65], %92 {strides = array<i32>} : memref<32x256xf32, #tpu.memory_space<vmem>>, vector<32x256xf32>,
    return
  }
  func.func @transform_0(%arg0: i32) -> (i32, i32) {
    %c0_i32 = arith.constant 0 : i32
    %c0_i32_0 = arith.constant 0 : i32
    return %arg0, %c0_i32 : i32, i32
  }
  func.func @transform_1(%arg0: i32) -> (i32, i32) {
    %c0_i32 = arith.constant 0 : i32
    %c0_i32_0 = arith.constant 0 : i32
    return %arg0, %c0_i32 : i32, i32
  }
  func.func @transform_2(%arg0: i32) -> (i32, i32) {
    %c0_i32 = arith.constant 0 : i32
    %c0_i32_0 = arith.constant 0 : i32
    return %arg0, %c0_i32 : i32, i32
  }
  func.func @transform_3(%arg0: i32) -> (i32, i32, i32) {
    %c0_i32 = arith.constant 0 : i32
    %c0_i32_0 = arith.constant 0 : i32
    %c0_i32_1 = arith.constant 0 : i32
    return %c0_i32, %arg0, %c0_i32_0 : i32, i32, i32
  }
  func.func @transform_4(%arg0: i32) -> (i32, i32, i32) {
    %c0_i32 = arith.constant 0 : i32
    %c0_i32_0 = arith.constant 0 : i32
    %c0_i32_1 = arith.constant 0 : i32
    return %c0_i32, %arg0, %c0_i32_0 : i32, i32, i32
  }
  func.func @transform_5(%arg0: i32) -> (i32, i32, i32) {
    %c0_i32 = arith.constant 0 : i32
    %c0_i32_0 = arith.constant 0 : i32
    %c0_i32_1 = arith.constant 0 : i32
    return %c0_i32, %arg0, %c0_i32_0 : i32, i32, i32
  }
  func.func @transform_6(%arg0: i32) -> (i32, i32) {
    %c0_i32 = arith.constant 0 : i32
    %c0_i32_0 = arith.constant 0 : i32
    return %arg0, %c0_i32 : i32, i32
  }
  func.func @transform_7(%arg0: i32) -> (i32, i32) {
    %c0_i32 = arith.constant 0 : i32
    %c0_i32_0 = arith.constant 0 : i32
    return %arg0, %c0_i32 : i32, i32
  }
  func.func @transform_8(%arg0: i32) -> (i32, i32) {
    %c0_i32 = arith.constant 0 : i32
    %c0_i32_0 = arith.constant 0 : i32
    %c0_i32_1 = arith.constant 0 : i32
    return %c0_i32, %c0_i32_0 : i32, i32
  }
  func.func @transform_9(%arg0: i32) -> (i32, i32) {
    %c0_i32 = arith.constant 0 : i32
    %c0_i32_0 = arith.constant 0 : i32
    %c0_i32_1 = arith.constant 0 : i32
    return %c0_i32, %c0_i32_0 : i32, i32
  }
  func.func @transform_10(%arg0: i32) -> (i32, i32) {
    %c0_i32 = arith.constant 0 : i32
    %c0_i32_0 = arith.constant 0 : i32
    %c0_i32_1 = arith.constant 0 : i32
    return %c0_i32, %c0_i32_0 : i32, i32
  }
  func.func @transform_11(%arg0: i32) -> (i32, i32) {
    %c0_i32 = arith.constant 0 : i32
    %c0_i32_0 = arith.constant 0 : i32
    %c0_i32_1 = arith.constant 0 : i32
    return %c0_i32, %c0_i32_0 : i32, i32
  }
  func.func @transform_12(%arg0: i32) -> (i32, i32) {
    %c0_i32 = arith.constant 0 : i32
    %c0_i32_0 = arith.constant 0 : i32
    %c0_i32_1 = arith.constant 0 : i32
    return %c0_i32, %c0_i32_0 : i32, i32
  }
  func.func @transform_13(%arg0: i32) -> (i32, i32) {
    %c0_i32 = arith.constant 0 : i32
    %c0_i32_0 = arith.constant 0 : i32
    %c0_i32_1 = arith.constant 0 : i32
    return %c0_i32, %c0_i32_0 : i32, i32
  }
  func.func @transform_14(%arg0: i32) -> (i32, i32) {
    %c0_i32 = arith.constant 0 : i32
    %c0_i32_0 = arith.constant 0 : i32
    %c0_i32_1 = arith.constant 0 : i32
    return %c0_i32, %c0_i32_0 : i32, i32
  }
  func.func @transform_15(%arg0: i32) -> (i32, i32) {
    %c0_i32 = arith.constant 0 : i32
    %c0_i32_0 = arith.constant 0 : i32
    %c0_i32_1 = arith.constant 0 : i32
    return %c0_i32, %c0_i32_0 : i32, i32
  }
  func.func @transform_16(%arg0: i32) -> (i32, i32) {
    %c0_i32 = arith.constant 0 : i32
    %c0_i32_0 = arith.constant 0 : i32
    %c0_i32_1 = arith.constant 0 : i32
    return %c0_i32, %c0_i32_0 : i32, i32
  }
  func.func @transform_17(%arg0: i32) -> (i32, i32) {
    %c0_i32 = arith.constant 0 : i32
    %c0_i32_0 = arith.constant 0 : i32
    %c0_i32_1 = arith.constant 0 : i32
    return %c0_i32, %c0_i32_0 : i32, i32
  }
  func.func @transform_18(%arg0: i32) -> (i32, i32) {
    %c0_i32 = arith.constant 0 : i32
    %c0_i32_0 = arith.constant 0 : i32
    return %arg0, %c0_i32 : i32, i32
  }
}

</mosaic_0001>

<llo_original>
// kernel: tpu_custom_call.1
$region0: #{tpu_custom_call.1}
  #allocation0 [shape = 'u32[]', space=smem, size = 0x4, offset = 0x4, fixed_abs, tag = 'smem constant byte address 0x4 - core index']
  #allocation1 [shape = 'u32[144,128]{1,0:T(1,128)}', space=vmem, size = 0x12000, scoped, tag = 'internal scratch']
  %s0 = inlined_call_operand.vmem [shape: f32[32,32], index: 0, kind: input, shape index: {}]
  %s1 = inlined_call_operand.vmem [shape: f32[32,32], index: 1, kind: input, shape index: {}]
  %s2 = inlined_call_operand.vmem [shape: f32[32,32], index: 2, kind: input, shape index: {}]
  %s3 = inlined_call_operand.vmem [shape: f32[3,32,37], index: 3, kind: input, shape index: {}]
  %s4 = inlined_call_operand.vmem [shape: f32[3,32,50], index: 4, kind: input, shape index: {}]
  %s5 = inlined_call_operand.vmem [shape: f32[3,32,1], index: 5, kind: input, shape index: {}]
  %s6 = inlined_call_operand.vmem [shape: f32[32,1], index: 6, kind: input, shape index: {}]
  %s7 = inlined_call_operand.vmem [shape: f32[32,1000], index: 7, kind: input, shape index: {}]
  %s8 = inlined_call_operand.vmem [shape: f32[37,37], index: 8, kind: input, shape index: {}]
  %s9 = inlined_call_operand.vmem [shape: f32[1,37], index: 9, kind: input, shape index: {}]
  %s10 = inlined_call_operand.vmem [shape: f32[37,37], index: 10, kind: input, shape index: {}]
  %s11 = inlined_call_operand.vmem [shape: f32[1,37], index: 11, kind: input, shape index: {}]
  %s12 = inlined_call_operand.vmem [shape: f32[50,32], index: 12, kind: input, shape index: {}]
  %s13 = inlined_call_operand.vmem [shape: f32[1,32], index: 13, kind: input, shape index: {}]
  %s14 = inlined_call_operand.vmem [shape: f32[1000,32], index: 14, kind: input, shape index: {}]
  %s15 = inlined_call_operand.vmem [shape: f32[1,32], index: 15, kind: input, shape index: {}]
  %s16 = inlined_call_operand.vmem [shape: f32[165,256], index: 16, kind: input, shape index: {}]
  %s17 = inlined_call_operand.vmem [shape: f32[1,256], index: 17, kind: input, shape index: {}]
  %s18 = inlined_call_operand.hbm [shape: f32[32,256], index: 18, kind: output, shape index: {}]
  %s19 = sld [smem:[#allocation0]]
  $region82: #{tpu_custom_call.1} parent=0
    _
  %s21 = ssub.s32 1, %s19
  %s22 = scalar_select 0, %s21, %s19
  $region1: #{tpu_custom_call.1} parent=0
    #allocation2 [shape = 'u8[32768]{0}', space=vmem, size = 0x8000, scoped, tag = 'output window, operand 0, single buffered']
    #allocation3 [shape = 's32[1]{0}', space=sflag, size = 0x4, scoped, tag = 'scoped memory for tpu_custom_call.1']
    %23 = vsyncpa [#allocation3], 0
    // Predicated region
    $region2: #{tpu_custom_call.1} parent=1 // pred_check
      _
    $region3: #{tpu_custom_call.1} parent=1 // pred_check_branch
      %25 = sbr.rel (0) target = $region5
    $region4: #{tpu_custom_call.1} parent=1 // pred_region
      _
    $region5: #{tpu_custom_call.1} parent=1 // pred_fallthru
      _
    // Predicated region
    $region6: #{tpu_custom_call.1} parent=1 // pred_check
      _
    $region7: #{tpu_custom_call.1} parent=1 // pred_check_branch
      %27 = sbr.rel (0) target = $region9
    $region8: #{tpu_custom_call.1} parent=1 // pred_region
      _
    $region9: #{tpu_custom_call.1} parent=1 // pred_fallthru
      _
    // Predicated region
    $region10: #{tpu_custom_call.1} parent=1 // pred_check
      _
    $region11: #{tpu_custom_call.1} parent=1 // pred_check_branch
      %29 = sbr.rel (0) target = $region13
    $region12: #{tpu_custom_call.1} parent=1 // pred_region
      _
    $region13: #{tpu_custom_call.1} parent=1 // pred_fallthru
      _
    // Predicated region
    $region14: #{tpu_custom_call.1} parent=1 // pred_check
      _
    $region15: #{tpu_custom_call.1} parent=1 // pred_check_branch
      %31 = sbr.rel (0) target = $region17
    $region16: #{tpu_custom_call.1} parent=1 // pred_region
      _
    $region17: #{tpu_custom_call.1} parent=1 // pred_fallthru
      _
    // Predicated region
    $region18: #{tpu_custom_call.1} parent=1 // pred_check
      _
    $region19: #{tpu_custom_call.1} parent=1 // pred_check_branch
      %33 = sbr.rel (0) target = $region21
    $region20: #{tpu_custom_call.1} parent=1 // pred_region
      _
    $region21: #{tpu_custom_call.1} parent=1 // pred_fallthru
      _
    // Predicated region
    $region22: #{tpu_custom_call.1} parent=1 // pred_check
      _
    $region23: #{tpu_custom_call.1} parent=1 // pred_check_branch
      %35 = sbr.rel (0) target = $region25
    $region24: #{tpu_custom_call.1} parent=1 // pred_region
      _
    $region25: #{tpu_custom_call.1} parent=1 // pred_fallthru
      _
    // Predicated region
    $region26: #{tpu_custom_call.1} parent=1 // pred_check
      _
    $region27: #{tpu_custom_call.1} parent=1 // pred_check_branch
      %37 = sbr.rel (0) target = $region29
    $region28: #{tpu_custom_call.1} parent=1 // pred_region
      _
    $region29: #{tpu_custom_call.1} parent=1 // pred_fallthru
      _
    // Predicated region
    $region30: #{tpu_custom_call.1} parent=1 // pred_check
      _
    $region31: #{tpu_custom_call.1} parent=1 // pred_check_branch
      %39 = sbr.rel (0) target = $region33
    $region32: #{tpu_custom_call.1} parent=1 // pred_region
      _
    $region33: #{tpu_custom_call.1} parent=1 // pred_fallthru
      _
    // Predicated region
    $region34: #{tpu_custom_call.1} parent=1 // pred_check
      _
    $region35: #{tpu_custom_call.1} parent=1 // pred_check_branch
      %41 = sbr.rel (0) target = $region37
    $region36: #{tpu_custom_call.1} parent=1 // pred_region
      _
    $region37: #{tpu_custom_call.1} parent=1 // pred_fallthru
      _
    // Predicated region
    $region38: #{tpu_custom_call.1} parent=1 // pred_check
      _
    $region39: #{tpu_custom_call.1} parent=1 // pred_check_branch
      %43 = sbr.rel (0) target = $region41
    $region40: #{tpu_custom_call.1} parent=1 // pred_region
      _
    $region41: #{tpu_custom_call.1} parent=1 // pred_fallthru
      _
    // Predicated region
    $region42: #{tpu_custom_call.1} parent=1 // pred_check
      _
    $region43: #{tpu_custom_call.1} parent=1 // pred_check_branch
      %45 = sbr.rel (0) target = $region45
    $region44: #{tpu_custom_call.1} parent=1 // pred_region
      _
    $region45: #{tpu_custom_call.1} parent=1 // pred_fallthru
      _
    // Predicated region
    $region46: #{tpu_custom_call.1} parent=1 // pred_check
      _
    $region47: #{tpu_custom_call.1} parent=1 // pred_check_branch
      %47 = sbr.rel (0) target = $region49
    $region48: #{tpu_custom_call.1} parent=1 // pred_region
      _
    $region49: #{tpu_custom_call.1} parent=1 // pred_fallthru
      _
    // Predicated region
    $region50: #{tpu_custom_call.1} parent=1 // pred_check
      _
    $region51: #{tpu_custom_call.1} parent=1 // pred_check_branch
      %49 = sbr.rel (0) target = $region53
    $region52: #{tpu_custom_call.1} parent=1 // pred_region
      _
    $region53: #{tpu_custom_call.1} parent=1 // pred_fallthru
      _
    // Predicated region
    $region54: #{tpu_custom_call.1} parent=1 // pred_check
      _
    $region55: #{tpu_custom_call.1} parent=1 // pred_check_branch
      %51 = sbr.rel (0) target = $region57
    $region56: #{tpu_custom_call.1} parent=1 // pred_region
      _
    $region57: #{tpu_custom_call.1} parent=1 // pred_fallthru
      _
    // Predicated region
    $region58: #{tpu_custom_call.1} parent=1 // pred_check
      _
    $region59: #{tpu_custom_call.1} parent=1 // pred_check_branch
      %53 = sbr.rel (0) target = $region61
    $region60: #{tpu_custom_call.1} parent=1 // pred_region
      _
    $region61: #{tpu_custom_call.1} parent=1 // pred_fallthru
      _
    // Predicated region
    $region62: #{tpu_custom_call.1} parent=1 // pred_check
      _
    $region63: #{tpu_custom_call.1} parent=1 // pred_check_branch
      %55 = sbr.rel (0) target = $region65
    $region64: #{tpu_custom_call.1} parent=1 // pred_region
      _
    $region65: #{tpu_custom_call.1} parent=1 // pred_fallthru
      _
    // Predicated region
    $region66: #{tpu_custom_call.1} parent=1 // pred_check
      _
    $region67: #{tpu_custom_call.1} parent=1 // pred_check_branch
      %57 = sbr.rel (0) target = $region69
    $region68: #{tpu_custom_call.1} parent=1 // pred_region
      _
    $region69: #{tpu_custom_call.1} parent=1 // pred_fallthru
      _
    // Predicated region
    $region70: #{tpu_custom_call.1} parent=1 // pred_check
      _
    $region71: #{tpu_custom_call.1} parent=1 // pred_check_branch
      %59 = sbr.rel (0) target = $region73
    $region72: #{tpu_custom_call.1} parent=1 // pred_region
      _
    $region73: #{tpu_custom_call.1} parent=1 // pred_fallthru
      _
    %v60 = vld [vmem:[%s5] sm:$0xff]
    %v61 = vld [vmem:[%s5 + $0x8] sm:$0xff]
    %v62 = vld [vmem:[%s5 + $0x10] sm:$0xff]
    %v63 = vld [vmem:[%s5 + $0x18] sm:$0xff]
    %s64 = scalar_lea.vmem %s5, 32
    %v65 = vld [vmem:[%s64] sm:$0xff]
    %v66 = vld [vmem:[%s64 + $0x8] sm:$0xff]
    %v67 = vld [vmem:[%s64 + $0x10] sm:$0xff]
    %v68 = vld [vmem:[%s64 + $0x18] sm:$0xff]
    %s69 = scalar_lea.vmem %s5, 64
    %v70 = vld [vmem:[%s69] sm:$0xff]
    %v71 = vld [vmem:[%s69 + $0x8] sm:$0xff]
    %v72 = vld [vmem:[%s69 + $0x10] sm:$0xff]
    %v73 = vld [vmem:[%s69 + $0x18] sm:$0xff]
    %v74 = vld [vmem:[%s6] sm:$0xff]
    %v75 = vld [vmem:[%s6 + $0x8] sm:$0xff]
    %v76 = vld [vmem:[%s6 + $0x10] sm:$0xff]
    %v77 = vld [vmem:[%s6 + $0x18] sm:$0xff]
    %v78 = vld [vmem:[%s3] sm:$0xff]
    %v79 = vld [vmem:[%s3 + $0x8] sm:$0xff]
    %v80 = vld [vmem:[%s3 + $0x10] sm:$0xff]
    %v81 = vld [vmem:[%s3 + $0x18] sm:$0xff]
    %s82 = scalar_lea.vmem %s3, 32
    %v83 = vld [vmem:[%s82] sm:$0xff]
    %v84 = vld [vmem:[%s82 + $0x8] sm:$0xff]
    %v85 = vld [vmem:[%s82 + $0x10] sm:$0xff]
    %v86 = vld [vmem:[%s82 + $0x18] sm:$0xff]
    %s87 = scalar_lea.vmem %s3, 64
    %v88 = vld [vmem:[%s87] sm:$0xff]
    %v89 = vld [vmem:[%s87 + $0x8] sm:$0xff]
    %v90 = vld [vmem:[%s87 + $0x10] sm:$0xff]
    %v91 = vld [vmem:[%s87 + $0x18] sm:$0xff]
    %v92 = vld [vmem:[%s8] sm:$0xff]
    %v93 = vld [vmem:[%s8 + $0x8] sm:$0xff]
    %v94 = vld [vmem:[%s8 + $0x10] sm:$0xff]
    %v95 = vld [vmem:[%s8 + $0x18] sm:$0xff]
    %v96 = vld [vmem:[%s8 + $0x20] sm:$0x1f]
    %v97 = vld [vmem:[%s9] sm:$0x1]
    %v99 = vlaneseq
    %v100 = vshrl.u32 %v99, 7
    %v101 = vsub.s32 0, %v100
    %v102 = vrot.slane %v97, %v101
    %vm104 = vcmask 302080
    %v106 = vsel %vm104, %v78, 0
    %v109 = vsel %vm104, %v79, 0
    %v112 = vsel %vm104, %v80, 0
    %v115 = vsel %vm104, %v81, 0
    %v118 = vsel %vm104, %v83, 0
    %v121 = vsel %vm104, %v84, 0
    %v124 = vsel %vm104, %v85, 0
    %v127 = vsel %vm104, %v86, 0
    %v130 = vsel %vm104, %v88, 0
    %v133 = vsel %vm104, %v89, 0
    %v136 = vsel %vm104, %v90, 0
    %v139 = vsel %vm104, %v91, 0
    %vm141 = vcmask 1044480
    %v143 = vsel %vm141, %v96, 0
    %145 = vmatprep.subr.mxu0 0.0
    %146 = vmatpush1.msra.mxu0 0.0
    %147 = vmatprep.subr.mxu0 0.0
    %148 = vmatpush1.msra.mxu0 0.0
    %149 = vmatprep.subr.mxu0 0.0
    %150 = vmatpush1.msra.mxu0 0.0
    %151 = vmatprep.subr.mxu0 0.0
    %152 = vmatpush1.msra.mxu0 0.0
    %153 = vmatprep.subr.mxu0 0.0
    %154 = vmatpush1.msra.mxu0 0.0
    %155 = vmatprep.subr.mxu0 0.0
    %156 = vmatpush1.msra.mxu0 0.0
    %157 = vmatprep.subr.mxu0 0.0
    %158 = vmatpush1.msra.mxu0 0.0
    %159 = vmatprep.subr.mxu0 0.0
    %160 = vmatpush1.msra.mxu0 0.0
    %161 = vmatprep.subr.mxu0 0.0
    %162 = vmatpush1.msra.mxu0 0.0
    %163 = vmatprep.subr.mxu0 0.0
    %164 = vmatpush1.msra.mxu0 0.0
    %165 = vmatprep.subr.mxu0 0.0
    %166 = vmatpush1.msra.mxu0 0.0
    %167 = vmatprep.subr.mxu0 0.0
    %v168 = vand.u32 %v143, 4294901760
    %169 = vmatpush1.msra.mxu0 %v168
    %170 = vmatprep.subr.mxu0 0.0
    %v171 = vand.u32 %v95, 4294901760
    %172 = vmatpush1.msra.mxu0 %v171
    %173 = vmatprep.subr.mxu0 0.0
    %v174 = vand.u32 %v94, 4294901760
    %175 = vmatpush1.msra.mxu0 %v174
    %176 = vmatprep.subr.mxu0 0.0
    %v177 = vand.u32 %v93, 4294901760
    %178 = vmatpush1.msra.mxu0 %v177
    %179 = vmatprep.subr.mxu0 0.0
    %v180 = vand.u32 %v92, 4294901760
    %181 = vmatpush1.msra.mxu0 %v180
    %182 = vmatprep.subr.mxu0 0.0
    %183 = vmatpush2.msra.mxu0 0.0
    %184 = vmatprep.subr.mxu0 0.0
    %185 = vmatpush2.msra.mxu0 0.0
    %186 = vmatprep.subr.mxu0 0.0
    %187 = vmatpush2.msra.mxu0 0.0
    %188 = vmatprep.subr.mxu0 0.0
    %189 = vmatpush2.msra.mxu0 0.0
    %190 = vmatprep.subr.mxu0 0.0
    %191 = vmatpush2.msra.mxu0 0.0
    %192 = vmatprep.subr.mxu0 0.0
    %193 = vmatpush2.msra.mxu0 0.0
    %194 = vmatprep.subr.mxu0 0.0
    %195 = vmatpush2.msra.mxu0 0.0
    %196 = vmatprep.subr.mxu0 0.0
    %197 = vmatpush2.msra.mxu0 0.0
    %198 = vmatprep.subr.mxu0 0.0
    %199 = vmatpush2.msra.mxu0 0.0
    %200 = vmatprep.subr.mxu0 0.0
    %201 = vmatpush2.msra.mxu0 0.0
    %202 = vmatprep.subr.mxu0 0.0
    %203 = vmatpush2.msra.mxu0 0.0
    %204 = vmatprep.subr.mxu0 0.0
    %205 = vmatpush2.msra.mxu0 0.0
    %206 = vmatprep.subr.mxu0 0.0
    %207 = vmatpush2.msra.mxu0 0.0
    %208 = vmatprep.subr.mxu0 0.0
    %209 = vmatpush2.msra.mxu0 0.0
    %210 = vmatprep.subr.mxu0 0.0
    %211 = vmatpush2.msra.mxu0 0.0
    %212 = vmatprep.subr.mxu0 0.0
    %213 = vmatpush2.msra.mxu0 0.0
    %214 = vmatprep.mubr.f32.mxu0 0.0
    %v215 = vand.u32 %v106, 4294901760
    %v216 = vsub.f32 %v106, %v215
    %v217 = vand.u32 %v216, 4294901760
    %v218 = vsub.f32 %v216, %v217
    %v219 = vand.u32 %v218, 4294901760
    %220 = vmatmul.mubr.f32.gmra.mxu0 %v219
    %v221 = vpop.f32.mrf.mxu0
    %v222 = vadd.f32 %v102, %v221
    %v223 = vpop.f32.mrf.mxu0
    %224 = vmatprep.mubr.f32.mxu0 0.0
    %v225 = vand.u32 %v109, 4294901760
    %v226 = vsub.f32 %v109, %v225
    %v227 = vand.u32 %v226, 4294901760
    %v228 = vsub.f32 %v226, %v227
    %v229 = vand.u32 %v228, 4294901760
    %230 = vmatmul.mubr.f32.gmra.mxu0 %v229
    %v231 = vpop.f32.mrf.mxu0
    %v232 = vadd.f32 %v102, %v231
    %v233 = vpop.f32.mrf.mxu0
    %234 = vmatprep.mubr.f32.mxu0 0.0
    %v235 = vand.u32 %v112, 4294901760
    %v236 = vsub.f32 %v112, %v235
    %v237 = vand.u32 %v236, 4294901760
    %v238 = vsub.f32 %v236, %v237
    %v239 = vand.u32 %v238, 4294901760
    %240 = vmatmul.mubr.f32.gmra.mxu0 %v239
    %v241 = vpop.f32.mrf.mxu0
    %v242 = vadd.f32 %v102, %v241
    %v243 = vpop.f32.mrf.mxu0
    %244 = vmatprep.mubr.f32.mxu0 0.0
    %v245 = vand.u32 %v115, 4294901760
    %v246 = vsub.f32 %v115, %v245
    %v247 = vand.u32 %v246, 4294901760
    %v248 = vsub.f32 %v246, %v247
    %v249 = vand.u32 %v248, 4294901760
    %250 = vmatmul.mubr.f32.gmra.mxu0 %v249
    %v251 = vpop.f32.mrf.mxu0
    %v252 = vadd.f32 %v102, %v251
    %v253 = vpop.f32.mrf.mxu0
    %254 = vmatprep.mubr.f32.mxu0 0.0
    %v255 = vand.u32 %v118, 4294901760
    %v256 = vsub.f32 %v118, %v255
    %v257 = vand.u32 %v256, 4294901760
    %v258 = vsub.f32 %v256, %v257
    %v259 = vand.u32 %v258, 4294901760
    %260 = vmatmul.mubr.f32.gmra.mxu0 %v259
    %v261 = vpop.f32.mrf.mxu0
    %v262 = vadd.f32 %v102, %v261
    %v263 = vpop.f32.mrf.mxu0
    %264 = vmatprep.mubr.f32.mxu0 0.0
    %v265 = vand.u32 %v121, 4294901760
    %v266 = vsub.f32 %v121, %v265
    %v267 = vand.u32 %v266, 4294901760
    %v268 = vsub.f32 %v266, %v267
    %v269 = vand.u32 %v268, 4294901760
    %270 = vmatmul.mubr.f32.gmra.mxu0 %v269
    %v271 = vpop.f32.mrf.mxu0
    %v272 = vadd.f32 %v102, %v271
    %v273 = vpop.f32.mrf.mxu0
    %274 = vmatprep.mubr.f32.mxu0 0.0
    %v275 = vand.u32 %v124, 4294901760
    %v276 = vsub.f32 %v124, %v275
    %v277 = vand.u32 %v276, 4294901760
    %v278 = vsub.f32 %v276, %v277
    %v279 = vand.u32 %v278, 4294901760
    %280 = vmatmul.mubr.f32.gmra.mxu0 %v279
    %v281 = vpop.f32.mrf.mxu0
    %v282 = vadd.f32 %v102, %v281
    %v283 = vpop.f32.mrf.mxu0
    %284 = vmatprep.mubr.f32.mxu0 0.0
    %v285 = vand.u32 %v127, 4294901760
    %v286 = vsub.f32 %v127, %v285
    %v287 = vand.u32 %v286, 4294901760
    %v288 = vsub.f32 %v286, %v287
    %v289 = vand.u32 %v288, 4294901760
    %290 = vmatmul.mubr.f32.gmra.mxu0 %v289
    %v291 = vpop.f32.mrf.mxu0
    %v292 = vadd.f32 %v102, %v291
    %v293 = vpop.f32.mrf.mxu0
    %294 = vmatprep.mubr.f32.mxu0 0.0
    %v295 = vand.u32 %v130, 4294901760
    %v296 = vsub.f32 %v130, %v295
    %v297 = vand.u32 %v296, 4294901760
    %v298 = vsub.f32 %v296, %v297
    %v299 = vand.u32 %v298, 4294901760
    %300 = vmatmul.mubr.f32.gmra.mxu0 %v299
    %v301 = vpop.f32.mrf.mxu0
    %v302 = vadd.f32 %v102, %v301
    %v303 = vpop.f32.mrf.mxu0
    %304 = vmatprep.mubr.f32.mxu0 0.0
    %v305 = vand.u32 %v133, 4294901760
    %v306 = vsub.f32 %v133, %v305
    %v307 = vand.u32 %v306, 4294901760
    %v308 = vsub.f32 %v306, %v307
    %v309 = vand.u32 %v308, 4294901760
    %310 = vmatmul.mubr.f32.gmra.mxu0 %v309
    %v311 = vpop.f32.mrf.mxu0
    %v312 = vadd.f32 %v102, %v311
    %v313 = vpop.f32.mrf.mxu0
    %314 = vmatprep.mubr.f32.mxu0 0.0
    %v315 = vand.u32 %v136, 4294901760
    %v316 = vsub.f32 %v136, %v315
    %v317 = vand.u32 %v316, 4294901760
    %v318 = vsub.f32 %v316, %v317
    %v319 = vand.u32 %v318, 4294901760
    %320 = vmatmul.mubr.f32.gmra.mxu0 %v319
    %v321 = vpop.f32.mrf.mxu0
    %v322 = vadd.f32 %v102, %v321
    %v323 = vpop.f32.mrf.mxu0
    %324 = vmatprep.mubr.f32.mxu0 0.0
    %v325 = vand.u32 %v139, 4294901760
    %v326 = vsub.f32 %v139, %v325
    %v327 = vand.u32 %v326, 4294901760
    %v328 = vsub.f32 %v326, %v327
    %v329 = vand.u32 %v328, 4294901760
    %330 = vmatmul.mubr.f32.gmra.mxu0 %v329
    %v331 = vpop.f32.mrf.mxu0
    %v332 = vadd.f32 %v102, %v331
    %v333 = vpop.f32.mrf.mxu0
    %334 = vdwg.mxu0
    %335 = vmatprep.subr.mxu0 0.0
    %336 = vmatpush1.msra.mxu0 0.0
    %337 = vmatprep.subr.mxu0 0.0
    %338 = vmatpush1.msra.mxu0 0.0
    %339 = vmatprep.subr.mxu0 0.0
    %340 = vmatpush1.msra.mxu0 0.0
    %341 = vmatprep.subr.mxu0 0.0
    %342 = vmatpush1.msra.mxu0 0.0
    %343 = vmatprep.subr.mxu0 0.0
    %344 = vmatpush1.msra.mxu0 0.0
    %345 = vmatprep.subr.mxu0 0.0
    %346 = vmatpush1.msra.mxu0 0.0
    %347 = vmatprep.subr.mxu0 0.0
    %348 = vmatpush1.msra.mxu0 0.0
    %349 = vmatprep.subr.mxu0 0.0
    %350 = vmatpush1.msra.mxu0 0.0
    %351 = vmatprep.subr.mxu0 0.0
    %352 = vmatpush1.msra.mxu0 0.0
    %353 = vmatprep.subr.mxu0 0.0
    %354 = vmatpush1.msra.mxu0 0.0
    %355 = vmatprep.subr.mxu0 0.0
    %356 = vmatpush1.msra.mxu0 0.0
    %357 = vmatprep.subr.mxu0 0.0
    %v358 = vand.u32 %v143, 4294901760
    %v359 = vsub.f32 %v143, %v358
    %v360 = vand.u32 %v359, 4294901760
    %v361 = vsub.f32 %v359, %v360
    %v362 = vand.u32 %v361, 4294901760
    %363 = vmatpush1.msra.mxu0 %v362
    %364 = vmatprep.subr.mxu0 0.0
    %v365 = vand.u32 %v95, 4294901760
    %v366 = vsub.f32 %v95, %v365
    %v367 = vand.u32 %v366, 4294901760
    %v368 = vsub.f32 %v366, %v367
    %v369 = vand.u32 %v368, 4294901760
    %370 = vmatpush1.msra.mxu0 %v369
    %371 = vmatprep.subr.mxu0 0.0
    %v372 = vand.u32 %v94, 4294901760
    %v373 = vsub.f32 %v94, %v372
    %v374 = vand.u32 %v373, 4294901760
    %v375 = vsub.f32 %v373, %v374
    %v376 = vand.u32 %v375, 4294901760
    %377 = vmatpush1.msra.mxu0 %v376
    %378 = vmatprep.subr.mxu0 0.0
    %v379 = vand.u32 %v93, 4294901760
    %v380 = vsub.f32 %v93, %v379
    %v381 = vand.u32 %v380, 4294901760
    %v382 = vsub.f32 %v380, %v381
    %v383 = vand.u32 %v382, 4294901760
    %384 = vmatpush1.msra.mxu0 %v383
    %385 = vmatprep.subr.mxu0 0.0
    %v386 = vand.u32 %v92, 4294901760
    %v387 = vsub.f32 %v92, %v386
    %v388 = vand.u32 %v387, 4294901760
    %v389 = vsub.f32 %v387, %v388
    %v390 = vand.u32 %v389, 4294901760
    %391 = vmatpush1.msra.mxu0 %v390
    %392 = vmatprep.subr.mxu0 0.0
    %393 = vmatpush2.msra.mxu0 0.0
    %394 = vmatprep.subr.mxu0 0.0
    %395 = vmatpush2.msra.mxu0 0.0
    %396 = vmatprep.subr.mxu0 0.0
    %397 = vmatpush2.msra.mxu0 0.0
    %398 = vmatprep.subr.mxu0 0.0
    %399 = vmatpush2.msra.mxu0 0.0
    %400 = vmatprep.subr.mxu0 0.0
    %401 = vmatpush2.msra.mxu0 0.0
    %402 = vmatprep.subr.mxu0 0.0
    %403 = vmatpush2.msra.mxu0 0.0
    %404 = vmatprep.subr.mxu0 0.0
    %405 = vmatpush2.msra.mxu0 0.0
    %406 = vmatprep.subr.mxu0 0.0
    %407 = vmatpush2.msra.mxu0 0.0
    %408 = vmatprep.subr.mxu0 0.0
    %409 = vmatpush2.msra.mxu0 0.0
    %410 = vmatprep.subr.mxu0 0.0
    %411 = vmatpush2.msra.mxu0 0.0
    %412 = vmatprep.subr.mxu0 0.0
    %413 = vmatpush2.msra.mxu0 0.0
    %414 = vmatprep.subr.mxu0 0.0
    %415 = vmatpush2.msra.mxu0 0.0
    %416 = vmatprep.subr.mxu0 0.0
    %417 = vmatpush2.msra.mxu0 0.0
    %418 = vmatprep.subr.mxu0 0.0
    %419 = vmatpush2.msra.mxu0 0.0
    %420 = vmatprep.subr.mxu0 0.0
    %421 = vmatpush2.msra.mxu0 0.0
    %422 = vmatprep.subr.mxu0 0.0
    %423 = vmatpush2.msra.mxu0 0.0
    %424 = vmatprep.mubr.f32.mxu0 0.0
    %v425 = vand.u32 %v106, 4294901760
    %426 = vmatmul.mubr.f32.gmra.mxu0 %v425
    %v427 = vpop.f32.mrf.mxu0
    %v428 = vadd.f32 %v222, %v427
    %v429 = vpop.f32.mrf.mxu0
    %430 = vmatprep.mubr.f32.mxu0 0.0
    %v431 = vand.u32 %v109, 4294901760
    %432 = vmatmul.mubr.f32.gmra.mxu0 %v431
    %v433 = vpop.f32.mrf.mxu0
    %v434 = vadd.f32 %v232, %v433
    %v435 = vpop.f32.mrf.mxu0
    %436 = vmatprep.mubr.f32.mxu0 0.0
    %v437 = vand.u32 %v112, 4294901760
    %438 = vmatmul.mubr.f32.gmra.mxu0 %v437
    %v439 = vpop.f32.mrf.mxu0
    %v440 = vadd.f32 %v242, %v439
    %v441 = vpop.f32.mrf.mxu0
    %442 = vmatprep.mubr.f32.mxu0 0.0
    %v443 = vand.u32 %v115, 4294901760
    %444 = vmatmul.mubr.f32.gmra.mxu0 %v443
    %v445 = vpop.f32.mrf.mxu0
    %v446 = vadd.f32 %v252, %v445
    %v447 = vpop.f32.mrf.mxu0
    %448 = vmatprep.mubr.f32.mxu0 0.0
    %v449 = vand.u32 %v118, 4294901760
    %450 = vmatmul.mubr.f32.gmra.mxu0 %v449
    %v451 = vpop.f32.mrf.mxu0
    %v452 = vadd.f32 %v262, %v451
    %v453 = vpop.f32.mrf.mxu0
    %454 = vmatprep.mubr.f32.mxu0 0.0
    %v455 = vand.u32 %v121, 4294901760
    %456 = vmatmul.mubr.f32.gmra.mxu0 %v455
    %v457 = vpop.f32.mrf.mxu0
    %v458 = vadd.f32 %v272, %v457
    %v459 = vpop.f32.mrf.mxu0
    %460 = vmatprep.mubr.f32.mxu0 0.0
    %v461 = vand.u32 %v124, 4294901760
    %462 = vmatmul.mubr.f32.gmra.mxu0 %v461
    %v463 = vpop.f32.mrf.mxu0
    %v464 = vadd.f32 %v282, %v463
    %v465 = vpop.f32.mrf.mxu0
    %466 = vmatprep.mubr.f32.mxu0 0.0
    %v467 = vand.u32 %v127, 4294901760
    %468 = vmatmul.mubr.f32.gmra.mxu0 %v467
    %v469 = vpop.f32.mrf.mxu0
    %v470 = vadd.f32 %v292, %v469
    %v471 = vpop.f32.mrf.mxu0
    %472 = vmatprep.mubr.f32.mxu0 0.0
    %v473 = vand.u32 %v130, 4294901760
    %474 = vmatmul.mubr.f32.gmra.mxu0 %v473
    %v475 = vpop.f32.mrf.mxu0
    %v476 = vadd.f32 %v302, %v475
    %v477 = vpop.f32.mrf.mxu0
    %478 = vmatprep.mubr.f32.mxu0 0.0
    %v479 = vand.u32 %v133, 4294901760
    %480 = vmatmul.mubr.f32.gmra.mxu0 %v479
    %v481 = vpop.f32.mrf.mxu0
    %v482 = vadd.f32 %v312, %v481
    %v483 = vpop.f32.mrf.mxu0
    %484 = vmatprep.mubr.f32.mxu0 0.0
    %v485 = vand.u32 %v136, 4294901760
    %486 = vmatmul.mubr.f32.gmra.mxu0 %v485
    %v487 = vpop.f32.mrf.mxu0
    %v488 = vadd.f32 %v322, %v487
    %v489 = vpop.f32.mrf.mxu0
    %490 = vmatprep.mubr.f32.mxu0 0.0
    %v491 = vand.u32 %v139, 4294901760
    %492 = vmatmul.mubr.f32.gmra.mxu0 %v491
    %v493 = vpop.f32.mrf.mxu0
    %v494 = vadd.f32 %v332, %v493
    %v495 = vpop.f32.mrf.mxu0
    %496 = vdwg.mxu0
    %497 = vmatprep.subr.mxu0 0.0
    %498 = vmatpush1.msra.mxu0 0.0
    %499 = vmatprep.subr.mxu0 0.0
    %500 = vmatpush1.msra.mxu0 0.0
    %501 = vmatprep.subr.mxu0 0.0
    %502 = vmatpush1.msra.mxu0 0.0
    %503 = vmatprep.subr.mxu0 0.0
    %504 = vmatpush1.msra.mxu0 0.0
    %505 = vmatprep.subr.mxu0 0.0
    %506 = vmatpush1.msra.mxu0 0.0
    %507 = vmatprep.subr.mxu0 0.0
    %508 = vmatpush1.msra.mxu0 0.0
    %509 = vmatprep.subr.mxu0 0.0
    %510 = vmatpush1.msra.mxu0 0.0
    %511 = vmatprep.subr.mxu0 0.0
    %512 = vmatpush1.msra.mxu0 0.0
    %513 = vmatprep.subr.mxu0 0.0
    %514 = vmatpush1.msra.mxu0 0.0
    %515 = vmatprep.subr.mxu0 0.0
    %516 = vmatpush1.msra.mxu0 0.0
    %517 = vmatprep.subr.mxu0 0.0
    %518 = vmatpush1.msra.mxu0 0.0
    %519 = vmatprep.subr.mxu0 0.0
    %v520 = vand.u32 %v143, 4294901760
    %v521 = vsub.f32 %v143, %v520
    %522 = vmatpush1.msra.mxu0 %v521
    %523 = vmatprep.subr.mxu0 0.0
    %v524 = vand.u32 %v95, 4294901760
    %v525 = vsub.f32 %v95, %v524
    %526 = vmatpush1.msra.mxu0 %v525
    %527 = vmatprep.subr.mxu0 0.0
    %v528 = vand.u32 %v94, 4294901760
    %v529 = vsub.f32 %v94, %v528
    %530 = vmatpush1.msra.mxu0 %v529
    %531 = vmatprep.subr.mxu0 0.0
    %v532 = vand.u32 %v93, 4294901760
    %v533 = vsub.f32 %v93, %v532
    %534 = vmatpush1.msra.mxu0 %v533
    %535 = vmatprep.subr.mxu0 0.0
    %v536 = vand.u32 %v92, 4294901760
    %v537 = vsub.f32 %v92, %v536
    %538 = vmatpush1.msra.mxu0 %v537
    %539 = vmatprep.subr.mxu0 0.0
    %540 = vmatpush2.msra.mxu0 0.0
    %541 = vmatprep.subr.mxu0 0.0
    %542 = vmatpush2.msra.mxu0 0.0
    %543 = vmatprep.subr.mxu0 0.0
    %544 = vmatpush2.msra.mxu0 0.0
    %545 = vmatprep.subr.mxu0 0.0
    %546 = vmatpush2.msra.mxu0 0.0
    %547 = vmatprep.subr.mxu0 0.0
    %548 = vmatpush2.msra.mxu0 0.0
    %549 = vmatprep.subr.mxu0 0.0
    %550 = vmatpush2.msra.mxu0 0.0
    %551 = vmatprep.subr.mxu0 0.0
    %552 = vmatpush2.msra.mxu0 0.0
    %553 = vmatprep.subr.mxu0 0.0
    %554 = vmatpush2.msra.mxu0 0.0
    %555 = vmatprep.subr.mxu0 0.0
    %556 = vmatpush2.msra.mxu0 0.0
    %557 = vmatprep.subr.mxu0 0.0
    %558 = vmatpush2.msra.mxu0 0.0
    %559 = vmatprep.subr.mxu0 0.0
    %560 = vmatpush2.msra.mxu0 0.0
    %561 = vmatprep.subr.mxu0 0.0
    %562 = vmatpush2.msra.mxu0 0.0
    %563 = vmatprep.subr.mxu0 0.0
    %564 = vmatpush2.msra.mxu0 0.0
    %565 = vmatprep.subr.mxu0 0.0
    %566 = vmatpush2.msra.mxu0 0.0
    %567 = vmatprep.subr.mxu0 0.0
    %568 = vmatpush2.msra.mxu0 0.0
    %569 = vmatprep.subr.mxu0 0.0
    %570 = vmatpush2.msra.mxu0 0.0
    %571 = vmatprep.mubr.f32.mxu0 0.0
    %v572 = vand.u32 %v106, 4294901760
    %v573 = vsub.f32 %v106, %v572
    %574 = vmatmul.mubr.f32.gmra.mxu0 %v573
    %v575 = vpop.f32.mrf.mxu0
    %v576 = vadd.f32 %v428, %v575
    %v577 = vpop.f32.mrf.mxu0
    %578 = vmatprep.mubr.f32.mxu0 0.0
    %v579 = vand.u32 %v109, 4294901760
    %v580 = vsub.f32 %v109, %v579
    %581 = vmatmul.mubr.f32.gmra.mxu0 %v580
    %v582 = vpop.f32.mrf.mxu0
    %v583 = vadd.f32 %v434, %v582
    %v584 = vpop.f32.mrf.mxu0
    %585 = vmatprep.mubr.f32.mxu0 0.0
    %v586 = vand.u32 %v112, 4294901760
    %v587 = vsub.f32 %v112, %v586
    %588 = vmatmul.mubr.f32.gmra.mxu0 %v587
    %v589 = vpop.f32.mrf.mxu0
    %v590 = vadd.f32 %v440, %v589
    %v591 = vpop.f32.mrf.mxu0
    %592 = vmatprep.mubr.f32.mxu0 0.0
    %v593 = vand.u32 %v115, 4294901760
    %v594 = vsub.f32 %v115, %v593
    %595 = vmatmul.mubr.f32.gmra.mxu0 %v594
    %v596 = vpop.f32.mrf.mxu0
    %v597 = vadd.f32 %v446, %v596
    %v598 = vpop.f32.mrf.mxu0
    %599 = vmatprep.mubr.f32.mxu0 0.0
    %v600 = vand.u32 %v118, 4294901760
    %v601 = vsub.f32 %v118, %v600
    %602 = vmatmul.mubr.f32.gmra.mxu0 %v601
    %v603 = vpop.f32.mrf.mxu0
    %v604 = vadd.f32 %v452, %v603
    %v605 = vpop.f32.mrf.mxu0
    %606 = vmatprep.mubr.f32.mxu0 0.0
    %v607 = vand.u32 %v121, 4294901760
    %v608 = vsub.f32 %v121, %v607
    %609 = vmatmul.mubr.f32.gmra.mxu0 %v608
    %v610 = vpop.f32.mrf.mxu0
    %v611 = vadd.f32 %v458, %v610
    %v612 = vpop.f32.mrf.mxu0
    %613 = vmatprep.mubr.f32.mxu0 0.0
    %v614 = vand.u32 %v124, 4294901760
    %v615 = vsub.f32 %v124, %v614
    %616 = vmatmul.mubr.f32.gmra.mxu0 %v615
    %v617 = vpop.f32.mrf.mxu0
    %v618 = vadd.f32 %v464, %v617
    %v619 = vpop.f32.mrf.mxu0
    %620 = vmatprep.mubr.f32.mxu0 0.0
    %v621 = vand.u32 %v127, 4294901760
    %v622 = vsub.f32 %v127, %v621
    %623 = vmatmul.mubr.f32.gmra.mxu0 %v622
    %v624 = vpop.f32.mrf.mxu0
    %v625 = vadd.f32 %v470, %v624
    %v626 = vpop.f32.mrf.mxu0
    %627 = vmatprep.mubr.f32.mxu0 0.0
    %v628 = vand.u32 %v130, 4294901760
    %v629 = vsub.f32 %v130, %v628
    %630 = vmatmul.mubr.f32.gmra.mxu0 %v629
    %v631 = vpop.f32.mrf.mxu0
    %v632 = vadd.f32 %v476, %v631
    %v633 = vpop.f32.mrf.mxu0
    %634 = vmatprep.mubr.f32.mxu0 0.0
    %v635 = vand.u32 %v133, 4294901760
    %v636 = vsub.f32 %v133, %v635
    %637 = vmatmul.mubr.f32.gmra.mxu0 %v636
    %v638 = vpop.f32.mrf.mxu0
    %v639 = vadd.f32 %v482, %v638
    %v640 = vpop.f32.mrf.mxu0
    %641 = vmatprep.mubr.f32.mxu0 0.0
    %v642 = vand.u32 %v136, 4294901760
    %v643 = vsub.f32 %v136, %v642
    %644 = vmatmul.mubr.f32.gmra.mxu0 %v643
    %v645 = vpop.f32.mrf.mxu0
    %v646 = vadd.f32 %v488, %v645
    %v647 = vpop.f32.mrf.mxu0
    %648 = vmatprep.mubr.f32.mxu0 0.0
    %v649 = vand.u32 %v139, 4294901760
    %v650 = vsub.f32 %v139, %v649
    %651 = vmatmul.mubr.f32.gmra.mxu0 %v650
    %v652 = vpop.f32.mrf.mxu0
    %v653 = vadd.f32 %v494, %v652
    %v654 = vpop.f32.mrf.mxu0
    %655 = vdwg.mxu0
    %656 = vmatprep.subr.mxu0 0.0
    %657 = vmatpush1.msra.mxu0 0.0
    %658 = vmatprep.subr.mxu0 0.0
    %659 = vmatpush1.msra.mxu0 0.0
    %660 = vmatprep.subr.mxu0 0.0
    %661 = vmatpush1.msra.mxu0 0.0
    %662 = vmatprep.subr.mxu0 0.0
    %663 = vmatpush1.msra.mxu0 0.0
    %664 = vmatprep.subr.mxu0 0.0
    %665 = vmatpush1.msra.mxu0 0.0
    %666 = vmatprep.subr.mxu0 0.0
    %667 = vmatpush1.msra.mxu0 0.0
    %668 = vmatprep.subr.mxu0 0.0
    %669 = vmatpush1.msra.mxu0 0.0
    %670 = vmatprep.subr.mxu0 0.0
    %671 = vmatpush1.msra.mxu0 0.0
    %672 = vmatprep.subr.mxu0 0.0
    %673 = vmatpush1.msra.mxu0 0.0
    %674 = vmatprep.subr.mxu0 0.0
    %675 = vmatpush1.msra.mxu0 0.0
    %676 = vmatprep.subr.mxu0 0.0
    %677 = vmatpush1.msra.mxu0 0.0
    %678 = vmatprep.subr.mxu0 0.0
    %v679 = vand.u32 %v143, 4294901760
    %680 = vmatpush1.msra.mxu0 %v679
    %681 = vmatprep.subr.mxu0 0.0
    %v682 = vand.u32 %v95, 4294901760
    %683 = vmatpush1.msra.mxu0 %v682
    %684 = vmatprep.subr.mxu0 0.0
    %v685 = vand.u32 %v94, 4294901760
    %686 = vmatpush1.msra.mxu0 %v685
    %687 = vmatprep.subr.mxu0 0.0
    %v688 = vand.u32 %v93, 4294901760
    %689 = vmatpush1.msra.mxu0 %v688
    %690 = vmatprep.subr.mxu0 0.0
    %v691 = vand.u32 %v92, 4294901760
    %692 = vmatpush1.msra.mxu0 %v691
    %693 = vmatprep.subr.mxu0 0.0
    %694 = vmatpush2.msra.mxu0 0.0
    %695 = vmatprep.subr.mxu0 0.0
    %696 = vmatpush2.msra.mxu0 0.0
    %697 = vmatprep.subr.mxu0 0.0
    %698 = vmatpush2.msra.mxu0 0.0
    %699 = vmatprep.subr.mxu0 0.0
    %700 = vmatpush2.msra.mxu0 0.0
    %701 = vmatprep.subr.mxu0 0.0
    %702 = vmatpush2.msra.mxu0 0.0
    %703 = vmatprep.subr.mxu0 0.0
    %704 = vmatpush2.msra.mxu0 0.0
    %705 = vmatprep.subr.mxu0 0.0
    %706 = vmatpush2.msra.mxu0 0.0
    %707 = vmatprep.subr.mxu0 0.0
    %708 = vmatpush2.msra.mxu0 0.0
    %709 = vmatprep.subr.mxu0 0.0
    %710 = vmatpush2.msra.mxu0 0.0
    %711 = vmatprep.subr.mxu0 0.0
    %712 = vmatpush2.msra.mxu0 0.0
    %713 = vmatprep.subr.mxu0 0.0
    %714 = vmatpush2.msra.mxu0 0.0
    %715 = vmatprep.subr.mxu0 0.0
    %716 = vmatpush2.msra.mxu0 0.0
    %717 = vmatprep.subr.mxu0 0.0
    %718 = vmatpush2.msra.mxu0 0.0
    %719 = vmatprep.subr.mxu0 0.0
    %720 = vmatpush2.msra.mxu0 0.0
    %721 = vmatprep.subr.mxu0 0.0
    %722 = vmatpush2.msra.mxu0 0.0
    %723 = vmatprep.subr.mxu0 0.0
    %724 = vmatpush2.msra.mxu0 0.0
    %725 = vmatprep.mubr.f32.mxu0 0.0
    %v726 = vand.u32 %v106, 4294901760
    %v727 = vsub.f32 %v106, %v726
    %v728 = vand.u32 %v727, 4294901760
    %729 = vmatmul.mubr.f32.gmra.mxu0 %v728
    %v730 = vpop.f32.mrf.mxu0
    %v731 = vadd.f32 %v576, %v730
    %v732 = vpop.f32.mrf.mxu0
    %733 = vmatprep.mubr.f32.mxu0 0.0
    %v734 = vand.u32 %v109, 4294901760
    %v735 = vsub.f32 %v109, %v734
    %v736 = vand.u32 %v735, 4294901760
    %737 = vmatmul.mubr.f32.gmra.mxu0 %v736
    %v738 = vpop.f32.mrf.mxu0
    %v739 = vadd.f32 %v583, %v738
    %v740 = vpop.f32.mrf.mxu0
    %741 = vmatprep.mubr.f32.mxu0 0.0
    %v742 = vand.u32 %v112, 4294901760
    %v743 = vsub.f32 %v112, %v742
    %v744 = vand.u32 %v743, 4294901760
    %745 = vmatmul.mubr.f32.gmra.mxu0 %v744
    %v746 = vpop.f32.mrf.mxu0
    %v747 = vadd.f32 %v590, %v746
    %v748 = vpop.f32.mrf.mxu0
    %749 = vmatprep.mubr.f32.mxu0 0.0
    %v750 = vand.u32 %v115, 4294901760
    %v751 = vsub.f32 %v115, %v750
    %v752 = vand.u32 %v751, 4294901760
    %753 = vmatmul.mubr.f32.gmra.mxu0 %v752
    %v754 = vpop.f32.mrf.mxu0
    %v755 = vadd.f32 %v597, %v754
    %v756 = vpop.f32.mrf.mxu0
    %757 = vmatprep.mubr.f32.mxu0 0.0
    %v758 = vand.u32 %v118, 4294901760
    %v759 = vsub.f32 %v118, %v758
    %v760 = vand.u32 %v759, 4294901760
    %761 = vmatmul.mubr.f32.gmra.mxu0 %v760
    %v762 = vpop.f32.mrf.mxu0
    %v763 = vadd.f32 %v604, %v762
    %v764 = vpop.f32.mrf.mxu0
    %765 = vmatprep.mubr.f32.mxu0 0.0
    %v766 = vand.u32 %v121, 4294901760
    %v767 = vsub.f32 %v121, %v766
    %v768 = vand.u32 %v767, 4294901760
    %769 = vmatmul.mubr.f32.gmra.mxu0 %v768
    %v770 = vpop.f32.mrf.mxu0
    %v771 = vadd.f32 %v611, %v770
    %v772 = vpop.f32.mrf.mxu0
    %773 = vmatprep.mubr.f32.mxu0 0.0
    %v774 = vand.u32 %v124, 4294901760
    %v775 = vsub.f32 %v124, %v774
    %v776 = vand.u32 %v775, 4294901760
    %777 = vmatmul.mubr.f32.gmra.mxu0 %v776
    %v778 = vpop.f32.mrf.mxu0
    %v779 = vadd.f32 %v618, %v778
    %v780 = vpop.f32.mrf.mxu0
    %781 = vmatprep.mubr.f32.mxu0 0.0
    %v782 = vand.u32 %v127, 4294901760
    %v783 = vsub.f32 %v127, %v782
    %v784 = vand.u32 %v783, 4294901760
    %785 = vmatmul.mubr.f32.gmra.mxu0 %v784
    %v786 = vpop.f32.mrf.mxu0
    %v787 = vadd.f32 %v625, %v786
    %v788 = vpop.f32.mrf.mxu0
    %789 = vmatprep.mubr.f32.mxu0 0.0
    %v790 = vand.u32 %v130, 4294901760
    %v791 = vsub.f32 %v130, %v790
    %v792 = vand.u32 %v791, 4294901760
    %793 = vmatmul.mubr.f32.gmra.mxu0 %v792
    %v794 = vpop.f32.mrf.mxu0
    %v795 = vadd.f32 %v632, %v794
    %v796 = vpop.f32.mrf.mxu0
    %797 = vmatprep.mubr.f32.mxu0 0.0
    %v798 = vand.u32 %v133, 4294901760
    %v799 = vsub.f32 %v133, %v798
    %v800 = vand.u32 %v799, 4294901760
    %801 = vmatmul.mubr.f32.gmra.mxu0 %v800
    %v802 = vpop.f32.mrf.mxu0
    %v803 = vadd.f32 %v639, %v802
    %v804 = vpop.f32.mrf.mxu0
    %805 = vmatprep.mubr.f32.mxu0 0.0
    %v806 = vand.u32 %v136, 4294901760
    %v807 = vsub.f32 %v136, %v806
    %v808 = vand.u32 %v807, 4294901760
    %809 = vmatmul.mubr.f32.gmra.mxu0 %v808
    %v810 = vpop.f32.mrf.mxu0
    %v811 = vadd.f32 %v646, %v810
    %v812 = vpop.f32.mrf.mxu0
    %813 = vmatprep.mubr.f32.mxu0 0.0
    %v814 = vand.u32 %v139, 4294901760
    %v815 = vsub.f32 %v139, %v814
    %v816 = vand.u32 %v815, 4294901760
    %817 = vmatmul.mubr.f32.gmra.mxu0 %v816
    %v818 = vpop.f32.mrf.mxu0
    %v819 = vadd.f32 %v653, %v818
    %v820 = vpop.f32.mrf.mxu0
    %821 = vdwg.mxu0
    %822 = vmatprep.subr.mxu0 0.0
    %823 = vmatpush1.msra.mxu0 0.0
    %824 = vmatprep.subr.mxu0 0.0
    %825 = vmatpush1.msra.mxu0 0.0
    %826 = vmatprep.subr.mxu0 0.0
    %827 = vmatpush1.msra.mxu0 0.0
    %828 = vmatprep.subr.mxu0 0.0
    %829 = vmatpush1.msra.mxu0 0.0
    %830 = vmatprep.subr.mxu0 0.0
    %831 = vmatpush1.msra.mxu0 0.0
    %832 = vmatprep.subr.mxu0 0.0
    %833 = vmatpush1.msra.mxu0 0.0
    %834 = vmatprep.subr.mxu0 0.0
    %835 = vmatpush1.msra.mxu0 0.0
    %836 = vmatprep.subr.mxu0 0.0
    %837 = vmatpush1.msra.mxu0 0.0
    %838 = vmatprep.subr.mxu0 0.0
    %839 = vmatpush1.msra.mxu0 0.0
    %840 = vmatprep.subr.mxu0 0.0
    %841 = vmatpush1.msra.mxu0 0.0
    %842 = vmatprep.subr.mxu0 0.0
    %843 = vmatpush1.msra.mxu0 0.0
    %844 = vmatprep.subr.mxu0 0.0
    %v845 = vand.u32 %v143, 4294901760
    %v846 = vsub.f32 %v143, %v845
    %v847 = vand.u32 %v846, 4294901760
    %848 = vmatpush1.msra.mxu0 %v847
    %849 = vmatprep.subr.mxu0 0.0
    %v850 = vand.u32 %v95, 4294901760
    %v851 = vsub.f32 %v95, %v850
    %v852 = vand.u32 %v851, 4294901760
    %853 = vmatpush1.msra.mxu0 %v852
    %854 = vmatprep.subr.mxu0 0.0
    %v855 = vand.u32 %v94, 4294901760
    %v856 = vsub.f32 %v94, %v855
    %v857 = vand.u32 %v856, 4294901760
    %858 = vmatpush1.msra.mxu0 %v857
    %859 = vmatprep.subr.mxu0 0.0
    %v860 = vand.u32 %v93, 4294901760
    %v861 = vsub.f32 %v93, %v860
    %v862 = vand.u32 %v861, 4294901760
    %863 = vmatpush1.msra.mxu0 %v862
    %864 = vmatprep.subr.mxu0 0.0
    %v865 = vand.u32 %v92, 4294901760
    %v866 = vsub.f32 %v92, %v865
    %v867 = vand.u32 %v866, 4294901760
    %868 = vmatpush1.msra.mxu0 %v867
    %869 = vmatprep.subr.mxu0 0.0
    %870 = vmatpush2.msra.mxu0 0.0
    %871 = vmatprep.subr.mxu0 0.0
    %872 = vmatpush2.msra.mxu0 0.0
    %873 = vmatprep.subr.mxu0 0.0
    %874 = vmatpush2.msra.mxu0 0.0
    %875 = vmatprep.subr.mxu0 0.0
    %876 = vmatpush2.msra.mxu0 0.0
    %877 = vmatprep.subr.mxu0 0.0
    %878 = vmatpush2.msra.mxu0 0.0
    %879 = vmatprep.subr.mxu0 0.0
    %880 = vmatpush2.msra.mxu0 0.0
    %881 = vmatprep.subr.mxu0 0.0
    %882 = vmatpush2.msra.mxu0 0.0
    %883 = vmatprep.subr.mxu0 0.0
    %884 = vmatpush2.msra.mxu0 0.0
    %885 = vmatprep.subr.mxu0 0.0
    %886 = vmatpush2.msra.mxu0 0.0
    %887 = vmatprep.subr.mxu0 0.0
    %888 = vmatpush2.msra.mxu0 0.0
    %889 = vmatprep.subr.mxu0 0.0
    %890 = vmatpush2.msra.mxu0 0.0
    %891 = vmatprep.subr.mxu0 0.0
    %892 = vmatpush2.msra.mxu0 0.0
    %893 = vmatprep.subr.mxu0 0.0
    %894 = vmatpush2.msra.mxu0 0.0
    %895 = vmatprep.subr.mxu0 0.0
    %896 = vmatpush2.msra.mxu0 0.0
    %897 = vmatprep.subr.mxu0 0.0
    %898 = vmatpush2.msra.mxu0 0.0
    %899 = vmatprep.subr.mxu0 0.0
    %900 = vmatpush2.msra.mxu0 0.0
    %901 = vmatprep.mubr.f32.mxu0 0.0
    %v902 = vand.u32 %v106, 4294901760
    %903 = vmatmul.mubr.f32.gmra.mxu0 %v902
    %v904 = vpop.f32.mrf.mxu0
    %v905 = vadd.f32 %v731, %v904
    %v906 = vpop.f32.mrf.mxu0
    %907 = vmatprep.mubr.f32.mxu0 0.0
    %v908 = vand.u32 %v109, 4294901760
    %909 = vmatmul.mubr.f32.gmra.mxu0 %v908
    %v910 = vpop.f32.mrf.mxu0
    %v911 = vadd.f32 %v739, %v910
    %v912 = vpop.f32.mrf.mxu0
    %913 = vmatprep.mubr.f32.mxu0 0.0
    %v914 = vand.u32 %v112, 4294901760
    %915 = vmatmul.mubr.f32.gmra.mxu0 %v914
    %v916 = vpop.f32.mrf.mxu0
    %v917 = vadd.f32 %v747, %v916
    %v918 = vpop.f32.mrf.mxu0
    %919 = vmatprep.mubr.f32.mxu0 0.0
    %v920 = vand.u32 %v115, 4294901760
    %921 = vmatmul.mubr.f32.gmra.mxu0 %v920
    %v922 = vpop.f32.mrf.mxu0
    %v923 = vadd.f32 %v755, %v922
    %v924 = vpop.f32.mrf.mxu0
    %925 = vmatprep.mubr.f32.mxu0 0.0
    %v926 = vand.u32 %v118, 4294901760
    %927 = vmatmul.mubr.f32.gmra.mxu0 %v926
    %v928 = vpop.f32.mrf.mxu0
    %v929 = vadd.f32 %v763, %v928
    %v930 = vpop.f32.mrf.mxu0
    %931 = vmatprep.mubr.f32.mxu0 0.0
    %v932 = vand.u32 %v121, 4294901760
    %933 = vmatmul.mubr.f32.gmra.mxu0 %v932
    %v934 = vpop.f32.mrf.mxu0
    %v935 = vadd.f32 %v771, %v934
    %v936 = vpop.f32.mrf.mxu0
    %937 = vmatprep.mubr.f32.mxu0 0.0
    %v938 = vand.u32 %v124, 4294901760
    %939 = vmatmul.mubr.f32.gmra.mxu0 %v938
    %v940 = vpop.f32.mrf.mxu0
    %v941 = vadd.f32 %v779, %v940
    %v942 = vpop.f32.mrf.mxu0
    %943 = vmatprep.mubr.f32.mxu0 0.0
    %v944 = vand.u32 %v127, 4294901760
    %945 = vmatmul.mubr.f32.gmra.mxu0 %v944
    %v946 = vpop.f32.mrf.mxu0
    %v947 = vadd.f32 %v787, %v946
    %v948 = vpop.f32.mrf.mxu0
    %949 = vmatprep.mubr.f32.mxu0 0.0
    %v950 = vand.u32 %v130, 4294901760
    %951 = vmatmul.mubr.f32.gmra.mxu0 %v950
    %v952 = vpop.f32.mrf.mxu0
    %v953 = vadd.f32 %v795, %v952
    %v954 = vpop.f32.mrf.mxu0
    %955 = vmatprep.mubr.f32.mxu0 0.0
    %v956 = vand.u32 %v133, 4294901760
    %957 = vmatmul.mubr.f32.gmra.mxu0 %v956
    %v958 = vpop.f32.mrf.mxu0
    %v959 = vadd.f32 %v803, %v958
    %v960 = vpop.f32.mrf.mxu0
    %961 = vmatprep.mubr.f32.mxu0 0.0
    %v962 = vand.u32 %v136, 4294901760
    %963 = vmatmul.mubr.f32.gmra.mxu0 %v962
    %v964 = vpop.f32.mrf.mxu0
    %v965 = vadd.f32 %v811, %v964
    %v966 = vpop.f32.mrf.mxu0
    %967 = vmatprep.mubr.f32.mxu0 0.0
    %v968 = vand.u32 %v139, 4294901760
    %969 = vmatmul.mubr.f32.gmra.mxu0 %v968
    %v970 = vpop.f32.mrf.mxu0
    %v971 = vadd.f32 %v819, %v970
    %v972 = vpop.f32.mrf.mxu0
    %973 = vdwg.mxu0
    %974 = vmatprep.subr.mxu0 0.0
    %975 = vmatpush1.msra.mxu0 0.0
    %976 = vmatprep.subr.mxu0 0.0
    %977 = vmatpush1.msra.mxu0 0.0
    %978 = vmatprep.subr.mxu0 0.0
    %979 = vmatpush1.msra.mxu0 0.0
    %980 = vmatprep.subr.mxu0 0.0
    %981 = vmatpush1.msra.mxu0 0.0
    %982 = vmatprep.subr.mxu0 0.0
    %983 = vmatpush1.msra.mxu0 0.0
    %984 = vmatprep.subr.mxu0 0.0
    %985 = vmatpush1.msra.mxu0 0.0
    %986 = vmatprep.subr.mxu0 0.0
    %987 = vmatpush1.msra.mxu0 0.0
    %988 = vmatprep.subr.mxu0 0.0
    %989 = vmatpush1.msra.mxu0 0.0
    %990 = vmatprep.subr.mxu0 0.0
    %991 = vmatpush1.msra.mxu0 0.0
    %992 = vmatprep.subr.mxu0 0.0
    %993 = vmatpush1.msra.mxu0 0.0
    %994 = vmatprep.subr.mxu0 0.0
    %995 = vmatpush1.msra.mxu0 0.0
    %996 = vmatprep.subr.mxu0 0.0
    %v997 = vand.u32 %v143, 4294901760
    %998 = vmatpush1.msra.mxu0 %v997
    %999 = vmatprep.subr.mxu0 0.0
    %v1000 = vand.u32 %v95, 4294901760
    %1001 = vmatpush1.msra.mxu0 %v1000
    %1002 = vmatprep.subr.mxu0 0.0
    %v1003 = vand.u32 %v94, 4294901760
    %1004 = vmatpush1.msra.mxu0 %v1003
    %1005 = vmatprep.subr.mxu0 0.0
    %v1006 = vand.u32 %v93, 4294901760
    %1007 = vmatpush1.msra.mxu0 %v1006
    %1008 = vmatprep.subr.mxu0 0.0
    %v1009 = vand.u32 %v92, 4294901760
    %1010 = vmatpush1.msra.mxu0 %v1009
    %1011 = vmatprep.subr.mxu0 0.0
    %1012 = vmatpush2.msra.mxu0 0.0
    %1013 = vmatprep.subr.mxu0 0.0
    %1014 = vmatpush2.msra.mxu0 0.0
    %1015 = vmatprep.subr.mxu0 0.0
    %1016 = vmatpush2.msra.mxu0 0.0
    %1017 = vmatprep.subr.mxu0 0.0
    %1018 = vmatpush2.msra.mxu0 0.0
    %1019 = vmatprep.subr.mxu0 0.0
    %1020 = vmatpush2.msra.mxu0 0.0
    %1021 = vmatprep.subr.mxu0 0.0
    %1022 = vmatpush2.msra.mxu0 0.0
    %1023 = vmatprep.subr.mxu0 0.0
    %1024 = vmatpush2.msra.mxu0 0.0
    %1025 = vmatprep.subr.mxu0 0.0
    %1026 = vmatpush2.msra.mxu0 0.0
    %1027 = vmatprep.subr.mxu0 0.0
    %1028 = vmatpush2.msra.mxu0 0.0
    %1029 = vmatprep.subr.mxu0 0.0
    %1030 = vmatpush2.msra.mxu0 0.0
    %1031 = vmatprep.subr.mxu0 0.0
    %1032 = vmatpush2.msra.mxu0 0.0
    %1033 = vmatprep.subr.mxu0 0.0
    %1034 = vmatpush2.msra.mxu0 0.0
    %1035 = vmatprep.subr.mxu0 0.0
    %1036 = vmatpush2.msra.mxu0 0.0
    %1037 = vmatprep.subr.mxu0 0.0
    %1038 = vmatpush2.msra.mxu0 0.0
    %1039 = vmatprep.subr.mxu0 0.0
    %1040 = vmatpush2.msra.mxu0 0.0
    %1041 = vmatprep.subr.mxu0 0.0
    %1042 = vmatpush2.msra.mxu0 0.0
    %1043 = vmatprep.mubr.f32.mxu0 0.0
    %v1044 = vand.u32 %v106, 4294901760
    %1045 = vmatmul.mubr.f32.gmra.mxu0 %v1044
    %v1046 = vpop.f32.mrf.mxu0
    %v1047 = vadd.f32 %v905, %v1046
    %v1048 = vpop.f32.mrf.mxu0
    %1049 = vmatprep.mubr.f32.mxu0 0.0
    %v1050 = vand.u32 %v109, 4294901760
    %1051 = vmatmul.mubr.f32.gmra.mxu0 %v1050
    %v1052 = vpop.f32.mrf.mxu0
    %v1053 = vadd.f32 %v911, %v1052
    %v1054 = vpop.f32.mrf.mxu0
    %1055 = vmatprep.mubr.f32.mxu0 0.0
    %v1056 = vand.u32 %v112, 4294901760
    %1057 = vmatmul.mubr.f32.gmra.mxu0 %v1056
    %v1058 = vpop.f32.mrf.mxu0
    %v1059 = vadd.f32 %v917, %v1058
    %v1060 = vpop.f32.mrf.mxu0
    %1061 = vmatprep.mubr.f32.mxu0 0.0
    %v1062 = vand.u32 %v115, 4294901760
    %1063 = vmatmul.mubr.f32.gmra.mxu0 %v1062
    %v1064 = vpop.f32.mrf.mxu0
    %v1065 = vadd.f32 %v923, %v1064
    %v1066 = vpop.f32.mrf.mxu0
    %1067 = vmatprep.mubr.f32.mxu0 0.0
    %v1068 = vand.u32 %v118, 4294901760
    %1069 = vmatmul.mubr.f32.gmra.mxu0 %v1068
    %v1070 = vpop.f32.mrf.mxu0
    %v1071 = vadd.f32 %v929, %v1070
    %v1072 = vpop.f32.mrf.mxu0
    %1073 = vmatprep.mubr.f32.mxu0 0.0
    %v1074 = vand.u32 %v121, 4294901760
    %1075 = vmatmul.mubr.f32.gmra.mxu0 %v1074
    %v1076 = vpop.f32.mrf.mxu0
    %v1077 = vadd.f32 %v935, %v1076
    %v1078 = vpop.f32.mrf.mxu0
    %1079 = vmatprep.mubr.f32.mxu0 0.0
    %v1080 = vand.u32 %v124, 4294901760
    %1081 = vmatmul.mubr.f32.gmra.mxu0 %v1080
    %v1082 = vpop.f32.mrf.mxu0
    %v1083 = vadd.f32 %v941, %v1082
    %v1084 = vpop.f32.mrf.mxu0
    %1085 = vmatprep.mubr.f32.mxu0 0.0
    %v1086 = vand.u32 %v127, 4294901760
    %1087 = vmatmul.mubr.f32.gmra.mxu0 %v1086
    %v1088 = vpop.f32.mrf.mxu0
    %v1089 = vadd.f32 %v947, %v1088
    %v1090 = vpop.f32.mrf.mxu0
    %1091 = vmatprep.mubr.f32.mxu0 0.0
    %v1092 = vand.u32 %v130, 4294901760
    %1093 = vmatmul.mubr.f32.gmra.mxu0 %v1092
    %v1094 = vpop.f32.mrf.mxu0
    %v1095 = vadd.f32 %v953, %v1094
    %v1096 = vpop.f32.mrf.mxu0
    %1097 = vmatprep.mubr.f32.mxu0 0.0
    %v1098 = vand.u32 %v133, 4294901760
    %1099 = vmatmul.mubr.f32.gmra.mxu0 %v1098
    %v1100 = vpop.f32.mrf.mxu0
    %v1101 = vadd.f32 %v959, %v1100
    %v1102 = vpop.f32.mrf.mxu0
    %1103 = vmatprep.mubr.f32.mxu0 0.0
    %v1104 = vand.u32 %v136, 4294901760
    %1105 = vmatmul.mubr.f32.gmra.mxu0 %v1104
    %v1106 = vpop.f32.mrf.mxu0
    %v1107 = vadd.f32 %v965, %v1106
    %v1108 = vpop.f32.mrf.mxu0
    %1109 = vmatprep.mubr.f32.mxu0 0.0
    %v1110 = vand.u32 %v139, 4294901760
    %1111 = vmatmul.mubr.f32.gmra.mxu0 %v1110
    %v1112 = vpop.f32.mrf.mxu0
    %v1113 = vadd.f32 %v971, %v1112
    %v1114 = vpop.f32.mrf.mxu0
    %1115 = vdwg.mxu0
    %vm1116 = vcmp.ge.f32.partialorder %v1047, 0.0
    %vm1117 = vcmp.ge.f32.partialorder %v1053, 0.0
    %vm1118 = vcmp.ge.f32.partialorder %v1059, 0.0
    %vm1119 = vcmp.ge.f32.partialorder %v1065, 0.0
    %vm1120 = vcmp.ge.f32.partialorder %v1071, 0.0
    %vm1121 = vcmp.ge.f32.partialorder %v1077, 0.0
    %vm1122 = vcmp.ge.f32.partialorder %v1083, 0.0
    %vm1123 = vcmp.ge.f32.partialorder %v1089, 0.0
    %vm1124 = vcmp.ge.f32.partialorder %v1095, 0.0
    %vm1125 = vcmp.ge.f32.partialorder %v1101, 0.0
    %vm1126 = vcmp.ge.f32.partialorder %v1107, 0.0
    %vm1127 = vcmp.ge.f32.partialorder %v1113, 0.0
    %v1128 = vmul.f32 %v1047, 0.01
    %v1129 = vmul.f32 %v1053, 0.01
    %v1130 = vmul.f32 %v1059, 0.01
    %v1131 = vmul.f32 %v1065, 0.01
    %v1132 = vmul.f32 %v1071, 0.01
    %v1133 = vmul.f32 %v1077, 0.01
    %v1134 = vmul.f32 %v1083, 0.01
    %v1135 = vmul.f32 %v1089, 0.01
    %v1136 = vmul.f32 %v1095, 0.01
    %v1137 = vmul.f32 %v1101, 0.01
    %v1138 = vmul.f32 %v1107, 0.01
    %v1139 = vmul.f32 %v1113, 0.01
    %v1140 = vsel %vm1116, %v1047, %v1128
    %v1141 = vsel %vm1117, %v1053, %v1129
    %v1142 = vsel %vm1118, %v1059, %v1130
    %v1143 = vsel %vm1119, %v1065, %v1131
    %v1144 = vsel %vm1120, %v1071, %v1132
    %v1145 = vsel %vm1121, %v1077, %v1133
    %v1146 = vsel %vm1122, %v1083, %v1134
    %v1147 = vsel %vm1123, %v1089, %v1135
    %v1148 = vsel %vm1124, %v1095, %v1136
    %v1149 = vsel %vm1125, %v1101, %v1137
    %v1150 = vsel %vm1126, %v1107, %v1138
    %v1151 = vsel %vm1127, %v1113, %v1139
    %v1152 = vld [vmem:[%s10] sm:$0xff]
    %v1153 = vld [vmem:[%s10 + $0x8] sm:$0xff]
    %v1154 = vld [vmem:[%s10 + $0x10] sm:$0xff]
    %v1155 = vld [vmem:[%s10 + $0x18] sm:$0xff]
    %v1156 = vld [vmem:[%s10 + $0x20] sm:$0x1f]
    %v1157 = vld [vmem:[%s11] sm:$0x1]
    %v1159 = vlaneseq
    %v1160 = vshrl.u32 %v1159, 7
    %v1161 = vsub.s32 0, %v1160
    %v1162 = vrot.slane %v1157, %v1161
    %v1165 = vsel %vm104, %v1140, 0
    %v1168 = vsel %vm104, %v1141, 0
    %v1171 = vsel %vm104, %v1142, 0
    %v1174 = vsel %vm104, %v1143, 0
    %v1177 = vsel %vm104, %v1144, 0
    %v1180 = vsel %vm104, %v1145, 0
    %v1183 = vsel %vm104, %v1146, 0
    %v1186 = vsel %vm104, %v1147, 0
    %v1189 = vsel %vm104, %v1148, 0
    %v1192 = vsel %vm104, %v1149, 0
    %v1195 = vsel %vm104, %v1150, 0
    %v1198 = vsel %vm104, %v1151, 0
    %v1201 = vsel %vm141, %v1156, 0
    %1203 = vmatprep.subr.mxu0 0.0
    %1204 = vmatpush1.msra.mxu0 0.0
    %1205 = vmatprep.subr.mxu0 0.0
    %1206 = vmatpush1.msra.mxu0 0.0
    %1207 = vmatprep.subr.mxu0 0.0
    %1208 = vmatpush1.msra.mxu0 0.0
    %1209 = vmatprep.subr.mxu0 0.0
    %1210 = vmatpush1.msra.mxu0 0.0
    %1211 = vmatprep.subr.mxu0 0.0
    %1212 = vmatpush1.msra.mxu0 0.0
    %1213 = vmatprep.subr.mxu0 0.0
    %1214 = vmatpush1.msra.mxu0 0.0
    %1215 = vmatprep.subr.mxu0 0.0
    %1216 = vmatpush1.msra.mxu0 0.0
    %1217 = vmatprep.subr.mxu0 0.0
    %1218 = vmatpush1.msra.mxu0 0.0
    %1219 = vmatprep.subr.mxu0 0.0
    %1220 = vmatpush1.msra.mxu0 0.0
    %1221 = vmatprep.subr.mxu0 0.0
    %1222 = vmatpush1.msra.mxu0 0.0
    %1223 = vmatprep.subr.mxu0 0.0
    %1224 = vmatpush1.msra.mxu0 0.0
    %1225 = vmatprep.subr.mxu0 0.0
    %v1226 = vand.u32 %v1201, 4294901760
    %1227 = vmatpush1.msra.mxu0 %v1226
    %1228 = vmatprep.subr.mxu0 0.0
    %v1229 = vand.u32 %v1155, 4294901760
    %1230 = vmatpush1.msra.mxu0 %v1229
    %1231 = vmatprep.subr.mxu0 0.0
    %v1232 = vand.u32 %v1154, 4294901760
    %1233 = vmatpush1.msra.mxu0 %v1232
    %1234 = vmatprep.subr.mxu0 0.0
    %v1235 = vand.u32 %v1153, 4294901760
    %1236 = vmatpush1.msra.mxu0 %v1235
    %1237 = vmatprep.subr.mxu0 0.0
    %v1238 = vand.u32 %v1152, 4294901760
    %1239 = vmatpush1.msra.mxu0 %v1238
    %1240 = vmatprep.subr.mxu0 0.0
    %1241 = vmatpush2.msra.mxu0 0.0
    %1242 = vmatprep.subr.mxu0 0.0
    %1243 = vmatpush2.msra.mxu0 0.0
    %1244 = vmatprep.subr.mxu0 0.0
    %1245 = vmatpush2.msra.mxu0 0.0
    %1246 = vmatprep.subr.mxu0 0.0
    %1247 = vmatpush2.msra.mxu0 0.0
    %1248 = vmatprep.subr.mxu0 0.0
    %1249 = vmatpush2.msra.mxu0 0.0
    %1250 = vmatprep.subr.mxu0 0.0
    %1251 = vmatpush2.msra.mxu0 0.0
    %1252 = vmatprep.subr.mxu0 0.0
    %1253 = vmatpush2.msra.mxu0 0.0
    %1254 = vmatprep.subr.mxu0 0.0
    %1255 = vmatpush2.msra.mxu0 0.0
    %1256 = vmatprep.subr.mxu0 0.0
    %1257 = vmatpush2.msra.mxu0 0.0
    %1258 = vmatprep.subr.mxu0 0.0
    %1259 = vmatpush2.msra.mxu0 0.0
    %1260 = vmatprep.subr.mxu0 0.0
    %1261 = vmatpush2.msra.mxu0 0.0
    %1262 = vmatprep.subr.mxu0 0.0
    %1263 = vmatpush2.msra.mxu0 0.0
    %1264 = vmatprep.subr.mxu0 0.0
    %1265 = vmatpush2.msra.mxu0 0.0
    %1266 = vmatprep.subr.mxu0 0.0
    %1267 = vmatpush2.msra.mxu0 0.0
    %1268 = vmatprep.subr.mxu0 0.0
    %1269 = vmatpush2.msra.mxu0 0.0
    %1270 = vmatprep.subr.mxu0 0.0
    %1271 = vmatpush2.msra.mxu0 0.0
    %1272 = vmatprep.mubr.f32.mxu0 0.0
    %v1273 = vand.u32 %v1165, 4294901760
    %v1274 = vsub.f32 %v1165, %v1273
    %v1275 = vand.u32 %v1274, 4294901760
    %v1276 = vsub.f32 %v1274, %v1275
    %v1277 = vand.u32 %v1276, 4294901760
    %1278 = vmatmul.mubr.f32.gmra.mxu0 %v1277
    %v1279 = vpop.f32.mrf.mxu0
    %v1280 = vadd.f32 %v1162, %v1279
    %v1281 = vpop.f32.mrf.mxu0
    %1282 = vmatprep.mubr.f32.mxu0 0.0
    %v1283 = vand.u32 %v1168, 4294901760
    %v1284 = vsub.f32 %v1168, %v1283
    %v1285 = vand.u32 %v1284, 4294901760
    %v1286 = vsub.f32 %v1284, %v1285
    %v1287 = vand.u32 %v1286, 4294901760
    %1288 = vmatmul.mubr.f32.gmra.mxu0 %v1287
    %v1289 = vpop.f32.mrf.mxu0
    %v1290 = vadd.f32 %v1162, %v1289
    %v1291 = vpop.f32.mrf.mxu0
    %1292 = vmatprep.mubr.f32.mxu0 0.0
    %v1293 = vand.u32 %v1171, 4294901760
    %v1294 = vsub.f32 %v1171, %v1293
    %v1295 = vand.u32 %v1294, 4294901760
    %v1296 = vsub.f32 %v1294, %v1295
    %v1297 = vand.u32 %v1296, 4294901760
    %1298 = vmatmul.mubr.f32.gmra.mxu0 %v1297
    %v1299 = vpop.f32.mrf.mxu0
    %v1300 = vadd.f32 %v1162, %v1299
    %v1301 = vpop.f32.mrf.mxu0
    %1302 = vmatprep.mubr.f32.mxu0 0.0
    %v1303 = vand.u32 %v1174, 4294901760
    %v1304 = vsub.f32 %v1174, %v1303
    %v1305 = vand.u32 %v1304, 4294901760
    %v1306 = vsub.f32 %v1304, %v1305
    %v1307 = vand.u32 %v1306, 4294901760
    %1308 = vmatmul.mubr.f32.gmra.mxu0 %v1307
    %v1309 = vpop.f32.mrf.mxu0
    %v1310 = vadd.f32 %v1162, %v1309
    %v1311 = vpop.f32.mrf.mxu0
    %1312 = vmatprep.mubr.f32.mxu0 0.0
    %v1313 = vand.u32 %v1177, 4294901760
    %v1314 = vsub.f32 %v1177, %v1313
    %v1315 = vand.u32 %v1314, 4294901760
    %v1316 = vsub.f32 %v1314, %v1315
    %v1317 = vand.u32 %v1316, 4294901760
    %1318 = vmatmul.mubr.f32.gmra.mxu0 %v1317
    %v1319 = vpop.f32.mrf.mxu0
    %v1320 = vadd.f32 %v1162, %v1319
    %v1321 = vpop.f32.mrf.mxu0
    %1322 = vmatprep.mubr.f32.mxu0 0.0
    %v1323 = vand.u32 %v1180, 4294901760
    %v1324 = vsub.f32 %v1180, %v1323
    %v1325 = vand.u32 %v1324, 4294901760
    %v1326 = vsub.f32 %v1324, %v1325
    %v1327 = vand.u32 %v1326, 4294901760
    %1328 = vmatmul.mubr.f32.gmra.mxu0 %v1327
    %v1329 = vpop.f32.mrf.mxu0
    %v1330 = vadd.f32 %v1162, %v1329
    %v1331 = vpop.f32.mrf.mxu0
    %1332 = vmatprep.mubr.f32.mxu0 0.0
    %v1333 = vand.u32 %v1183, 4294901760
    %v1334 = vsub.f32 %v1183, %v1333
    %v1335 = vand.u32 %v1334, 4294901760
    %v1336 = vsub.f32 %v1334, %v1335
    %v1337 = vand.u32 %v1336, 4294901760
    %1338 = vmatmul.mubr.f32.gmra.mxu0 %v1337
    %v1339 = vpop.f32.mrf.mxu0
    %v1340 = vadd.f32 %v1162, %v1339
    %v1341 = vpop.f32.mrf.mxu0
    %1342 = vmatprep.mubr.f32.mxu0 0.0
    %v1343 = vand.u32 %v1186, 4294901760
    %v1344 = vsub.f32 %v1186, %v1343
    %v1345 = vand.u32 %v1344, 4294901760
    %v1346 = vsub.f32 %v1344, %v1345
    %v1347 = vand.u32 %v1346, 4294901760
    %1348 = vmatmul.mubr.f32.gmra.mxu0 %v1347
    %v1349 = vpop.f32.mrf.mxu0
    %v1350 = vadd.f32 %v1162, %v1349
    %v1351 = vpop.f32.mrf.mxu0
    %1352 = vmatprep.mubr.f32.mxu0 0.0
    %v1353 = vand.u32 %v1189, 4294901760
    %v1354 = vsub.f32 %v1189, %v1353
    %v1355 = vand.u32 %v1354, 4294901760
    %v1356 = vsub.f32 %v1354, %v1355
    %v1357 = vand.u32 %v1356, 4294901760
    %1358 = vmatmul.mubr.f32.gmra.mxu0 %v1357
    %v1359 = vpop.f32.mrf.mxu0
    %v1360 = vadd.f32 %v1162, %v1359
    %v1361 = vpop.f32.mrf.mxu0
    %1362 = vmatprep.mubr.f32.mxu0 0.0
    %v1363 = vand.u32 %v1192, 4294901760
    %v1364 = vsub.f32 %v1192, %v1363
    %v1365 = vand.u32 %v1364, 4294901760
    %v1366 = vsub.f32 %v1364, %v1365
    %v1367 = vand.u32 %v1366, 4294901760
    %1368 = vmatmul.mubr.f32.gmra.mxu0 %v1367
    %v1369 = vpop.f32.mrf.mxu0
    %v1370 = vadd.f32 %v1162, %v1369
    %v1371 = vpop.f32.mrf.mxu0
    %1372 = vmatprep.mubr.f32.mxu0 0.0
    %v1373 = vand.u32 %v1195, 4294901760
    %v1374 = vsub.f32 %v1195, %v1373
    %v1375 = vand.u32 %v1374, 4294901760
    %v1376 = vsub.f32 %v1374, %v1375
    %v1377 = vand.u32 %v1376, 4294901760
    %1378 = vmatmul.mubr.f32.gmra.mxu0 %v1377
    %v1379 = vpop.f32.mrf.mxu0
    %v1380 = vadd.f32 %v1162, %v1379
    %v1381 = vpop.f32.mrf.mxu0
    %1382 = vmatprep.mubr.f32.mxu0 0.0
    %v1383 = vand.u32 %v1198, 4294901760
    %v1384 = vsub.f32 %v1198, %v1383
    %v1385 = vand.u32 %v1384, 4294901760
    %v1386 = vsub.f32 %v1384, %v1385
    %v1387 = vand.u32 %v1386, 4294901760
    %1388 = vmatmul.mubr.f32.gmra.mxu0 %v1387
    %v1389 = vpop.f32.mrf.mxu0
    %v1390 = vadd.f32 %v1162, %v1389
    %v1391 = vpop.f32.mrf.mxu0
    %1392 = vdwg.mxu0
    %1393 = vmatprep.subr.mxu0 0.0
    %1394 = vmatpush1.msra.mxu0 0.0
    %1395 = vmatprep.subr.mxu0 0.0
    %1396 = vmatpush1.msra.mxu0 0.0
    %1397 = vmatprep.subr.mxu0 0.0
    %1398 = vmatpush1.msra.mxu0 0.0
    %1399 = vmatprep.subr.mxu0 0.0
    %1400 = vmatpush1.msra.mxu0 0.0
    %1401 = vmatprep.subr.mxu0 0.0
    %1402 = vmatpush1.msra.mxu0 0.0
    %1403 = vmatprep.subr.mxu0 0.0
    %1404 = vmatpush1.msra.mxu0 0.0
    %1405 = vmatprep.subr.mxu0 0.0
    %1406 = vmatpush1.msra.mxu0 0.0
    %1407 = vmatprep.subr.mxu0 0.0
    %1408 = vmatpush1.msra.mxu0 0.0
    %1409 = vmatprep.subr.mxu0 0.0
    %1410 = vmatpush1.msra.mxu0 0.0
    %1411 = vmatprep.subr.mxu0 0.0
    %1412 = vmatpush1.msra.mxu0 0.0
    %1413 = vmatprep.subr.mxu0 0.0
    %1414 = vmatpush1.msra.mxu0 0.0
    %1415 = vmatprep.subr.mxu0 0.0
    %v1416 = vand.u32 %v1201, 4294901760
    %v1417 = vsub.f32 %v1201, %v1416
    %v1418 = vand.u32 %v1417, 4294901760
    %v1419 = vsub.f32 %v1417, %v1418
    %v1420 = vand.u32 %v1419, 4294901760
    %1421 = vmatpush1.msra.mxu0 %v1420
    %1422 = vmatprep.subr.mxu0 0.0
    %v1423 = vand.u32 %v1155, 4294901760
    %v1424 = vsub.f32 %v1155, %v1423
    %v1425 = vand.u32 %v1424, 4294901760
    %v1426 = vsub.f32 %v1424, %v1425
    %v1427 = vand.u32 %v1426, 4294901760
    %1428 = vmatpush1.msra.mxu0 %v1427
    %1429 = vmatprep.subr.mxu0 0.0
    %v1430 = vand.u32 %v1154, 4294901760
    %v1431 = vsub.f32 %v1154, %v1430
    %v1432 = vand.u32 %v1431, 4294901760
    %v1433 = vsub.f32 %v1431, %v1432
    %v1434 = vand.u32 %v1433, 4294901760
    %1435 = vmatpush1.msra.mxu0 %v1434
    %1436 = vmatprep.subr.mxu0 0.0
    %v1437 = vand.u32 %v1153, 4294901760
    %v1438 = vsub.f32 %v1153, %v1437
    %v1439 = vand.u32 %v1438, 4294901760
    %v1440 = vsub.f32 %v1438, %v1439
    %v1441 = vand.u32 %v1440, 4294901760
    %1442 = vmatpush1.msra.mxu0 %v1441
    %1443 = vmatprep.subr.mxu0 0.0
    %v1444 = vand.u32 %v1152, 4294901760
    %v1445 = vsub.f32 %v1152, %v1444
    %v1446 = vand.u32 %v1445, 4294901760
    %v1447 = vsub.f32 %v1445, %v1446
    %v1448 = vand.u32 %v1447, 4294901760
    %1449 = vmatpush1.msra.mxu0 %v1448
    %1450 = vmatprep.subr.mxu0 0.0
    %1451 = vmatpush2.msra.mxu0 0.0
    %1452 = vmatprep.subr.mxu0 0.0
    %1453 = vmatpush2.msra.mxu0 0.0
    %1454 = vmatprep.subr.mxu0 0.0
    %1455 = vmatpush2.msra.mxu0 0.0
    %1456 = vmatprep.subr.mxu0 0.0
    %1457 = vmatpush2.msra.mxu0 0.0
    %1458 = vmatprep.subr.mxu0 0.0
    %1459 = vmatpush2.msra.mxu0 0.0
    %1460 = vmatprep.subr.mxu0 0.0
    %1461 = vmatpush2.msra.mxu0 0.0
    %1462 = vmatprep.subr.mxu0 0.0
    %1463 = vmatpush2.msra.mxu0 0.0
    %1464 = vmatprep.subr.mxu0 0.0
    %1465 = vmatpush2.msra.mxu0 0.0
    %1466 = vmatprep.subr.mxu0 0.0
    %1467 = vmatpush2.msra.mxu0 0.0
    %1468 = vmatprep.subr.mxu0 0.0
    %1469 = vmatpush2.msra.mxu0 0.0
    %1470 = vmatprep.subr.mxu0 0.0
    %1471 = vmatpush2.msra.mxu0 0.0
    %1472 = vmatprep.subr.mxu0 0.0
    %1473 = vmatpush2.msra.mxu0 0.0
    %1474 = vmatprep.subr.mxu0 0.0
    %1475 = vmatpush2.msra.mxu0 0.0
    %1476 = vmatprep.subr.mxu0 0.0
    %1477 = vmatpush2.msra.mxu0 0.0
    %1478 = vmatprep.subr.mxu0 0.0
    %1479 = vmatpush2.msra.mxu0 0.0
    %1480 = vmatprep.subr.mxu0 0.0
    %1481 = vmatpush2.msra.mxu0 0.0
    %1482 = vmatprep.mubr.f32.mxu0 0.0
    %v1483 = vand.u32 %v1165, 4294901760
    %1484 = vmatmul.mubr.f32.gmra.mxu0 %v1483
    %v1485 = vpop.f32.mrf.mxu0
    %v1486 = vadd.f32 %v1280, %v1485
    %v1487 = vpop.f32.mrf.mxu0
    %1488 = vmatprep.mubr.f32.mxu0 0.0
    %v1489 = vand.u32 %v1168, 4294901760
    %1490 = vmatmul.mubr.f32.gmra.mxu0 %v1489
    %v1491 = vpop.f32.mrf.mxu0
    %v1492 = vadd.f32 %v1290, %v1491
    %v1493 = vpop.f32.mrf.mxu0
    %1494 = vmatprep.mubr.f32.mxu0 0.0
    %v1495 = vand.u32 %v1171, 4294901760
    %1496 = vmatmul.mubr.f32.gmra.mxu0 %v1495
    %v1497 = vpop.f32.mrf.mxu0
    %v1498 = vadd.f32 %v1300, %v1497
    %v1499 = vpop.f32.mrf.mxu0
    %1500 = vmatprep.mubr.f32.mxu0 0.0
    %v1501 = vand.u32 %v1174, 4294901760
    %1502 = vmatmul.mubr.f32.gmra.mxu0 %v1501
    %v1503 = vpop.f32.mrf.mxu0
    %v1504 = vadd.f32 %v1310, %v1503
    %v1505 = vpop.f32.mrf.mxu0
    %1506 = vmatprep.mubr.f32.mxu0 0.0
    %v1507 = vand.u32 %v1177, 4294901760
    %1508 = vmatmul.mubr.f32.gmra.mxu0 %v1507
    %v1509 = vpop.f32.mrf.mxu0
    %v1510 = vadd.f32 %v1320, %v1509
    %v1511 = vpop.f32.mrf.mxu0
    %1512 = vmatprep.mubr.f32.mxu0 0.0
    %v1513 = vand.u32 %v1180, 4294901760
    %1514 = vmatmul.mubr.f32.gmra.mxu0 %v1513
    %v1515 = vpop.f32.mrf.mxu0
    %v1516 = vadd.f32 %v1330, %v1515
    %v1517 = vpop.f32.mrf.mxu0
    %1518 = vmatprep.mubr.f32.mxu0 0.0
    %v1519 = vand.u32 %v1183, 4294901760
    %1520 = vmatmul.mubr.f32.gmra.mxu0 %v1519
    %v1521 = vpop.f32.mrf.mxu0
    %v1522 = vadd.f32 %v1340, %v1521
    %v1523 = vpop.f32.mrf.mxu0
    %1524 = vmatprep.mubr.f32.mxu0 0.0
    %v1525 = vand.u32 %v1186, 4294901760
    %1526 = vmatmul.mubr.f32.gmra.mxu0 %v1525
    %v1527 = vpop.f32.mrf.mxu0
    %v1528 = vadd.f32 %v1350, %v1527
    %v1529 = vpop.f32.mrf.mxu0
    %1530 = vmatprep.mubr.f32.mxu0 0.0
    %v1531 = vand.u32 %v1189, 4294901760
    %1532 = vmatmul.mubr.f32.gmra.mxu0 %v1531
    %v1533 = vpop.f32.mrf.mxu0
    %v1534 = vadd.f32 %v1360, %v1533
    %v1535 = vpop.f32.mrf.mxu0
    %1536 = vmatprep.mubr.f32.mxu0 0.0
    %v1537 = vand.u32 %v1192, 4294901760
    %1538 = vmatmul.mubr.f32.gmra.mxu0 %v1537
    %v1539 = vpop.f32.mrf.mxu0
    %v1540 = vadd.f32 %v1370, %v1539
    %v1541 = vpop.f32.mrf.mxu0
    %1542 = vmatprep.mubr.f32.mxu0 0.0
    %v1543 = vand.u32 %v1195, 4294901760
    %1544 = vmatmul.mubr.f32.gmra.mxu0 %v1543
    %v1545 = vpop.f32.mrf.mxu0
    %v1546 = vadd.f32 %v1380, %v1545
    %v1547 = vpop.f32.mrf.mxu0
    %1548 = vmatprep.mubr.f32.mxu0 0.0
    %v1549 = vand.u32 %v1198, 4294901760
    %1550 = vmatmul.mubr.f32.gmra.mxu0 %v1549
    %v1551 = vpop.f32.mrf.mxu0
    %v1552 = vadd.f32 %v1390, %v1551
    %v1553 = vpop.f32.mrf.mxu0
    %1554 = vdwg.mxu0
    %1555 = vmatprep.subr.mxu0 0.0
    %1556 = vmatpush1.msra.mxu0 0.0
    %1557 = vmatprep.subr.mxu0 0.0
    %1558 = vmatpush1.msra.mxu0 0.0
    %1559 = vmatprep.subr.mxu0 0.0
    %1560 = vmatpush1.msra.mxu0 0.0
    %1561 = vmatprep.subr.mxu0 0.0
    %1562 = vmatpush1.msra.mxu0 0.0
    %1563 = vmatprep.subr.mxu0 0.0
    %1564 = vmatpush1.msra.mxu0 0.0
    %1565 = vmatprep.subr.mxu0 0.0
    %1566 = vmatpush1.msra.mxu0 0.0
    %1567 = vmatprep.subr.mxu0 0.0
    %1568 = vmatpush1.msra.mxu0 0.0
    %1569 = vmatprep.subr.mxu0 0.0
    %1570 = vmatpush1.msra.mxu0 0.0
    %1571 = vmatprep.subr.mxu0 0.0
    %1572 = vmatpush1.msra.mxu0 0.0
    %1573 = vmatprep.subr.mxu0 0.0
    %1574 = vmatpush1.msra.mxu0 0.0
    %1575 = vmatprep.subr.mxu0 0.0
    %1576 = vmatpush1.msra.mxu0 0.0
    %1577 = vmatprep.subr.mxu0 0.0
    %v1578 = vand.u32 %v1201, 4294901760
    %v1579 = vsub.f32 %v1201, %v1578
    %1580 = vmatpush1.msra.mxu0 %v1579
    %1581 = vmatprep.subr.mxu0 0.0
    %v1582 = vand.u32 %v1155, 4294901760
    %v1583 = vsub.f32 %v1155, %v1582
    %1584 = vmatpush1.msra.mxu0 %v1583
    %1585 = vmatprep.subr.mxu0 0.0
    %v1586 = vand.u32 %v1154, 4294901760
    %v1587 = vsub.f32 %v1154, %v1586
    %1588 = vmatpush1.msra.mxu0 %v1587
    %1589 = vmatprep.subr.mxu0 0.0
    %v1590 = vand.u32 %v1153, 4294901760
    %v1591 = vsub.f32 %v1153, %v1590
    %1592 = vmatpush1.msra.mxu0 %v1591
    %1593 = vmatprep.subr.mxu0 0.0
    %v1594 = vand.u32 %v1152, 4294901760
    %v1595 = vsub.f32 %v1152, %v1594
    %1596 = vmatpush1.msra.mxu0 %v1595
    %1597 = vmatprep.subr.mxu0 0.0
    %1598 = vmatpush2.msra.mxu0 0.0
    %1599 = vmatprep.subr.mxu0 0.0
    %1600 = vmatpush2.msra.mxu0 0.0
    %1601 = vmatprep.subr.mxu0 0.0
    %1602 = vmatpush2.msra.mxu0 0.0
    %1603 = vmatprep.subr.mxu0 0.0
    %1604 = vmatpush2.msra.mxu0 0.0
    %1605 = vmatprep.subr.mxu0 0.0
    %1606 = vmatpush2.msra.mxu0 0.0
    %1607 = vmatprep.subr.mxu0 0.0
    %1608 = vmatpush2.msra.mxu0 0.0
    %1609 = vmatprep.subr.mxu0 0.0
    %1610 = vmatpush2.msra.mxu0 0.0
    %1611 = vmatprep.subr.mxu0 0.0
    %1612 = vmatpush2.msra.mxu0 0.0
    %1613 = vmatprep.subr.mxu0 0.0
    %1614 = vmatpush2.msra.mxu0 0.0
    %1615 = vmatprep.subr.mxu0 0.0
    %1616 = vmatpush2.msra.mxu0 0.0
    %1617 = vmatprep.subr.mxu0 0.0
    %1618 = vmatpush2.msra.mxu0 0.0
    %1619 = vmatprep.subr.mxu0 0.0
    %1620 = vmatpush2.msra.mxu0 0.0
    %1621 = vmatprep.subr.mxu0 0.0
    %1622 = vmatpush2.msra.mxu0 0.0
    %1623 = vmatprep.subr.mxu0 0.0
    %1624 = vmatpush2.msra.mxu0 0.0
    %1625 = vmatprep.subr.mxu0 0.0
    %1626 = vmatpush2.msra.mxu0 0.0
    %1627 = vmatprep.subr.mxu0 0.0
    %1628 = vmatpush2.msra.mxu0 0.0
    %1629 = vmatprep.mubr.f32.mxu0 0.0
    %v1630 = vand.u32 %v1165, 4294901760
    %v1631 = vsub.f32 %v1165, %v1630
    %1632 = vmatmul.mubr.f32.gmra.mxu0 %v1631
    %v1633 = vpop.f32.mrf.mxu0
    %v1634 = vadd.f32 %v1486, %v1633
    %v1635 = vpop.f32.mrf.mxu0
    %1636 = vmatprep.mubr.f32.mxu0 0.0
    %v1637 = vand.u32 %v1168, 4294901760
    %v1638 = vsub.f32 %v1168, %v1637
    %1639 = vmatmul.mubr.f32.gmra.mxu0 %v1638
    %v1640 = vpop.f32.mrf.mxu0
    %v1641 = vadd.f32 %v1492, %v1640
    %v1642 = vpop.f32.mrf.mxu0
    %1643 = vmatprep.mubr.f32.mxu0 0.0
    %v1644 = vand.u32 %v1171, 4294901760
    %v1645 = vsub.f32 %v1171, %v1644
    %1646 = vmatmul.mubr.f32.gmra.mxu0 %v1645
    %v1647 = vpop.f32.mrf.mxu0
    %v1648 = vadd.f32 %v1498, %v1647
    %v1649 = vpop.f32.mrf.mxu0
    %1650 = vmatprep.mubr.f32.mxu0 0.0
    %v1651 = vand.u32 %v1174, 4294901760
    %v1652 = vsub.f32 %v1174, %v1651
    %1653 = vmatmul.mubr.f32.gmra.mxu0 %v1652
    %v1654 = vpop.f32.mrf.mxu0
    %v1655 = vadd.f32 %v1504, %v1654
    %v1656 = vpop.f32.mrf.mxu0
    %1657 = vmatprep.mubr.f32.mxu0 0.0
    %v1658 = vand.u32 %v1177, 4294901760
    %v1659 = vsub.f32 %v1177, %v1658
    %1660 = vmatmul.mubr.f32.gmra.mxu0 %v1659
    %v1661 = vpop.f32.mrf.mxu0
    %v1662 = vadd.f32 %v1510, %v1661
    %v1663 = vpop.f32.mrf.mxu0
    %1664 = vmatprep.mubr.f32.mxu0 0.0
    %v1665 = vand.u32 %v1180, 4294901760
    %v1666 = vsub.f32 %v1180, %v1665
    %1667 = vmatmul.mubr.f32.gmra.mxu0 %v1666
    %v1668 = vpop.f32.mrf.mxu0
    %v1669 = vadd.f32 %v1516, %v1668
    %v1670 = vpop.f32.mrf.mxu0
    %1671 = vmatprep.mubr.f32.mxu0 0.0
    %v1672 = vand.u32 %v1183, 4294901760
    %v1673 = vsub.f32 %v1183, %v1672
    %1674 = vmatmul.mubr.f32.gmra.mxu0 %v1673
    %v1675 = vpop.f32.mrf.mxu0
    %v1676 = vadd.f32 %v1522, %v1675
    %v1677 = vpop.f32.mrf.mxu0
    %1678 = vmatprep.mubr.f32.mxu0 0.0
    %v1679 = vand.u32 %v1186, 4294901760
    %v1680 = vsub.f32 %v1186, %v1679
    %1681 = vmatmul.mubr.f32.gmra.mxu0 %v1680
    %v1682 = vpop.f32.mrf.mxu0
    %v1683 = vadd.f32 %v1528, %v1682
    %v1684 = vpop.f32.mrf.mxu0
    %1685 = vmatprep.mubr.f32.mxu0 0.0
    %v1686 = vand.u32 %v1189, 4294901760
    %v1687 = vsub.f32 %v1189, %v1686
    %1688 = vmatmul.mubr.f32.gmra.mxu0 %v1687
    %v1689 = vpop.f32.mrf.mxu0
    %v1690 = vadd.f32 %v1534, %v1689
    %v1691 = vpop.f32.mrf.mxu0
    %1692 = vmatprep.mubr.f32.mxu0 0.0
    %v1693 = vand.u32 %v1192, 4294901760
    %v1694 = vsub.f32 %v1192, %v1693
    %1695 = vmatmul.mubr.f32.gmra.mxu0 %v1694
    %v1696 = vpop.f32.mrf.mxu0
    %v1697 = vadd.f32 %v1540, %v1696
    %v1698 = vpop.f32.mrf.mxu0
    %1699 = vmatprep.mubr.f32.mxu0 0.0
    %v1700 = vand.u32 %v1195, 4294901760
    %v1701 = vsub.f32 %v1195, %v1700
    %1702 = vmatmul.mubr.f32.gmra.mxu0 %v1701
    %v1703 = vpop.f32.mrf.mxu0
    %v1704 = vadd.f32 %v1546, %v1703
    %v1705 = vpop.f32.mrf.mxu0
    %1706 = vmatprep.mubr.f32.mxu0 0.0
    %v1707 = vand.u32 %v1198, 4294901760
    %v1708 = vsub.f32 %v1198, %v1707
    %1709 = vmatmul.mubr.f32.gmra.mxu0 %v1708
    %v1710 = vpop.f32.mrf.mxu0
    %v1711 = vadd.f32 %v1552, %v1710
    %v1712 = vpop.f32.mrf.mxu0
    %1713 = vdwg.mxu0
    %1714 = vmatprep.subr.mxu0 0.0
    %1715 = vmatpush1.msra.mxu0 0.0
    %1716 = vmatprep.subr.mxu0 0.0
    %1717 = vmatpush1.msra.mxu0 0.0
    %1718 = vmatprep.subr.mxu0 0.0
    %1719 = vmatpush1.msra.mxu0 0.0
    %1720 = vmatprep.subr.mxu0 0.0
    %1721 = vmatpush1.msra.mxu0 0.0
    %1722 = vmatprep.subr.mxu0 0.0
    %1723 = vmatpush1.msra.mxu0 0.0
    %1724 = vmatprep.subr.mxu0 0.0
    %1725 = vmatpush1.msra.mxu0 0.0
    %1726 = vmatprep.subr.mxu0 0.0
    %1727 = vmatpush1.msra.mxu0 0.0
    %1728 = vmatprep.subr.mxu0 0.0
    %1729 = vmatpush1.msra.mxu0 0.0
    %1730 = vmatprep.subr.mxu0 0.0
    %1731 = vmatpush1.msra.mxu0 0.0
    %1732 = vmatprep.subr.mxu0 0.0
    %1733 = vmatpush1.msra.mxu0 0.0
    %1734 = vmatprep.subr.mxu0 0.0
    %1735 = vmatpush1.msra.mxu0 0.0
    %1736 = vmatprep.subr.mxu0 0.0
    %v1737 = vand.u32 %v1201, 4294901760
    %1738 = vmatpush1.msra.mxu0 %v1737
    %1739 = vmatprep.subr.mxu0 0.0
    %v1740 = vand.u32 %v1155, 4294901760
    %1741 = vmatpush1.msra.mxu0 %v1740
    %1742 = vmatprep.subr.mxu0 0.0
    %v1743 = vand.u32 %v1154, 4294901760
    %1744 = vmatpush1.msra.mxu0 %v1743
    %1745 = vmatprep.subr.mxu0 0.0
    %v1746 = vand.u32 %v1153, 4294901760
    %1747 = vmatpush1.msra.mxu0 %v1746
    %1748 = vmatprep.subr.mxu0 0.0
    %v1749 = vand.u32 %v1152, 4294901760
    %1750 = vmatpush1.msra.mxu0 %v1749
    %1751 = vmatprep.subr.mxu0 0.0
    %1752 = vmatpush2.msra.mxu0 0.0
    %1753 = vmatprep.subr.mxu0 0.0
    %1754 = vmatpush2.msra.mxu0 0.0
    %1755 = vmatprep.subr.mxu0 0.0
    %1756 = vmatpush2.msra.mxu0 0.0
    %1757 = vmatprep.subr.mxu0 0.0
    %1758 = vmatpush2.msra.mxu0 0.0
    %1759 = vmatprep.subr.mxu0 0.0
    %1760 = vmatpush2.msra.mxu0 0.0
    %1761 = vmatprep.subr.mxu0 0.0
    %1762 = vmatpush2.msra.mxu0 0.0
    %1763 = vmatprep.subr.mxu0 0.0
    %1764 = vmatpush2.msra.mxu0 0.0
    %1765 = vmatprep.subr.mxu0 0.0
    %1766 = vmatpush2.msra.mxu0 0.0
    %1767 = vmatprep.subr.mxu0 0.0
    %1768 = vmatpush2.msra.mxu0 0.0
    %1769 = vmatprep.subr.mxu0 0.0
    %1770 = vmatpush2.msra.mxu0 0.0
    %1771 = vmatprep.subr.mxu0 0.0
    %1772 = vmatpush2.msra.mxu0 0.0
    %1773 = vmatprep.subr.mxu0 0.0
    %1774 = vmatpush2.msra.mxu0 0.0
    %1775 = vmatprep.subr.mxu0 0.0
    %1776 = vmatpush2.msra.mxu0 0.0
    %1777 = vmatprep.subr.mxu0 0.0
    %1778 = vmatpush2.msra.mxu0 0.0
    %1779 = vmatprep.subr.mxu0 0.0
    %1780 = vmatpush2.msra.mxu0 0.0
    %1781 = vmatprep.subr.mxu0 0.0
    %1782 = vmatpush2.msra.mxu0 0.0
    %1783 = vmatprep.mubr.f32.mxu0 0.0
    %v1784 = vand.u32 %v1165, 4294901760
    %v1785 = vsub.f32 %v1165, %v1784
    %v1786 = vand.u32 %v1785, 4294901760
    %1787 = vmatmul.mubr.f32.gmra.mxu0 %v1786
    %v1788 = vpop.f32.mrf.mxu0
    %v1789 = vadd.f32 %v1634, %v1788
    %v1790 = vpop.f32.mrf.mxu0
    %1791 = vmatprep.mubr.f32.mxu0 0.0
    %v1792 = vand.u32 %v1168, 4294901760
    %v1793 = vsub.f32 %v1168, %v1792
    %v1794 = vand.u32 %v1793, 4294901760
    %1795 = vmatmul.mubr.f32.gmra.mxu0 %v1794
    %v1796 = vpop.f32.mrf.mxu0
    %v1797 = vadd.f32 %v1641, %v1796
    %v1798 = vpop.f32.mrf.mxu0
    %1799 = vmatprep.mubr.f32.mxu0 0.0
    %v1800 = vand.u32 %v1171, 4294901760
    %v1801 = vsub.f32 %v1171, %v1800
    %v1802 = vand.u32 %v1801, 4294901760
    %1803 = vmatmul.mubr.f32.gmra.mxu0 %v1802
    %v1804 = vpop.f32.mrf.mxu0
    %v1805 = vadd.f32 %v1648, %v1804
    %v1806 = vpop.f32.mrf.mxu0
    %1807 = vmatprep.mubr.f32.mxu0 0.0
    %v1808 = vand.u32 %v1174, 4294901760
    %v1809 = vsub.f32 %v1174, %v1808
    %v1810 = vand.u32 %v1809, 4294901760
    %1811 = vmatmul.mubr.f32.gmra.mxu0 %v1810
    %v1812 = vpop.f32.mrf.mxu0
    %v1813 = vadd.f32 %v1655, %v1812
    %v1814 = vpop.f32.mrf.mxu0
    %1815 = vmatprep.mubr.f32.mxu0 0.0
    %v1816 = vand.u32 %v1177, 4294901760
    %v1817 = vsub.f32 %v1177, %v1816
    %v1818 = vand.u32 %v1817, 4294901760
    %1819 = vmatmul.mubr.f32.gmra.mxu0 %v1818
    %v1820 = vpop.f32.mrf.mxu0
    %v1821 = vadd.f32 %v1662, %v1820
    %v1822 = vpop.f32.mrf.mxu0
    %1823 = vmatprep.mubr.f32.mxu0 0.0
    %v1824 = vand.u32 %v1180, 4294901760
    %v1825 = vsub.f32 %v1180, %v1824
    %v1826 = vand.u32 %v1825, 4294901760
    %1827 = vmatmul.mubr.f32.gmra.mxu0 %v1826
    %v1828 = vpop.f32.mrf.mxu0
    %v1829 = vadd.f32 %v1669, %v1828
    %v1830 = vpop.f32.mrf.mxu0
    %1831 = vmatprep.mubr.f32.mxu0 0.0
    %v1832 = vand.u32 %v1183, 4294901760
    %v1833 = vsub.f32 %v1183, %v1832
    %v1834 = vand.u32 %v1833, 4294901760
    %1835 = vmatmul.mubr.f32.gmra.mxu0 %v1834
    %v1836 = vpop.f32.mrf.mxu0
    %v1837 = vadd.f32 %v1676, %v1836
    %v1838 = vpop.f32.mrf.mxu0
    %1839 = vmatprep.mubr.f32.mxu0 0.0
    %v1840 = vand.u32 %v1186, 4294901760
    %v1841 = vsub.f32 %v1186, %v1840
    %v1842 = vand.u32 %v1841, 4294901760
    %1843 = vmatmul.mubr.f32.gmra.mxu0 %v1842
    %v1844 = vpop.f32.mrf.mxu0
    %v1845 = vadd.f32 %v1683, %v1844
    %v1846 = vpop.f32.mrf.mxu0
    %1847 = vmatprep.mubr.f32.mxu0 0.0
    %v1848 = vand.u32 %v1189, 4294901760
    %v1849 = vsub.f32 %v1189, %v1848
    %v1850 = vand.u32 %v1849, 4294901760
    %1851 = vmatmul.mubr.f32.gmra.mxu0 %v1850
    %v1852 = vpop.f32.mrf.mxu0
    %v1853 = vadd.f32 %v1690, %v1852
    %v1854 = vpop.f32.mrf.mxu0
    %1855 = vmatprep.mubr.f32.mxu0 0.0
    %v1856 = vand.u32 %v1192, 4294901760
    %v1857 = vsub.f32 %v1192, %v1856
    %v1858 = vand.u32 %v1857, 4294901760
    %1859 = vmatmul.mubr.f32.gmra.mxu0 %v1858
    %v1860 = vpop.f32.mrf.mxu0
    %v1861 = vadd.f32 %v1697, %v1860
    %v1862 = vpop.f32.mrf.mxu0
    %1863 = vmatprep.mubr.f32.mxu0 0.0
    %v1864 = vand.u32 %v1195, 4294901760
    %v1865 = vsub.f32 %v1195, %v1864
    %v1866 = vand.u32 %v1865, 4294901760
    %1867 = vmatmul.mubr.f32.gmra.mxu0 %v1866
    %v1868 = vpop.f32.mrf.mxu0
    %v1869 = vadd.f32 %v1704, %v1868
    %v1870 = vpop.f32.mrf.mxu0
    %1871 = vmatprep.mubr.f32.mxu0 0.0
    %v1872 = vand.u32 %v1198, 4294901760
    %v1873 = vsub.f32 %v1198, %v1872
    %v1874 = vand.u32 %v1873, 4294901760
    %1875 = vmatmul.mubr.f32.gmra.mxu0 %v1874
    %v1876 = vpop.f32.mrf.mxu0
    %v1877 = vadd.f32 %v1711, %v1876
    %v1878 = vpop.f32.mrf.mxu0
    %1879 = vdwg.mxu0
    %1880 = vmatprep.subr.mxu0 0.0
    %1881 = vmatpush1.msra.mxu0 0.0
    %1882 = vmatprep.subr.mxu0 0.0
    %1883 = vmatpush1.msra.mxu0 0.0
    %1884 = vmatprep.subr.mxu0 0.0
    %1885 = vmatpush1.msra.mxu0 0.0
    %1886 = vmatprep.subr.mxu0 0.0
    %1887 = vmatpush1.msra.mxu0 0.0
    %1888 = vmatprep.subr.mxu0 0.0
    %1889 = vmatpush1.msra.mxu0 0.0
    %1890 = vmatprep.subr.mxu0 0.0
    %1891 = vmatpush1.msra.mxu0 0.0
    %1892 = vmatprep.subr.mxu0 0.0
    %1893 = vmatpush1.msra.mxu0 0.0
    %1894 = vmatprep.subr.mxu0 0.0
    %1895 = vmatpush1.msra.mxu0 0.0
    %1896 = vmatprep.subr.mxu0 0.0
    %1897 = vmatpush1.msra.mxu0 0.0
    %1898 = vmatprep.subr.mxu0 0.0
    %1899 = vmatpush1.msra.mxu0 0.0
    %1900 = vmatprep.subr.mxu0 0.0
    %1901 = vmatpush1.msra.mxu0 0.0
    %1902 = vmatprep.subr.mxu0 0.0
    %v1903 = vand.u32 %v1201, 4294901760
    %v1904 = vsub.f32 %v1201, %v1903
    %v1905 = vand.u32 %v1904, 4294901760
    %1906 = vmatpush1.msra.mxu0 %v1905
    %1907 = vmatprep.subr.mxu0 0.0
    %v1908 = vand.u32 %v1155, 4294901760
    %v1909 = vsub.f32 %v1155, %v1908
    %v1910 = vand.u32 %v1909, 4294901760
    %1911 = vmatpush1.msra.mxu0 %v1910
    %1912 = vmatprep.subr.mxu0 0.0
    %v1913 = vand.u32 %v1154, 4294901760
    %v1914 = vsub.f32 %v1154, %v1913
    %v1915 = vand.u32 %v1914, 4294901760
    %1916 = vmatpush1.msra.mxu0 %v1915
    %1917 = vmatprep.subr.mxu0 0.0
    %v1918 = vand.u32 %v1153, 4294901760
    %v1919 = vsub.f32 %v1153, %v1918
    %v1920 = vand.u32 %v1919, 4294901760
    %1921 = vmatpush1.msra.mxu0 %v1920
    %1922 = vmatprep.subr.mxu0 0.0
    %v1923 = vand.u32 %v1152, 4294901760
    %v1924 = vsub.f32 %v1152, %v1923
    %v1925 = vand.u32 %v1924, 4294901760
    %1926 = vmatpush1.msra.mxu0 %v1925
    %1927 = vmatprep.subr.mxu0 0.0
    %1928 = vmatpush2.msra.mxu0 0.0
    %1929 = vmatprep.subr.mxu0 0.0
    %1930 = vmatpush2.msra.mxu0 0.0
    %1931 = vmatprep.subr.mxu0 0.0
    %1932 = vmatpush2.msra.mxu0 0.0
    %1933 = vmatprep.subr.mxu0 0.0
    %1934 = vmatpush2.msra.mxu0 0.0
    %1935 = vmatprep.subr.mxu0 0.0
    %1936 = vmatpush2.msra.mxu0 0.0
    %1937 = vmatprep.subr.mxu0 0.0
    %1938 = vmatpush2.msra.mxu0 0.0
    %1939 = vmatprep.subr.mxu0 0.0
    %1940 = vmatpush2.msra.mxu0 0.0
    %1941 = vmatprep.subr.mxu0 0.0
    %1942 = vmatpush2.msra.mxu0 0.0
    %1943 = vmatprep.subr.mxu0 0.0
    %1944 = vmatpush2.msra.mxu0 0.0
    %1945 = vmatprep.subr.mxu0 0.0
    %1946 = vmatpush2.msra.mxu0 0.0
    %1947 = vmatprep.subr.mxu0 0.0
    %1948 = vmatpush2.msra.mxu0 0.0
    %1949 = vmatprep.subr.mxu0 0.0
    %1950 = vmatpush2.msra.mxu0 0.0
    %1951 = vmatprep.subr.mxu0 0.0
    %1952 = vmatpush2.msra.mxu0 0.0
    %1953 = vmatprep.subr.mxu0 0.0
    %1954 = vmatpush2.msra.mxu0 0.0
    %1955 = vmatprep.subr.mxu0 0.0
    %1956 = vmatpush2.msra.mxu0 0.0
    %1957 = vmatprep.subr.mxu0 0.0
    %1958 = vmatpush2.msra.mxu0 0.0
    %1959 = vmatprep.mubr.f32.mxu0 0.0
    %v1960 = vand.u32 %v1165, 4294901760
    %1961 = vmatmul.mubr.f32.gmra.mxu0 %v1960
    %v1962 = vpop.f32.mrf.mxu0
    %v1963 = vadd.f32 %v1789, %v1962
    %v1964 = vpop.f32.mrf.mxu0
    %1965 = vmatprep.mubr.f32.mxu0 0.0
    %v1966 = vand.u32 %v1168, 4294901760
    %1967 = vmatmul.mubr.f32.gmra.mxu0 %v1966
    %v1968 = vpop.f32.mrf.mxu0
    %v1969 = vadd.f32 %v1797, %v1968
    %v1970 = vpop.f32.mrf.mxu0
    %1971 = vmatprep.mubr.f32.mxu0 0.0
    %v1972 = vand.u32 %v1171, 4294901760
    %1973 = vmatmul.mubr.f32.gmra.mxu0 %v1972
    %v1974 = vpop.f32.mrf.mxu0
    %v1975 = vadd.f32 %v1805, %v1974
    %v1976 = vpop.f32.mrf.mxu0
    %1977 = vmatprep.mubr.f32.mxu0 0.0
    %v1978 = vand.u32 %v1174, 4294901760
    %1979 = vmatmul.mubr.f32.gmra.mxu0 %v1978
    %v1980 = vpop.f32.mrf.mxu0
    %v1981 = vadd.f32 %v1813, %v1980
    %v1982 = vpop.f32.mrf.mxu0
    %1983 = vmatprep.mubr.f32.mxu0 0.0
    %v1984 = vand.u32 %v1177, 4294901760
    %1985 = vmatmul.mubr.f32.gmra.mxu0 %v1984
    %v1986 = vpop.f32.mrf.mxu0
    %v1987 = vadd.f32 %v1821, %v1986
    %v1988 = vpop.f32.mrf.mxu0
    %1989 = vmatprep.mubr.f32.mxu0 0.0
    %v1990 = vand.u32 %v1180, 4294901760
    %1991 = vmatmul.mubr.f32.gmra.mxu0 %v1990
    %v1992 = vpop.f32.mrf.mxu0
    %v1993 = vadd.f32 %v1829, %v1992
    %v1994 = vpop.f32.mrf.mxu0
    %1995 = vmatprep.mubr.f32.mxu0 0.0
    %v1996 = vand.u32 %v1183, 4294901760
    %1997 = vmatmul.mubr.f32.gmra.mxu0 %v1996
    %v1998 = vpop.f32.mrf.mxu0
    %v1999 = vadd.f32 %v1837, %v1998
    %v2000 = vpop.f32.mrf.mxu0
    %2001 = vmatprep.mubr.f32.mxu0 0.0
    %v2002 = vand.u32 %v1186, 4294901760
    %2003 = vmatmul.mubr.f32.gmra.mxu0 %v2002
    %v2004 = vpop.f32.mrf.mxu0
    %v2005 = vadd.f32 %v1845, %v2004
    %v2006 = vpop.f32.mrf.mxu0
    %2007 = vmatprep.mubr.f32.mxu0 0.0
    %v2008 = vand.u32 %v1189, 4294901760
    %2009 = vmatmul.mubr.f32.gmra.mxu0 %v2008
    %v2010 = vpop.f32.mrf.mxu0
    %v2011 = vadd.f32 %v1853, %v2010
    %v2012 = vpop.f32.mrf.mxu0
    %2013 = vmatprep.mubr.f32.mxu0 0.0
    %v2014 = vand.u32 %v1192, 4294901760
    %2015 = vmatmul.mubr.f32.gmra.mxu0 %v2014
    %v2016 = vpop.f32.mrf.mxu0
    %v2017 = vadd.f32 %v1861, %v2016
    %v2018 = vpop.f32.mrf.mxu0
    %2019 = vmatprep.mubr.f32.mxu0 0.0
    %v2020 = vand.u32 %v1195, 4294901760
    %2021 = vmatmul.mubr.f32.gmra.mxu0 %v2020
    %v2022 = vpop.f32.mrf.mxu0
    %v2023 = vadd.f32 %v1869, %v2022
    %v2024 = vpop.f32.mrf.mxu0
    %2025 = vmatprep.mubr.f32.mxu0 0.0
    %v2026 = vand.u32 %v1198, 4294901760
    %2027 = vmatmul.mubr.f32.gmra.mxu0 %v2026
    %v2028 = vpop.f32.mrf.mxu0
    %v2029 = vadd.f32 %v1877, %v2028
    %v2030 = vpop.f32.mrf.mxu0
    %2031 = vdwg.mxu0
    %2032 = vmatprep.subr.mxu0 0.0
    %2033 = vmatpush1.msra.mxu0 0.0
    %2034 = vmatprep.subr.mxu0 0.0
    %2035 = vmatpush1.msra.mxu0 0.0
    %2036 = vmatprep.subr.mxu0 0.0
    %2037 = vmatpush1.msra.mxu0 0.0
    %2038 = vmatprep.subr.mxu0 0.0
    %2039 = vmatpush1.msra.mxu0 0.0
    %2040 = vmatprep.subr.mxu0 0.0
    %2041 = vmatpush1.msra.mxu0 0.0
    %2042 = vmatprep.subr.mxu0 0.0
    %2043 = vmatpush1.msra.mxu0 0.0
    %2044 = vmatprep.subr.mxu0 0.0
    %2045 = vmatpush1.msra.mxu0 0.0
    %2046 = vmatprep.subr.mxu0 0.0
    %2047 = vmatpush1.msra.mxu0 0.0
    %2048 = vmatprep.subr.mxu0 0.0
    %2049 = vmatpush1.msra.mxu0 0.0
    %2050 = vmatprep.subr.mxu0 0.0
    %2051 = vmatpush1.msra.mxu0 0.0
    %2052 = vmatprep.subr.mxu0 0.0
    %2053 = vmatpush1.msra.mxu0 0.0
    %2054 = vmatprep.subr.mxu0 0.0
    %v2055 = vand.u32 %v1201, 4294901760
    %2056 = vmatpush1.msra.mxu0 %v2055
    %2057 = vmatprep.subr.mxu0 0.0
    %v2058 = vand.u32 %v1155, 4294901760
    %2059 = vmatpush1.msra.mxu0 %v2058
    %2060 = vmatprep.subr.mxu0 0.0
    %v2061 = vand.u32 %v1154, 4294901760
    %2062 = vmatpush1.msra.mxu0 %v2061
    %2063 = vmatprep.subr.mxu0 0.0
    %v2064 = vand.u32 %v1153, 4294901760
    %2065 = vmatpush1.msra.mxu0 %v2064
    %2066 = vmatprep.subr.mxu0 0.0
    %v2067 = vand.u32 %v1152, 4294901760
    %2068 = vmatpush1.msra.mxu0 %v2067
    %2069 = vmatprep.subr.mxu0 0.0
    %2070 = vmatpush2.msra.mxu0 0.0
    %2071 = vmatprep.subr.mxu0 0.0
    %2072 = vmatpush2.msra.mxu0 0.0
    %2073 = vmatprep.subr.mxu0 0.0
    %2074 = vmatpush2.msra.mxu0 0.0
    %2075 = vmatprep.subr.mxu0 0.0
    %2076 = vmatpush2.msra.mxu0 0.0
    %2077 = vmatprep.subr.mxu0 0.0
    %2078 = vmatpush2.msra.mxu0 0.0
    %2079 = vmatprep.subr.mxu0 0.0
    %2080 = vmatpush2.msra.mxu0 0.0
    %2081 = vmatprep.subr.mxu0 0.0
    %2082 = vmatpush2.msra.mxu0 0.0
    %2083 = vmatprep.subr.mxu0 0.0
    %2084 = vmatpush2.msra.mxu0 0.0
    %2085 = vmatprep.subr.mxu0 0.0
    %2086 = vmatpush2.msra.mxu0 0.0
    %2087 = vmatprep.subr.mxu0 0.0
    %2088 = vmatpush2.msra.mxu0 0.0
    %2089 = vmatprep.subr.mxu0 0.0
    %2090 = vmatpush2.msra.mxu0 0.0
    %2091 = vmatprep.subr.mxu0 0.0
    %2092 = vmatpush2.msra.mxu0 0.0
    %2093 = vmatprep.subr.mxu0 0.0
    %2094 = vmatpush2.msra.mxu0 0.0
    %2095 = vmatprep.subr.mxu0 0.0
    %2096 = vmatpush2.msra.mxu0 0.0
    %2097 = vmatprep.subr.mxu0 0.0
    %2098 = vmatpush2.msra.mxu0 0.0
    %2099 = vmatprep.subr.mxu0 0.0
    %2100 = vmatpush2.msra.mxu0 0.0
    %2101 = vmatprep.mubr.f32.mxu0 0.0
    %v2102 = vand.u32 %v1165, 4294901760
    %2103 = vmatmul.mubr.f32.gmra.mxu0 %v2102
    %v2104 = vpop.f32.mrf.mxu0
    %v2105 = vadd.f32 %v1963, %v2104
    %v2106 = vpop.f32.mrf.mxu0
    %2107 = vmatprep.mubr.f32.mxu0 0.0
    %v2108 = vand.u32 %v1168, 4294901760
    %2109 = vmatmul.mubr.f32.gmra.mxu0 %v2108
    %v2110 = vpop.f32.mrf.mxu0
    %v2111 = vadd.f32 %v1969, %v2110
    %v2112 = vpop.f32.mrf.mxu0
    %2113 = vmatprep.mubr.f32.mxu0 0.0
    %v2114 = vand.u32 %v1171, 4294901760
    %2115 = vmatmul.mubr.f32.gmra.mxu0 %v2114
    %v2116 = vpop.f32.mrf.mxu0
    %v2117 = vadd.f32 %v1975, %v2116
    %v2118 = vpop.f32.mrf.mxu0
    %2119 = vmatprep.mubr.f32.mxu0 0.0
    %v2120 = vand.u32 %v1174, 4294901760
    %2121 = vmatmul.mubr.f32.gmra.mxu0 %v2120
    %v2122 = vpop.f32.mrf.mxu0
    %v2123 = vadd.f32 %v1981, %v2122
    %v2124 = vpop.f32.mrf.mxu0
    %2125 = vmatprep.mubr.f32.mxu0 0.0
    %v2126 = vand.u32 %v1177, 4294901760
    %2127 = vmatmul.mubr.f32.gmra.mxu0 %v2126
    %v2128 = vpop.f32.mrf.mxu0
    %v2129 = vadd.f32 %v1987, %v2128
    %v2130 = vpop.f32.mrf.mxu0
    %2131 = vmatprep.mubr.f32.mxu0 0.0
    %v2132 = vand.u32 %v1180, 4294901760
    %2133 = vmatmul.mubr.f32.gmra.mxu0 %v2132
    %v2134 = vpop.f32.mrf.mxu0
    %v2135 = vadd.f32 %v1993, %v2134
    %v2136 = vpop.f32.mrf.mxu0
    %2137 = vmatprep.mubr.f32.mxu0 0.0
    %v2138 = vand.u32 %v1183, 4294901760
    %2139 = vmatmul.mubr.f32.gmra.mxu0 %v2138
    %v2140 = vpop.f32.mrf.mxu0
    %v2141 = vadd.f32 %v1999, %v2140
    %v2142 = vpop.f32.mrf.mxu0
    %2143 = vmatprep.mubr.f32.mxu0 0.0
    %v2144 = vand.u32 %v1186, 4294901760
    %2145 = vmatmul.mubr.f32.gmra.mxu0 %v2144
    %v2146 = vpop.f32.mrf.mxu0
    %v2147 = vadd.f32 %v2005, %v2146
    %v2148 = vpop.f32.mrf.mxu0
    %2149 = vmatprep.mubr.f32.mxu0 0.0
    %v2150 = vand.u32 %v1189, 4294901760
    %2151 = vmatmul.mubr.f32.gmra.mxu0 %v2150
    %v2152 = vpop.f32.mrf.mxu0
    %v2153 = vadd.f32 %v2011, %v2152
    %v2154 = vpop.f32.mrf.mxu0
    %2155 = vmatprep.mubr.f32.mxu0 0.0
    %v2156 = vand.u32 %v1192, 4294901760
    %2157 = vmatmul.mubr.f32.gmra.mxu0 %v2156
    %v2158 = vpop.f32.mrf.mxu0
    %v2159 = vadd.f32 %v2017, %v2158
    %v2160 = vpop.f32.mrf.mxu0
    %2161 = vmatprep.mubr.f32.mxu0 0.0
    %v2162 = vand.u32 %v1195, 4294901760
    %2163 = vmatmul.mubr.f32.gmra.mxu0 %v2162
    %v2164 = vpop.f32.mrf.mxu0
    %v2165 = vadd.f32 %v2023, %v2164
    %v2166 = vpop.f32.mrf.mxu0
    %2167 = vmatprep.mubr.f32.mxu0 0.0
    %v2168 = vand.u32 %v1198, 4294901760
    %2169 = vmatmul.mubr.f32.gmra.mxu0 %v2168
    %v2170 = vpop.f32.mrf.mxu0
    %v2171 = vadd.f32 %v2029, %v2170
    %v2172 = vpop.f32.mrf.mxu0
    %2173 = vdwg.mxu0
    %vm2174 = vcmp.ge.f32.partialorder %v2105, 0.0
    %vm2175 = vcmp.ge.f32.partialorder %v2111, 0.0
    %vm2176 = vcmp.ge.f32.partialorder %v2117, 0.0
    %vm2177 = vcmp.ge.f32.partialorder %v2123, 0.0
    %vm2178 = vcmp.ge.f32.partialorder %v2129, 0.0
    %vm2179 = vcmp.ge.f32.partialorder %v2135, 0.0
    %vm2180 = vcmp.ge.f32.partialorder %v2141, 0.0
    %vm2181 = vcmp.ge.f32.partialorder %v2147, 0.0
    %vm2182 = vcmp.ge.f32.partialorder %v2153, 0.0
    %vm2183 = vcmp.ge.f32.partialorder %v2159, 0.0
    %vm2184 = vcmp.ge.f32.partialorder %v2165, 0.0
    %vm2185 = vcmp.ge.f32.partialorder %v2171, 0.0
    %v2186 = vmul.f32 %v2105, 0.01
    %v2187 = vmul.f32 %v2111, 0.01
    %v2188 = vmul.f32 %v2117, 0.01
    %v2189 = vmul.f32 %v2123, 0.01
    %v2190 = vmul.f32 %v2129, 0.01
    %v2191 = vmul.f32 %v2135, 0.01
    %v2192 = vmul.f32 %v2141, 0.01
    %v2193 = vmul.f32 %v2147, 0.01
    %v2194 = vmul.f32 %v2153, 0.01
    %v2195 = vmul.f32 %v2159, 0.01
    %v2196 = vmul.f32 %v2165, 0.01
    %v2197 = vmul.f32 %v2171, 0.01
    %v2198 = vsel %vm2174, %v2105, %v2186
    %v2199 = vsel %vm2175, %v2111, %v2187
    %v2200 = vsel %vm2176, %v2117, %v2188
    %v2201 = vsel %vm2177, %v2123, %v2189
    %v2202 = vsel %vm2178, %v2129, %v2190
    %v2203 = vsel %vm2179, %v2135, %v2191
    %v2204 = vsel %vm2180, %v2141, %v2192
    %v2205 = vsel %vm2181, %v2147, %v2193
    %v2206 = vsel %vm2182, %v2153, %v2194
    %v2207 = vsel %vm2183, %v2159, %v2195
    %v2208 = vsel %vm2184, %v2165, %v2196
    %v2209 = vsel %vm2185, %v2171, %v2197
    %2211 = vset.pattern.permute.xlu0 0
    %2212 = vperm.xlu0 %2211, %v60
    %v2213 = vpop.permute.xlu0 %2212
    %2216 = vset.pattern.permute.xlu0 0
    %2217 = vperm.xlu0 %2216, %v61
    %v2218 = vpop.permute.xlu0 %2217
    %2221 = vset.pattern.permute.xlu0 0
    %2222 = vperm.xlu0 %2221, %v62
    %v2223 = vpop.permute.xlu0 %2222
    %2226 = vset.pattern.permute.xlu0 0
    %2227 = vperm.xlu0 %2226, %v63
    %v2228 = vpop.permute.xlu0 %2227
    %v2230 = vmul.f32 %v2198, %v2213
    %v2231 = vmul.f32 %v2199, %v2218
    %v2232 = vmul.f32 %v2200, %v2223
    %v2233 = vmul.f32 %v2201, %v2228
    %2235 = vset.pattern.permute.xlu0 0
    %2236 = vperm.xlu0 %2235, %v65
    %v2237 = vpop.permute.xlu0 %2236
    %2240 = vset.pattern.permute.xlu0 0
    %2241 = vperm.xlu0 %2240, %v66
    %v2242 = vpop.permute.xlu0 %2241
    %2245 = vset.pattern.permute.xlu0 0
    %2246 = vperm.xlu0 %2245, %v67
    %v2247 = vpop.permute.xlu0 %2246
    %2250 = vset.pattern.permute.xlu0 0
    %2251 = vperm.xlu0 %2250, %v68
    %v2252 = vpop.permute.xlu0 %2251
    %v2254 = vmul.f32 %v2202, %v2237
    %v2255 = vmul.f32 %v2203, %v2242
    %v2256 = vmul.f32 %v2204, %v2247
    %v2257 = vmul.f32 %v2205, %v2252
    %v2258 = vadd.f32 %v2230, %v2254
    %v2259 = vadd.f32 %v2231, %v2255
    %v2260 = vadd.f32 %v2232, %v2256
    %v2261 = vadd.f32 %v2233, %v2257
    %2263 = vset.pattern.permute.xlu0 0
    %2264 = vperm.xlu0 %2263, %v70
    %v2265 = vpop.permute.xlu0 %2264
    %2268 = vset.pattern.permute.xlu0 0
    %2269 = vperm.xlu0 %2268, %v71
    %v2270 = vpop.permute.xlu0 %2269
    %2273 = vset.pattern.permute.xlu0 0
    %2274 = vperm.xlu0 %2273, %v72
    %v2275 = vpop.permute.xlu0 %2274
    %2278 = vset.pattern.permute.xlu0 0
    %2279 = vperm.xlu0 %2278, %v73
    %v2280 = vpop.permute.xlu0 %2279
    %v2282 = vmul.f32 %v2206, %v2265
    %v2283 = vmul.f32 %v2207, %v2270
    %v2284 = vmul.f32 %v2208, %v2275
    %v2285 = vmul.f32 %v2209, %v2280
    %v2286 = vadd.f32 %v2258, %v2282
    %v2287 = vadd.f32 %v2259, %v2283
    %v2288 = vadd.f32 %v2260, %v2284
    %v2289 = vadd.f32 %v2261, %v2285
    %2291 = vset.pattern.permute.xlu0 0
    %2292 = vperm.xlu0 %2291, %v74
    %v2293 = vpop.permute.xlu0 %2292
    %2296 = vset.pattern.permute.xlu0 0
    %2297 = vperm.xlu0 %2296, %v75
    %v2298 = vpop.permute.xlu0 %2297
    %2301 = vset.pattern.permute.xlu0 0
    %2302 = vperm.xlu0 %2301, %v76
    %v2303 = vpop.permute.xlu0 %2302
    %2306 = vset.pattern.permute.xlu0 0
    %2307 = vperm.xlu0 %2306, %v77
    %v2308 = vpop.permute.xlu0 %2307
    %v2310 = vmul.f32 %v2286, %v2293
    %v2311 = vmul.f32 %v2287, %v2298
    %v2312 = vmul.f32 %v2288, %v2303
    %v2313 = vmul.f32 %v2289, %v2308
    %v2314 = vld [vmem:[%s4] sm:$0xff]
    %v2315 = vld [vmem:[%s4 + $0x8] sm:$0xff]
    %v2316 = vld [vmem:[%s4 + $0x10] sm:$0xff]
    %v2317 = vld [vmem:[%s4 + $0x18] sm:$0xff]
    %s2318 = scalar_lea.vmem %s4, 32
    %v2319 = vld [vmem:[%s2318] sm:$0xff]
    %v2320 = vld [vmem:[%s2318 + $0x8] sm:$0xff]
    %v2321 = vld [vmem:[%s2318 + $0x10] sm:$0xff]
    %v2322 = vld [vmem:[%s2318 + $0x18] sm:$0xff]
    %s2323 = scalar_lea.vmem %s4, 64
    %v2324 = vld [vmem:[%s2323] sm:$0xff]
    %v2325 = vld [vmem:[%s2323 + $0x8] sm:$0xff]
    %v2326 = vld [vmem:[%s2323 + $0x10] sm:$0xff]
    %v2327 = vld [vmem:[%s2323 + $0x18] sm:$0xff]
    %v2328 = vld [vmem:[%s12] sm:$0xff]
    %v2329 = vld [vmem:[%s12 + $0x8] sm:$0xff]
    %v2330 = vld [vmem:[%s12 + $0x10] sm:$0xff]
    %v2331 = vld [vmem:[%s12 + $0x18] sm:$0xff]
    %v2332 = vld [vmem:[%s12 + $0x20] sm:$0xff]
    %v2333 = vld [vmem:[%s12 + $0x28] sm:$0xff]
    %v2334 = vld [vmem:[%s12 + $0x30] sm:$0x3]
    %v2335 = vld [vmem:[%s13] sm:$0x1]
    %v2337 = vlaneseq
    %v2338 = vshrl.u32 %v2337, 7
    %v2339 = vsub.s32 0, %v2338
    %v2340 = vrot.slane %v2335, %v2339
    %vm2342 = vcmask 408576
    %v2344 = vsel %vm2342, %v2314, 0
    %v2347 = vsel %vm2342, %v2315, 0
    %v2350 = vsel %vm2342, %v2316, 0
    %v2353 = vsel %vm2342, %v2317, 0
    %v2356 = vsel %vm2342, %v2319, 0
    %v2359 = vsel %vm2342, %v2320, 0
    %v2362 = vsel %vm2342, %v2321, 0
    %v2365 = vsel %vm2342, %v2322, 0
    %v2368 = vsel %vm2342, %v2324, 0
    %v2371 = vsel %vm2342, %v2325, 0
    %v2374 = vsel %vm2342, %v2326, 0
    %v2377 = vsel %vm2342, %v2327, 0
    %vm2379 = vcmask 1041408
    %v2381 = vsel %vm2379, %v2334, 0
    %2383 = vmatprep.subr.mxu0 0.0
    %2384 = vmatpush1.msra.mxu0 0.0
    %2385 = vmatprep.subr.mxu0 0.0
    %2386 = vmatpush1.msra.mxu0 0.0
    %2387 = vmatprep.subr.mxu0 0.0
    %2388 = vmatpush1.msra.mxu0 0.0
    %2389 = vmatprep.subr.mxu0 0.0
    %2390 = vmatpush1.msra.mxu0 0.0
    %2391 = vmatprep.subr.mxu0 0.0
    %2392 = vmatpush1.msra.mxu0 0.0
    %2393 = vmatprep.subr.mxu0 0.0
    %2394 = vmatpush1.msra.mxu0 0.0
    %2395 = vmatprep.subr.mxu0 0.0
    %2396 = vmatpush1.msra.mxu0 0.0
    %2397 = vmatprep.subr.mxu0 0.0
    %2398 = vmatpush1.msra.mxu0 0.0
    %2399 = vmatprep.subr.mxu0 0.0
    %2400 = vmatpush1.msra.mxu0 0.0
    %2401 = vmatprep.subr.mxu0 0.0
    %v2402 = vand.u32 %v2381, 4294901760
    %2403 = vmatpush1.msra.mxu0 %v2402
    %2404 = vmatprep.subr.mxu0 0.0
    %v2405 = vand.u32 %v2333, 4294901760
    %2406 = vmatpush1.msra.mxu0 %v2405
    %2407 = vmatprep.subr.mxu0 0.0
    %v2408 = vand.u32 %v2332, 4294901760
    %2409 = vmatpush1.msra.mxu0 %v2408
    %2410 = vmatprep.subr.mxu0 0.0
    %v2411 = vand.u32 %v2331, 4294901760
    %2412 = vmatpush1.msra.mxu0 %v2411
    %2413 = vmatprep.subr.mxu0 0.0
    %v2414 = vand.u32 %v2330, 4294901760
    %2415 = vmatpush1.msra.mxu0 %v2414
    %2416 = vmatprep.subr.mxu0 0.0
    %v2417 = vand.u32 %v2329, 4294901760
    %2418 = vmatpush1.msra.mxu0 %v2417
    %2419 = vmatprep.subr.mxu0 0.0
    %v2420 = vand.u32 %v2328, 4294901760
    %2421 = vmatpush1.msra.mxu0 %v2420
    %2422 = vmatprep.subr.mxu0 0.0
    %2423 = vmatpush2.msra.mxu0 0.0
    %2424 = vmatprep.subr.mxu0 0.0
    %2425 = vmatpush2.msra.mxu0 0.0
    %2426 = vmatprep.subr.mxu0 0.0
    %2427 = vmatpush2.msra.mxu0 0.0
    %2428 = vmatprep.subr.mxu0 0.0
    %2429 = vmatpush2.msra.mxu0 0.0
    %2430 = vmatprep.subr.mxu0 0.0
    %2431 = vmatpush2.msra.mxu0 0.0
    %2432 = vmatprep.subr.mxu0 0.0
    %2433 = vmatpush2.msra.mxu0 0.0
    %2434 = vmatprep.subr.mxu0 0.0
    %2435 = vmatpush2.msra.mxu0 0.0
    %2436 = vmatprep.subr.mxu0 0.0
    %2437 = vmatpush2.msra.mxu0 0.0
    %2438 = vmatprep.subr.mxu0 0.0
    %2439 = vmatpush2.msra.mxu0 0.0
    %2440 = vmatprep.subr.mxu0 0.0
    %2441 = vmatpush2.msra.mxu0 0.0
    %2442 = vmatprep.subr.mxu0 0.0
    %2443 = vmatpush2.msra.mxu0 0.0
    %2444 = vmatprep.subr.mxu0 0.0
    %2445 = vmatpush2.msra.mxu0 0.0
    %2446 = vmatprep.subr.mxu0 0.0
    %2447 = vmatpush2.msra.mxu0 0.0
    %2448 = vmatprep.subr.mxu0 0.0
    %2449 = vmatpush2.msra.mxu0 0.0
    %2450 = vmatprep.subr.mxu0 0.0
    %2451 = vmatpush2.msra.mxu0 0.0
    %2452 = vmatprep.subr.mxu0 0.0
    %2453 = vmatpush2.msra.mxu0 0.0
    %2454 = vmatprep.mubr.f32.mxu0 0.0
    %v2455 = vand.u32 %v2344, 4294901760
    %v2456 = vsub.f32 %v2344, %v2455
    %v2457 = vand.u32 %v2456, 4294901760
    %v2458 = vsub.f32 %v2456, %v2457
    %v2459 = vand.u32 %v2458, 4294901760
    %2460 = vmatmul.mubr.f32.gmra.mxu0 %v2459
    %v2461 = vpop.f32.mrf.mxu0
    %v2462 = vadd.f32 %v2340, %v2461
    %v2463 = vpop.f32.mrf.mxu0
    %2464 = vmatprep.mubr.f32.mxu0 0.0
    %v2465 = vand.u32 %v2347, 4294901760
    %v2466 = vsub.f32 %v2347, %v2465
    %v2467 = vand.u32 %v2466, 4294901760
    %v2468 = vsub.f32 %v2466, %v2467
    %v2469 = vand.u32 %v2468, 4294901760
    %2470 = vmatmul.mubr.f32.gmra.mxu0 %v2469
    %v2471 = vpop.f32.mrf.mxu0
    %v2472 = vadd.f32 %v2340, %v2471
    %v2473 = vpop.f32.mrf.mxu0
    %2474 = vmatprep.mubr.f32.mxu0 0.0
    %v2475 = vand.u32 %v2350, 4294901760
    %v2476 = vsub.f32 %v2350, %v2475
    %v2477 = vand.u32 %v2476, 4294901760
    %v2478 = vsub.f32 %v2476, %v2477
    %v2479 = vand.u32 %v2478, 4294901760
    %2480 = vmatmul.mubr.f32.gmra.mxu0 %v2479
    %v2481 = vpop.f32.mrf.mxu0
    %v2482 = vadd.f32 %v2340, %v2481
    %v2483 = vpop.f32.mrf.mxu0
    %2484 = vmatprep.mubr.f32.mxu0 0.0
    %v2485 = vand.u32 %v2353, 4294901760
    %v2486 = vsub.f32 %v2353, %v2485
    %v2487 = vand.u32 %v2486, 4294901760
    %v2488 = vsub.f32 %v2486, %v2487
    %v2489 = vand.u32 %v2488, 4294901760
    %2490 = vmatmul.mubr.f32.gmra.mxu0 %v2489
    %v2491 = vpop.f32.mrf.mxu0
    %v2492 = vadd.f32 %v2340, %v2491
    %v2493 = vpop.f32.mrf.mxu0
    %2494 = vmatprep.mubr.f32.mxu0 0.0
    %v2495 = vand.u32 %v2356, 4294901760
    %v2496 = vsub.f32 %v2356, %v2495
    %v2497 = vand.u32 %v2496, 4294901760
    %v2498 = vsub.f32 %v2496, %v2497
    %v2499 = vand.u32 %v2498, 4294901760
    %2500 = vmatmul.mubr.f32.gmra.mxu0 %v2499
    %v2501 = vpop.f32.mrf.mxu0
    %v2502 = vadd.f32 %v2340, %v2501
    %v2503 = vpop.f32.mrf.mxu0
    %2504 = vmatprep.mubr.f32.mxu0 0.0
    %v2505 = vand.u32 %v2359, 4294901760
    %v2506 = vsub.f32 %v2359, %v2505
    %v2507 = vand.u32 %v2506, 4294901760
    %v2508 = vsub.f32 %v2506, %v2507
    %v2509 = vand.u32 %v2508, 4294901760
    %2510 = vmatmul.mubr.f32.gmra.mxu0 %v2509
    %v2511 = vpop.f32.mrf.mxu0
    %v2512 = vadd.f32 %v2340, %v2511
    %v2513 = vpop.f32.mrf.mxu0
    %2514 = vmatprep.mubr.f32.mxu0 0.0
    %v2515 = vand.u32 %v2362, 4294901760
    %v2516 = vsub.f32 %v2362, %v2515
    %v2517 = vand.u32 %v2516, 4294901760
    %v2518 = vsub.f32 %v2516, %v2517
    %v2519 = vand.u32 %v2518, 4294901760
    %2520 = vmatmul.mubr.f32.gmra.mxu0 %v2519
    %v2521 = vpop.f32.mrf.mxu0
    %v2522 = vadd.f32 %v2340, %v2521
    %v2523 = vpop.f32.mrf.mxu0
    %2524 = vmatprep.mubr.f32.mxu0 0.0
    %v2525 = vand.u32 %v2365, 4294901760
    %v2526 = vsub.f32 %v2365, %v2525
    %v2527 = vand.u32 %v2526, 4294901760
    %v2528 = vsub.f32 %v2526, %v2527
    %v2529 = vand.u32 %v2528, 4294901760
    %2530 = vmatmul.mubr.f32.gmra.mxu0 %v2529
    %v2531 = vpop.f32.mrf.mxu0
    %v2532 = vadd.f32 %v2340, %v2531
    %v2533 = vpop.f32.mrf.mxu0
    %2534 = vmatprep.mubr.f32.mxu0 0.0
    %v2535 = vand.u32 %v2368, 4294901760
    %v2536 = vsub.f32 %v2368, %v2535
    %v2537 = vand.u32 %v2536, 4294901760
    %v2538 = vsub.f32 %v2536, %v2537
    %v2539 = vand.u32 %v2538, 4294901760
    %2540 = vmatmul.mubr.f32.gmra.mxu0 %v2539
    %v2541 = vpop.f32.mrf.mxu0
    %v2542 = vadd.f32 %v2340, %v2541
    %v2543 = vpop.f32.mrf.mxu0
    %2544 = vmatprep.mubr.f32.mxu0 0.0
    %v2545 = vand.u32 %v2371, 4294901760
    %v2546 = vsub.f32 %v2371, %v2545
    %v2547 = vand.u32 %v2546, 4294901760
    %v2548 = vsub.f32 %v2546, %v2547
    %v2549 = vand.u32 %v2548, 4294901760
    %2550 = vmatmul.mubr.f32.gmra.mxu0 %v2549
    %v2551 = vpop.f32.mrf.mxu0
    %v2552 = vadd.f32 %v2340, %v2551
    %v2553 = vpop.f32.mrf.mxu0
    %2554 = vmatprep.mubr.f32.mxu0 0.0
    %v2555 = vand.u32 %v2374, 4294901760
    %v2556 = vsub.f32 %v2374, %v2555
    %v2557 = vand.u32 %v2556, 4294901760
    %v2558 = vsub.f32 %v2556, %v2557
    %v2559 = vand.u32 %v2558, 4294901760
    %2560 = vmatmul.mubr.f32.gmra.mxu0 %v2559
    %v2561 = vpop.f32.mrf.mxu0
    %v2562 = vadd.f32 %v2340, %v2561
    %v2563 = vpop.f32.mrf.mxu0
    %2564 = vmatprep.mubr.f32.mxu0 0.0
    %v2565 = vand.u32 %v2377, 4294901760
    %v2566 = vsub.f32 %v2377, %v2565
    %v2567 = vand.u32 %v2566, 4294901760
    %v2568 = vsub.f32 %v2566, %v2567
    %v2569 = vand.u32 %v2568, 4294901760
    %2570 = vmatmul.mubr.f32.gmra.mxu0 %v2569
    %v2571 = vpop.f32.mrf.mxu0
    %v2572 = vadd.f32 %v2340, %v2571
    %v2573 = vpop.f32.mrf.mxu0
    %2574 = vdwg.mxu0
    %2575 = vmatprep.subr.mxu0 0.0
    %2576 = vmatpush1.msra.mxu0 0.0
    %2577 = vmatprep.subr.mxu0 0.0
    %2578 = vmatpush1.msra.mxu0 0.0
    %2579 = vmatprep.subr.mxu0 0.0
    %2580 = vmatpush1.msra.mxu0 0.0
    %2581 = vmatprep.subr.mxu0 0.0
    %2582 = vmatpush1.msra.mxu0 0.0
    %2583 = vmatprep.subr.mxu0 0.0
    %2584 = vmatpush1.msra.mxu0 0.0
    %2585 = vmatprep.subr.mxu0 0.0
    %2586 = vmatpush1.msra.mxu0 0.0
    %2587 = vmatprep.subr.mxu0 0.0
    %2588 = vmatpush1.msra.mxu0 0.0
    %2589 = vmatprep.subr.mxu0 0.0
    %2590 = vmatpush1.msra.mxu0 0.0
    %2591 = vmatprep.subr.mxu0 0.0
    %2592 = vmatpush1.msra.mxu0 0.0
    %2593 = vmatprep.subr.mxu0 0.0
    %v2594 = vand.u32 %v2381, 4294901760
    %v2595 = vsub.f32 %v2381, %v2594
    %v2596 = vand.u32 %v2595, 4294901760
    %v2597 = vsub.f32 %v2595, %v2596
    %v2598 = vand.u32 %v2597, 4294901760
    %2599 = vmatpush1.msra.mxu0 %v2598
    %2600 = vmatprep.subr.mxu0 0.0
    %v2601 = vand.u32 %v2333, 4294901760
    %v2602 = vsub.f32 %v2333, %v2601
    %v2603 = vand.u32 %v2602, 4294901760
    %v2604 = vsub.f32 %v2602, %v2603
    %v2605 = vand.u32 %v2604, 4294901760
    %2606 = vmatpush1.msra.mxu0 %v2605
    %2607 = vmatprep.subr.mxu0 0.0
    %v2608 = vand.u32 %v2332, 4294901760
    %v2609 = vsub.f32 %v2332, %v2608
    %v2610 = vand.u32 %v2609, 4294901760
    %v2611 = vsub.f32 %v2609, %v2610
    %v2612 = vand.u32 %v2611, 4294901760
    %2613 = vmatpush1.msra.mxu0 %v2612
    %2614 = vmatprep.subr.mxu0 0.0
    %v2615 = vand.u32 %v2331, 4294901760
    %v2616 = vsub.f32 %v2331, %v2615
    %v2617 = vand.u32 %v2616, 4294901760
    %v2618 = vsub.f32 %v2616, %v2617
    %v2619 = vand.u32 %v2618, 4294901760
    %2620 = vmatpush1.msra.mxu0 %v2619
    %2621 = vmatprep.subr.mxu0 0.0
    %v2622 = vand.u32 %v2330, 4294901760
    %v2623 = vsub.f32 %v2330, %v2622
    %v2624 = vand.u32 %v2623, 4294901760
    %v2625 = vsub.f32 %v2623, %v2624
    %v2626 = vand.u32 %v2625, 4294901760
    %2627 = vmatpush1.msra.mxu0 %v2626
    %2628 = vmatprep.subr.mxu0 0.0
    %v2629 = vand.u32 %v2329, 4294901760
    %v2630 = vsub.f32 %v2329, %v2629
    %v2631 = vand.u32 %v2630, 4294901760
    %v2632 = vsub.f32 %v2630, %v2631
    %v2633 = vand.u32 %v2632, 4294901760
    %2634 = vmatpush1.msra.mxu0 %v2633
    %2635 = vmatprep.subr.mxu0 0.0
    %v2636 = vand.u32 %v2328, 4294901760
    %v2637 = vsub.f32 %v2328, %v2636
    %v2638 = vand.u32 %v2637, 4294901760
    %v2639 = vsub.f32 %v2637, %v2638
    %v2640 = vand.u32 %v2639, 4294901760
    %2641 = vmatpush1.msra.mxu0 %v2640
    %2642 = vmatprep.subr.mxu0 0.0
    %2643 = vmatpush2.msra.mxu0 0.0
    %2644 = vmatprep.subr.mxu0 0.0
    %2645 = vmatpush2.msra.mxu0 0.0
    %2646 = vmatprep.subr.mxu0 0.0
    %2647 = vmatpush2.msra.mxu0 0.0
    %2648 = vmatprep.subr.mxu0 0.0
    %2649 = vmatpush2.msra.mxu0 0.0
    %2650 = vmatprep.subr.mxu0 0.0
    %2651 = vmatpush2.msra.mxu0 0.0
    %2652 = vmatprep.subr.mxu0 0.0
    %2653 = vmatpush2.msra.mxu0 0.0
    %2654 = vmatprep.subr.mxu0 0.0
    %2655 = vmatpush2.msra.mxu0 0.0
    %2656 = vmatprep.subr.mxu0 0.0
    %2657 = vmatpush2.msra.mxu0 0.0
    %2658 = vmatprep.subr.mxu0 0.0
    %2659 = vmatpush2.msra.mxu0 0.0
    %2660 = vmatprep.subr.mxu0 0.0
    %2661 = vmatpush2.msra.mxu0 0.0
    %2662 = vmatprep.subr.mxu0 0.0
    %2663 = vmatpush2.msra.mxu0 0.0
    %2664 = vmatprep.subr.mxu0 0.0
    %2665 = vmatpush2.msra.mxu0 0.0
    %2666 = vmatprep.subr.mxu0 0.0
    %2667 = vmatpush2.msra.mxu0 0.0
    %2668 = vmatprep.subr.mxu0 0.0
    %2669 = vmatpush2.msra.mxu0 0.0
    %2670 = vmatprep.subr.mxu0 0.0
    %2671 = vmatpush2.msra.mxu0 0.0
    %2672 = vmatprep.subr.mxu0 0.0
    %2673 = vmatpush2.msra.mxu0 0.0
    %2674 = vmatprep.mubr.f32.mxu0 0.0
    %v2675 = vand.u32 %v2344, 4294901760
    %2676 = vmatmul.mubr.f32.gmra.mxu0 %v2675
    %v2677 = vpop.f32.mrf.mxu0
    %v2678 = vadd.f32 %v2462, %v2677
    %v2679 = vpop.f32.mrf.mxu0
    %2680 = vmatprep.mubr.f32.mxu0 0.0
    %v2681 = vand.u32 %v2347, 4294901760
    %2682 = vmatmul.mubr.f32.gmra.mxu0 %v2681
    %v2683 = vpop.f32.mrf.mxu0
    %v2684 = vadd.f32 %v2472, %v2683
    %v2685 = vpop.f32.mrf.mxu0
    %2686 = vmatprep.mubr.f32.mxu0 0.0
    %v2687 = vand.u32 %v2350, 4294901760
    %2688 = vmatmul.mubr.f32.gmra.mxu0 %v2687
    %v2689 = vpop.f32.mrf.mxu0
    %v2690 = vadd.f32 %v2482, %v2689
    %v2691 = vpop.f32.mrf.mxu0
    %2692 = vmatprep.mubr.f32.mxu0 0.0
    %v2693 = vand.u32 %v2353, 4294901760
    %2694 = vmatmul.mubr.f32.gmra.mxu0 %v2693
    %v2695 = vpop.f32.mrf.mxu0
    %v2696 = vadd.f32 %v2492, %v2695
    %v2697 = vpop.f32.mrf.mxu0
    %2698 = vmatprep.mubr.f32.mxu0 0.0
    %v2699 = vand.u32 %v2356, 4294901760
    %2700 = vmatmul.mubr.f32.gmra.mxu0 %v2699
    %v2701 = vpop.f32.mrf.mxu0
    %v2702 = vadd.f32 %v2502, %v2701
    %v2703 = vpop.f32.mrf.mxu0
    %2704 = vmatprep.mubr.f32.mxu0 0.0
    %v2705 = vand.u32 %v2359, 4294901760
    %2706 = vmatmul.mubr.f32.gmra.mxu0 %v2705
    %v2707 = vpop.f32.mrf.mxu0
    %v2708 = vadd.f32 %v2512, %v2707
    %v2709 = vpop.f32.mrf.mxu0
    %2710 = vmatprep.mubr.f32.mxu0 0.0
    %v2711 = vand.u32 %v2362, 4294901760
    %2712 = vmatmul.mubr.f32.gmra.mxu0 %v2711
    %v2713 = vpop.f32.mrf.mxu0
    %v2714 = vadd.f32 %v2522, %v2713
    %v2715 = vpop.f32.mrf.mxu0
    %2716 = vmatprep.mubr.f32.mxu0 0.0
    %v2717 = vand.u32 %v2365, 4294901760
    %2718 = vmatmul.mubr.f32.gmra.mxu0 %v2717
    %v2719 = vpop.f32.mrf.mxu0
    %v2720 = vadd.f32 %v2532, %v2719
    %v2721 = vpop.f32.mrf.mxu0
    %2722 = vmatprep.mubr.f32.mxu0 0.0
    %v2723 = vand.u32 %v2368, 4294901760
    %2724 = vmatmul.mubr.f32.gmra.mxu0 %v2723
    %v2725 = vpop.f32.mrf.mxu0
    %v2726 = vadd.f32 %v2542, %v2725
    %v2727 = vpop.f32.mrf.mxu0
    %2728 = vmatprep.mubr.f32.mxu0 0.0
    %v2729 = vand.u32 %v2371, 4294901760
    %2730 = vmatmul.mubr.f32.gmra.mxu0 %v2729
    %v2731 = vpop.f32.mrf.mxu0
    %v2732 = vadd.f32 %v2552, %v2731
    %v2733 = vpop.f32.mrf.mxu0
    %2734 = vmatprep.mubr.f32.mxu0 0.0
    %v2735 = vand.u32 %v2374, 4294901760
    %2736 = vmatmul.mubr.f32.gmra.mxu0 %v2735
    %v2737 = vpop.f32.mrf.mxu0
    %v2738 = vadd.f32 %v2562, %v2737
    %v2739 = vpop.f32.mrf.mxu0
    %2740 = vmatprep.mubr.f32.mxu0 0.0
    %v2741 = vand.u32 %v2377, 4294901760
    %2742 = vmatmul.mubr.f32.gmra.mxu0 %v2741
    %v2743 = vpop.f32.mrf.mxu0
    %v2744 = vadd.f32 %v2572, %v2743
    %v2745 = vpop.f32.mrf.mxu0
    %2746 = vdwg.mxu0
    %2747 = vmatprep.subr.mxu0 0.0
    %2748 = vmatpush1.msra.mxu0 0.0
    %2749 = vmatprep.subr.mxu0 0.0
    %2750 = vmatpush1.msra.mxu0 0.0
    %2751 = vmatprep.subr.mxu0 0.0
    %2752 = vmatpush1.msra.mxu0 0.0
    %2753 = vmatprep.subr.mxu0 0.0
    %2754 = vmatpush1.msra.mxu0 0.0
    %2755 = vmatprep.subr.mxu0 0.0
    %2756 = vmatpush1.msra.mxu0 0.0
    %2757 = vmatprep.subr.mxu0 0.0
    %2758 = vmatpush1.msra.mxu0 0.0
    %2759 = vmatprep.subr.mxu0 0.0
    %2760 = vmatpush1.msra.mxu0 0.0
    %2761 = vmatprep.subr.mxu0 0.0
    %2762 = vmatpush1.msra.mxu0 0.0
    %2763 = vmatprep.subr.mxu0 0.0
    %2764 = vmatpush1.msra.mxu0 0.0
    %2765 = vmatprep.subr.mxu0 0.0
    %v2766 = vand.u32 %v2381, 4294901760
    %v2767 = vsub.f32 %v2381, %v2766
    %2768 = vmatpush1.msra.mxu0 %v2767
    %2769 = vmatprep.subr.mxu0 0.0
    %v2770 = vand.u32 %v2333, 4294901760
    %v2771 = vsub.f32 %v2333, %v2770
    %2772 = vmatpush1.msra.mxu0 %v2771
    %2773 = vmatprep.subr.mxu0 0.0
    %v2774 = vand.u32 %v2332, 4294901760
    %v2775 = vsub.f32 %v2332, %v2774
    %2776 = vmatpush1.msra.mxu0 %v2775
    %2777 = vmatprep.subr.mxu0 0.0
    %v2778 = vand.u32 %v2331, 4294901760
    %v2779 = vsub.f32 %v2331, %v2778
    %2780 = vmatpush1.msra.mxu0 %v2779
    %2781 = vmatprep.subr.mxu0 0.0
    %v2782 = vand.u32 %v2330, 4294901760
    %v2783 = vsub.f32 %v2330, %v2782
    %2784 = vmatpush1.msra.mxu0 %v2783
    %2785 = vmatprep.subr.mxu0 0.0
    %v2786 = vand.u32 %v2329, 4294901760
    %v2787 = vsub.f32 %v2329, %v2786
    %2788 = vmatpush1.msra.mxu0 %v2787
    %2789 = vmatprep.subr.mxu0 0.0
    %v2790 = vand.u32 %v2328, 4294901760
    %v2791 = vsub.f32 %v2328, %v2790
    %2792 = vmatpush1.msra.mxu0 %v2791
    %2793 = vmatprep.subr.mxu0 0.0
    %2794 = vmatpush2.msra.mxu0 0.0
    %2795 = vmatprep.subr.mxu0 0.0
    %2796 = vmatpush2.msra.mxu0 0.0
    %2797 = vmatprep.subr.mxu0 0.0
    %2798 = vmatpush2.msra.mxu0 0.0
    %2799 = vmatprep.subr.mxu0 0.0
    %2800 = vmatpush2.msra.mxu0 0.0
    %2801 = vmatprep.subr.mxu0 0.0
    %2802 = vmatpush2.msra.mxu0 0.0
    %2803 = vmatprep.subr.mxu0 0.0
    %2804 = vmatpush2.msra.mxu0 0.0
    %2805 = vmatprep.subr.mxu0 0.0
    %2806 = vmatpush2.msra.mxu0 0.0
    %2807 = vmatprep.subr.mxu0 0.0
    %2808 = vmatpush2.msra.mxu0 0.0
    %2809 = vmatprep.subr.mxu0 0.0
    %2810 = vmatpush2.msra.mxu0 0.0
    %2811 = vmatprep.subr.mxu0 0.0
    %2812 = vmatpush2.msra.mxu0 0.0
    %2813 = vmatprep.subr.mxu0 0.0
    %2814 = vmatpush2.msra.mxu0 0.0
    %2815 = vmatprep.subr.mxu0 0.0
    %2816 = vmatpush2.msra.mxu0 0.0
    %2817 = vmatprep.subr.mxu0 0.0
    %2818 = vmatpush2.msra.mxu0 0.0
    %2819 = vmatprep.subr.mxu0 0.0
    %2820 = vmatpush2.msra.mxu0 0.0
    %2821 = vmatprep.subr.mxu0 0.0
    %2822 = vmatpush2.msra.mxu0 0.0
    %2823 = vmatprep.subr.mxu0 0.0
    %2824 = vmatpush2.msra.mxu0 0.0
    %2825 = vmatprep.mubr.f32.mxu0 0.0
    %v2826 = vand.u32 %v2344, 4294901760
    %v2827 = vsub.f32 %v2344, %v2826
    %2828 = vmatmul.mubr.f32.gmra.mxu0 %v2827
    %v2829 = vpop.f32.mrf.mxu0
    %v2830 = vadd.f32 %v2678, %v2829
    %v2831 = vpop.f32.mrf.mxu0
    %2832 = vmatprep.mubr.f32.mxu0 0.0
    %v2833 = vand.u32 %v2347, 4294901760
    %v2834 = vsub.f32 %v2347, %v2833
    %2835 = vmatmul.mubr.f32.gmra.mxu0 %v2834
    %v2836 = vpop.f32.mrf.mxu0
    %v2837 = vadd.f32 %v2684, %v2836
    %v2838 = vpop.f32.mrf.mxu0
    %2839 = vmatprep.mubr.f32.mxu0 0.0
    %v2840 = vand.u32 %v2350, 4294901760
    %v2841 = vsub.f32 %v2350, %v2840
    %2842 = vmatmul.mubr.f32.gmra.mxu0 %v2841
    %v2843 = vpop.f32.mrf.mxu0
    %v2844 = vadd.f32 %v2690, %v2843
    %v2845 = vpop.f32.mrf.mxu0
    %2846 = vmatprep.mubr.f32.mxu0 0.0
    %v2847 = vand.u32 %v2353, 4294901760
    %v2848 = vsub.f32 %v2353, %v2847
    %2849 = vmatmul.mubr.f32.gmra.mxu0 %v2848
    %v2850 = vpop.f32.mrf.mxu0
    %v2851 = vadd.f32 %v2696, %v2850
    %v2852 = vpop.f32.mrf.mxu0
    %2853 = vmatprep.mubr.f32.mxu0 0.0
    %v2854 = vand.u32 %v2356, 4294901760
    %v2855 = vsub.f32 %v2356, %v2854
    %2856 = vmatmul.mubr.f32.gmra.mxu0 %v2855
    %v2857 = vpop.f32.mrf.mxu0
    %v2858 = vadd.f32 %v2702, %v2857
    %v2859 = vpop.f32.mrf.mxu0
    %2860 = vmatprep.mubr.f32.mxu0 0.0
    %v2861 = vand.u32 %v2359, 4294901760
    %v2862 = vsub.f32 %v2359, %v2861
    %2863 = vmatmul.mubr.f32.gmra.mxu0 %v2862
    %v2864 = vpop.f32.mrf.mxu0
    %v2865 = vadd.f32 %v2708, %v2864
    %v2866 = vpop.f32.mrf.mxu0
    %2867 = vmatprep.mubr.f32.mxu0 0.0
    %v2868 = vand.u32 %v2362, 4294901760
    %v2869 = vsub.f32 %v2362, %v2868
    %2870 = vmatmul.mubr.f32.gmra.mxu0 %v2869
    %v2871 = vpop.f32.mrf.mxu0
    %v2872 = vadd.f32 %v2714, %v2871
    %v2873 = vpop.f32.mrf.mxu0
    %2874 = vmatprep.mubr.f32.mxu0 0.0
    %v2875 = vand.u32 %v2365, 4294901760
    %v2876 = vsub.f32 %v2365, %v2875
    %2877 = vmatmul.mubr.f32.gmra.mxu0 %v2876
    %v2878 = vpop.f32.mrf.mxu0
    %v2879 = vadd.f32 %v2720, %v2878
    %v2880 = vpop.f32.mrf.mxu0
    %2881 = vmatprep.mubr.f32.mxu0 0.0
    %v2882 = vand.u32 %v2368, 4294901760
    %v2883 = vsub.f32 %v2368, %v2882
    %2884 = vmatmul.mubr.f32.gmra.mxu0 %v2883
    %v2885 = vpop.f32.mrf.mxu0
    %v2886 = vadd.f32 %v2726, %v2885
    %v2887 = vpop.f32.mrf.mxu0
    %2888 = vmatprep.mubr.f32.mxu0 0.0
    %v2889 = vand.u32 %v2371, 4294901760
    %v2890 = vsub.f32 %v2371, %v2889
    %2891 = vmatmul.mubr.f32.gmra.mxu0 %v2890
    %v2892 = vpop.f32.mrf.mxu0
    %v2893 = vadd.f32 %v2732, %v2892
    %v2894 = vpop.f32.mrf.mxu0
    %2895 = vmatprep.mubr.f32.mxu0 0.0
    %v2896 = vand.u32 %v2374, 4294901760
    %v2897 = vsub.f32 %v2374, %v2896
    %2898 = vmatmul.mubr.f32.gmra.mxu0 %v2897
    %v2899 = vpop.f32.mrf.mxu0
    %v2900 = vadd.f32 %v2738, %v2899
    %v2901 = vpop.f32.mrf.mxu0
    %2902 = vmatprep.mubr.f32.mxu0 0.0
    %v2903 = vand.u32 %v2377, 4294901760
    %v2904 = vsub.f32 %v2377, %v2903
    %2905 = vmatmul.mubr.f32.gmra.mxu0 %v2904
    %v2906 = vpop.f32.mrf.mxu0
    %v2907 = vadd.f32 %v2744, %v2906
    %v2908 = vpop.f32.mrf.mxu0
    %2909 = vdwg.mxu0
    %2910 = vmatprep.subr.mxu0 0.0
    %2911 = vmatpush1.msra.mxu0 0.0
    %2912 = vmatprep.subr.mxu0 0.0
    %2913 = vmatpush1.msra.mxu0 0.0
    %2914 = vmatprep.subr.mxu0 0.0
    %2915 = vmatpush1.msra.mxu0 0.0
    %2916 = vmatprep.subr.mxu0 0.0
    %2917 = vmatpush1.msra.mxu0 0.0
    %2918 = vmatprep.subr.mxu0 0.0
    %2919 = vmatpush1.msra.mxu0 0.0
    %2920 = vmatprep.subr.mxu0 0.0
    %2921 = vmatpush1.msra.mxu0 0.0
    %2922 = vmatprep.subr.mxu0 0.0
    %2923 = vmatpush1.msra.mxu0 0.0
    %2924 = vmatprep.subr.mxu0 0.0
    %2925 = vmatpush1.msra.mxu0 0.0
    %2926 = vmatprep.subr.mxu0 0.0
    %2927 = vmatpush1.msra.mxu0 0.0
    %2928 = vmatprep.subr.mxu0 0.0
    %v2929 = vand.u32 %v2381, 4294901760
    %2930 = vmatpush1.msra.mxu0 %v2929
    %2931 = vmatprep.subr.mxu0 0.0
    %v2932 = vand.u32 %v2333, 4294901760
    %2933 = vmatpush1.msra.mxu0 %v2932
    %2934 = vmatprep.subr.mxu0 0.0
    %v2935 = vand.u32 %v2332, 4294901760
    %2936 = vmatpush1.msra.mxu0 %v2935
    %2937 = vmatprep.subr.mxu0 0.0
    %v2938 = vand.u32 %v2331, 4294901760
    %2939 = vmatpush1.msra.mxu0 %v2938
    %2940 = vmatprep.subr.mxu0 0.0
    %v2941 = vand.u32 %v2330, 4294901760
    %2942 = vmatpush1.msra.mxu0 %v2941
    %2943 = vmatprep.subr.mxu0 0.0
    %v2944 = vand.u32 %v2329, 4294901760
    %2945 = vmatpush1.msra.mxu0 %v2944
    %2946 = vmatprep.subr.mxu0 0.0
    %v2947 = vand.u32 %v2328, 4294901760
    %2948 = vmatpush1.msra.mxu0 %v2947
    %2949 = vmatprep.subr.mxu0 0.0
    %2950 = vmatpush2.msra.mxu0 0.0
    %2951 = vmatprep.subr.mxu0 0.0
    %2952 = vmatpush2.msra.mxu0 0.0
    %2953 = vmatprep.subr.mxu0 0.0
    %2954 = vmatpush2.msra.mxu0 0.0
    %2955 = vmatprep.subr.mxu0 0.0
    %2956 = vmatpush2.msra.mxu0 0.0
    %2957 = vmatprep.subr.mxu0 0.0
    %2958 = vmatpush2.msra.mxu0 0.0
    %2959 = vmatprep.subr.mxu0 0.0
    %2960 = vmatpush2.msra.mxu0 0.0
    %2961 = vmatprep.subr.mxu0 0.0
    %2962 = vmatpush2.msra.mxu0 0.0
    %2963 = vmatprep.subr.mxu0 0.0
    %2964 = vmatpush2.msra.mxu0 0.0
    %2965 = vmatprep.subr.mxu0 0.0
    %2966 = vmatpush2.msra.mxu0 0.0
    %2967 = vmatprep.subr.mxu0 0.0
    %2968 = vmatpush2.msra.mxu0 0.0
    %2969 = vmatprep.subr.mxu0 0.0
    %2970 = vmatpush2.msra.mxu0 0.0
    %2971 = vmatprep.subr.mxu0 0.0
    %2972 = vmatpush2.msra.mxu0 0.0
    %2973 = vmatprep.subr.mxu0 0.0
    %2974 = vmatpush2.msra.mxu0 0.0
    %2975 = vmatprep.subr.mxu0 0.0
    %2976 = vmatpush2.msra.mxu0 0.0
    %2977 = vmatprep.subr.mxu0 0.0
    %2978 = vmatpush2.msra.mxu0 0.0
    %2979 = vmatprep.subr.mxu0 0.0
    %2980 = vmatpush2.msra.mxu0 0.0
    %2981 = vmatprep.mubr.f32.mxu0 0.0
    %v2982 = vand.u32 %v2344, 4294901760
    %v2983 = vsub.f32 %v2344, %v2982
    %v2984 = vand.u32 %v2983, 4294901760
    %2985 = vmatmul.mubr.f32.gmra.mxu0 %v2984
    %v2986 = vpop.f32.mrf.mxu0
    %v2987 = vadd.f32 %v2830, %v2986
    %v2988 = vpop.f32.mrf.mxu0
    %2989 = vmatprep.mubr.f32.mxu0 0.0
    %v2990 = vand.u32 %v2347, 4294901760
    %v2991 = vsub.f32 %v2347, %v2990
    %v2992 = vand.u32 %v2991, 4294901760
    %2993 = vmatmul.mubr.f32.gmra.mxu0 %v2992
    %v2994 = vpop.f32.mrf.mxu0
    %v2995 = vadd.f32 %v2837, %v2994
    %v2996 = vpop.f32.mrf.mxu0
    %2997 = vmatprep.mubr.f32.mxu0 0.0
    %v2998 = vand.u32 %v2350, 4294901760
    %v2999 = vsub.f32 %v2350, %v2998
    %v3000 = vand.u32 %v2999, 4294901760
    %3001 = vmatmul.mubr.f32.gmra.mxu0 %v3000
    %v3002 = vpop.f32.mrf.mxu0
    %v3003 = vadd.f32 %v2844, %v3002
    %v3004 = vpop.f32.mrf.mxu0
    %3005 = vmatprep.mubr.f32.mxu0 0.0
    %v3006 = vand.u32 %v2353, 4294901760
    %v3007 = vsub.f32 %v2353, %v3006
    %v3008 = vand.u32 %v3007, 4294901760
    %3009 = vmatmul.mubr.f32.gmra.mxu0 %v3008
    %v3010 = vpop.f32.mrf.mxu0
    %v3011 = vadd.f32 %v2851, %v3010
    %v3012 = vpop.f32.mrf.mxu0
    %3013 = vmatprep.mubr.f32.mxu0 0.0
    %v3014 = vand.u32 %v2356, 4294901760
    %v3015 = vsub.f32 %v2356, %v3014
    %v3016 = vand.u32 %v3015, 4294901760
    %3017 = vmatmul.mubr.f32.gmra.mxu0 %v3016
    %v3018 = vpop.f32.mrf.mxu0
    %v3019 = vadd.f32 %v2858, %v3018
    %v3020 = vpop.f32.mrf.mxu0
    %3021 = vmatprep.mubr.f32.mxu0 0.0
    %v3022 = vand.u32 %v2359, 4294901760
    %v3023 = vsub.f32 %v2359, %v3022
    %v3024 = vand.u32 %v3023, 4294901760
    %3025 = vmatmul.mubr.f32.gmra.mxu0 %v3024
    %v3026 = vpop.f32.mrf.mxu0
    %v3027 = vadd.f32 %v2865, %v3026
    %v3028 = vpop.f32.mrf.mxu0
    %3029 = vmatprep.mubr.f32.mxu0 0.0
    %v3030 = vand.u32 %v2362, 4294901760
    %v3031 = vsub.f32 %v2362, %v3030
    %v3032 = vand.u32 %v3031, 4294901760
    %3033 = vmatmul.mubr.f32.gmra.mxu0 %v3032
    %v3034 = vpop.f32.mrf.mxu0
    %v3035 = vadd.f32 %v2872, %v3034
    %v3036 = vpop.f32.mrf.mxu0
    %3037 = vmatprep.mubr.f32.mxu0 0.0
    %v3038 = vand.u32 %v2365, 4294901760
    %v3039 = vsub.f32 %v2365, %v3038
    %v3040 = vand.u32 %v3039, 4294901760
    %3041 = vmatmul.mubr.f32.gmra.mxu0 %v3040
    %v3042 = vpop.f32.mrf.mxu0
    %v3043 = vadd.f32 %v2879, %v3042
    %v3044 = vpop.f32.mrf.mxu0
    %3045 = vmatprep.mubr.f32.mxu0 0.0
    %v3046 = vand.u32 %v2368, 4294901760
    %v3047 = vsub.f32 %v2368, %v3046
    %v3048 = vand.u32 %v3047, 4294901760
    %3049 = vmatmul.mubr.f32.gmra.mxu0 %v3048
    %v3050 = vpop.f32.mrf.mxu0
    %v3051 = vadd.f32 %v2886, %v3050
    %v3052 = vpop.f32.mrf.mxu0
    %3053 = vmatprep.mubr.f32.mxu0 0.0
    %v3054 = vand.u32 %v2371, 4294901760
    %v3055 = vsub.f32 %v2371, %v3054
    %v3056 = vand.u32 %v3055, 4294901760
    %3057 = vmatmul.mubr.f32.gmra.mxu0 %v3056
    %v3058 = vpop.f32.mrf.mxu0
    %v3059 = vadd.f32 %v2893, %v3058
    %v3060 = vpop.f32.mrf.mxu0
    %3061 = vmatprep.mubr.f32.mxu0 0.0
    %v3062 = vand.u32 %v2374, 4294901760
    %v3063 = vsub.f32 %v2374, %v3062
    %v3064 = vand.u32 %v3063, 4294901760
    %3065 = vmatmul.mubr.f32.gmra.mxu0 %v3064
    %v3066 = vpop.f32.mrf.mxu0
    %v3067 = vadd.f32 %v2900, %v3066
    %v3068 = vpop.f32.mrf.mxu0
    %3069 = vmatprep.mubr.f32.mxu0 0.0
    %v3070 = vand.u32 %v2377, 4294901760
    %v3071 = vsub.f32 %v2377, %v3070
    %v3072 = vand.u32 %v3071, 4294901760
    %3073 = vmatmul.mubr.f32.gmra.mxu0 %v3072
    %v3074 = vpop.f32.mrf.mxu0
    %v3075 = vadd.f32 %v2907, %v3074
    %v3076 = vpop.f32.mrf.mxu0
    %3077 = vdwg.mxu0
    %3078 = vmatprep.subr.mxu0 0.0
    %3079 = vmatpush1.msra.mxu0 0.0
    %3080 = vmatprep.subr.mxu0 0.0
    %3081 = vmatpush1.msra.mxu0 0.0
    %3082 = vmatprep.subr.mxu0 0.0
    %3083 = vmatpush1.msra.mxu0 0.0
    %3084 = vmatprep.subr.mxu0 0.0
    %3085 = vmatpush1.msra.mxu0 0.0
    %3086 = vmatprep.subr.mxu0 0.0
    %3087 = vmatpush1.msra.mxu0 0.0
    %3088 = vmatprep.subr.mxu0 0.0
    %3089 = vmatpush1.msra.mxu0 0.0
    %3090 = vmatprep.subr.mxu0 0.0
    %3091 = vmatpush1.msra.mxu0 0.0
    %3092 = vmatprep.subr.mxu0 0.0
    %3093 = vmatpush1.msra.mxu0 0.0
    %3094 = vmatprep.subr.mxu0 0.0
    %3095 = vmatpush1.msra.mxu0 0.0
    %3096 = vmatprep.subr.mxu0 0.0
    %v3097 = vand.u32 %v2381, 4294901760
    %v3098 = vsub.f32 %v2381, %v3097
    %v3099 = vand.u32 %v3098, 4294901760
    %3100 = vmatpush1.msra.mxu0 %v3099
    %3101 = vmatprep.subr.mxu0 0.0
    %v3102 = vand.u32 %v2333, 4294901760
    %v3103 = vsub.f32 %v2333, %v3102
    %v3104 = vand.u32 %v3103, 4294901760
    %3105 = vmatpush1.msra.mxu0 %v3104
    %3106 = vmatprep.subr.mxu0 0.0
    %v3107 = vand.u32 %v2332, 4294901760
    %v3108 = vsub.f32 %v2332, %v3107
    %v3109 = vand.u32 %v3108, 4294901760
    %3110 = vmatpush1.msra.mxu0 %v3109
    %3111 = vmatprep.subr.mxu0 0.0
    %v3112 = vand.u32 %v2331, 4294901760
    %v3113 = vsub.f32 %v2331, %v3112
    %v3114 = vand.u32 %v3113, 4294901760
    %3115 = vmatpush1.msra.mxu0 %v3114
    %3116 = vmatprep.subr.mxu0 0.0
    %v3117 = vand.u32 %v2330, 4294901760
    %v3118 = vsub.f32 %v2330, %v3117
    %v3119 = vand.u32 %v3118, 4294901760
    %3120 = vmatpush1.msra.mxu0 %v3119
    %3121 = vmatprep.subr.mxu0 0.0
    %v3122 = vand.u32 %v2329, 4294901760
    %v3123 = vsub.f32 %v2329, %v3122
    %v3124 = vand.u32 %v3123, 4294901760
    %3125 = vmatpush1.msra.mxu0 %v3124
    %3126 = vmatprep.subr.mxu0 0.0
    %v3127 = vand.u32 %v2328, 4294901760
    %v3128 = vsub.f32 %v2328, %v3127
    %v3129 = vand.u32 %v3128, 4294901760
    %3130 = vmatpush1.msra.mxu0 %v3129
    %3131 = vmatprep.subr.mxu0 0.0
    %3132 = vmatpush2.msra.mxu0 0.0
    %3133 = vmatprep.subr.mxu0 0.0
    %3134 = vmatpush2.msra.mxu0 0.0
    %3135 = vmatprep.subr.mxu0 0.0
    %3136 = vmatpush2.msra.mxu0 0.0
    %3137 = vmatprep.subr.mxu0 0.0
    %3138 = vmatpush2.msra.mxu0 0.0
    %3139 = vmatprep.subr.mxu0 0.0
    %3140 = vmatpush2.msra.mxu0 0.0
    %3141 = vmatprep.subr.mxu0 0.0
    %3142 = vmatpush2.msra.mxu0 0.0
    %3143 = vmatprep.subr.mxu0 0.0
    %3144 = vmatpush2.msra.mxu0 0.0
    %3145 = vmatprep.subr.mxu0 0.0
    %3146 = vmatpush2.msra.mxu0 0.0
    %3147 = vmatprep.subr.mxu0 0.0
    %3148 = vmatpush2.msra.mxu0 0.0
    %3149 = vmatprep.subr.mxu0 0.0
    %3150 = vmatpush2.msra.mxu0 0.0
    %3151 = vmatprep.subr.mxu0 0.0
    %3152 = vmatpush2.msra.mxu0 0.0
    %3153 = vmatprep.subr.mxu0 0.0
    %3154 = vmatpush2.msra.mxu0 0.0
    %3155 = vmatprep.subr.mxu0 0.0
    %3156 = vmatpush2.msra.mxu0 0.0
    %3157 = vmatprep.subr.mxu0 0.0
    %3158 = vmatpush2.msra.mxu0 0.0
    %3159 = vmatprep.subr.mxu0 0.0
    %3160 = vmatpush2.msra.mxu0 0.0
    %3161 = vmatprep.subr.mxu0 0.0
    %3162 = vmatpush2.msra.mxu0 0.0
    %3163 = vmatprep.mubr.f32.mxu0 0.0
    %v3164 = vand.u32 %v2344, 4294901760
    %3165 = vmatmul.mubr.f32.gmra.mxu0 %v3164
    %v3166 = vpop.f32.mrf.mxu0
    %v3167 = vadd.f32 %v2987, %v3166
    %v3168 = vpop.f32.mrf.mxu0
    %3169 = vmatprep.mubr.f32.mxu0 0.0
    %v3170 = vand.u32 %v2347, 4294901760
    %3171 = vmatmul.mubr.f32.gmra.mxu0 %v3170
    %v3172 = vpop.f32.mrf.mxu0
    %v3173 = vadd.f32 %v2995, %v3172
    %v3174 = vpop.f32.mrf.mxu0
    %3175 = vmatprep.mubr.f32.mxu0 0.0
    %v3176 = vand.u32 %v2350, 4294901760
    %3177 = vmatmul.mubr.f32.gmra.mxu0 %v3176
    %v3178 = vpop.f32.mrf.mxu0
    %v3179 = vadd.f32 %v3003, %v3178
    %v3180 = vpop.f32.mrf.mxu0
    %3181 = vmatprep.mubr.f32.mxu0 0.0
    %v3182 = vand.u32 %v2353, 4294901760
    %3183 = vmatmul.mubr.f32.gmra.mxu0 %v3182
    %v3184 = vpop.f32.mrf.mxu0
    %v3185 = vadd.f32 %v3011, %v3184
    %v3186 = vpop.f32.mrf.mxu0
    %3187 = vmatprep.mubr.f32.mxu0 0.0
    %v3188 = vand.u32 %v2356, 4294901760
    %3189 = vmatmul.mubr.f32.gmra.mxu0 %v3188
    %v3190 = vpop.f32.mrf.mxu0
    %v3191 = vadd.f32 %v3019, %v3190
    %v3192 = vpop.f32.mrf.mxu0
    %3193 = vmatprep.mubr.f32.mxu0 0.0
    %v3194 = vand.u32 %v2359, 4294901760
    %3195 = vmatmul.mubr.f32.gmra.mxu0 %v3194
    %v3196 = vpop.f32.mrf.mxu0
    %v3197 = vadd.f32 %v3027, %v3196
    %v3198 = vpop.f32.mrf.mxu0
    %3199 = vmatprep.mubr.f32.mxu0 0.0
    %v3200 = vand.u32 %v2362, 4294901760
    %3201 = vmatmul.mubr.f32.gmra.mxu0 %v3200
    %v3202 = vpop.f32.mrf.mxu0
    %v3203 = vadd.f32 %v3035, %v3202
    %v3204 = vpop.f32.mrf.mxu0
    %3205 = vmatprep.mubr.f32.mxu0 0.0
    %v3206 = vand.u32 %v2365, 4294901760
    %3207 = vmatmul.mubr.f32.gmra.mxu0 %v3206
    %v3208 = vpop.f32.mrf.mxu0
    %v3209 = vadd.f32 %v3043, %v3208
    %v3210 = vpop.f32.mrf.mxu0
    %3211 = vmatprep.mubr.f32.mxu0 0.0
    %v3212 = vand.u32 %v2368, 4294901760
    %3213 = vmatmul.mubr.f32.gmra.mxu0 %v3212
    %v3214 = vpop.f32.mrf.mxu0
    %v3215 = vadd.f32 %v3051, %v3214
    %v3216 = vpop.f32.mrf.mxu0
    %3217 = vmatprep.mubr.f32.mxu0 0.0
    %v3218 = vand.u32 %v2371, 4294901760
    %3219 = vmatmul.mubr.f32.gmra.mxu0 %v3218
    %v3220 = vpop.f32.mrf.mxu0
    %v3221 = vadd.f32 %v3059, %v3220
    %v3222 = vpop.f32.mrf.mxu0
    %3223 = vmatprep.mubr.f32.mxu0 0.0
    %v3224 = vand.u32 %v2374, 4294901760
    %3225 = vmatmul.mubr.f32.gmra.mxu0 %v3224
    %v3226 = vpop.f32.mrf.mxu0
    %v3227 = vadd.f32 %v3067, %v3226
    %v3228 = vpop.f32.mrf.mxu0
    %3229 = vmatprep.mubr.f32.mxu0 0.0
    %v3230 = vand.u32 %v2377, 4294901760
    %3231 = vmatmul.mubr.f32.gmra.mxu0 %v3230
    %v3232 = vpop.f32.mrf.mxu0
    %v3233 = vadd.f32 %v3075, %v3232
    %v3234 = vpop.f32.mrf.mxu0
    %3235 = vdwg.mxu0
    %3236 = vmatprep.subr.mxu0 0.0
    %3237 = vmatpush1.msra.mxu0 0.0
    %3238 = vmatprep.subr.mxu0 0.0
    %3239 = vmatpush1.msra.mxu0 0.0
    %3240 = vmatprep.subr.mxu0 0.0
    %3241 = vmatpush1.msra.mxu0 0.0
    %3242 = vmatprep.subr.mxu0 0.0
    %3243 = vmatpush1.msra.mxu0 0.0
    %3244 = vmatprep.subr.mxu0 0.0
    %3245 = vmatpush1.msra.mxu0 0.0
    %3246 = vmatprep.subr.mxu0 0.0
    %3247 = vmatpush1.msra.mxu0 0.0
    %3248 = vmatprep.subr.mxu0 0.0
    %3249 = vmatpush1.msra.mxu0 0.0
    %3250 = vmatprep.subr.mxu0 0.0
    %3251 = vmatpush1.msra.mxu0 0.0
    %3252 = vmatprep.subr.mxu0 0.0
    %3253 = vmatpush1.msra.mxu0 0.0
    %3254 = vmatprep.subr.mxu0 0.0
    %v3255 = vand.u32 %v2381, 4294901760
    %3256 = vmatpush1.msra.mxu0 %v3255
    %3257 = vmatprep.subr.mxu0 0.0
    %v3258 = vand.u32 %v2333, 4294901760
    %3259 = vmatpush1.msra.mxu0 %v3258
    %3260 = vmatprep.subr.mxu0 0.0
    %v3261 = vand.u32 %v2332, 4294901760
    %3262 = vmatpush1.msra.mxu0 %v3261
    %3263 = vmatprep.subr.mxu0 0.0
    %v3264 = vand.u32 %v2331, 4294901760
    %3265 = vmatpush1.msra.mxu0 %v3264
    %3266 = vmatprep.subr.mxu0 0.0
    %v3267 = vand.u32 %v2330, 4294901760
    %3268 = vmatpush1.msra.mxu0 %v3267
    %3269 = vmatprep.subr.mxu0 0.0
    %v3270 = vand.u32 %v2329, 4294901760
    %3271 = vmatpush1.msra.mxu0 %v3270
    %3272 = vmatprep.subr.mxu0 0.0
    %v3273 = vand.u32 %v2328, 4294901760
    %3274 = vmatpush1.msra.mxu0 %v3273
    %3275 = vmatprep.subr.mxu0 0.0
    %3276 = vmatpush2.msra.mxu0 0.0
    %3277 = vmatprep.subr.mxu0 0.0
    %3278 = vmatpush2.msra.mxu0 0.0
    %3279 = vmatprep.subr.mxu0 0.0
    %3280 = vmatpush2.msra.mxu0 0.0
    %3281 = vmatprep.subr.mxu0 0.0
    %3282 = vmatpush2.msra.mxu0 0.0
    %3283 = vmatprep.subr.mxu0 0.0
    %3284 = vmatpush2.msra.mxu0 0.0
    %3285 = vmatprep.subr.mxu0 0.0
    %3286 = vmatpush2.msra.mxu0 0.0
    %3287 = vmatprep.subr.mxu0 0.0
    %3288 = vmatpush2.msra.mxu0 0.0
    %3289 = vmatprep.subr.mxu0 0.0
    %3290 = vmatpush2.msra.mxu0 0.0
    %3291 = vmatprep.subr.mxu0 0.0
    %3292 = vmatpush2.msra.mxu0 0.0
    %3293 = vmatprep.subr.mxu0 0.0
    %3294 = vmatpush2.msra.mxu0 0.0
    %3295 = vmatprep.subr.mxu0 0.0
    %3296 = vmatpush2.msra.mxu0 0.0
    %3297 = vmatprep.subr.mxu0 0.0
    %3298 = vmatpush2.msra.mxu0 0.0
    %3299 = vmatprep.subr.mxu0 0.0
    %3300 = vmatpush2.msra.mxu0 0.0
    %3301 = vmatprep.subr.mxu0 0.0
    %3302 = vmatpush2.msra.mxu0 0.0
    %3303 = vmatprep.subr.mxu0 0.0
    %3304 = vmatpush2.msra.mxu0 0.0
    %3305 = vmatprep.subr.mxu0 0.0
    %3306 = vmatpush2.msra.mxu0 0.0
    %3307 = vmatprep.mubr.f32.mxu0 0.0
    %v3308 = vand.u32 %v2344, 4294901760
    %3309 = vmatmul.mubr.f32.gmra.mxu0 %v3308
    %v3310 = vpop.f32.mrf.mxu0
    %v3311 = vadd.f32 %v3167, %v3310
    %v3312 = vpop.f32.mrf.mxu0
    %3313 = vmatprep.mubr.f32.mxu0 0.0
    %v3314 = vand.u32 %v2347, 4294901760
    %3315 = vmatmul.mubr.f32.gmra.mxu0 %v3314
    %v3316 = vpop.f32.mrf.mxu0
    %v3317 = vadd.f32 %v3173, %v3316
    %v3318 = vpop.f32.mrf.mxu0
    %3319 = vmatprep.mubr.f32.mxu0 0.0
    %v3320 = vand.u32 %v2350, 4294901760
    %3321 = vmatmul.mubr.f32.gmra.mxu0 %v3320
    %v3322 = vpop.f32.mrf.mxu0
    %v3323 = vadd.f32 %v3179, %v3322
    %v3324 = vpop.f32.mrf.mxu0
    %3325 = vmatprep.mubr.f32.mxu0 0.0
    %v3326 = vand.u32 %v2353, 4294901760
    %3327 = vmatmul.mubr.f32.gmra.mxu0 %v3326
    %v3328 = vpop.f32.mrf.mxu0
    %v3329 = vadd.f32 %v3185, %v3328
    %v3330 = vpop.f32.mrf.mxu0
    %3331 = vmatprep.mubr.f32.mxu0 0.0
    %v3332 = vand.u32 %v2356, 4294901760
    %3333 = vmatmul.mubr.f32.gmra.mxu0 %v3332
    %v3334 = vpop.f32.mrf.mxu0
    %v3335 = vadd.f32 %v3191, %v3334
    %v3336 = vpop.f32.mrf.mxu0
    %3337 = vmatprep.mubr.f32.mxu0 0.0
    %v3338 = vand.u32 %v2359, 4294901760
    %3339 = vmatmul.mubr.f32.gmra.mxu0 %v3338
    %v3340 = vpop.f32.mrf.mxu0
    %v3341 = vadd.f32 %v3197, %v3340
    %v3342 = vpop.f32.mrf.mxu0
    %3343 = vmatprep.mubr.f32.mxu0 0.0
    %v3344 = vand.u32 %v2362, 4294901760
    %3345 = vmatmul.mubr.f32.gmra.mxu0 %v3344
    %v3346 = vpop.f32.mrf.mxu0
    %v3347 = vadd.f32 %v3203, %v3346
    %v3348 = vpop.f32.mrf.mxu0
    %3349 = vmatprep.mubr.f32.mxu0 0.0
    %v3350 = vand.u32 %v2365, 4294901760
    %3351 = vmatmul.mubr.f32.gmra.mxu0 %v3350
    %v3352 = vpop.f32.mrf.mxu0
    %v3353 = vadd.f32 %v3209, %v3352
    %v3354 = vpop.f32.mrf.mxu0
    %3355 = vmatprep.mubr.f32.mxu0 0.0
    %v3356 = vand.u32 %v2368, 4294901760
    %3357 = vmatmul.mubr.f32.gmra.mxu0 %v3356
    %v3358 = vpop.f32.mrf.mxu0
    %v3359 = vadd.f32 %v3215, %v3358
    %v3360 = vpop.f32.mrf.mxu0
    %3361 = vmatprep.mubr.f32.mxu0 0.0
    %v3362 = vand.u32 %v2371, 4294901760
    %3363 = vmatmul.mubr.f32.gmra.mxu0 %v3362
    %v3364 = vpop.f32.mrf.mxu0
    %v3365 = vadd.f32 %v3221, %v3364
    %v3366 = vpop.f32.mrf.mxu0
    %3367 = vmatprep.mubr.f32.mxu0 0.0
    %v3368 = vand.u32 %v2374, 4294901760
    %3369 = vmatmul.mubr.f32.gmra.mxu0 %v3368
    %v3370 = vpop.f32.mrf.mxu0
    %v3371 = vadd.f32 %v3227, %v3370
    %v3372 = vpop.f32.mrf.mxu0
    %3373 = vmatprep.mubr.f32.mxu0 0.0
    %v3374 = vand.u32 %v2377, 4294901760
    %3375 = vmatmul.mubr.f32.gmra.mxu0 %v3374
    %v3376 = vpop.f32.mrf.mxu0
    %v3377 = vadd.f32 %v3233, %v3376
    %v3378 = vpop.f32.mrf.mxu0
    %3379 = vdwg.mxu0
    %v3380 = vmul.f32 %v3311, %v2213
    %v3381 = vmul.f32 %v3317, %v2218
    %v3382 = vmul.f32 %v3323, %v2223
    %v3383 = vmul.f32 %v3329, %v2228
    %v3384 = vmul.f32 %v3335, %v2237
    %v3385 = vmul.f32 %v3341, %v2242
    %v3386 = vmul.f32 %v3347, %v2247
    %v3387 = vmul.f32 %v3353, %v2252
    %v3388 = vadd.f32 %v3380, %v3384
    %v3389 = vadd.f32 %v3381, %v3385
    %v3390 = vadd.f32 %v3382, %v3386
    %v3391 = vadd.f32 %v3383, %v3387
    %v3392 = vmul.f32 %v3359, %v2265
    %v3393 = vmul.f32 %v3365, %v2270
    %v3394 = vmul.f32 %v3371, %v2275
    %v3395 = vmul.f32 %v3377, %v2280
    %v3396 = vadd.f32 %v3388, %v3392
    %v3397 = vadd.f32 %v3389, %v3393
    %v3398 = vadd.f32 %v3390, %v3394
    %v3399 = vadd.f32 %v3391, %v3395
    %v3400 = vmul.f32 %v3396, %v2293
    %v3401 = vmul.f32 %v3397, %v2298
    %v3402 = vmul.f32 %v3398, %v2303
    %v3403 = vmul.f32 %v3399, %v2308
    %v3404 = vld [vmem:[%s2] sm:$0xff]
    %v3405 = vld [vmem:[%s2 + $0x8] sm:$0xff]
    %v3406 = vld [vmem:[%s2 + $0x10] sm:$0xff]
    %v3407 = vld [vmem:[%s2 + $0x18] sm:$0xff]
    %v3408 = vld [vmem:[%s7] sm:$0xff]
    %v3409 = vld [vmem:[%s7 + $0x8] sm:$0xff]
    %v3410 = vld [vmem:[%s7 + $0x10] sm:$0xff]
    %v3411 = vld [vmem:[%s7 + $0x18] sm:$0xff]
    %v3412 = vld [vmem:[%s7 + $0x20] sm:$0xff]
    %v3413 = vld [vmem:[%s7 + $0x28] sm:$0xff]
    %v3414 = vld [vmem:[%s7 + $0x30] sm:$0xff]
    %v3415 = vld [vmem:[%s7 + $0x38] sm:$0xff]
    %v3416 = vld [vmem:[%s7 + $0x40] sm:$0xff]
    %v3417 = vld [vmem:[%s7 + $0x48] sm:$0xff]
    %v3418 = vld [vmem:[%s7 + $0x50] sm:$0xff]
    %v3419 = vld [vmem:[%s7 + $0x58] sm:$0xff]
    %v3420 = vld [vmem:[%s7 + $0x60] sm:$0xff]
    %v3421 = vld [vmem:[%s7 + $0x68] sm:$0xff]
    %v3422 = vld [vmem:[%s7 + $0x70] sm:$0xff]
    %v3423 = vld [vmem:[%s7 + $0x78] sm:$0xff]
    %v3424 = vld [vmem:[%s7 + $0x80] sm:$0xff]
    %v3425 = vld [vmem:[%s7 + $0x88] sm:$0xff]
    %v3426 = vld [vmem:[%s7 + $0x90] sm:$0xff]
    %v3427 = vld [vmem:[%s7 + $0x98] sm:$0xff]
    %v3428 = vld [vmem:[%s7 + $0xa0] sm:$0xff]
    %v3429 = vld [vmem:[%s7 + $0xa8] sm:$0xff]
    %v3430 = vld [vmem:[%s7 + $0xb0] sm:$0xff]
    %v3431 = vld [vmem:[%s7 + $0xb8] sm:$0xff]
    %v3432 = vld [vmem:[%s7 + $0xc0] sm:$0xff]
    %v3433 = vld [vmem:[%s7 + $0xc8] sm:$0xff]
    %v3434 = vld [vmem:[%s7 + $0xd0] sm:$0xff]
    %v3435 = vld [vmem:[%s7 + $0xd8] sm:$0xff]
    %v3436 = vld [vmem:[%s7 + $0xe0] sm:$0xff]
    %v3437 = vld [vmem:[%s7 + $0xe8] sm:$0xff]
    %v3438 = vld [vmem:[%s7 + $0xf0] sm:$0xff]
    %v3439 = vld [vmem:[%s7 + $0xf8] sm:$0xff]
    %v3440 = vld [vmem:[%s14] sm:$0xff]
    %v3441 = vld [vmem:[%s14 + $0x8] sm:$0xff]
    %v3442 = vld [vmem:[%s14 + $0x10] sm:$0xff]
    %v3443 = vld [vmem:[%s14 + $0x18] sm:$0xff]
    %v3444 = vld [vmem:[%s14 + $0x20] sm:$0xff]
    %v3445 = vld [vmem:[%s14 + $0x28] sm:$0xff]
    %v3446 = vld [vmem:[%s14 + $0x30] sm:$0xff]
    %v3447 = vld [vmem:[%s14 + $0x38] sm:$0xff]
    %v3448 = vld [vmem:[%s14 + $0x40] sm:$0xff]
    %v3449 = vld [vmem:[%s14 + $0x48] sm:$0xff]
    %v3450 = vld [vmem:[%s14 + $0x50] sm:$0xff]
    %v3451 = vld [vmem:[%s14 + $0x58] sm:$0xff]
    %v3452 = vld [vmem:[%s14 + $0x60] sm:$0xff]
    %v3453 = vld [vmem:[%s14 + $0x68] sm:$0xff]
    %v3454 = vld [vmem:[%s14 + $0x70] sm:$0xff]
    %v3455 = vld [vmem:[%s14 + $0x78] sm:$0xff]
    %v3456 = vld [vmem:[%s14 + $0x80] sm:$0xff]
    %v3457 = vld [vmem:[%s14 + $0x88] sm:$0xff]
    %v3458 = vld [vmem:[%s14 + $0x90] sm:$0xff]
    %v3459 = vld [vmem:[%s14 + $0x98] sm:$0xff]
    %v3460 = vld [vmem:[%s14 + $0xa0] sm:$0xff]
    %v3461 = vld [vmem:[%s14 + $0xa8] sm:$0xff]
    %v3462 = vld [vmem:[%s14 + $0xb0] sm:$0xff]
    %v3463 = vld [vmem:[%s14 + $0xb8] sm:$0xff]
    %v3464 = vld [vmem:[%s14 + $0xc0] sm:$0xff]
    %v3465 = vld [vmem:[%s14 + $0xc8] sm:$0xff]
    %v3466 = vld [vmem:[%s14 + $0xd0] sm:$0xff]
    %v3467 = vld [vmem:[%s14 + $0xd8] sm:$0xff]
    %v3468 = vld [vmem:[%s14 + $0xe0] sm:$0xff]
    %v3469 = vld [vmem:[%s14 + $0xe8] sm:$0xff]
    %v3470 = vld [vmem:[%s14 + $0xf0] sm:$0xff]
    %v3471 = vld [vmem:[%s14 + $0xf8] sm:$0xff]
    %v3472 = vld [vmem:[%s14 + $0x100] sm:$0xff]
    %v3473 = vld [vmem:[%s14 + $0x108] sm:$0xff]
    %v3474 = vld [vmem:[%s14 + $0x110] sm:$0xff]
    %v3475 = vld [vmem:[%s14 + $0x118] sm:$0xff]
    %v3476 = vld [vmem:[%s14 + $0x120] sm:$0xff]
    %v3477 = vld [vmem:[%s14 + $0x128] sm:$0xff]
    %v3478 = vld [vmem:[%s14 + $0x130] sm:$0xff]
    %v3479 = vld [vmem:[%s14 + $0x138] sm:$0xff]
    %v3480 = vld [vmem:[%s14 + $0x140] sm:$0xff]
    %v3481 = vld [vmem:[%s14 + $0x148] sm:$0xff]
    %v3482 = vld [vmem:[%s14 + $0x150] sm:$0xff]
    %v3483 = vld [vmem:[%s14 + $0x158] sm:$0xff]
    %v3484 = vld [vmem:[%s14 + $0x160] sm:$0xff]
    %v3485 = vld [vmem:[%s14 + $0x168] sm:$0xff]
    %v3486 = vld [vmem:[%s14 + $0x170] sm:$0xff]
    %v3487 = vld [vmem:[%s14 + $0x178] sm:$0xff]
    %v3488 = vld [vmem:[%s14 + $0x180] sm:$0xff]
    %v3489 = vld [vmem:[%s14 + $0x188] sm:$0xff]
    %v3490 = vld [vmem:[%s14 + $0x190] sm:$0xff]
    %v3491 = vld [vmem:[%s14 + $0x198] sm:$0xff]
    %v3492 = vld [vmem:[%s14 + $0x1a0] sm:$0xff]
    %v3493 = vld [vmem:[%s14 + $0x1a8] sm:$0xff]
    %v3494 = vld [vmem:[%s14 + $0x1b0] sm:$0xff]
    %v3495 = vld [vmem:[%s14 + $0x1b8] sm:$0xff]
    %v3496 = vld [vmem:[%s14 + $0x1c0] sm:$0xff]
    %v3497 = vld [vmem:[%s14 + $0x1c8] sm:$0xff]
    %v3498 = vld [vmem:[%s14 + $0x1d0] sm:$0xff]
    %v3499 = vld [vmem:[%s14 + $0x1d8] sm:$0xff]
    %v3500 = vld [vmem:[%s14 + $0x1e0] sm:$0xff]
    %v3501 = vld [vmem:[%s14 + $0x1e8] sm:$0xff]
    %v3502 = vld [vmem:[%s14 + $0x1f0] sm:$0xff]
    %v3503 = vld [vmem:[%s14 + $0x1f8] sm:$0xff]
    %v3504 = vld [vmem:[%s14 + $0x200] sm:$0xff]
    %v3505 = vld [vmem:[%s14 + $0x208] sm:$0xff]
    %v3506 = vld [vmem:[%s14 + $0x210] sm:$0xff]
    %v3507 = vld [vmem:[%s14 + $0x218] sm:$0xff]
    %v3508 = vld [vmem:[%s14 + $0x220] sm:$0xff]
    %v3509 = vld [vmem:[%s14 + $0x228] sm:$0xff]
    %v3510 = vld [vmem:[%s14 + $0x230] sm:$0xff]
    %v3511 = vld [vmem:[%s14 + $0x238] sm:$0xff]
    %v3512 = vld [vmem:[%s14 + $0x240] sm:$0xff]
    %v3513 = vld [vmem:[%s14 + $0x248] sm:$0xff]
    %v3514 = vld [vmem:[%s14 + $0x250] sm:$0xff]
    %v3515 = vld [vmem:[%s14 + $0x258] sm:$0xff]
    %v3516 = vld [vmem:[%s14 + $0x260] sm:$0xff]
    %v3517 = vld [vmem:[%s14 + $0x268] sm:$0xff]
    %v3518 = vld [vmem:[%s14 + $0x270] sm:$0xff]
    %v3519 = vld [vmem:[%s14 + $0x278] sm:$0xff]
    %v3520 = vld [vmem:[%s14 + $0x280] sm:$0xff]
    %v3521 = vld [vmem:[%s14 + $0x288] sm:$0xff]
    %v3522 = vld [vmem:[%s14 + $0x290] sm:$0xff]
    %v3523 = vld [vmem:[%s14 + $0x298] sm:$0xff]
    %v3524 = vld [vmem:[%s14 + $0x2a0] sm:$0xff]
    %v3525 = vld [vmem:[%s14 + $0x2a8] sm:$0xff]
    %v3526 = vld [vmem:[%s14 + $0x2b0] sm:$0xff]
    %v3527 = vld [vmem:[%s14 + $0x2b8] sm:$0xff]
    %v3528 = vld [vmem:[%s14 + $0x2c0] sm:$0xff]
    %v3529 = vld [vmem:[%s14 + $0x2c8] sm:$0xff]
    %v3530 = vld [vmem:[%s14 + $0x2d0] sm:$0xff]
    %v3531 = vld [vmem:[%s14 + $0x2d8] sm:$0xff]
    %v3532 = vld [vmem:[%s14 + $0x2e0] sm:$0xff]
    %v3533 = vld [vmem:[%s14 + $0x2e8] sm:$0xff]
    %v3534 = vld [vmem:[%s14 + $0x2f0] sm:$0xff]
    %v3535 = vld [vmem:[%s14 + $0x2f8] sm:$0xff]
    %v3536 = vld [vmem:[%s14 + $0x300] sm:$0xff]
    %v3537 = vld [vmem:[%s14 + $0x308] sm:$0xff]
    %v3538 = vld [vmem:[%s14 + $0x310] sm:$0xff]
    %v3539 = vld [vmem:[%s14 + $0x318] sm:$0xff]
    %v3540 = vld [vmem:[%s14 + $0x320] sm:$0xff]
    %v3541 = vld [vmem:[%s14 + $0x328] sm:$0xff]
    %v3542 = vld [vmem:[%s14 + $0x330] sm:$0xff]
    %v3543 = vld [vmem:[%s14 + $0x338] sm:$0xff]
    %v3544 = vld [vmem:[%s14 + $0x340] sm:$0xff]
    %v3545 = vld [vmem:[%s14 + $0x348] sm:$0xff]
    %v3546 = vld [vmem:[%s14 + $0x350] sm:$0xff]
    %v3547 = vld [vmem:[%s14 + $0x358] sm:$0xff]
    %v3548 = vld [vmem:[%s14 + $0x360] sm:$0xff]
    %v3549 = vld [vmem:[%s14 + $0x368] sm:$0xff]
    %v3550 = vld [vmem:[%s14 + $0x370] sm:$0xff]
    %v3551 = vld [vmem:[%s14 + $0x378] sm:$0xff]
    %v3552 = vld [vmem:[%s14 + $0x380] sm:$0xff]
    %v3553 = vld [vmem:[%s14 + $0x388] sm:$0xff]
    %v3554 = vld [vmem:[%s14 + $0x390] sm:$0xff]
    %v3555 = vld [vmem:[%s14 + $0x398] sm:$0xff]
    %v3556 = vld [vmem:[%s14 + $0x3a0] sm:$0xff]
    %v3557 = vld [vmem:[%s14 + $0x3a8] sm:$0xff]
    %v3558 = vld [vmem:[%s14 + $0x3b0] sm:$0xff]
    %v3559 = vld [vmem:[%s14 + $0x3b8] sm:$0xff]
    %v3560 = vld [vmem:[%s14 + $0x3c0] sm:$0xff]
    %v3561 = vld [vmem:[%s14 + $0x3c8] sm:$0xff]
    %v3562 = vld [vmem:[%s14 + $0x3d0] sm:$0xff]
    %v3563 = vld [vmem:[%s14 + $0x3d8] sm:$0xff]
    %v3564 = vld [vmem:[%s14 + $0x3e0] sm:$0xff]
    %vm3565 = vcmask 850944
    %v3567 = vsel %vm3565, %v3415, 0
    %v3570 = vsel %vm3565, %v3423, 0
    %v3573 = vsel %vm3565, %v3431, 0
    %v3576 = vsel %vm3565, %v3439, 0
    %3578 = vmatprep.subr.mxu0 0.0
    %v3579 = vand.u32 %v3455, 4294901760
    %3580 = vmatpush1.msra.mxu0 %v3579
    %3581 = vmatprep.subr.mxu0 0.0
    %v3582 = vand.u32 %v3454, 4294901760
    %3583 = vmatpush1.msra.mxu0 %v3582
    %3584 = vmatprep.subr.mxu0 0.0
    %v3585 = vand.u32 %v3453, 4294901760
    %3586 = vmatpush1.msra.mxu0 %v3585
    %3587 = vmatprep.subr.mxu0 0.0
    %v3588 = vand.u32 %v3452, 4294901760
    %3589 = vmatpush1.msra.mxu0 %v3588
    %3590 = vmatprep.subr.mxu0 0.0
    %v3591 = vand.u32 %v3451, 4294901760
    %3592 = vmatpush1.msra.mxu0 %v3591
    %3593 = vmatprep.subr.mxu0 0.0
    %v3594 = vand.u32 %v3450, 4294901760
    %3595 = vmatpush1.msra.mxu0 %v3594
    %3596 = vmatprep.subr.mxu0 0.0
    %v3597 = vand.u32 %v3449, 4294901760
    %3598 = vmatpush1.msra.mxu0 %v3597
    %3599 = vmatprep.subr.mxu0 0.0
    %v3600 = vand.u32 %v3448, 4294901760
    %3601 = vmatpush1.msra.mxu0 %v3600
    %3602 = vmatprep.subr.mxu0 0.0
    %v3603 = vand.u32 %v3447, 4294901760
    %3604 = vmatpush1.msra.mxu0 %v3603
    %3605 = vmatprep.subr.mxu0 0.0
    %v3606 = vand.u32 %v3446, 4294901760
    %3607 = vmatpush1.msra.mxu0 %v3606
    %3608 = vmatprep.subr.mxu0 0.0
    %v3609 = vand.u32 %v3445, 4294901760
    %3610 = vmatpush1.msra.mxu0 %v3609
    %3611 = vmatprep.subr.mxu0 0.0
    %v3612 = vand.u32 %v3444, 4294901760
    %3613 = vmatpush1.msra.mxu0 %v3612
    %3614 = vmatprep.subr.mxu0 0.0
    %v3615 = vand.u32 %v3443, 4294901760
    %3616 = vmatpush1.msra.mxu0 %v3615
    %3617 = vmatprep.subr.mxu0 0.0
    %v3618 = vand.u32 %v3442, 4294901760
    %3619 = vmatpush1.msra.mxu0 %v3618
    %3620 = vmatprep.subr.mxu0 0.0
    %v3621 = vand.u32 %v3441, 4294901760
    %3622 = vmatpush1.msra.mxu0 %v3621
    %3623 = vmatprep.subr.mxu0 0.0
    %v3624 = vand.u32 %v3440, 4294901760
    %3625 = vmatpush1.msra.mxu0 %v3624
    %3626 = vmatprep.subr.mxu0 0.0
    %v3627 = vand.u32 %v3471, 4294901760
    %3628 = vmatpush2.msra.mxu0 %v3627
    %3629 = vmatprep.subr.mxu0 0.0
    %v3630 = vand.u32 %v3470, 4294901760
    %3631 = vmatpush2.msra.mxu0 %v3630
    %3632 = vmatprep.subr.mxu0 0.0
    %v3633 = vand.u32 %v3469, 4294901760
    %3634 = vmatpush2.msra.mxu0 %v3633
    %3635 = vmatprep.subr.mxu0 0.0
    %v3636 = vand.u32 %v3468, 4294901760
    %3637 = vmatpush2.msra.mxu0 %v3636
    %3638 = vmatprep.subr.mxu0 0.0
    %v3639 = vand.u32 %v3467, 4294901760
    %3640 = vmatpush2.msra.mxu0 %v3639
    %3641 = vmatprep.subr.mxu0 0.0
    %v3642 = vand.u32 %v3466, 4294901760
    %3643 = vmatpush2.msra.mxu0 %v3642
    %3644 = vmatprep.subr.mxu0 0.0
    %v3645 = vand.u32 %v3465, 4294901760
    %3646 = vmatpush2.msra.mxu0 %v3645
    %3647 = vmatprep.subr.mxu0 0.0
    %v3648 = vand.u32 %v3464, 4294901760
    %3649 = vmatpush2.msra.mxu0 %v3648
    %3650 = vmatprep.subr.mxu0 0.0
    %v3651 = vand.u32 %v3463, 4294901760
    %3652 = vmatpush2.msra.mxu0 %v3651
    %3653 = vmatprep.subr.mxu0 0.0
    %v3654 = vand.u32 %v3462, 4294901760
    %3655 = vmatpush2.msra.mxu0 %v3654
    %3656 = vmatprep.subr.mxu0 0.0
    %v3657 = vand.u32 %v3461, 4294901760
    %3658 = vmatpush2.msra.mxu0 %v3657
    %3659 = vmatprep.subr.mxu0 0.0
    %v3660 = vand.u32 %v3460, 4294901760
    %3661 = vmatpush2.msra.mxu0 %v3660
    %3662 = vmatprep.subr.mxu0 0.0
    %v3663 = vand.u32 %v3459, 4294901760
    %3664 = vmatpush2.msra.mxu0 %v3663
    %3665 = vmatprep.subr.mxu0 0.0
    %v3666 = vand.u32 %v3458, 4294901760
    %3667 = vmatpush2.msra.mxu0 %v3666
    %3668 = vmatprep.subr.mxu0 0.0
    %v3669 = vand.u32 %v3457, 4294901760
    %3670 = vmatpush2.msra.mxu0 %v3669
    %3671 = vmatprep.subr.mxu0 0.0
    %v3672 = vand.u32 %v3456, 4294901760
    %3673 = vmatpush2.msra.mxu0 %v3672
    %v3674 = vand.u32 %v3409, 4294901760
    %v3675 = vsub.f32 %v3409, %v3674
    %v3676 = vand.u32 %v3675, 4294901760
    %v3677 = vsub.f32 %v3675, %v3676
    %v3678 = vand.u32 %v3677, 4294901760
    %3679 = vmatprep.mubr.f32.mxu0 %v3678
    %v3680 = vand.u32 %v3408, 4294901760
    %v3681 = vsub.f32 %v3408, %v3680
    %v3682 = vand.u32 %v3681, 4294901760
    %v3683 = vsub.f32 %v3681, %v3682
    %v3684 = vand.u32 %v3683, 4294901760
    %3685 = vmatmul.mubr.f32.gmra.mxu0 %v3684
    %v3686 = vpop.f32.mrf.mxu0
    %v3687 = vadd.f32 0.0, %v3686
    %v3688 = vpop.f32.mrf.mxu0
    %v3689 = vand.u32 %v3417, 4294901760
    %v3690 = vsub.f32 %v3417, %v3689
    %v3691 = vand.u32 %v3690, 4294901760
    %v3692 = vsub.f32 %v3690, %v3691
    %v3693 = vand.u32 %v3692, 4294901760
    %3694 = vmatprep.mubr.f32.mxu0 %v3693
    %v3695 = vand.u32 %v3416, 4294901760
    %v3696 = vsub.f32 %v3416, %v3695
    %v3697 = vand.u32 %v3696, 4294901760
    %v3698 = vsub.f32 %v3696, %v3697
    %v3699 = vand.u32 %v3698, 4294901760
    %3700 = vmatmul.mubr.f32.gmra.mxu0 %v3699
    %v3701 = vpop.f32.mrf.mxu0
    %v3702 = vadd.f32 0.0, %v3701
    %v3703 = vpop.f32.mrf.mxu0
    %v3704 = vand.u32 %v3425, 4294901760
    %v3705 = vsub.f32 %v3425, %v3704
    %v3706 = vand.u32 %v3705, 4294901760
    %v3707 = vsub.f32 %v3705, %v3706
    %v3708 = vand.u32 %v3707, 4294901760
    %3709 = vmatprep.mubr.f32.mxu0 %v3708
    %v3710 = vand.u32 %v3424, 4294901760
    %v3711 = vsub.f32 %v3424, %v3710
    %v3712 = vand.u32 %v3711, 4294901760
    %v3713 = vsub.f32 %v3711, %v3712
    %v3714 = vand.u32 %v3713, 4294901760
    %3715 = vmatmul.mubr.f32.gmra.mxu0 %v3714
    %v3716 = vpop.f32.mrf.mxu0
    %v3717 = vadd.f32 0.0, %v3716
    %v3718 = vpop.f32.mrf.mxu0
    %v3719 = vand.u32 %v3433, 4294901760
    %v3720 = vsub.f32 %v3433, %v3719
    %v3721 = vand.u32 %v3720, 4294901760
    %v3722 = vsub.f32 %v3720, %v3721
    %v3723 = vand.u32 %v3722, 4294901760
    %3724 = vmatprep.mubr.f32.mxu0 %v3723
    %v3725 = vand.u32 %v3432, 4294901760
    %v3726 = vsub.f32 %v3432, %v3725
    %v3727 = vand.u32 %v3726, 4294901760
    %v3728 = vsub.f32 %v3726, %v3727
    %v3729 = vand.u32 %v3728, 4294901760
    %3730 = vmatmul.mubr.f32.gmra.mxu0 %v3729
    %v3731 = vpop.f32.mrf.mxu0
    %v3732 = vadd.f32 0.0, %v3731
    %v3733 = vpop.f32.mrf.mxu0
    %3734 = vdwg.mxu0
    %3735 = vmatprep.subr.mxu0 0.0
    %v3736 = vand.u32 %v3455, 4294901760
    %v3737 = vsub.f32 %v3455, %v3736
    %v3738 = vand.u32 %v3737, 4294901760
    %v3739 = vsub.f32 %v3737, %v3738
    %v3740 = vand.u32 %v3739, 4294901760
    %3741 = vmatpush1.msra.mxu0 %v3740
    %3742 = vmatprep.subr.mxu0 0.0
    %v3743 = vand.u32 %v3454, 4294901760
    %v3744 = vsub.f32 %v3454, %v3743
    %v3745 = vand.u32 %v3744, 4294901760
    %v3746 = vsub.f32 %v3744, %v3745
    %v3747 = vand.u32 %v3746, 4294901760
    %3748 = vmatpush1.msra.mxu0 %v3747
    %3749 = vmatprep.subr.mxu0 0.0
    %v3750 = vand.u32 %v3453, 4294901760
    %v3751 = vsub.f32 %v3453, %v3750
    %v3752 = vand.u32 %v3751, 4294901760
    %v3753 = vsub.f32 %v3751, %v3752
    %v3754 = vand.u32 %v3753, 4294901760
    %3755 = vmatpush1.msra.mxu0 %v3754
    %3756 = vmatprep.subr.mxu0 0.0
    %v3757 = vand.u32 %v3452, 4294901760
    %v3758 = vsub.f32 %v3452, %v3757
    %v3759 = vand.u32 %v3758, 4294901760
    %v3760 = vsub.f32 %v3758, %v3759
    %v3761 = vand.u32 %v3760, 4294901760
    %3762 = vmatpush1.msra.mxu0 %v3761
    %3763 = vmatprep.subr.mxu0 0.0
    %v3764 = vand.u32 %v3451, 4294901760
    %v3765 = vsub.f32 %v3451, %v3764
    %v3766 = vand.u32 %v3765, 4294901760
    %v3767 = vsub.f32 %v3765, %v3766
    %v3768 = vand.u32 %v3767, 4294901760
    %3769 = vmatpush1.msra.mxu0 %v3768
    %3770 = vmatprep.subr.mxu0 0.0
    %v3771 = vand.u32 %v3450, 4294901760
    %v3772 = vsub.f32 %v3450, %v3771
    %v3773 = vand.u32 %v3772, 4294901760
    %v3774 = vsub.f32 %v3772, %v3773
    %v3775 = vand.u32 %v3774, 4294901760
    %3776 = vmatpush1.msra.mxu0 %v3775
    %3777 = vmatprep.subr.mxu0 0.0
    %v3778 = vand.u32 %v3449, 4294901760
    %v3779 = vsub.f32 %v3449, %v3778
    %v3780 = vand.u32 %v3779, 4294901760
    %v3781 = vsub.f32 %v3779, %v3780
    %v3782 = vand.u32 %v3781, 4294901760
    %3783 = vmatpush1.msra.mxu0 %v3782
    %3784 = vmatprep.subr.mxu0 0.0
    %v3785 = vand.u32 %v3448, 4294901760
    %v3786 = vsub.f32 %v3448, %v3785
    %v3787 = vand.u32 %v3786, 4294901760
    %v3788 = vsub.f32 %v3786, %v3787
    %v3789 = vand.u32 %v3788, 4294901760
    %3790 = vmatpush1.msra.mxu0 %v3789
    %3791 = vmatprep.subr.mxu0 0.0
    %v3792 = vand.u32 %v3447, 4294901760
    %v3793 = vsub.f32 %v3447, %v3792
    %v3794 = vand.u32 %v3793, 4294901760
    %v3795 = vsub.f32 %v3793, %v3794
    %v3796 = vand.u32 %v3795, 4294901760
    %3797 = vmatpush1.msra.mxu0 %v3796
    %3798 = vmatprep.subr.mxu0 0.0
    %v3799 = vand.u32 %v3446, 4294901760
    %v3800 = vsub.f32 %v3446, %v3799
    %v3801 = vand.u32 %v3800, 4294901760
    %v3802 = vsub.f32 %v3800, %v3801
    %v3803 = vand.u32 %v3802, 4294901760
    %3804 = vmatpush1.msra.mxu0 %v3803
    %3805 = vmatprep.subr.mxu0 0.0
    %v3806 = vand.u32 %v3445, 4294901760
    %v3807 = vsub.f32 %v3445, %v3806
    %v3808 = vand.u32 %v3807, 4294901760
    %v3809 = vsub.f32 %v3807, %v3808
    %v3810 = vand.u32 %v3809, 4294901760
    %3811 = vmatpush1.msra.mxu0 %v3810
    %3812 = vmatprep.subr.mxu0 0.0
    %v3813 = vand.u32 %v3444, 4294901760
    %v3814 = vsub.f32 %v3444, %v3813
    %v3815 = vand.u32 %v3814, 4294901760
    %v3816 = vsub.f32 %v3814, %v3815
    %v3817 = vand.u32 %v3816, 4294901760
    %3818 = vmatpush1.msra.mxu0 %v3817
    %3819 = vmatprep.subr.mxu0 0.0
    %v3820 = vand.u32 %v3443, 4294901760
    %v3821 = vsub.f32 %v3443, %v3820
    %v3822 = vand.u32 %v3821, 4294901760
    %v3823 = vsub.f32 %v3821, %v3822
    %v3824 = vand.u32 %v3823, 4294901760
    %3825 = vmatpush1.msra.mxu0 %v3824
    %3826 = vmatprep.subr.mxu0 0.0
    %v3827 = vand.u32 %v3442, 4294901760
    %v3828 = vsub.f32 %v3442, %v3827
    %v3829 = vand.u32 %v3828, 4294901760
    %v3830 = vsub.f32 %v3828, %v3829
    %v3831 = vand.u32 %v3830, 4294901760
    %3832 = vmatpush1.msra.mxu0 %v3831
    %3833 = vmatprep.subr.mxu0 0.0
    %v3834 = vand.u32 %v3441, 4294901760
    %v3835 = vsub.f32 %v3441, %v3834
    %v3836 = vand.u32 %v3835, 4294901760
    %v3837 = vsub.f32 %v3835, %v3836
    %v3838 = vand.u32 %v3837, 4294901760
    %3839 = vmatpush1.msra.mxu0 %v3838
    %3840 = vmatprep.subr.mxu0 0.0
    %v3841 = vand.u32 %v3440, 4294901760
    %v3842 = vsub.f32 %v3440, %v3841
    %v3843 = vand.u32 %v3842, 4294901760
    %v3844 = vsub.f32 %v3842, %v3843
    %v3845 = vand.u32 %v3844, 4294901760
    %3846 = vmatpush1.msra.mxu0 %v3845
    %3847 = vmatprep.subr.mxu0 0.0
    %v3848 = vand.u32 %v3471, 4294901760
    %v3849 = vsub.f32 %v3471, %v3848
    %v3850 = vand.u32 %v3849, 4294901760
    %v3851 = vsub.f32 %v3849, %v3850
    %v3852 = vand.u32 %v3851, 4294901760
    %3853 = vmatpush2.msra.mxu0 %v3852
    %3854 = vmatprep.subr.mxu0 0.0
    %v3855 = vand.u32 %v3470, 4294901760
    %v3856 = vsub.f32 %v3470, %v3855
    %v3857 = vand.u32 %v3856, 4294901760
    %v3858 = vsub.f32 %v3856, %v3857
    %v3859 = vand.u32 %v3858, 4294901760
    %3860 = vmatpush2.msra.mxu0 %v3859
    %3861 = vmatprep.subr.mxu0 0.0
    %v3862 = vand.u32 %v3469, 4294901760
    %v3863 = vsub.f32 %v3469, %v3862
    %v3864 = vand.u32 %v3863, 4294901760
    %v3865 = vsub.f32 %v3863, %v3864
    %v3866 = vand.u32 %v3865, 4294901760
    %3867 = vmatpush2.msra.mxu0 %v3866
    %3868 = vmatprep.subr.mxu0 0.0
    %v3869 = vand.u32 %v3468, 4294901760
    %v3870 = vsub.f32 %v3468, %v3869
    %v3871 = vand.u32 %v3870, 4294901760
    %v3872 = vsub.f32 %v3870, %v3871
    %v3873 = vand.u32 %v3872, 4294901760
    %3874 = vmatpush2.msra.mxu0 %v3873
    %3875 = vmatprep.subr.mxu0 0.0
    %v3876 = vand.u32 %v3467, 4294901760
    %v3877 = vsub.f32 %v3467, %v3876
    %v3878 = vand.u32 %v3877, 4294901760
    %v3879 = vsub.f32 %v3877, %v3878
    %v3880 = vand.u32 %v3879, 4294901760
    %3881 = vmatpush2.msra.mxu0 %v3880
    %3882 = vmatprep.subr.mxu0 0.0
    %v3883 = vand.u32 %v3466, 4294901760
    %v3884 = vsub.f32 %v3466, %v3883
    %v3885 = vand.u32 %v3884, 4294901760
    %v3886 = vsub.f32 %v3884, %v3885
    %v3887 = vand.u32 %v3886, 4294901760
    %3888 = vmatpush2.msra.mxu0 %v3887
    %3889 = vmatprep.subr.mxu0 0.0
    %v3890 = vand.u32 %v3465, 4294901760
    %v3891 = vsub.f32 %v3465, %v3890
    %v3892 = vand.u32 %v3891, 4294901760
    %v3893 = vsub.f32 %v3891, %v3892
    %v3894 = vand.u32 %v3893, 4294901760
    %3895 = vmatpush2.msra.mxu0 %v3894
    %3896 = vmatprep.subr.mxu0 0.0
    %v3897 = vand.u32 %v3464, 4294901760
    %v3898 = vsub.f32 %v3464, %v3897
    %v3899 = vand.u32 %v3898, 4294901760
    %v3900 = vsub.f32 %v3898, %v3899
    %v3901 = vand.u32 %v3900, 4294901760
    %3902 = vmatpush2.msra.mxu0 %v3901
    %3903 = vmatprep.subr.mxu0 0.0
    %v3904 = vand.u32 %v3463, 4294901760
    %v3905 = vsub.f32 %v3463, %v3904
    %v3906 = vand.u32 %v3905, 4294901760
    %v3907 = vsub.f32 %v3905, %v3906
    %v3908 = vand.u32 %v3907, 4294901760
    %3909 = vmatpush2.msra.mxu0 %v3908
    %3910 = vmatprep.subr.mxu0 0.0
    %v3911 = vand.u32 %v3462, 4294901760
    %v3912 = vsub.f32 %v3462, %v3911
    %v3913 = vand.u32 %v3912, 4294901760
    %v3914 = vsub.f32 %v3912, %v3913
    %v3915 = vand.u32 %v3914, 4294901760
    %3916 = vmatpush2.msra.mxu0 %v3915
    %3917 = vmatprep.subr.mxu0 0.0
    %v3918 = vand.u32 %v3461, 4294901760
    %v3919 = vsub.f32 %v3461, %v3918
    %v3920 = vand.u32 %v3919, 4294901760
    %v3921 = vsub.f32 %v3919, %v3920
    %v3922 = vand.u32 %v3921, 4294901760
    %3923 = vmatpush2.msra.mxu0 %v3922
    %3924 = vmatprep.subr.mxu0 0.0
    %v3925 = vand.u32 %v3460, 4294901760
    %v3926 = vsub.f32 %v3460, %v3925
    %v3927 = vand.u32 %v3926, 4294901760
    %v3928 = vsub.f32 %v3926, %v3927
    %v3929 = vand.u32 %v3928, 4294901760
    %3930 = vmatpush2.msra.mxu0 %v3929
    %3931 = vmatprep.subr.mxu0 0.0
    %v3932 = vand.u32 %v3459, 4294901760
    %v3933 = vsub.f32 %v3459, %v3932
    %v3934 = vand.u32 %v3933, 4294901760
    %v3935 = vsub.f32 %v3933, %v3934
    %v3936 = vand.u32 %v3935, 4294901760
    %3937 = vmatpush2.msra.mxu0 %v3936
    %3938 = vmatprep.subr.mxu0 0.0
    %v3939 = vand.u32 %v3458, 4294901760
    %v3940 = vsub.f32 %v3458, %v3939
    %v3941 = vand.u32 %v3940, 4294901760
    %v3942 = vsub.f32 %v3940, %v3941
    %v3943 = vand.u32 %v3942, 4294901760
    %3944 = vmatpush2.msra.mxu0 %v3943
    %3945 = vmatprep.subr.mxu0 0.0
    %v3946 = vand.u32 %v3457, 4294901760
    %v3947 = vsub.f32 %v3457, %v3946
    %v3948 = vand.u32 %v3947, 4294901760
    %v3949 = vsub.f32 %v3947, %v3948
    %v3950 = vand.u32 %v3949, 4294901760
    %3951 = vmatpush2.msra.mxu0 %v3950
    %3952 = vmatprep.subr.mxu0 0.0
    %v3953 = vand.u32 %v3456, 4294901760
    %v3954 = vsub.f32 %v3456, %v3953
    %v3955 = vand.u32 %v3954, 4294901760
    %v3956 = vsub.f32 %v3954, %v3955
    %v3957 = vand.u32 %v3956, 4294901760
    %3958 = vmatpush2.msra.mxu0 %v3957
    %v3959 = vand.u32 %v3409, 4294901760
    %3960 = vmatprep.mubr.f32.mxu0 %v3959
    %v3961 = vand.u32 %v3408, 4294901760
    %3962 = vmatmul.mubr.f32.gmra.mxu0 %v3961
    %v3963 = vpop.f32.mrf.mxu0
    %v3964 = vadd.f32 %v3687, %v3963
    %v3965 = vpop.f32.mrf.mxu0
    %v3966 = vand.u32 %v3417, 4294901760
    %3967 = vmatprep.mubr.f32.mxu0 %v3966
    %v3968 = vand.u32 %v3416, 4294901760
    %3969 = vmatmul.mubr.f32.gmra.mxu0 %v3968
    %v3970 = vpop.f32.mrf.mxu0
    %v3971 = vadd.f32 %v3702, %v3970
    %v3972 = vpop.f32.mrf.mxu0
    %v3973 = vand.u32 %v3425, 4294901760
    %3974 = vmatprep.mubr.f32.mxu0 %v3973
    %v3975 = vand.u32 %v3424, 4294901760
    %3976 = vmatmul.mubr.f32.gmra.mxu0 %v3975
    %v3977 = vpop.f32.mrf.mxu0
    %v3978 = vadd.f32 %v3717, %v3977
    %v3979 = vpop.f32.mrf.mxu0
    %v3980 = vand.u32 %v3433, 4294901760
    %3981 = vmatprep.mubr.f32.mxu0 %v3980
    %v3982 = vand.u32 %v3432, 4294901760
    %3983 = vmatmul.mubr.f32.gmra.mxu0 %v3982
    %v3984 = vpop.f32.mrf.mxu0
    %v3985 = vadd.f32 %v3732, %v3984
    %v3986 = vpop.f32.mrf.mxu0
    %3987 = vdwg.mxu0
    %3988 = vmatprep.subr.mxu0 0.0
    %v3989 = vand.u32 %v3455, 4294901760
    %v3990 = vsub.f32 %v3455, %v3989
    %3991 = vmatpush1.msra.mxu0 %v3990
    %3992 = vmatprep.subr.mxu0 0.0
    %v3993 = vand.u32 %v3454, 4294901760
    %v3994 = vsub.f32 %v3454, %v3993
    %3995 = vmatpush1.msra.mxu0 %v3994
    %3996 = vmatprep.subr.mxu0 0.0
    %v3997 = vand.u32 %v3453, 4294901760
    %v3998 = vsub.f32 %v3453, %v3997
    %3999 = vmatpush1.msra.mxu0 %v3998
    %4000 = vmatprep.subr.mxu0 0.0
    %v4001 = vand.u32 %v3452, 4294901760
    %v4002 = vsub.f32 %v3452, %v4001
    %4003 = vmatpush1.msra.mxu0 %v4002
    %4004 = vmatprep.subr.mxu0 0.0
    %v4005 = vand.u32 %v3451, 4294901760
    %v4006 = vsub.f32 %v3451, %v4005
    %4007 = vmatpush1.msra.mxu0 %v4006
    %4008 = vmatprep.subr.mxu0 0.0
    %v4009 = vand.u32 %v3450, 4294901760
    %v4010 = vsub.f32 %v3450, %v4009
    %4011 = vmatpush1.msra.mxu0 %v4010
    %4012 = vmatprep.subr.mxu0 0.0
    %v4013 = vand.u32 %v3449, 4294901760
    %v4014 = vsub.f32 %v3449, %v4013
    %4015 = vmatpush1.msra.mxu0 %v4014
    %4016 = vmatprep.subr.mxu0 0.0
    %v4017 = vand.u32 %v3448, 4294901760
    %v4018 = vsub.f32 %v3448, %v4017
    %4019 = vmatpush1.msra.mxu0 %v4018
    %4020 = vmatprep.subr.mxu0 0.0
    %v4021 = vand.u32 %v3447, 4294901760
    %v4022 = vsub.f32 %v3447, %v4021
    %4023 = vmatpush1.msra.mxu0 %v4022
    %4024 = vmatprep.subr.mxu0 0.0
    %v4025 = vand.u32 %v3446, 4294901760
    %v4026 = vsub.f32 %v3446, %v4025
    %4027 = vmatpush1.msra.mxu0 %v4026
    %4028 = vmatprep.subr.mxu0 0.0
    %v4029 = vand.u32 %v3445, 4294901760
    %v4030 = vsub.f32 %v3445, %v4029
    %4031 = vmatpush1.msra.mxu0 %v4030
    %4032 = vmatprep.subr.mxu0 0.0
    %v4033 = vand.u32 %v3444, 4294901760
    %v4034 = vsub.f32 %v3444, %v4033
    %4035 = vmatpush1.msra.mxu0 %v4034
    %4036 = vmatprep.subr.mxu0 0.0
    %v4037 = vand.u32 %v3443, 4294901760
    %v4038 = vsub.f32 %v3443, %v4037
    %4039 = vmatpush1.msra.mxu0 %v4038
    %4040 = vmatprep.subr.mxu0 0.0
    %v4041 = vand.u32 %v3442, 4294901760
    %v4042 = vsub.f32 %v3442, %v4041
    %4043 = vmatpush1.msra.mxu0 %v4042
    %4044 = vmatprep.subr.mxu0 0.0
    %v4045 = vand.u32 %v3441, 4294901760
    %v4046 = vsub.f32 %v3441, %v4045
    %4047 = vmatpush1.msra.mxu0 %v4046
    %4048 = vmatprep.subr.mxu0 0.0
    %v4049 = vand.u32 %v3440, 4294901760
    %v4050 = vsub.f32 %v3440, %v4049
    %4051 = vmatpush1.msra.mxu0 %v4050
    %4052 = vmatprep.subr.mxu0 0.0
    %v4053 = vand.u32 %v3471, 4294901760
    %v4054 = vsub.f32 %v3471, %v4053
    %4055 = vmatpush2.msra.mxu0 %v4054
    %4056 = vmatprep.subr.mxu0 0.0
    %v4057 = vand.u32 %v3470, 4294901760
    %v4058 = vsub.f32 %v3470, %v4057
    %4059 = vmatpush2.msra.mxu0 %v4058
    %4060 = vmatprep.subr.mxu0 0.0
    %v4061 = vand.u32 %v3469, 4294901760
    %v4062 = vsub.f32 %v3469, %v4061
    %4063 = vmatpush2.msra.mxu0 %v4062
    %4064 = vmatprep.subr.mxu0 0.0
    %v4065 = vand.u32 %v3468, 4294901760
    %v4066 = vsub.f32 %v3468, %v4065
    %4067 = vmatpush2.msra.mxu0 %v4066
    %4068 = vmatprep.subr.mxu0 0.0
    %v4069 = vand.u32 %v3467, 4294901760
    %v4070 = vsub.f32 %v3467, %v4069
    %4071 = vmatpush2.msra.mxu0 %v4070
    %4072 = vmatprep.subr.mxu0 0.0
    %v4073 = vand.u32 %v3466, 4294901760
    %v4074 = vsub.f32 %v3466, %v4073
    %4075 = vmatpush2.msra.mxu0 %v4074
    %4076 = vmatprep.subr.mxu0 0.0
    %v4077 = vand.u32 %v3465, 4294901760
    %v4078 = vsub.f32 %v3465, %v4077
    %4079 = vmatpush2.msra.mxu0 %v4078
    %4080 = vmatprep.subr.mxu0 0.0
    %v4081 = vand.u32 %v3464, 4294901760
    %v4082 = vsub.f32 %v3464, %v4081
    %4083 = vmatpush2.msra.mxu0 %v4082
    %4084 = vmatprep.subr.mxu0 0.0
    %v4085 = vand.u32 %v3463, 4294901760
    %v4086 = vsub.f32 %v3463, %v4085
    %4087 = vmatpush2.msra.mxu0 %v4086
    %4088 = vmatprep.subr.mxu0 0.0
    %v4089 = vand.u32 %v3462, 4294901760
    %v4090 = vsub.f32 %v3462, %v4089
    %4091 = vmatpush2.msra.mxu0 %v4090
    %4092 = vmatprep.subr.mxu0 0.0
    %v4093 = vand.u32 %v3461, 4294901760
    %v4094 = vsub.f32 %v3461, %v4093
    %4095 = vmatpush2.msra.mxu0 %v4094
    %4096 = vmatprep.subr.mxu0 0.0
    %v4097 = vand.u32 %v3460, 4294901760
    %v4098 = vsub.f32 %v3460, %v4097
    %4099 = vmatpush2.msra.mxu0 %v4098
    %4100 = vmatprep.subr.mxu0 0.0
    %v4101 = vand.u32 %v3459, 4294901760
    %v4102 = vsub.f32 %v3459, %v4101
    %4103 = vmatpush2.msra.mxu0 %v4102
    %4104 = vmatprep.subr.mxu0 0.0
    %v4105 = vand.u32 %v3458, 4294901760
    %v4106 = vsub.f32 %v3458, %v4105
    %4107 = vmatpush2.msra.mxu0 %v4106
    %4108 = vmatprep.subr.mxu0 0.0
    %v4109 = vand.u32 %v3457, 4294901760
    %v4110 = vsub.f32 %v3457, %v4109
    %4111 = vmatpush2.msra.mxu0 %v4110
    %4112 = vmatprep.subr.mxu0 0.0
    %v4113 = vand.u32 %v3456, 4294901760
    %v4114 = vsub.f32 %v3456, %v4113
    %4115 = vmatpush2.msra.mxu0 %v4114
    %v4116 = vand.u32 %v3409, 4294901760
    %v4117 = vsub.f32 %v3409, %v4116
    %4118 = vmatprep.mubr.f32.mxu0 %v4117
    %v4119 = vand.u32 %v3408, 4294901760
    %v4120 = vsub.f32 %v3408, %v4119
    %4121 = vmatmul.mubr.f32.gmra.mxu0 %v4120
    %v4122 = vpop.f32.mrf.mxu0
    %v4123 = vadd.f32 %v3964, %v4122
    %v4124 = vpop.f32.mrf.mxu0
    %v4125 = vand.u32 %v3417, 4294901760
    %v4126 = vsub.f32 %v3417, %v4125
    %4127 = vmatprep.mubr.f32.mxu0 %v4126
    %v4128 = vand.u32 %v3416, 4294901760
    %v4129 = vsub.f32 %v3416, %v4128
    %4130 = vmatmul.mubr.f32.gmra.mxu0 %v4129
    %v4131 = vpop.f32.mrf.mxu0
    %v4132 = vadd.f32 %v3971, %v4131
    %v4133 = vpop.f32.mrf.mxu0
    %v4134 = vand.u32 %v3425, 4294901760
    %v4135 = vsub.f32 %v3425, %v4134
    %4136 = vmatprep.mubr.f32.mxu0 %v4135
    %v4137 = vand.u32 %v3424, 4294901760
    %v4138 = vsub.f32 %v3424, %v4137
    %4139 = vmatmul.mubr.f32.gmra.mxu0 %v4138
    %v4140 = vpop.f32.mrf.mxu0
    %v4141 = vadd.f32 %v3978, %v4140
    %v4142 = vpop.f32.mrf.mxu0
    %v4143 = vand.u32 %v3433, 4294901760
    %v4144 = vsub.f32 %v3433, %v4143
    %4145 = vmatprep.mubr.f32.mxu0 %v4144
    %v4146 = vand.u32 %v3432, 4294901760
    %v4147 = vsub.f32 %v3432, %v4146
    %4148 = vmatmul.mubr.f32.gmra.mxu0 %v4147
    %v4149 = vpop.f32.mrf.mxu0
    %v4150 = vadd.f32 %v3985, %v4149
    %v4151 = vpop.f32.mrf.mxu0
    %4152 = vdwg.mxu0
    %4153 = vmatprep.subr.mxu0 0.0
    %v4154 = vand.u32 %v3455, 4294901760
    %4155 = vmatpush1.msra.mxu0 %v4154
    %4156 = vmatprep.subr.mxu0 0.0
    %v4157 = vand.u32 %v3454, 4294901760
    %4158 = vmatpush1.msra.mxu0 %v4157
    %4159 = vmatprep.subr.mxu0 0.0
    %v4160 = vand.u32 %v3453, 4294901760
    %4161 = vmatpush1.msra.mxu0 %v4160
    %4162 = vmatprep.subr.mxu0 0.0
    %v4163 = vand.u32 %v3452, 4294901760
    %4164 = vmatpush1.msra.mxu0 %v4163
    %4165 = vmatprep.subr.mxu0 0.0
    %v4166 = vand.u32 %v3451, 4294901760
    %4167 = vmatpush1.msra.mxu0 %v4166
    %4168 = vmatprep.subr.mxu0 0.0
    %v4169 = vand.u32 %v3450, 4294901760
    %4170 = vmatpush1.msra.mxu0 %v4169
    %4171 = vmatprep.subr.mxu0 0.0
    %v4172 = vand.u32 %v3449, 4294901760
    %4173 = vmatpush1.msra.mxu0 %v4172
    %4174 = vmatprep.subr.mxu0 0.0
    %v4175 = vand.u32 %v3448, 4294901760
    %4176 = vmatpush1.msra.mxu0 %v4175
    %4177 = vmatprep.subr.mxu0 0.0
    %v4178 = vand.u32 %v3447, 4294901760
    %4179 = vmatpush1.msra.mxu0 %v4178
    %4180 = vmatprep.subr.mxu0 0.0
    %v4181 = vand.u32 %v3446, 4294901760
    %4182 = vmatpush1.msra.mxu0 %v4181
    %4183 = vmatprep.subr.mxu0 0.0
    %v4184 = vand.u32 %v3445, 4294901760
    %4185 = vmatpush1.msra.mxu0 %v4184
    %4186 = vmatprep.subr.mxu0 0.0
    %v4187 = vand.u32 %v3444, 4294901760
    %4188 = vmatpush1.msra.mxu0 %v4187
    %4189 = vmatprep.subr.mxu0 0.0
    %v4190 = vand.u32 %v3443, 4294901760
    %4191 = vmatpush1.msra.mxu0 %v4190
    %4192 = vmatprep.subr.mxu0 0.0
    %v4193 = vand.u32 %v3442, 4294901760
    %4194 = vmatpush1.msra.mxu0 %v4193
    %4195 = vmatprep.subr.mxu0 0.0
    %v4196 = vand.u32 %v3441, 4294901760
    %4197 = vmatpush1.msra.mxu0 %v4196
    %4198 = vmatprep.subr.mxu0 0.0
    %v4199 = vand.u32 %v3440, 4294901760
    %4200 = vmatpush1.msra.mxu0 %v4199
    %4201 = vmatprep.subr.mxu0 0.0
    %v4202 = vand.u32 %v3471, 4294901760
    %4203 = vmatpush2.msra.mxu0 %v4202
    %4204 = vmatprep.subr.mxu0 0.0
    %v4205 = vand.u32 %v3470, 4294901760
    %4206 = vmatpush2.msra.mxu0 %v4205
    %4207 = vmatprep.subr.mxu0 0.0
    %v4208 = vand.u32 %v3469, 4294901760
    %4209 = vmatpush2.msra.mxu0 %v4208
    %4210 = vmatprep.subr.mxu0 0.0
    %v4211 = vand.u32 %v3468, 4294901760
    %4212 = vmatpush2.msra.mxu0 %v4211
    %4213 = vmatprep.subr.mxu0 0.0
    %v4214 = vand.u32 %v3467, 4294901760
    %4215 = vmatpush2.msra.mxu0 %v4214
    %4216 = vmatprep.subr.mxu0 0.0
    %v4217 = vand.u32 %v3466, 4294901760
    %4218 = vmatpush2.msra.mxu0 %v4217
    %4219 = vmatprep.subr.mxu0 0.0
    %v4220 = vand.u32 %v3465, 4294901760
    %4221 = vmatpush2.msra.mxu0 %v4220
    %4222 = vmatprep.subr.mxu0 0.0
    %v4223 = vand.u32 %v3464, 4294901760
    %4224 = vmatpush2.msra.mxu0 %v4223
    %4225 = vmatprep.subr.mxu0 0.0
    %v4226 = vand.u32 %v3463, 4294901760
    %4227 = vmatpush2.msra.mxu0 %v4226
    %4228 = vmatprep.subr.mxu0 0.0
    %v4229 = vand.u32 %v3462, 4294901760
    %4230 = vmatpush2.msra.mxu0 %v4229
    %4231 = vmatprep.subr.mxu0 0.0
    %v4232 = vand.u32 %v3461, 4294901760
    %4233 = vmatpush2.msra.mxu0 %v4232
    %4234 = vmatprep.subr.mxu0 0.0
    %v4235 = vand.u32 %v3460, 4294901760
    %4236 = vmatpush2.msra.mxu0 %v4235
    %4237 = vmatprep.subr.mxu0 0.0
    %v4238 = vand.u32 %v3459, 4294901760
    %4239 = vmatpush2.msra.mxu0 %v4238
    %4240 = vmatprep.subr.mxu0 0.0
    %v4241 = vand.u32 %v3458, 4294901760
    %4242 = vmatpush2.msra.mxu0 %v4241
    %4243 = vmatprep.subr.mxu0 0.0
    %v4244 = vand.u32 %v3457, 4294901760
    %4245 = vmatpush2.msra.mxu0 %v4244
    %4246 = vmatprep.subr.mxu0 0.0
    %v4247 = vand.u32 %v3456, 4294901760
    %4248 = vmatpush2.msra.mxu0 %v4247
    %v4249 = vand.u32 %v3409, 4294901760
    %v4250 = vsub.f32 %v3409, %v4249
    %v4251 = vand.u32 %v4250, 4294901760
    %4252 = vmatprep.mubr.f32.mxu0 %v4251
    %v4253 = vand.u32 %v3408, 4294901760
    %v4254 = vsub.f32 %v3408, %v4253
    %v4255 = vand.u32 %v4254, 4294901760
    %4256 = vmatmul.mubr.f32.gmra.mxu0 %v4255
    %v4257 = vpop.f32.mrf.mxu0
    %v4258 = vadd.f32 %v4123, %v4257
    %v4259 = vpop.f32.mrf.mxu0
    %v4260 = vand.u32 %v3417, 4294901760
    %v4261 = vsub.f32 %v3417, %v4260
    %v4262 = vand.u32 %v4261, 4294901760
    %4263 = vmatprep.mubr.f32.mxu0 %v4262
    %v4264 = vand.u32 %v3416, 4294901760
    %v4265 = vsub.f32 %v3416, %v4264
    %v4266 = vand.u32 %v4265, 4294901760
    %4267 = vmatmul.mubr.f32.gmra.mxu0 %v4266
    %v4268 = vpop.f32.mrf.mxu0
    %v4269 = vadd.f32 %v4132, %v4268
    %v4270 = vpop.f32.mrf.mxu0
    %v4271 = vand.u32 %v3425, 4294901760
    %v4272 = vsub.f32 %v3425, %v4271
    %v4273 = vand.u32 %v4272, 4294901760
    %4274 = vmatprep.mubr.f32.mxu0 %v4273
    %v4275 = vand.u32 %v3424, 4294901760
    %v4276 = vsub.f32 %v3424, %v4275
    %v4277 = vand.u32 %v4276, 4294901760
    %4278 = vmatmul.mubr.f32.gmra.mxu0 %v4277
    %v4279 = vpop.f32.mrf.mxu0
    %v4280 = vadd.f32 %v4141, %v4279
    %v4281 = vpop.f32.mrf.mxu0
    %v4282 = vand.u32 %v3433, 4294901760
    %v4283 = vsub.f32 %v3433, %v4282
    %v4284 = vand.u32 %v4283, 4294901760
    %4285 = vmatprep.mubr.f32.mxu0 %v4284
    %v4286 = vand.u32 %v3432, 4294901760
    %v4287 = vsub.f32 %v3432, %v4286
    %v4288 = vand.u32 %v4287, 4294901760
    %4289 = vmatmul.mubr.f32.gmra.mxu0 %v4288
    %v4290 = vpop.f32.mrf.mxu0
    %v4291 = vadd.f32 %v4150, %v4290
    %v4292 = vpop.f32.mrf.mxu0
    %4293 = vdwg.mxu0
    %4294 = vmatprep.subr.mxu0 0.0
    %v4295 = vand.u32 %v3455, 4294901760
    %v4296 = vsub.f32 %v3455, %v4295
    %v4297 = vand.u32 %v4296, 4294901760
    %4298 = vmatpush1.msra.mxu0 %v4297
    %4299 = vmatprep.subr.mxu0 0.0
    %v4300 = vand.u32 %v3454, 4294901760
    %v4301 = vsub.f32 %v3454, %v4300
    %v4302 = vand.u32 %v4301, 4294901760
    %4303 = vmatpush1.msra.mxu0 %v4302
    %4304 = vmatprep.subr.mxu0 0.0
    %v4305 = vand.u32 %v3453, 4294901760
    %v4306 = vsub.f32 %v3453, %v4305
    %v4307 = vand.u32 %v4306, 4294901760
    %4308 = vmatpush1.msra.mxu0 %v4307
    %4309 = vmatprep.subr.mxu0 0.0
    %v4310 = vand.u32 %v3452, 4294901760
    %v4311 = vsub.f32 %v3452, %v4310
    %v4312 = vand.u32 %v4311, 4294901760
    %4313 = vmatpush1.msra.mxu0 %v4312
    %4314 = vmatprep.subr.mxu0 0.0
    %v4315 = vand.u32 %v3451, 4294901760
    %v4316 = vsub.f32 %v3451, %v4315
    %v4317 = vand.u32 %v4316, 4294901760
    %4318 = vmatpush1.msra.mxu0 %v4317
    %4319 = vmatprep.subr.mxu0 0.0
    %v4320 = vand.u32 %v3450, 4294901760
    %v4321 = vsub.f32 %v3450, %v4320
    %v4322 = vand.u32 %v4321, 4294901760
    %4323 = vmatpush1.msra.mxu0 %v4322
    %4324 = vmatprep.subr.mxu0 0.0
    %v4325 = vand.u32 %v3449, 4294901760
    %v4326 = vsub.f32 %v3449, %v4325
    %v4327 = vand.u32 %v4326, 4294901760
    %4328 = vmatpush1.msra.mxu0 %v4327
    %4329 = vmatprep.subr.mxu0 0.0
    %v4330 = vand.u32 %v3448, 4294901760
    %v4331 = vsub.f32 %v3448, %v4330
    %v4332 = vand.u32 %v4331, 4294901760
    %4333 = vmatpush1.msra.mxu0 %v4332
    %4334 = vmatprep.subr.mxu0 0.0
    %v4335 = vand.u32 %v3447, 4294901760
    %v4336 = vsub.f32 %v3447, %v4335
    %v4337 = vand.u32 %v4336, 4294901760
    %4338 = vmatpush1.msra.mxu0 %v4337
    %4339 = vmatprep.subr.mxu0 0.0
    %v4340 = vand.u32 %v3446, 4294901760
    %v4341 = vsub.f32 %v3446, %v4340
    %v4342 = vand.u32 %v4341, 4294901760
    %4343 = vmatpush1.msra.mxu0 %v4342
    %4344 = vmatprep.subr.mxu0 0.0
    %v4345 = vand.u32 %v3445, 4294901760
    %v4346 = vsub.f32 %v3445, %v4345
    %v4347 = vand.u32 %v4346, 4294901760
    %4348 = vmatpush1.msra.mxu0 %v4347
    %4349 = vmatprep.subr.mxu0 0.0
    %v4350 = vand.u32 %v3444, 4294901760
    %v4351 = vsub.f32 %v3444, %v4350
    %v4352 = vand.u32 %v4351, 4294901760
    %4353 = vmatpush1.msra.mxu0 %v4352
    %4354 = vmatprep.subr.mxu0 0.0
    %v4355 = vand.u32 %v3443, 4294901760
    %v4356 = vsub.f32 %v3443, %v4355
    %v4357 = vand.u32 %v4356, 4294901760
    %4358 = vmatpush1.msra.mxu0 %v4357
    %4359 = vmatprep.subr.mxu0 0.0
    %v4360 = vand.u32 %v3442, 4294901760
    %v4361 = vsub.f32 %v3442, %v4360
    %v4362 = vand.u32 %v4361, 4294901760
    %4363 = vmatpush1.msra.mxu0 %v4362
    %4364 = vmatprep.subr.mxu0 0.0
    %v4365 = vand.u32 %v3441, 4294901760
    %v4366 = vsub.f32 %v3441, %v4365
    %v4367 = vand.u32 %v4366, 4294901760
    %4368 = vmatpush1.msra.mxu0 %v4367
    %4369 = vmatprep.subr.mxu0 0.0
    %v4370 = vand.u32 %v3440, 4294901760
    %v4371 = vsub.f32 %v3440, %v4370
    %v4372 = vand.u32 %v4371, 4294901760
    %4373 = vmatpush1.msra.mxu0 %v4372
    %4374 = vmatprep.subr.mxu0 0.0
    %v4375 = vand.u32 %v3471, 4294901760
    %v4376 = vsub.f32 %v3471, %v4375
    %v4377 = vand.u32 %v4376, 4294901760
    %4378 = vmatpush2.msra.mxu0 %v4377
    %4379 = vmatprep.subr.mxu0 0.0
    %v4380 = vand.u32 %v3470, 4294901760
    %v4381 = vsub.f32 %v3470, %v4380
    %v4382 = vand.u32 %v4381, 4294901760
    %4383 = vmatpush2.msra.mxu0 %v4382
    %4384 = vmatprep.subr.mxu0 0.0
    %v4385 = vand.u32 %v3469, 4294901760
    %v4386 = vsub.f32 %v3469, %v4385
    %v4387 = vand.u32 %v4386, 4294901760
    %4388 = vmatpush2.msra.mxu0 %v4387
    %4389 = vmatprep.subr.mxu0 0.0
    %v4390 = vand.u32 %v3468, 4294901760
    %v4391 = vsub.f32 %v3468, %v4390
    %v4392 = vand.u32 %v4391, 4294901760
    %4393 = vmatpush2.msra.mxu0 %v4392
    %4394 = vmatprep.subr.mxu0 0.0
    %v4395 = vand.u32 %v3467, 4294901760
    %v4396 = vsub.f32 %v3467, %v4395
    %v4397 = vand.u32 %v4396, 4294901760
    %4398 = vmatpush2.msra.mxu0 %v4397
    %4399 = vmatprep.subr.mxu0 0.0
    %v4400 = vand.u32 %v3466, 4294901760
    %v4401 = vsub.f32 %v3466, %v4400
    %v4402 = vand.u32 %v4401, 4294901760
    %4403 = vmatpush2.msra.mxu0 %v4402
    %4404 = vmatprep.subr.mxu0 0.0
    %v4405 = vand.u32 %v3465, 4294901760
    %v4406 = vsub.f32 %v3465, %v4405
    %v4407 = vand.u32 %v4406, 4294901760
    %4408 = vmatpush2.msra.mxu0 %v4407
    %4409 = vmatprep.subr.mxu0 0.0
    %v4410 = vand.u32 %v3464, 4294901760
    %v4411 = vsub.f32 %v3464, %v4410
    %v4412 = vand.u32 %v4411, 4294901760
    %4413 = vmatpush2.msra.mxu0 %v4412
    %4414 = vmatprep.subr.mxu0 0.0
    %v4415 = vand.u32 %v3463, 4294901760
    %v4416 = vsub.f32 %v3463, %v4415
    %v4417 = vand.u32 %v4416, 4294901760
    %4418 = vmatpush2.msra.mxu0 %v4417
    %4419 = vmatprep.subr.mxu0 0.0
    %v4420 = vand.u32 %v3462, 4294901760
    %v4421 = vsub.f32 %v3462, %v4420
    %v4422 = vand.u32 %v4421, 4294901760
    %4423 = vmatpush2.msra.mxu0 %v4422
    %4424 = vmatprep.subr.mxu0 0.0
    %v4425 = vand.u32 %v3461, 4294901760
    %v4426 = vsub.f32 %v3461, %v4425
    %v4427 = vand.u32 %v4426, 4294901760
    %4428 = vmatpush2.msra.mxu0 %v4427
    %4429 = vmatprep.subr.mxu0 0.0
    %v4430 = vand.u32 %v3460, 4294901760
    %v4431 = vsub.f32 %v3460, %v4430
    %v4432 = vand.u32 %v4431, 4294901760
    %4433 = vmatpush2.msra.mxu0 %v4432
    %4434 = vmatprep.subr.mxu0 0.0
    %v4435 = vand.u32 %v3459, 4294901760
    %v4436 = vsub.f32 %v3459, %v4435
    %v4437 = vand.u32 %v4436, 4294901760
    %4438 = vmatpush2.msra.mxu0 %v4437
    %4439 = vmatprep.subr.mxu0 0.0
    %v4440 = vand.u32 %v3458, 4294901760
    %v4441 = vsub.f32 %v3458, %v4440
    %v4442 = vand.u32 %v4441, 4294901760
    %4443 = vmatpush2.msra.mxu0 %v4442
    %4444 = vmatprep.subr.mxu0 0.0
    %v4445 = vand.u32 %v3457, 4294901760
    %v4446 = vsub.f32 %v3457, %v4445
    %v4447 = vand.u32 %v4446, 4294901760
    %4448 = vmatpush2.msra.mxu0 %v4447
    %4449 = vmatprep.subr.mxu0 0.0
    %v4450 = vand.u32 %v3456, 4294901760
    %v4451 = vsub.f32 %v3456, %v4450
    %v4452 = vand.u32 %v4451, 4294901760
    %4453 = vmatpush2.msra.mxu0 %v4452
    %v4454 = vand.u32 %v3409, 4294901760
    %4455 = vmatprep.mubr.f32.mxu0 %v4454
    %v4456 = vand.u32 %v3408, 4294901760
    %4457 = vmatmul.mubr.f32.gmra.mxu0 %v4456
    %v4458 = vpop.f32.mrf.mxu0
    %v4459 = vadd.f32 %v4258, %v4458
    %v4460 = vpop.f32.mrf.mxu0
    %v4461 = vand.u32 %v3417, 4294901760
    %4462 = vmatprep.mubr.f32.mxu0 %v4461
    %v4463 = vand.u32 %v3416, 4294901760
    %4464 = vmatmul.mubr.f32.gmra.mxu0 %v4463
    %v4465 = vpop.f32.mrf.mxu0
    %v4466 = vadd.f32 %v4269, %v4465
    %v4467 = vpop.f32.mrf.mxu0
    %v4468 = vand.u32 %v3425, 4294901760
    %4469 = vmatprep.mubr.f32.mxu0 %v4468
    %v4470 = vand.u32 %v3424, 4294901760
    %4471 = vmatmul.mubr.f32.gmra.mxu0 %v4470
    %v4472 = vpop.f32.mrf.mxu0
    %v4473 = vadd.f32 %v4280, %v4472
    %v4474 = vpop.f32.mrf.mxu0
    %v4475 = vand.u32 %v3433, 4294901760
    %4476 = vmatprep.mubr.f32.mxu0 %v4475
    %v4477 = vand.u32 %v3432, 4294901760
    %4478 = vmatmul.mubr.f32.gmra.mxu0 %v4477
    %v4479 = vpop.f32.mrf.mxu0
    %v4480 = vadd.f32 %v4291, %v4479
    %v4481 = vpop.f32.mrf.mxu0
    %4482 = vdwg.mxu0
    %4483 = vmatprep.subr.mxu0 0.0
    %v4484 = vand.u32 %v3455, 4294901760
    %4485 = vmatpush1.msra.mxu0 %v4484
    %4486 = vmatprep.subr.mxu0 0.0
    %v4487 = vand.u32 %v3454, 4294901760
    %4488 = vmatpush1.msra.mxu0 %v4487
    %4489 = vmatprep.subr.mxu0 0.0
    %v4490 = vand.u32 %v3453, 4294901760
    %4491 = vmatpush1.msra.mxu0 %v4490
    %4492 = vmatprep.subr.mxu0 0.0
    %v4493 = vand.u32 %v3452, 4294901760
    %4494 = vmatpush1.msra.mxu0 %v4493
    %4495 = vmatprep.subr.mxu0 0.0
    %v4496 = vand.u32 %v3451, 4294901760
    %4497 = vmatpush1.msra.mxu0 %v4496
    %4498 = vmatprep.subr.mxu0 0.0
    %v4499 = vand.u32 %v3450, 4294901760
    %4500 = vmatpush1.msra.mxu0 %v4499
    %4501 = vmatprep.subr.mxu0 0.0
    %v4502 = vand.u32 %v3449, 4294901760
    %4503 = vmatpush1.msra.mxu0 %v4502
    %4504 = vmatprep.subr.mxu0 0.0
    %v4505 = vand.u32 %v3448, 4294901760
    %4506 = vmatpush1.msra.mxu0 %v4505
    %4507 = vmatprep.subr.mxu0 0.0
    %v4508 = vand.u32 %v3447, 4294901760
    %4509 = vmatpush1.msra.mxu0 %v4508
    %4510 = vmatprep.subr.mxu0 0.0
    %v4511 = vand.u32 %v3446, 4294901760
    %4512 = vmatpush1.msra.mxu0 %v4511
    %4513 = vmatprep.subr.mxu0 0.0
    %v4514 = vand.u32 %v3445, 4294901760
    %4515 = vmatpush1.msra.mxu0 %v4514
    %4516 = vmatprep.subr.mxu0 0.0
    %v4517 = vand.u32 %v3444, 4294901760
    %4518 = vmatpush1.msra.mxu0 %v4517
    %4519 = vmatprep.subr.mxu0 0.0
    %v4520 = vand.u32 %v3443, 4294901760
    %4521 = vmatpush1.msra.mxu0 %v4520
    %4522 = vmatprep.subr.mxu0 0.0
    %v4523 = vand.u32 %v3442, 4294901760
    %4524 = vmatpush1.msra.mxu0 %v4523
    %4525 = vmatprep.subr.mxu0 0.0
    %v4526 = vand.u32 %v3441, 4294901760
    %4527 = vmatpush1.msra.mxu0 %v4526
    %4528 = vmatprep.subr.mxu0 0.0
    %v4529 = vand.u32 %v3440, 4294901760
    %4530 = vmatpush1.msra.mxu0 %v4529
    %4531 = vmatprep.subr.mxu0 0.0
    %v4532 = vand.u32 %v3471, 4294901760
    %4533 = vmatpush2.msra.mxu0 %v4532
    %4534 = vmatprep.subr.mxu0 0.0
    %v4535 = vand.u32 %v3470, 4294901760
    %4536 = vmatpush2.msra.mxu0 %v4535
    %4537 = vmatprep.subr.mxu0 0.0
    %v4538 = vand.u32 %v3469, 4294901760
    %4539 = vmatpush2.msra.mxu0 %v4538
    %4540 = vmatprep.subr.mxu0 0.0
    %v4541 = vand.u32 %v3468, 4294901760
    %4542 = vmatpush2.msra.mxu0 %v4541
    %4543 = vmatprep.subr.mxu0 0.0
    %v4544 = vand.u32 %v3467, 4294901760
    %4545 = vmatpush2.msra.mxu0 %v4544
    %4546 = vmatprep.subr.mxu0 0.0
    %v4547 = vand.u32 %v3466, 4294901760
    %4548 = vmatpush2.msra.mxu0 %v4547
    %4549 = vmatprep.subr.mxu0 0.0
    %v4550 = vand.u32 %v3465, 4294901760
    %4551 = vmatpush2.msra.mxu0 %v4550
    %4552 = vmatprep.subr.mxu0 0.0
    %v4553 = vand.u32 %v3464, 4294901760
    %4554 = vmatpush2.msra.mxu0 %v4553
    %4555 = vmatprep.subr.mxu0 0.0
    %v4556 = vand.u32 %v3463, 4294901760
    %4557 = vmatpush2.msra.mxu0 %v4556
    %4558 = vmatprep.subr.mxu0 0.0
    %v4559 = vand.u32 %v3462, 4294901760
    %4560 = vmatpush2.msra.mxu0 %v4559
    %4561 = vmatprep.subr.mxu0 0.0
    %v4562 = vand.u32 %v3461, 4294901760
    %4563 = vmatpush2.msra.mxu0 %v4562
    %4564 = vmatprep.subr.mxu0 0.0
    %v4565 = vand.u32 %v3460, 4294901760
    %4566 = vmatpush2.msra.mxu0 %v4565
    %4567 = vmatprep.subr.mxu0 0.0
    %v4568 = vand.u32 %v3459, 4294901760
    %4569 = vmatpush2.msra.mxu0 %v4568
    %4570 = vmatprep.subr.mxu0 0.0
    %v4571 = vand.u32 %v3458, 4294901760
    %4572 = vmatpush2.msra.mxu0 %v4571
    %4573 = vmatprep.subr.mxu0 0.0
    %v4574 = vand.u32 %v3457, 4294901760
    %4575 = vmatpush2.msra.mxu0 %v4574
    %4576 = vmatprep.subr.mxu0 0.0
    %v4577 = vand.u32 %v3456, 4294901760
    %4578 = vmatpush2.msra.mxu0 %v4577
    %v4579 = vand.u32 %v3409, 4294901760
    %4580 = vmatprep.mubr.f32.mxu0 %v4579
    %v4581 = vand.u32 %v3408, 4294901760
    %4582 = vmatmul.mubr.f32.gmra.mxu0 %v4581
    %v4583 = vpop.f32.mrf.mxu0
    %v4584 = vadd.f32 %v4459, %v4583
    %v4585 = vpop.f32.mrf.mxu0
    %v4586 = vand.u32 %v3417, 4294901760
    %4587 = vmatprep.mubr.f32.mxu0 %v4586
    %v4588 = vand.u32 %v3416, 4294901760
    %4589 = vmatmul.mubr.f32.gmra.mxu0 %v4588
    %v4590 = vpop.f32.mrf.mxu0
    %v4591 = vadd.f32 %v4466, %v4590
    %v4592 = vpop.f32.mrf.mxu0
    %v4593 = vand.u32 %v3425, 4294901760
    %4594 = vmatprep.mubr.f32.mxu0 %v4593
    %v4595 = vand.u32 %v3424, 4294901760
    %4596 = vmatmul.mubr.f32.gmra.mxu0 %v4595
    %v4597 = vpop.f32.mrf.mxu0
    %v4598 = vadd.f32 %v4473, %v4597
    %v4599 = vpop.f32.mrf.mxu0
    %v4600 = vand.u32 %v3433, 4294901760
    %4601 = vmatprep.mubr.f32.mxu0 %v4600
    %v4602 = vand.u32 %v3432, 4294901760
    %4603 = vmatmul.mubr.f32.gmra.mxu0 %v4602
    %v4604 = vpop.f32.mrf.mxu0
    %v4605 = vadd.f32 %v4480, %v4604
    %v4606 = vpop.f32.mrf.mxu0
    %4607 = vdwg.mxu0
    %4608 = vmatprep.subr.mxu0 0.0
    %v4609 = vand.u32 %v3487, 4294901760
    %4610 = vmatpush1.msra.mxu0 %v4609
    %4611 = vmatprep.subr.mxu0 0.0
    %v4612 = vand.u32 %v3486, 4294901760
    %4613 = vmatpush1.msra.mxu0 %v4612
    %4614 = vmatprep.subr.mxu0 0.0
    %v4615 = vand.u32 %v3485, 4294901760
    %4616 = vmatpush1.msra.mxu0 %v4615
    %4617 = vmatprep.subr.mxu0 0.0
    %v4618 = vand.u32 %v3484, 4294901760
    %4619 = vmatpush1.msra.mxu0 %v4618
    %4620 = vmatprep.subr.mxu0 0.0
    %v4621 = vand.u32 %v3483, 4294901760
    %4622 = vmatpush1.msra.mxu0 %v4621
    %4623 = vmatprep.subr.mxu0 0.0
    %v4624 = vand.u32 %v3482, 4294901760
    %4625 = vmatpush1.msra.mxu0 %v4624
    %4626 = vmatprep.subr.mxu0 0.0
    %v4627 = vand.u32 %v3481, 4294901760
    %4628 = vmatpush1.msra.mxu0 %v4627
    %4629 = vmatprep.subr.mxu0 0.0
    %v4630 = vand.u32 %v3480, 4294901760
    %4631 = vmatpush1.msra.mxu0 %v4630
    %4632 = vmatprep.subr.mxu0 0.0
    %v4633 = vand.u32 %v3479, 4294901760
    %4634 = vmatpush1.msra.mxu0 %v4633
    %4635 = vmatprep.subr.mxu0 0.0
    %v4636 = vand.u32 %v3478, 4294901760
    %4637 = vmatpush1.msra.mxu0 %v4636
    %4638 = vmatprep.subr.mxu0 0.0
    %v4639 = vand.u32 %v3477, 4294901760
    %4640 = vmatpush1.msra.mxu0 %v4639
    %4641 = vmatprep.subr.mxu0 0.0
    %v4642 = vand.u32 %v3476, 4294901760
    %4643 = vmatpush1.msra.mxu0 %v4642
    %4644 = vmatprep.subr.mxu0 0.0
    %v4645 = vand.u32 %v3475, 4294901760
    %4646 = vmatpush1.msra.mxu0 %v4645
    %4647 = vmatprep.subr.mxu0 0.0
    %v4648 = vand.u32 %v3474, 4294901760
    %4649 = vmatpush1.msra.mxu0 %v4648
    %4650 = vmatprep.subr.mxu0 0.0
    %v4651 = vand.u32 %v3473, 4294901760
    %4652 = vmatpush1.msra.mxu0 %v4651
    %4653 = vmatprep.subr.mxu0 0.0
    %v4654 = vand.u32 %v3472, 4294901760
    %4655 = vmatpush1.msra.mxu0 %v4654
    %4656 = vmatprep.subr.mxu0 0.0
    %v4657 = vand.u32 %v3503, 4294901760
    %4658 = vmatpush2.msra.mxu0 %v4657
    %4659 = vmatprep.subr.mxu0 0.0
    %v4660 = vand.u32 %v3502, 4294901760
    %4661 = vmatpush2.msra.mxu0 %v4660
    %4662 = vmatprep.subr.mxu0 0.0
    %v4663 = vand.u32 %v3501, 4294901760
    %4664 = vmatpush2.msra.mxu0 %v4663
    %4665 = vmatprep.subr.mxu0 0.0
    %v4666 = vand.u32 %v3500, 4294901760
    %4667 = vmatpush2.msra.mxu0 %v4666
    %4668 = vmatprep.subr.mxu0 0.0
    %v4669 = vand.u32 %v3499, 4294901760
    %4670 = vmatpush2.msra.mxu0 %v4669
    %4671 = vmatprep.subr.mxu0 0.0
    %v4672 = vand.u32 %v3498, 4294901760
    %4673 = vmatpush2.msra.mxu0 %v4672
    %4674 = vmatprep.subr.mxu0 0.0
    %v4675 = vand.u32 %v3497, 4294901760
    %4676 = vmatpush2.msra.mxu0 %v4675
    %4677 = vmatprep.subr.mxu0 0.0
    %v4678 = vand.u32 %v3496, 4294901760
    %4679 = vmatpush2.msra.mxu0 %v4678
    %4680 = vmatprep.subr.mxu0 0.0
    %v4681 = vand.u32 %v3495, 4294901760
    %4682 = vmatpush2.msra.mxu0 %v4681
    %4683 = vmatprep.subr.mxu0 0.0
    %v4684 = vand.u32 %v3494, 4294901760
    %4685 = vmatpush2.msra.mxu0 %v4684
    %4686 = vmatprep.subr.mxu0 0.0
    %v4687 = vand.u32 %v3493, 4294901760
    %4688 = vmatpush2.msra.mxu0 %v4687
    %4689 = vmatprep.subr.mxu0 0.0
    %v4690 = vand.u32 %v3492, 4294901760
    %4691 = vmatpush2.msra.mxu0 %v4690
    %4692 = vmatprep.subr.mxu0 0.0
    %v4693 = vand.u32 %v3491, 4294901760
    %4694 = vmatpush2.msra.mxu0 %v4693
    %4695 = vmatprep.subr.mxu0 0.0
    %v4696 = vand.u32 %v3490, 4294901760
    %4697 = vmatpush2.msra.mxu0 %v4696
    %4698 = vmatprep.subr.mxu0 0.0
    %v4699 = vand.u32 %v3489, 4294901760
    %4700 = vmatpush2.msra.mxu0 %v4699
    %4701 = vmatprep.subr.mxu0 0.0
    %v4702 = vand.u32 %v3488, 4294901760
    %4703 = vmatpush2.msra.mxu0 %v4702
    %v4704 = vand.u32 %v3411, 4294901760
    %v4705 = vsub.f32 %v3411, %v4704
    %v4706 = vand.u32 %v4705, 4294901760
    %v4707 = vsub.f32 %v4705, %v4706
    %v4708 = vand.u32 %v4707, 4294901760
    %4709 = vmatprep.mubr.f32.mxu0 %v4708
    %v4710 = vand.u32 %v3410, 4294901760
    %v4711 = vsub.f32 %v3410, %v4710
    %v4712 = vand.u32 %v4711, 4294901760
    %v4713 = vsub.f32 %v4711, %v4712
    %v4714 = vand.u32 %v4713, 4294901760
    %4715 = vmatmul.mubr.f32.gmra.mxu0 %v4714
    %v4716 = vpop.f32.mrf.mxu0
    %v4717 = vadd.f32 %v4584, %v4716
    %v4718 = vpop.f32.mrf.mxu0
    %v4719 = vand.u32 %v3419, 4294901760
    %v4720 = vsub.f32 %v3419, %v4719
    %v4721 = vand.u32 %v4720, 4294901760
    %v4722 = vsub.f32 %v4720, %v4721
    %v4723 = vand.u32 %v4722, 4294901760
    %4724 = vmatprep.mubr.f32.mxu0 %v4723
    %v4725 = vand.u32 %v3418, 4294901760
    %v4726 = vsub.f32 %v3418, %v4725
    %v4727 = vand.u32 %v4726, 4294901760
    %v4728 = vsub.f32 %v4726, %v4727
    %v4729 = vand.u32 %v4728, 4294901760
    %4730 = vmatmul.mubr.f32.gmra.mxu0 %v4729
    %v4731 = vpop.f32.mrf.mxu0
    %v4732 = vadd.f32 %v4591, %v4731
    %v4733 = vpop.f32.mrf.mxu0
    %v4734 = vand.u32 %v3427, 4294901760
    %v4735 = vsub.f32 %v3427, %v4734
    %v4736 = vand.u32 %v4735, 4294901760
    %v4737 = vsub.f32 %v4735, %v4736
    %v4738 = vand.u32 %v4737, 4294901760
    %4739 = vmatprep.mubr.f32.mxu0 %v4738
    %v4740 = vand.u32 %v3426, 4294901760
    %v4741 = vsub.f32 %v3426, %v4740
    %v4742 = vand.u32 %v4741, 4294901760
    %v4743 = vsub.f32 %v4741, %v4742
    %v4744 = vand.u32 %v4743, 4294901760
    %4745 = vmatmul.mubr.f32.gmra.mxu0 %v4744
    %v4746 = vpop.f32.mrf.mxu0
    %v4747 = vadd.f32 %v4598, %v4746
    %v4748 = vpop.f32.mrf.mxu0
    %v4749 = vand.u32 %v3435, 4294901760
    %v4750 = vsub.f32 %v3435, %v4749
    %v4751 = vand.u32 %v4750, 4294901760
    %v4752 = vsub.f32 %v4750, %v4751
    %v4753 = vand.u32 %v4752, 4294901760
    %4754 = vmatprep.mubr.f32.mxu0 %v4753
    %v4755 = vand.u32 %v3434, 4294901760
    %v4756 = vsub.f32 %v3434, %v4755
    %v4757 = vand.u32 %v4756, 4294901760
    %v4758 = vsub.f32 %v4756, %v4757
    %v4759 = vand.u32 %v4758, 4294901760
    %4760 = vmatmul.mubr.f32.gmra.mxu0 %v4759
    %v4761 = vpop.f32.mrf.mxu0
    %v4762 = vadd.f32 %v4605, %v4761
    %v4763 = vpop.f32.mrf.mxu0
    %4764 = vdwg.mxu0
    %4765 = vmatprep.subr.mxu0 0.0
    %v4766 = vand.u32 %v3487, 4294901760
    %v4767 = vsub.f32 %v3487, %v4766
    %v4768 = vand.u32 %v4767, 4294901760
    %v4769 = vsub.f32 %v4767, %v4768
    %v4770 = vand.u32 %v4769, 4294901760
    %4771 = vmatpush1.msra.mxu0 %v4770
    %4772 = vmatprep.subr.mxu0 0.0
    %v4773 = vand.u32 %v3486, 4294901760
    %v4774 = vsub.f32 %v3486, %v4773
    %v4775 = vand.u32 %v4774, 4294901760
    %v4776 = vsub.f32 %v4774, %v4775
    %v4777 = vand.u32 %v4776, 4294901760
    %4778 = vmatpush1.msra.mxu0 %v4777
    %4779 = vmatprep.subr.mxu0 0.0
    %v4780 = vand.u32 %v3485, 4294901760
    %v4781 = vsub.f32 %v3485, %v4780
    %v4782 = vand.u32 %v4781, 4294901760
    %v4783 = vsub.f32 %v4781, %v4782
    %v4784 = vand.u32 %v4783, 4294901760
    %4785 = vmatpush1.msra.mxu0 %v4784
    %4786 = vmatprep.subr.mxu0 0.0
    %v4787 = vand.u32 %v3484, 4294901760
    %v4788 = vsub.f32 %v3484, %v4787
    %v4789 = vand.u32 %v4788, 4294901760
    %v4790 = vsub.f32 %v4788, %v4789
    %v4791 = vand.u32 %v4790, 4294901760
    %4792 = vmatpush1.msra.mxu0 %v4791
    %4793 = vmatprep.subr.mxu0 0.0
    %v4794 = vand.u32 %v3483, 4294901760
    %v4795 = vsub.f32 %v3483, %v4794
    %v4796 = vand.u32 %v4795, 4294901760
    %v4797 = vsub.f32 %v4795, %v4796
    %v4798 = vand.u32 %v4797, 4294901760
    %4799 = vmatpush1.msra.mxu0 %v4798
    %4800 = vmatprep.subr.mxu0 0.0
    %v4801 = vand.u32 %v3482, 4294901760
    %v4802 = vsub.f32 %v3482, %v4801
    %v4803 = vand.u32 %v4802, 4294901760
    %v4804 = vsub.f32 %v4802, %v4803
    %v4805 = vand.u32 %v4804, 4294901760
    %4806 = vmatpush1.msra.mxu0 %v4805
    %4807 = vmatprep.subr.mxu0 0.0
    %v4808 = vand.u32 %v3481, 4294901760
    %v4809 = vsub.f32 %v3481, %v4808
    %v4810 = vand.u32 %v4809, 4294901760
    %v4811 = vsub.f32 %v4809, %v4810
    %v4812 = vand.u32 %v4811, 4294901760
    %4813 = vmatpush1.msra.mxu0 %v4812
    %4814 = vmatprep.subr.mxu0 0.0
    %v4815 = vand.u32 %v3480, 4294901760
    %v4816 = vsub.f32 %v3480, %v4815
    %v4817 = vand.u32 %v4816, 4294901760
    %v4818 = vsub.f32 %v4816, %v4817
    %v4819 = vand.u32 %v4818, 4294901760
    %4820 = vmatpush1.msra.mxu0 %v4819
    %4821 = vmatprep.subr.mxu0 0.0
    %v4822 = vand.u32 %v3479, 4294901760
    %v4823 = vsub.f32 %v3479, %v4822
    %v4824 = vand.u32 %v4823, 4294901760
    %v4825 = vsub.f32 %v4823, %v4824
    %v4826 = vand.u32 %v4825, 4294901760
    %4827 = vmatpush1.msra.mxu0 %v4826
    %4828 = vmatprep.subr.mxu0 0.0
    %v4829 = vand.u32 %v3478, 4294901760
    %v4830 = vsub.f32 %v3478, %v4829
    %v4831 = vand.u32 %v4830, 4294901760
    %v4832 = vsub.f32 %v4830, %v4831
    %v4833 = vand.u32 %v4832, 4294901760
    %4834 = vmatpush1.msra.mxu0 %v4833
    %4835 = vmatprep.subr.mxu0 0.0
    %v4836 = vand.u32 %v3477, 4294901760
    %v4837 = vsub.f32 %v3477, %v4836
    %v4838 = vand.u32 %v4837, 4294901760
    %v4839 = vsub.f32 %v4837, %v4838
    %v4840 = vand.u32 %v4839, 4294901760
    %4841 = vmatpush1.msra.mxu0 %v4840
    %4842 = vmatprep.subr.mxu0 0.0
    %v4843 = vand.u32 %v3476, 4294901760
    %v4844 = vsub.f32 %v3476, %v4843
    %v4845 = vand.u32 %v4844, 4294901760
    %v4846 = vsub.f32 %v4844, %v4845
    %v4847 = vand.u32 %v4846, 4294901760
    %4848 = vmatpush1.msra.mxu0 %v4847
    %4849 = vmatprep.subr.mxu0 0.0
    %v4850 = vand.u32 %v3475, 4294901760
    %v4851 = vsub.f32 %v3475, %v4850
    %v4852 = vand.u32 %v4851, 4294901760
    %v4853 = vsub.f32 %v4851, %v4852
    %v4854 = vand.u32 %v4853, 4294901760
    %4855 = vmatpush1.msra.mxu0 %v4854
    %4856 = vmatprep.subr.mxu0 0.0
    %v4857 = vand.u32 %v3474, 4294901760
    %v4858 = vsub.f32 %v3474, %v4857
    %v4859 = vand.u32 %v4858, 4294901760
    %v4860 = vsub.f32 %v4858, %v4859
    %v4861 = vand.u32 %v4860, 4294901760
    %4862 = vmatpush1.msra.mxu0 %v4861
    %4863 = vmatprep.subr.mxu0 0.0
    %v4864 = vand.u32 %v3473, 4294901760
    %v4865 = vsub.f32 %v3473, %v4864
    %v4866 = vand.u32 %v4865, 4294901760
    %v4867 = vsub.f32 %v4865, %v4866
    %v4868 = vand.u32 %v4867, 4294901760
    %4869 = vmatpush1.msra.mxu0 %v4868
    %4870 = vmatprep.subr.mxu0 0.0
    %v4871 = vand.u32 %v3472, 4294901760
    %v4872 = vsub.f32 %v3472, %v4871
    %v4873 = vand.u32 %v4872, 4294901760
    %v4874 = vsub.f32 %v4872, %v4873
    %v4875 = vand.u32 %v4874, 4294901760
    %4876 = vmatpush1.msra.mxu0 %v4875
    %4877 = vmatprep.subr.mxu0 0.0
    %v4878 = vand.u32 %v3503, 4294901760
    %v4879 = vsub.f32 %v3503, %v4878
    %v4880 = vand.u32 %v4879, 4294901760
    %v4881 = vsub.f32 %v4879, %v4880
    %v4882 = vand.u32 %v4881, 4294901760
    %4883 = vmatpush2.msra.mxu0 %v4882
    %4884 = vmatprep.subr.mxu0 0.0
    %v4885 = vand.u32 %v3502, 4294901760
    %v4886 = vsub.f32 %v3502, %v4885
    %v4887 = vand.u32 %v4886, 4294901760
    %v4888 = vsub.f32 %v4886, %v4887
    %v4889 = vand.u32 %v4888, 4294901760
    %4890 = vmatpush2.msra.mxu0 %v4889
    %4891 = vmatprep.subr.mxu0 0.0
    %v4892 = vand.u32 %v3501, 4294901760
    %v4893 = vsub.f32 %v3501, %v4892
    %v4894 = vand.u32 %v4893, 4294901760
    %v4895 = vsub.f32 %v4893, %v4894
    %v4896 = vand.u32 %v4895, 4294901760
    %4897 = vmatpush2.msra.mxu0 %v4896
    %4898 = vmatprep.subr.mxu0 0.0
    %v4899 = vand.u32 %v3500, 4294901760
    %v4900 = vsub.f32 %v3500, %v4899
    %v4901 = vand.u32 %v4900, 4294901760
    %v4902 = vsub.f32 %v4900, %v4901
    %v4903 = vand.u32 %v4902, 4294901760
    %4904 = vmatpush2.msra.mxu0 %v4903
    %4905 = vmatprep.subr.mxu0 0.0
    %v4906 = vand.u32 %v3499, 4294901760
    %v4907 = vsub.f32 %v3499, %v4906
    %v4908 = vand.u32 %v4907, 4294901760
    %v4909 = vsub.f32 %v4907, %v4908
    %v4910 = vand.u32 %v4909, 4294901760
    %4911 = vmatpush2.msra.mxu0 %v4910
    %4912 = vmatprep.subr.mxu0 0.0
    %v4913 = vand.u32 %v3498, 4294901760
    %v4914 = vsub.f32 %v3498, %v4913
    %v4915 = vand.u32 %v4914, 4294901760
    %v4916 = vsub.f32 %v4914, %v4915
    %v4917 = vand.u32 %v4916, 4294901760
    %4918 = vmatpush2.msra.mxu0 %v4917
    %4919 = vmatprep.subr.mxu0 0.0
    %v4920 = vand.u32 %v3497, 4294901760
    %v4921 = vsub.f32 %v3497, %v4920
    %v4922 = vand.u32 %v4921, 4294901760
    %v4923 = vsub.f32 %v4921, %v4922
    %v4924 = vand.u32 %v4923, 4294901760
    %4925 = vmatpush2.msra.mxu0 %v4924
    %4926 = vmatprep.subr.mxu0 0.0
    %v4927 = vand.u32 %v3496, 4294901760
    %v4928 = vsub.f32 %v3496, %v4927
    %v4929 = vand.u32 %v4928, 4294901760
    %v4930 = vsub.f32 %v4928, %v4929
    %v4931 = vand.u32 %v4930, 4294901760
    %4932 = vmatpush2.msra.mxu0 %v4931
    %4933 = vmatprep.subr.mxu0 0.0
    %v4934 = vand.u32 %v3495, 4294901760
    %v4935 = vsub.f32 %v3495, %v4934
    %v4936 = vand.u32 %v4935, 4294901760
    %v4937 = vsub.f32 %v4935, %v4936
    %v4938 = vand.u32 %v4937, 4294901760
    %4939 = vmatpush2.msra.mxu0 %v4938
    %4940 = vmatprep.subr.mxu0 0.0
    %v4941 = vand.u32 %v3494, 4294901760
    %v4942 = vsub.f32 %v3494, %v4941
    %v4943 = vand.u32 %v4942, 4294901760
    %v4944 = vsub.f32 %v4942, %v4943
    %v4945 = vand.u32 %v4944, 4294901760
    %4946 = vmatpush2.msra.mxu0 %v4945
    %4947 = vmatprep.subr.mxu0 0.0
    %v4948 = vand.u32 %v3493, 4294901760
    %v4949 = vsub.f32 %v3493, %v4948
    %v4950 = vand.u32 %v4949, 4294901760
    %v4951 = vsub.f32 %v4949, %v4950
    %v4952 = vand.u32 %v4951, 4294901760
    %4953 = vmatpush2.msra.mxu0 %v4952
    %4954 = vmatprep.subr.mxu0 0.0
    %v4955 = vand.u32 %v3492, 4294901760
    %v4956 = vsub.f32 %v3492, %v4955
    %v4957 = vand.u32 %v4956, 4294901760
    %v4958 = vsub.f32 %v4956, %v4957
    %v4959 = vand.u32 %v4958, 4294901760
    %4960 = vmatpush2.msra.mxu0 %v4959
    %4961 = vmatprep.subr.mxu0 0.0
    %v4962 = vand.u32 %v3491, 4294901760
    %v4963 = vsub.f32 %v3491, %v4962
    %v4964 = vand.u32 %v4963, 4294901760
    %v4965 = vsub.f32 %v4963, %v4964
    %v4966 = vand.u32 %v4965, 4294901760
    %4967 = vmatpush2.msra.mxu0 %v4966
    %4968 = vmatprep.subr.mxu0 0.0
    %v4969 = vand.u32 %v3490, 4294901760
    %v4970 = vsub.f32 %v3490, %v4969
    %v4971 = vand.u32 %v4970, 4294901760
    %v4972 = vsub.f32 %v4970, %v4971
    %v4973 = vand.u32 %v4972, 4294901760
    %4974 = vmatpush2.msra.mxu0 %v4973
    %4975 = vmatprep.subr.mxu0 0.0
    %v4976 = vand.u32 %v3489, 4294901760
    %v4977 = vsub.f32 %v3489, %v4976
    %v4978 = vand.u32 %v4977, 4294901760
    %v4979 = vsub.f32 %v4977, %v4978
    %v4980 = vand.u32 %v4979, 4294901760
    %4981 = vmatpush2.msra.mxu0 %v4980
    %4982 = vmatprep.subr.mxu0 0.0
    %v4983 = vand.u32 %v3488, 4294901760
    %v4984 = vsub.f32 %v3488, %v4983
    %v4985 = vand.u32 %v4984, 4294901760
    %v4986 = vsub.f32 %v4984, %v4985
    %v4987 = vand.u32 %v4986, 4294901760
    %4988 = vmatpush2.msra.mxu0 %v4987
    %v4989 = vand.u32 %v3411, 4294901760
    %4990 = vmatprep.mubr.f32.mxu0 %v4989
    %v4991 = vand.u32 %v3410, 4294901760
    %4992 = vmatmul.mubr.f32.gmra.mxu0 %v4991
    %v4993 = vpop.f32.mrf.mxu0
    %v4994 = vadd.f32 %v4717, %v4993
    %v4995 = vpop.f32.mrf.mxu0
    %v4996 = vand.u32 %v3419, 4294901760
    %4997 = vmatprep.mubr.f32.mxu0 %v4996
    %v4998 = vand.u32 %v3418, 4294901760
    %4999 = vmatmul.mubr.f32.gmra.mxu0 %v4998
    %v5000 = vpop.f32.mrf.mxu0
    %v5001 = vadd.f32 %v4732, %v5000
    %v5002 = vpop.f32.mrf.mxu0
    %v5003 = vand.u32 %v3427, 4294901760
    %5004 = vmatprep.mubr.f32.mxu0 %v5003
    %v5005 = vand.u32 %v3426, 4294901760
    %5006 = vmatmul.mubr.f32.gmra.mxu0 %v5005
    %v5007 = vpop.f32.mrf.mxu0
    %v5008 = vadd.f32 %v4747, %v5007
    %v5009 = vpop.f32.mrf.mxu0
    %v5010 = vand.u32 %v3435, 4294901760
    %5011 = vmatprep.mubr.f32.mxu0 %v5010
    %v5012 = vand.u32 %v3434, 4294901760
    %5013 = vmatmul.mubr.f32.gmra.mxu0 %v5012
    %v5014 = vpop.f32.mrf.mxu0
    %v5015 = vadd.f32 %v4762, %v5014
    %v5016 = vpop.f32.mrf.mxu0
    %5017 = vdwg.mxu0
    %5018 = vmatprep.subr.mxu0 0.0
    %v5019 = vand.u32 %v3487, 4294901760
    %v5020 = vsub.f32 %v3487, %v5019
    %5021 = vmatpush1.msra.mxu0 %v5020
    %5022 = vmatprep.subr.mxu0 0.0
    %v5023 = vand.u32 %v3486, 4294901760
    %v5024 = vsub.f32 %v3486, %v5023
    %5025 = vmatpush1.msra.mxu0 %v5024
    %5026 = vmatprep.subr.mxu0 0.0
    %v5027 = vand.u32 %v3485, 4294901760
    %v5028 = vsub.f32 %v3485, %v5027
    %5029 = vmatpush1.msra.mxu0 %v5028
    %5030 = vmatprep.subr.mxu0 0.0
    %v5031 = vand.u32 %v3484, 4294901760
    %v5032 = vsub.f32 %v3484, %v5031
    %5033 = vmatpush1.msra.mxu0 %v5032
    %5034 = vmatprep.subr.mxu0 0.0
    %v5035 = vand.u32 %v3483, 4294901760
    %v5036 = vsub.f32 %v3483, %v5035
    %5037 = vmatpush1.msra.mxu0 %v5036
    %5038 = vmatprep.subr.mxu0 0.0
    %v5039 = vand.u32 %v3482, 4294901760
    %v5040 = vsub.f32 %v3482, %v5039
    %5041 = vmatpush1.msra.mxu0 %v5040
    %5042 = vmatprep.subr.mxu0 0.0
    %v5043 = vand.u32 %v3481, 4294901760
    %v5044 = vsub.f32 %v3481, %v5043
    %5045 = vmatpush1.msra.mxu0 %v5044
    %5046 = vmatprep.subr.mxu0 0.0
    %v5047 = vand.u32 %v3480, 4294901760
    %v5048 = vsub.f32 %v3480, %v5047
    %5049 = vmatpush1.msra.mxu0 %v5048
    %5050 = vmatprep.subr.mxu0 0.0
    %v5051 = vand.u32 %v3479, 4294901760
    %v5052 = vsub.f32 %v3479, %v5051
    %5053 = vmatpush1.msra.mxu0 %v5052
    %5054 = vmatprep.subr.mxu0 0.0
    %v5055 = vand.u32 %v3478, 4294901760
    %v5056 = vsub.f32 %v3478, %v5055
    %5057 = vmatpush1.msra.mxu0 %v5056
    %5058 = vmatprep.subr.mxu0 0.0
    %v5059 = vand.u32 %v3477, 4294901760
    %v5060 = vsub.f32 %v3477, %v5059
    %5061 = vmatpush1.msra.mxu0 %v5060
    %5062 = vmatprep.subr.mxu0 0.0
    %v5063 = vand.u32 %v3476, 4294901760
    %v5064 = vsub.f32 %v3476, %v5063
    %5065 = vmatpush1.msra.mxu0 %v5064
    %5066 = vmatprep.subr.mxu0 0.0
    %v5067 = vand.u32 %v3475, 4294901760
    %v5068 = vsub.f32 %v3475, %v5067
    %5069 = vmatpush1.msra.mxu0 %v5068
    %5070 = vmatprep.subr.mxu0 0.0
    %v5071 = vand.u32 %v3474, 4294901760
    %v5072 = vsub.f32 %v3474, %v5071
    %5073 = vmatpush1.msra.mxu0 %v5072
    %5074 = vmatprep.subr.mxu0 0.0
    %v5075 = vand.u32 %v3473, 4294901760
    %v5076 = vsub.f32 %v3473, %v5075
    %5077 = vmatpush1.msra.mxu0 %v5076
    %5078 = vmatprep.subr.mxu0 0.0
    %v5079 = vand.u32 %v3472, 4294901760
    %v5080 = vsub.f32 %v3472, %v5079
    %5081 = vmatpush1.msra.mxu0 %v5080
    %5082 = vmatprep.subr.mxu0 0.0
    %v5083 = vand.u32 %v3503, 4294901760
    %v5084 = vsub.f32 %v3503, %v5083
    %5085 = vmatpush2.msra.mxu0 %v5084
    %5086 = vmatprep.subr.mxu0 0.0
    %v5087 = vand.u32 %v3502, 4294901760
    %v5088 = vsub.f32 %v3502, %v5087
    %5089 = vmatpush2.msra.mxu0 %v5088
    %5090 = vmatprep.subr.mxu0 0.0
    %v5091 = vand.u32 %v3501, 4294901760
    %v5092 = vsub.f32 %v3501, %v5091
    %5093 = vmatpush2.msra.mxu0 %v5092
    %5094 = vmatprep.subr.mxu0 0.0
    %v5095 = vand.u32 %v3500, 4294901760
    %v5096 = vsub.f32 %v3500, %v5095
    %5097 = vmatpush2.msra.mxu0 %v5096
    %5098 = vmatprep.subr.mxu0 0.0
    %v5099 = vand.u32 %v3499, 4294901760
    %v5100 = vsub.f32 %v3499, %v5099
    %5101 = vmatpush2.msra.mxu0 %v5100
    %5102 = vmatprep.subr.mxu0 0.0
    %v5103 = vand.u32 %v3498, 4294901760
    %v5104 = vsub.f32 %v3498, %v5103
    %5105 = vmatpush2.msra.mxu0 %v5104
    %5106 = vmatprep.subr.mxu0 0.0
    %v5107 = vand.u32 %v3497, 4294901760
    %v5108 = vsub.f32 %v3497, %v5107
    %5109 = vmatpush2.msra.mxu0 %v5108
    %5110 = vmatprep.subr.mxu0 0.0
    %v5111 = vand.u32 %v3496, 4294901760
    %v5112 = vsub.f32 %v3496, %v5111
    %5113 = vmatpush2.msra.mxu0 %v5112
    %5114 = vmatprep.subr.mxu0 0.0
    %v5115 = vand.u32 %v3495, 4294901760
    %v5116 = vsub.f32 %v3495, %v5115
    %5117 = vmatpush2.msra.mxu0 %v5116
    %5118 = vmatprep.subr.mxu0 0.0
    %v5119 = vand.u32 %v3494, 4294901760
    %v5120 = vsub.f32 %v3494, %v5119
    %5121 = vmatpush2.msra.mxu0 %v5120
    %5122 = vmatprep.subr.mxu0 0.0
    %v5123 = vand.u32 %v3493, 4294901760
    %v5124 = vsub.f32 %v3493, %v5123
    %5125 = vmatpush2.msra.mxu0 %v5124
    %5126 = vmatprep.subr.mxu0 0.0
    %v5127 = vand.u32 %v3492, 4294901760
    %v5128 = vsub.f32 %v3492, %v5127
    %5129 = vmatpush2.msra.mxu0 %v5128
    %5130 = vmatprep.subr.mxu0 0.0
    %v5131 = vand.u32 %v3491, 4294901760
    %v5132 = vsub.f32 %v3491, %v5131
    %5133 = vmatpush2.msra.mxu0 %v5132
    %5134 = vmatprep.subr.mxu0 0.0
    %v5135 = vand.u32 %v3490, 4294901760
    %v5136 = vsub.f32 %v3490, %v5135
    %5137 = vmatpush2.msra.mxu0 %v5136
    %5138 = vmatprep.subr.mxu0 0.0
    %v5139 = vand.u32 %v3489, 4294901760
    %v5140 = vsub.f32 %v3489, %v5139
    %5141 = vmatpush2.msra.mxu0 %v5140
    %5142 = vmatprep.subr.mxu0 0.0
    %v5143 = vand.u32 %v3488, 4294901760
    %v5144 = vsub.f32 %v3488, %v5143
    %5145 = vmatpush2.msra.mxu0 %v5144
    %v5146 = vand.u32 %v3411, 4294901760
    %v5147 = vsub.f32 %v3411, %v5146
    %5148 = vmatprep.mubr.f32.mxu0 %v5147
    %v5149 = vand.u32 %v3410, 4294901760
    %v5150 = vsub.f32 %v3410, %v5149
    %5151 = vmatmul.mubr.f32.gmra.mxu0 %v5150
    %v5152 = vpop.f32.mrf.mxu0
    %v5153 = vadd.f32 %v4994, %v5152
    %v5154 = vpop.f32.mrf.mxu0
    %v5155 = vand.u32 %v3419, 4294901760
    %v5156 = vsub.f32 %v3419, %v5155
    %5157 = vmatprep.mubr.f32.mxu0 %v5156
    %v5158 = vand.u32 %v3418, 4294901760
    %v5159 = vsub.f32 %v3418, %v5158
    %5160 = vmatmul.mubr.f32.gmra.mxu0 %v5159
    %v5161 = vpop.f32.mrf.mxu0
    %v5162 = vadd.f32 %v5001, %v5161
    %v5163 = vpop.f32.mrf.mxu0
    %v5164 = vand.u32 %v3427, 4294901760
    %v5165 = vsub.f32 %v3427, %v5164
    %5166 = vmatprep.mubr.f32.mxu0 %v5165
    %v5167 = vand.u32 %v3426, 4294901760
    %v5168 = vsub.f32 %v3426, %v5167
    %5169 = vmatmul.mubr.f32.gmra.mxu0 %v5168
    %v5170 = vpop.f32.mrf.mxu0
    %v5171 = vadd.f32 %v5008, %v5170
    %v5172 = vpop.f32.mrf.mxu0
    %v5173 = vand.u32 %v3435, 4294901760
    %v5174 = vsub.f32 %v3435, %v5173
    %5175 = vmatprep.mubr.f32.mxu0 %v5174
    %v5176 = vand.u32 %v3434, 4294901760
    %v5177 = vsub.f32 %v3434, %v5176
    %5178 = vmatmul.mubr.f32.gmra.mxu0 %v5177
    %v5179 = vpop.f32.mrf.mxu0
    %v5180 = vadd.f32 %v5015, %v5179
    %v5181 = vpop.f32.mrf.mxu0
    %5182 = vdwg.mxu0
    %5183 = vmatprep.subr.mxu0 0.0
    %v5184 = vand.u32 %v3487, 4294901760
    %5185 = vmatpush1.msra.mxu0 %v5184
    %5186 = vmatprep.subr.mxu0 0.0
    %v5187 = vand.u32 %v3486, 4294901760
    %5188 = vmatpush1.msra.mxu0 %v5187
    %5189 = vmatprep.subr.mxu0 0.0
    %v5190 = vand.u32 %v3485, 4294901760
    %5191 = vmatpush1.msra.mxu0 %v5190
    %5192 = vmatprep.subr.mxu0 0.0
    %v5193 = vand.u32 %v3484, 4294901760
    %5194 = vmatpush1.msra.mxu0 %v5193
    %5195 = vmatprep.subr.mxu0 0.0
    %v5196 = vand.u32 %v3483, 4294901760
    %5197 = vmatpush1.msra.mxu0 %v5196
    %5198 = vmatprep.subr.mxu0 0.0
    %v5199 = vand.u32 %v3482, 4294901760
    %5200 = vmatpush1.msra.mxu0 %v5199
    %5201 = vmatprep.subr.mxu0 0.0
    %v5202 = vand.u32 %v3481, 4294901760
    %5203 = vmatpush1.msra.mxu0 %v5202
    %5204 = vmatprep.subr.mxu0 0.0
    %v5205 = vand.u32 %v3480, 4294901760
    %5206 = vmatpush1.msra.mxu0 %v5205
    %5207 = vmatprep.subr.mxu0 0.0
    %v5208 = vand.u32 %v3479, 4294901760
    %5209 = vmatpush1.msra.mxu0 %v5208
    %5210 = vmatprep.subr.mxu0 0.0
    %v5211 = vand.u32 %v3478, 4294901760
    %5212 = vmatpush1.msra.mxu0 %v5211
    %5213 = vmatprep.subr.mxu0 0.0
    %v5214 = vand.u32 %v3477, 4294901760
    %5215 = vmatpush1.msra.mxu0 %v5214
    %5216 = vmatprep.subr.mxu0 0.0
    %v5217 = vand.u32 %v3476, 4294901760
    %5218 = vmatpush1.msra.mxu0 %v5217
    %5219 = vmatprep.subr.mxu0 0.0
    %v5220 = vand.u32 %v3475, 4294901760
    %5221 = vmatpush1.msra.mxu0 %v5220
    %5222 = vmatprep.subr.mxu0 0.0
    %v5223 = vand.u32 %v3474, 4294901760
    %5224 = vmatpush1.msra.mxu0 %v5223
    %5225 = vmatprep.subr.mxu0 0.0
    %v5226 = vand.u32 %v3473, 4294901760
    %5227 = vmatpush1.msra.mxu0 %v5226
    %5228 = vmatprep.subr.mxu0 0.0
    %v5229 = vand.u32 %v3472, 4294901760
    %5230 = vmatpush1.msra.mxu0 %v5229
    %5231 = vmatprep.subr.mxu0 0.0
    %v5232 = vand.u32 %v3503, 4294901760
    %5233 = vmatpush2.msra.mxu0 %v5232
    %5234 = vmatprep.subr.mxu0 0.0
    %v5235 = vand.u32 %v3502, 4294901760
    %5236 = vmatpush2.msra.mxu0 %v5235
    %5237 = vmatprep.subr.mxu0 0.0
    %v5238 = vand.u32 %v3501, 4294901760
    %5239 = vmatpush2.msra.mxu0 %v5238
    %5240 = vmatprep.subr.mxu0 0.0
    %v5241 = vand.u32 %v3500, 4294901760
    %5242 = vmatpush2.msra.mxu0 %v5241
    %5243 = vmatprep.subr.mxu0 0.0
    %v5244 = vand.u32 %v3499, 4294901760
    %5245 = vmatpush2.msra.mxu0 %v5244
    %5246 = vmatprep.subr.mxu0 0.0
    %v5247 = vand.u32 %v3498, 4294901760
    %5248 = vmatpush2.msra.mxu0 %v5247
    %5249 = vmatprep.subr.mxu0 0.0
    %v5250 = vand.u32 %v3497, 4294901760
    %5251 = vmatpush2.msra.mxu0 %v5250
    %5252 = vmatprep.subr.mxu0 0.0
    %v5253 = vand.u32 %v3496, 4294901760
    %5254 = vmatpush2.msra.mxu0 %v5253
    %5255 = vmatprep.subr.mxu0 0.0
    %v5256 = vand.u32 %v3495, 4294901760
    %5257 = vmatpush2.msra.mxu0 %v5256
    %5258 = vmatprep.subr.mxu0 0.0
    %v5259 = vand.u32 %v3494, 4294901760
    %5260 = vmatpush2.msra.mxu0 %v5259
    %5261 = vmatprep.subr.mxu0 0.0
    %v5262 = vand.u32 %v3493, 4294901760
    %5263 = vmatpush2.msra.mxu0 %v5262
    %5264 = vmatprep.subr.mxu0 0.0
    %v5265 = vand.u32 %v3492, 4294901760
    %5266 = vmatpush2.msra.mxu0 %v5265
    %5267 = vmatprep.subr.mxu0 0.0
    %v5268 = vand.u32 %v3491, 4294901760
    %5269 = vmatpush2.msra.mxu0 %v5268
    %5270 = vmatprep.subr.mxu0 0.0
    %v5271 = vand.u32 %v3490, 4294901760
    %5272 = vmatpush2.msra.mxu0 %v5271
    %5273 = vmatprep.subr.mxu0 0.0
    %v5274 = vand.u32 %v3489, 4294901760
    %5275 = vmatpush2.msra.mxu0 %v5274
    %5276 = vmatprep.subr.mxu0 0.0
    %v5277 = vand.u32 %v3488, 4294901760
    %5278 = vmatpush2.msra.mxu0 %v5277
    %v5279 = vand.u32 %v3411, 4294901760
    %v5280 = vsub.f32 %v3411, %v5279
    %v5281 = vand.u32 %v5280, 4294901760
    %5282 = vmatprep.mubr.f32.mxu0 %v5281
    %v5283 = vand.u32 %v3410, 4294901760
    %v5284 = vsub.f32 %v3410, %v5283
    %v5285 = vand.u32 %v5284, 4294901760
    %5286 = vmatmul.mubr.f32.gmra.mxu0 %v5285
    %v5287 = vpop.f32.mrf.mxu0
    %v5288 = vadd.f32 %v5153, %v5287
    %v5289 = vpop.f32.mrf.mxu0
    %v5290 = vand.u32 %v3419, 4294901760
    %v5291 = vsub.f32 %v3419, %v5290
    %v5292 = vand.u32 %v5291, 4294901760
    %5293 = vmatprep.mubr.f32.mxu0 %v5292
    %v5294 = vand.u32 %v3418, 4294901760
    %v5295 = vsub.f32 %v3418, %v5294
    %v5296 = vand.u32 %v5295, 4294901760
    %5297 = vmatmul.mubr.f32.gmra.mxu0 %v5296
    %v5298 = vpop.f32.mrf.mxu0
    %v5299 = vadd.f32 %v5162, %v5298
    %v5300 = vpop.f32.mrf.mxu0
    %v5301 = vand.u32 %v3427, 4294901760
    %v5302 = vsub.f32 %v3427, %v5301
    %v5303 = vand.u32 %v5302, 4294901760
    %5304 = vmatprep.mubr.f32.mxu0 %v5303
    %v5305 = vand.u32 %v3426, 4294901760
    %v5306 = vsub.f32 %v3426, %v5305
    %v5307 = vand.u32 %v5306, 4294901760
    %5308 = vmatmul.mubr.f32.gmra.mxu0 %v5307
    %v5309 = vpop.f32.mrf.mxu0
    %v5310 = vadd.f32 %v5171, %v5309
    %v5311 = vpop.f32.mrf.mxu0
    %v5312 = vand.u32 %v3435, 4294901760
    %v5313 = vsub.f32 %v3435, %v5312
    %v5314 = vand.u32 %v5313, 4294901760
    %5315 = vmatprep.mubr.f32.mxu0 %v5314
    %v5316 = vand.u32 %v3434, 4294901760
    %v5317 = vsub.f32 %v3434, %v5316
    %v5318 = vand.u32 %v5317, 4294901760
    %5319 = vmatmul.mubr.f32.gmra.mxu0 %v5318
    %v5320 = vpop.f32.mrf.mxu0
    %v5321 = vadd.f32 %v5180, %v5320
    %v5322 = vpop.f32.mrf.mxu0
    %5323 = vdwg.mxu0
    %5324 = vmatprep.subr.mxu0 0.0
    %v5325 = vand.u32 %v3487, 4294901760
    %v5326 = vsub.f32 %v3487, %v5325
    %v5327 = vand.u32 %v5326, 4294901760
    %5328 = vmatpush1.msra.mxu0 %v5327
    %5329 = vmatprep.subr.mxu0 0.0
    %v5330 = vand.u32 %v3486, 4294901760
    %v5331 = vsub.f32 %v3486, %v5330
    %v5332 = vand.u32 %v5331, 4294901760
    %5333 = vmatpush1.msra.mxu0 %v5332
    %5334 = vmatprep.subr.mxu0 0.0
    %v5335 = vand.u32 %v3485, 4294901760
    %v5336 = vsub.f32 %v3485, %v5335
    %v5337 = vand.u32 %v5336, 4294901760
    %5338 = vmatpush1.msra.mxu0 %v5337
    %5339 = vmatprep.subr.mxu0 0.0
    %v5340 = vand.u32 %v3484, 4294901760
    %v5341 = vsub.f32 %v3484, %v5340
    %v5342 = vand.u32 %v5341, 4294901760
    %5343 = vmatpush1.msra.mxu0 %v5342
    %5344 = vmatprep.subr.mxu0 0.0
    %v5345 = vand.u32 %v3483, 4294901760
    %v5346 = vsub.f32 %v3483, %v5345
    %v5347 = vand.u32 %v5346, 4294901760
    %5348 = vmatpush1.msra.mxu0 %v5347
    %5349 = vmatprep.subr.mxu0 0.0
    %v5350 = vand.u32 %v3482, 4294901760
    %v5351 = vsub.f32 %v3482, %v5350
    %v5352 = vand.u32 %v5351, 4294901760
    %5353 = vmatpush1.msra.mxu0 %v5352
    %5354 = vmatprep.subr.mxu0 0.0
    %v5355 = vand.u32 %v3481, 4294901760
    %v5356 = vsub.f32 %v3481, %v5355
    %v5357 = vand.u32 %v5356, 4294901760
    %5358 = vmatpush1.msra.mxu0 %v5357
    %5359 = vmatprep.subr.mxu0 0.0
    %v5360 = vand.u32 %v3480, 4294901760
    %v5361 = vsub.f32 %v3480, %v5360
    %v5362 = vand.u32 %v5361, 4294901760
    %5363 = vmatpush1.msra.mxu0 %v5362
    %5364 = vmatprep.subr.mxu0 0.0
    %v5365 = vand.u32 %v3479, 4294901760
    %v5366 = vsub.f32 %v3479, %v5365
    %v5367 = vand.u32 %v5366, 4294901760
    %5368 = vmatpush1.msra.mxu0 %v5367
    %5369 = vmatprep.subr.mxu0 0.0
    %v5370 = vand.u32 %v3478, 4294901760
    %v5371 = vsub.f32 %v3478, %v5370
    %v5372 = vand.u32 %v5371, 4294901760
    %5373 = vmatpush1.msra.mxu0 %v5372
    %5374 = vmatprep.subr.mxu0 0.0
    %v5375 = vand.u32 %v3477, 4294901760
    %v5376 = vsub.f32 %v3477, %v5375
    %v5377 = vand.u32 %v5376, 4294901760
    %5378 = vmatpush1.msra.mxu0 %v5377
    %5379 = vmatprep.subr.mxu0 0.0
    %v5380 = vand.u32 %v3476, 4294901760
    %v5381 = vsub.f32 %v3476, %v5380
    %v5382 = vand.u32 %v5381, 4294901760
    %5383 = vmatpush1.msra.mxu0 %v5382
    %5384 = vmatprep.subr.mxu0 0.0
    %v5385 = vand.u32 %v3475, 4294901760
    %v5386 = vsub.f32 %v3475, %v5385
    %v5387 = vand.u32 %v5386, 4294901760
    %5388 = vmatpush1.msra.mxu0 %v5387
    %5389 = vmatprep.subr.mxu0 0.0
    %v5390 = vand.u32 %v3474, 4294901760
    %v5391 = vsub.f32 %v3474, %v5390
    %v5392 = vand.u32 %v5391, 4294901760
    %5393 = vmatpush1.msra.mxu0 %v5392
    %5394 = vmatprep.subr.mxu0 0.0
    %v5395 = vand.u32 %v3473, 4294901760
    %v5396 = vsub.f32 %v3473, %v5395
    %v5397 = vand.u32 %v5396, 4294901760
    %5398 = vmatpush1.msra.mxu0 %v5397
    %5399 = vmatprep.subr.mxu0 0.0
    %v5400 = vand.u32 %v3472, 4294901760
    %v5401 = vsub.f32 %v3472, %v5400
    %v5402 = vand.u32 %v5401, 4294901760
    %5403 = vmatpush1.msra.mxu0 %v5402
    %5404 = vmatprep.subr.mxu0 0.0
    %v5405 = vand.u32 %v3503, 4294901760
    %v5406 = vsub.f32 %v3503, %v5405
    %v5407 = vand.u32 %v5406, 4294901760
    %5408 = vmatpush2.msra.mxu0 %v5407
    %5409 = vmatprep.subr.mxu0 0.0
    %v5410 = vand.u32 %v3502, 4294901760
    %v5411 = vsub.f32 %v3502, %v5410
    %v5412 = vand.u32 %v5411, 4294901760
    %5413 = vmatpush2.msra.mxu0 %v5412
    %5414 = vmatprep.subr.mxu0 0.0
    %v5415 = vand.u32 %v3501, 4294901760
    %v5416 = vsub.f32 %v3501, %v5415
    %v5417 = vand.u32 %v5416, 4294901760
    %5418 = vmatpush2.msra.mxu0 %v5417
    %5419 = vmatprep.subr.mxu0 0.0
    %v5420 = vand.u32 %v3500, 4294901760
    %v5421 = vsub.f32 %v3500, %v5420
    %v5422 = vand.u32 %v5421, 4294901760
    %5423 = vmatpush2.msra.mxu0 %v5422
    %5424 = vmatprep.subr.mxu0 0.0
    %v5425 = vand.u32 %v3499, 4294901760
    %v5426 = vsub.f32 %v3499, %v5425
    %v5427 = vand.u32 %v5426, 4294901760
    %5428 = vmatpush2.msra.mxu0 %v5427
    %5429 = vmatprep.subr.mxu0 0.0
    %v5430 = vand.u32 %v3498, 4294901760
    %v5431 = vsub.f32 %v3498, %v5430
    %v5432 = vand.u32 %v5431, 4294901760
    %5433 = vmatpush2.msra.mxu0 %v5432
    %5434 = vmatprep.subr.mxu0 0.0
    %v5435 = vand.u32 %v3497, 4294901760
    %v5436 = vsub.f32 %v3497, %v5435
    %v5437 = vand.u32 %v5436, 4294901760
    %5438 = vmatpush2.msra.mxu0 %v5437
    %5439 = vmatprep.subr.mxu0 0.0
    %v5440 = vand.u32 %v3496, 4294901760
    %v5441 = vsub.f32 %v3496, %v5440
    %v5442 = vand.u32 %v5441, 4294901760
    %5443 = vmatpush2.msra.mxu0 %v5442
    %5444 = vmatprep.subr.mxu0 0.0
    %v5445 = vand.u32 %v3495, 4294901760
    %v5446 = vsub.f32 %v3495, %v5445
    %v5447 = vand.u32 %v5446, 4294901760
    %5448 = vmatpush2.msra.mxu0 %v5447
    %5449 = vmatprep.subr.mxu0 0.0
    %v5450 = vand.u32 %v3494, 4294901760
    %v5451 = vsub.f32 %v3494, %v5450
    %v5452 = vand.u32 %v5451, 4294901760
    %5453 = vmatpush2.msra.mxu0 %v5452
    %5454 = vmatprep.subr.mxu0 0.0
    %v5455 = vand.u32 %v3493, 4294901760
    %v5456 = vsub.f32 %v3493, %v5455
    %v5457 = vand.u32 %v5456, 4294901760
    %5458 = vmatpush2.msra.mxu0 %v5457
    %5459 = vmatprep.subr.mxu0 0.0
    %v5460 = vand.u32 %v3492, 4294901760
    %v5461 = vsub.f32 %v3492, %v5460
    %v5462 = vand.u32 %v5461, 4294901760
    %5463 = vmatpush2.msra.mxu0 %v5462
    %5464 = vmatprep.subr.mxu0 0.0
    %v5465 = vand.u32 %v3491, 4294901760
    %v5466 = vsub.f32 %v3491, %v5465
    %v5467 = vand.u32 %v5466, 4294901760
    %5468 = vmatpush2.msra.mxu0 %v5467
    %5469 = vmatprep.subr.mxu0 0.0
    %v5470 = vand.u32 %v3490, 4294901760
    %v5471 = vsub.f32 %v3490, %v5470
    %v5472 = vand.u32 %v5471, 4294901760
    %5473 = vmatpush2.msra.mxu0 %v5472
    %5474 = vmatprep.subr.mxu0 0.0
    %v5475 = vand.u32 %v3489, 4294901760
    %v5476 = vsub.f32 %v3489, %v5475
    %v5477 = vand.u32 %v5476, 4294901760
    %5478 = vmatpush2.msra.mxu0 %v5477
    %5479 = vmatprep.subr.mxu0 0.0
    %v5480 = vand.u32 %v3488, 4294901760
    %v5481 = vsub.f32 %v3488, %v5480
    %v5482 = vand.u32 %v5481, 4294901760
    %5483 = vmatpush2.msra.mxu0 %v5482
    %v5484 = vand.u32 %v3411, 4294901760
    %5485 = vmatprep.mubr.f32.mxu0 %v5484
    %v5486 = vand.u32 %v3410, 4294901760
    %5487 = vmatmul.mubr.f32.gmra.mxu0 %v5486
    %v5488 = vpop.f32.mrf.mxu0
    %v5489 = vadd.f32 %v5288, %v5488
    %v5490 = vpop.f32.mrf.mxu0
    %v5491 = vand.u32 %v3419, 4294901760
    %5492 = vmatprep.mubr.f32.mxu0 %v5491
    %v5493 = vand.u32 %v3418, 4294901760
    %5494 = vmatmul.mubr.f32.gmra.mxu0 %v5493
    %v5495 = vpop.f32.mrf.mxu0
    %v5496 = vadd.f32 %v5299, %v5495
    %v5497 = vpop.f32.mrf.mxu0
    %v5498 = vand.u32 %v3427, 4294901760
    %5499 = vmatprep.mubr.f32.mxu0 %v5498
    %v5500 = vand.u32 %v3426, 4294901760
    %5501 = vmatmul.mubr.f32.gmra.mxu0 %v5500
    %v5502 = vpop.f32.mrf.mxu0
    %v5503 = vadd.f32 %v5310, %v5502
    %v5504 = vpop.f32.mrf.mxu0
    %v5505 = vand.u32 %v3435, 4294901760
    %5506 = vmatprep.mubr.f32.mxu0 %v5505
    %v5507 = vand.u32 %v3434, 4294901760
    %5508 = vmatmul.mubr.f32.gmra.mxu0 %v5507
    %v5509 = vpop.f32.mrf.mxu0
    %v5510 = vadd.f32 %v5321, %v5509
    %v5511 = vpop.f32.mrf.mxu0
    %5512 = vdwg.mxu0
    %5513 = vmatprep.subr.mxu0 0.0
    %v5514 = vand.u32 %v3487, 4294901760
    %5515 = vmatpush1.msra.mxu0 %v5514
    %5516 = vmatprep.subr.mxu0 0.0
    %v5517 = vand.u32 %v3486, 4294901760
    %5518 = vmatpush1.msra.mxu0 %v5517
    %5519 = vmatprep.subr.mxu0 0.0
    %v5520 = vand.u32 %v3485, 4294901760
    %5521 = vmatpush1.msra.mxu0 %v5520
    %5522 = vmatprep.subr.mxu0 0.0
    %v5523 = vand.u32 %v3484, 4294901760
    %5524 = vmatpush1.msra.mxu0 %v5523
    %5525 = vmatprep.subr.mxu0 0.0
    %v5526 = vand.u32 %v3483, 4294901760
    %5527 = vmatpush1.msra.mxu0 %v5526
    %5528 = vmatprep.subr.mxu0 0.0
    %v5529 = vand.u32 %v3482, 4294901760
    %5530 = vmatpush1.msra.mxu0 %v5529
    %5531 = vmatprep.subr.mxu0 0.0
    %v5532 = vand.u32 %v3481, 4294901760
    %5533 = vmatpush1.msra.mxu0 %v5532
    %5534 = vmatprep.subr.mxu0 0.0
    %v5535 = vand.u32 %v3480, 4294901760
    %5536 = vmatpush1.msra.mxu0 %v5535
    %5537 = vmatprep.subr.mxu0 0.0
    %v5538 = vand.u32 %v3479, 4294901760
    %5539 = vmatpush1.msra.mxu0 %v5538
    %5540 = vmatprep.subr.mxu0 0.0
    %v5541 = vand.u32 %v3478, 4294901760
    %5542 = vmatpush1.msra.mxu0 %v5541
    %5543 = vmatprep.subr.mxu0 0.0
    %v5544 = vand.u32 %v3477, 4294901760
    %5545 = vmatpush1.msra.mxu0 %v5544
    %5546 = vmatprep.subr.mxu0 0.0
    %v5547 = vand.u32 %v3476, 4294901760
    %5548 = vmatpush1.msra.mxu0 %v5547
    %5549 = vmatprep.subr.mxu0 0.0
    %v5550 = vand.u32 %v3475, 4294901760
    %5551 = vmatpush1.msra.mxu0 %v5550
    %5552 = vmatprep.subr.mxu0 0.0
    %v5553 = vand.u32 %v3474, 4294901760
    %5554 = vmatpush1.msra.mxu0 %v5553
    %5555 = vmatprep.subr.mxu0 0.0
    %v5556 = vand.u32 %v3473, 4294901760
    %5557 = vmatpush1.msra.mxu0 %v5556
    %5558 = vmatprep.subr.mxu0 0.0
    %v5559 = vand.u32 %v3472, 4294901760
    %5560 = vmatpush1.msra.mxu0 %v5559
    %5561 = vmatprep.subr.mxu0 0.0
    %v5562 = vand.u32 %v3503, 4294901760
    %5563 = vmatpush2.msra.mxu0 %v5562
    %5564 = vmatprep.subr.mxu0 0.0
    %v5565 = vand.u32 %v3502, 4294901760
    %5566 = vmatpush2.msra.mxu0 %v5565
    %5567 = vmatprep.subr.mxu0 0.0
    %v5568 = vand.u32 %v3501, 4294901760
    %5569 = vmatpush2.msra.mxu0 %v5568
    %5570 = vmatprep.subr.mxu0 0.0
    %v5571 = vand.u32 %v3500, 4294901760
    %5572 = vmatpush2.msra.mxu0 %v5571
    %5573 = vmatprep.subr.mxu0 0.0
    %v5574 = vand.u32 %v3499, 4294901760
    %5575 = vmatpush2.msra.mxu0 %v5574
    %5576 = vmatprep.subr.mxu0 0.0
    %v5577 = vand.u32 %v3498, 4294901760
    %5578 = vmatpush2.msra.mxu0 %v5577
    %5579 = vmatprep.subr.mxu0 0.0
    %v5580 = vand.u32 %v3497, 4294901760
    %5581 = vmatpush2.msra.mxu0 %v5580
    %5582 = vmatprep.subr.mxu0 0.0
    %v5583 = vand.u32 %v3496, 4294901760
    %5584 = vmatpush2.msra.mxu0 %v5583
    %5585 = vmatprep.subr.mxu0 0.0
    %v5586 = vand.u32 %v3495, 4294901760
    %5587 = vmatpush2.msra.mxu0 %v5586
    %5588 = vmatprep.subr.mxu0 0.0
    %v5589 = vand.u32 %v3494, 4294901760
    %5590 = vmatpush2.msra.mxu0 %v5589
    %5591 = vmatprep.subr.mxu0 0.0
    %v5592 = vand.u32 %v3493, 4294901760
    %5593 = vmatpush2.msra.mxu0 %v5592
    %5594 = vmatprep.subr.mxu0 0.0
    %v5595 = vand.u32 %v3492, 4294901760
    %5596 = vmatpush2.msra.mxu0 %v5595
    %5597 = vmatprep.subr.mxu0 0.0
    %v5598 = vand.u32 %v3491, 4294901760
    %5599 = vmatpush2.msra.mxu0 %v5598
    %5600 = vmatprep.subr.mxu0 0.0
    %v5601 = vand.u32 %v3490, 4294901760
    %5602 = vmatpush2.msra.mxu0 %v5601
    %5603 = vmatprep.subr.mxu0 0.0
    %v5604 = vand.u32 %v3489, 4294901760
    %5605 = vmatpush2.msra.mxu0 %v5604
    %5606 = vmatprep.subr.mxu0 0.0
    %v5607 = vand.u32 %v3488, 4294901760
    %5608 = vmatpush2.msra.mxu0 %v5607
    %v5609 = vand.u32 %v3411, 4294901760
    %5610 = vmatprep.mubr.f32.mxu0 %v5609
    %v5611 = vand.u32 %v3410, 4294901760
    %5612 = vmatmul.mubr.f32.gmra.mxu0 %v5611
    %v5613 = vpop.f32.mrf.mxu0
    %v5614 = vadd.f32 %v5489, %v5613
    %v5615 = vpop.f32.mrf.mxu0
    %v5616 = vand.u32 %v3419, 4294901760
    %5617 = vmatprep.mubr.f32.mxu0 %v5616
    %v5618 = vand.u32 %v3418, 4294901760
    %5619 = vmatmul.mubr.f32.gmra.mxu0 %v5618
    %v5620 = vpop.f32.mrf.mxu0
    %v5621 = vadd.f32 %v5496, %v5620
    %v5622 = vpop.f32.mrf.mxu0
    %v5623 = vand.u32 %v3427, 4294901760
    %5624 = vmatprep.mubr.f32.mxu0 %v5623
    %v5625 = vand.u32 %v3426, 4294901760
    %5626 = vmatmul.mubr.f32.gmra.mxu0 %v5625
    %v5627 = vpop.f32.mrf.mxu0
    %v5628 = vadd.f32 %v5503, %v5627
    %v5629 = vpop.f32.mrf.mxu0
    %v5630 = vand.u32 %v3435, 4294901760
    %5631 = vmatprep.mubr.f32.mxu0 %v5630
    %v5632 = vand.u32 %v3434, 4294901760
    %5633 = vmatmul.mubr.f32.gmra.mxu0 %v5632
    %v5634 = vpop.f32.mrf.mxu0
    %v5635 = vadd.f32 %v5510, %v5634
    %v5636 = vpop.f32.mrf.mxu0
    %5637 = vdwg.mxu0
    %5638 = vmatprep.subr.mxu0 0.0
    %v5639 = vand.u32 %v3519, 4294901760
    %5640 = vmatpush1.msra.mxu0 %v5639
    %5641 = vmatprep.subr.mxu0 0.0
    %v5642 = vand.u32 %v3518, 4294901760
    %5643 = vmatpush1.msra.mxu0 %v5642
    %5644 = vmatprep.subr.mxu0 0.0
    %v5645 = vand.u32 %v3517, 4294901760
    %5646 = vmatpush1.msra.mxu0 %v5645
    %5647 = vmatprep.subr.mxu0 0.0
    %v5648 = vand.u32 %v3516, 4294901760
    %5649 = vmatpush1.msra.mxu0 %v5648
    %5650 = vmatprep.subr.mxu0 0.0
    %v5651 = vand.u32 %v3515, 4294901760
    %5652 = vmatpush1.msra.mxu0 %v5651
    %5653 = vmatprep.subr.mxu0 0.0
    %v5654 = vand.u32 %v3514, 4294901760
    %5655 = vmatpush1.msra.mxu0 %v5654
    %5656 = vmatprep.subr.mxu0 0.0
    %v5657 = vand.u32 %v3513, 4294901760
    %5658 = vmatpush1.msra.mxu0 %v5657
    %5659 = vmatprep.subr.mxu0 0.0
    %v5660 = vand.u32 %v3512, 4294901760
    %5661 = vmatpush1.msra.mxu0 %v5660
    %5662 = vmatprep.subr.mxu0 0.0
    %v5663 = vand.u32 %v3511, 4294901760
    %5664 = vmatpush1.msra.mxu0 %v5663
    %5665 = vmatprep.subr.mxu0 0.0
    %v5666 = vand.u32 %v3510, 4294901760
    %5667 = vmatpush1.msra.mxu0 %v5666
    %5668 = vmatprep.subr.mxu0 0.0
    %v5669 = vand.u32 %v3509, 4294901760
    %5670 = vmatpush1.msra.mxu0 %v5669
    %5671 = vmatprep.subr.mxu0 0.0
    %v5672 = vand.u32 %v3508, 4294901760
    %5673 = vmatpush1.msra.mxu0 %v5672
    %5674 = vmatprep.subr.mxu0 0.0
    %v5675 = vand.u32 %v3507, 4294901760
    %5676 = vmatpush1.msra.mxu0 %v5675
    %5677 = vmatprep.subr.mxu0 0.0
    %v5678 = vand.u32 %v3506, 4294901760
    %5679 = vmatpush1.msra.mxu0 %v5678
    %5680 = vmatprep.subr.mxu0 0.0
    %v5681 = vand.u32 %v3505, 4294901760
    %5682 = vmatpush1.msra.mxu0 %v5681
    %5683 = vmatprep.subr.mxu0 0.0
    %v5684 = vand.u32 %v3504, 4294901760
    %5685 = vmatpush1.msra.mxu0 %v5684
    %5686 = vmatprep.subr.mxu0 0.0
    %v5687 = vand.u32 %v3535, 4294901760
    %5688 = vmatpush2.msra.mxu0 %v5687
    %5689 = vmatprep.subr.mxu0 0.0
    %v5690 = vand.u32 %v3534, 4294901760
    %5691 = vmatpush2.msra.mxu0 %v5690
    %5692 = vmatprep.subr.mxu0 0.0
    %v5693 = vand.u32 %v3533, 4294901760
    %5694 = vmatpush2.msra.mxu0 %v5693
    %5695 = vmatprep.subr.mxu0 0.0
    %v5696 = vand.u32 %v3532, 4294901760
    %5697 = vmatpush2.msra.mxu0 %v5696
    %5698 = vmatprep.subr.mxu0 0.0
    %v5699 = vand.u32 %v3531, 4294901760
    %5700 = vmatpush2.msra.mxu0 %v5699
    %5701 = vmatprep.subr.mxu0 0.0
    %v5702 = vand.u32 %v3530, 4294901760
    %5703 = vmatpush2.msra.mxu0 %v5702
    %5704 = vmatprep.subr.mxu0 0.0
    %v5705 = vand.u32 %v3529, 4294901760
    %5706 = vmatpush2.msra.mxu0 %v5705
    %5707 = vmatprep.subr.mxu0 0.0
    %v5708 = vand.u32 %v3528, 4294901760
    %5709 = vmatpush2.msra.mxu0 %v5708
    %5710 = vmatprep.subr.mxu0 0.0
    %v5711 = vand.u32 %v3527, 4294901760
    %5712 = vmatpush2.msra.mxu0 %v5711
    %5713 = vmatprep.subr.mxu0 0.0
    %v5714 = vand.u32 %v3526, 4294901760
    %5715 = vmatpush2.msra.mxu0 %v5714
    %5716 = vmatprep.subr.mxu0 0.0
    %v5717 = vand.u32 %v3525, 4294901760
    %5718 = vmatpush2.msra.mxu0 %v5717
    %5719 = vmatprep.subr.mxu0 0.0
    %v5720 = vand.u32 %v3524, 4294901760
    %5721 = vmatpush2.msra.mxu0 %v5720
    %5722 = vmatprep.subr.mxu0 0.0
    %v5723 = vand.u32 %v3523, 4294901760
    %5724 = vmatpush2.msra.mxu0 %v5723
    %5725 = vmatprep.subr.mxu0 0.0
    %v5726 = vand.u32 %v3522, 4294901760
    %5727 = vmatpush2.msra.mxu0 %v5726
    %5728 = vmatprep.subr.mxu0 0.0
    %v5729 = vand.u32 %v3521, 4294901760
    %5730 = vmatpush2.msra.mxu0 %v5729
    %5731 = vmatprep.subr.mxu0 0.0
    %v5732 = vand.u32 %v3520, 4294901760
    %5733 = vmatpush2.msra.mxu0 %v5732
    %v5734 = vand.u32 %v3413, 4294901760
    %v5735 = vsub.f32 %v3413, %v5734
    %v5736 = vand.u32 %v5735, 4294901760
    %v5737 = vsub.f32 %v5735, %v5736
    %v5738 = vand.u32 %v5737, 4294901760
    %5739 = vmatprep.mubr.f32.mxu0 %v5738
    %v5740 = vand.u32 %v3412, 4294901760
    %v5741 = vsub.f32 %v3412, %v5740
    %v5742 = vand.u32 %v5741, 4294901760
    %v5743 = vsub.f32 %v5741, %v5742
    %v5744 = vand.u32 %v5743, 4294901760
    %5745 = vmatmul.mubr.f32.gmra.mxu0 %v5744
    %v5746 = vpop.f32.mrf.mxu0
    %v5747 = vadd.f32 %v5614, %v5746
    %v5748 = vpop.f32.mrf.mxu0
    %v5749 = vand.u32 %v3421, 4294901760
    %v5750 = vsub.f32 %v3421, %v5749
    %v5751 = vand.u32 %v5750, 4294901760
    %v5752 = vsub.f32 %v5750, %v5751
    %v5753 = vand.u32 %v5752, 4294901760
    %5754 = vmatprep.mubr.f32.mxu0 %v5753
    %v5755 = vand.u32 %v3420, 4294901760
    %v5756 = vsub.f32 %v3420, %v5755
    %v5757 = vand.u32 %v5756, 4294901760
    %v5758 = vsub.f32 %v5756, %v5757
    %v5759 = vand.u32 %v5758, 4294901760
    %5760 = vmatmul.mubr.f32.gmra.mxu0 %v5759
    %v5761 = vpop.f32.mrf.mxu0
    %v5762 = vadd.f32 %v5621, %v5761
    %v5763 = vpop.f32.mrf.mxu0
    %v5764 = vand.u32 %v3429, 4294901760
    %v5765 = vsub.f32 %v3429, %v5764
    %v5766 = vand.u32 %v5765, 4294901760
    %v5767 = vsub.f32 %v5765, %v5766
    %v5768 = vand.u32 %v5767, 4294901760
    %5769 = vmatprep.mubr.f32.mxu0 %v5768
    %v5770 = vand.u32 %v3428, 4294901760
    %v5771 = vsub.f32 %v3428, %v5770
    %v5772 = vand.u32 %v5771, 4294901760
    %v5773 = vsub.f32 %v5771, %v5772
    %v5774 = vand.u32 %v5773, 4294901760
    %5775 = vmatmul.mubr.f32.gmra.mxu0 %v5774
    %v5776 = vpop.f32.mrf.mxu0
    %v5777 = vadd.f32 %v5628, %v5776
    %v5778 = vpop.f32.mrf.mxu0
    %v5779 = vand.u32 %v3437, 4294901760
    %v5780 = vsub.f32 %v3437, %v5779
    %v5781 = vand.u32 %v5780, 4294901760
    %v5782 = vsub.f32 %v5780, %v5781
    %v5783 = vand.u32 %v5782, 4294901760
    %5784 = vmatprep.mubr.f32.mxu0 %v5783
    %v5785 = vand.u32 %v3436, 4294901760
    %v5786 = vsub.f32 %v3436, %v5785
    %v5787 = vand.u32 %v5786, 4294901760
    %v5788 = vsub.f32 %v5786, %v5787
    %v5789 = vand.u32 %v5788, 4294901760
    %5790 = vmatmul.mubr.f32.gmra.mxu0 %v5789
    %v5791 = vpop.f32.mrf.mxu0
    %v5792 = vadd.f32 %v5635, %v5791
    %v5793 = vpop.f32.mrf.mxu0
    %5794 = vdwg.mxu0
    %5795 = vmatprep.subr.mxu0 0.0
    %v5796 = vand.u32 %v3519, 4294901760
    %v5797 = vsub.f32 %v3519, %v5796
    %v5798 = vand.u32 %v5797, 4294901760
    %v5799 = vsub.f32 %v5797, %v5798
    %v5800 = vand.u32 %v5799, 4294901760
    %5801 = vmatpush1.msra.mxu0 %v5800
    %5802 = vmatprep.subr.mxu0 0.0
    %v5803 = vand.u32 %v3518, 4294901760
    %v5804 = vsub.f32 %v3518, %v5803
    %v5805 = vand.u32 %v5804, 4294901760
    %v5806 = vsub.f32 %v5804, %v5805
    %v5807 = vand.u32 %v5806, 4294901760
    %5808 = vmatpush1.msra.mxu0 %v5807
    %5809 = vmatprep.subr.mxu0 0.0
    %v5810 = vand.u32 %v3517, 4294901760
    %v5811 = vsub.f32 %v3517, %v5810
    %v5812 = vand.u32 %v5811, 4294901760
    %v5813 = vsub.f32 %v5811, %v5812
    %v5814 = vand.u32 %v5813, 4294901760
    %5815 = vmatpush1.msra.mxu0 %v5814
    %5816 = vmatprep.subr.mxu0 0.0
    %v5817 = vand.u32 %v3516, 4294901760
    %v5818 = vsub.f32 %v3516, %v5817
    %v5819 = vand.u32 %v5818, 4294901760
    %v5820 = vsub.f32 %v5818, %v5819
    %v5821 = vand.u32 %v5820, 4294901760
    %5822 = vmatpush1.msra.mxu0 %v5821
    %5823 = vmatprep.subr.mxu0 0.0
    %v5824 = vand.u32 %v3515, 4294901760
    %v5825 = vsub.f32 %v3515, %v5824
    %v5826 = vand.u32 %v5825, 4294901760
    %v5827 = vsub.f32 %v5825, %v5826
    %v5828 = vand.u32 %v5827, 4294901760
    %5829 = vmatpush1.msra.mxu0 %v5828
    %5830 = vmatprep.subr.mxu0 0.0
    %v5831 = vand.u32 %v3514, 4294901760
    %v5832 = vsub.f32 %v3514, %v5831
    %v5833 = vand.u32 %v5832, 4294901760
    %v5834 = vsub.f32 %v5832, %v5833
    %v5835 = vand.u32 %v5834, 4294901760
    %5836 = vmatpush1.msra.mxu0 %v5835
    %5837 = vmatprep.subr.mxu0 0.0
    %v5838 = vand.u32 %v3513, 4294901760
    %v5839 = vsub.f32 %v3513, %v5838
    %v5840 = vand.u32 %v5839, 4294901760
    %v5841 = vsub.f32 %v5839, %v5840
    %v5842 = vand.u32 %v5841, 4294901760
    %5843 = vmatpush1.msra.mxu0 %v5842
    %5844 = vmatprep.subr.mxu0 0.0
    %v5845 = vand.u32 %v3512, 4294901760
    %v5846 = vsub.f32 %v3512, %v5845
    %v5847 = vand.u32 %v5846, 4294901760
    %v5848 = vsub.f32 %v5846, %v5847
    %v5849 = vand.u32 %v5848, 4294901760
    %5850 = vmatpush1.msra.mxu0 %v5849
    %5851 = vmatprep.subr.mxu0 0.0
    %v5852 = vand.u32 %v3511, 4294901760
    %v5853 = vsub.f32 %v3511, %v5852
    %v5854 = vand.u32 %v5853, 4294901760
    %v5855 = vsub.f32 %v5853, %v5854
    %v5856 = vand.u32 %v5855, 4294901760
    %5857 = vmatpush1.msra.mxu0 %v5856
    %5858 = vmatprep.subr.mxu0 0.0
    %v5859 = vand.u32 %v3510, 4294901760
    %v5860 = vsub.f32 %v3510, %v5859
    %v5861 = vand.u32 %v5860, 4294901760
    %v5862 = vsub.f32 %v5860, %v5861
    %v5863 = vand.u32 %v5862, 4294901760
    %5864 = vmatpush1.msra.mxu0 %v5863
    %5865 = vmatprep.subr.mxu0 0.0
    %v5866 = vand.u32 %v3509, 4294901760
    %v5867 = vsub.f32 %v3509, %v5866
    %v5868 = vand.u32 %v5867, 4294901760
    %v5869 = vsub.f32 %v5867, %v5868
    %v5870 = vand.u32 %v5869, 4294901760
    %5871 = vmatpush1.msra.mxu0 %v5870
    %5872 = vmatprep.subr.mxu0 0.0
    %v5873 = vand.u32 %v3508, 4294901760
    %v5874 = vsub.f32 %v3508, %v5873
    %v5875 = vand.u32 %v5874, 4294901760
    %v5876 = vsub.f32 %v5874, %v5875
    %v5877 = vand.u32 %v5876, 4294901760
    %5878 = vmatpush1.msra.mxu0 %v5877
    %5879 = vmatprep.subr.mxu0 0.0
    %v5880 = vand.u32 %v3507, 4294901760
    %v5881 = vsub.f32 %v3507, %v5880
    %v5882 = vand.u32 %v5881, 4294901760
    %v5883 = vsub.f32 %v5881, %v5882
    %v5884 = vand.u32 %v5883, 4294901760
    %5885 = vmatpush1.msra.mxu0 %v5884
    %5886 = vmatprep.subr.mxu0 0.0
    %v5887 = vand.u32 %v3506, 4294901760
    %v5888 = vsub.f32 %v3506, %v5887
    %v5889 = vand.u32 %v5888, 4294901760
    %v5890 = vsub.f32 %v5888, %v5889
    %v5891 = vand.u32 %v5890, 4294901760
    %5892 = vmatpush1.msra.mxu0 %v5891
    %5893 = vmatprep.subr.mxu0 0.0
    %v5894 = vand.u32 %v3505, 4294901760
    %v5895 = vsub.f32 %v3505, %v5894
    %v5896 = vand.u32 %v5895, 4294901760
    %v5897 = vsub.f32 %v5895, %v5896
    %v5898 = vand.u32 %v5897, 4294901760
    %5899 = vmatpush1.msra.mxu0 %v5898
    %5900 = vmatprep.subr.mxu0 0.0
    %v5901 = vand.u32 %v3504, 4294901760
    %v5902 = vsub.f32 %v3504, %v5901
    %v5903 = vand.u32 %v5902, 4294901760
    %v5904 = vsub.f32 %v5902, %v5903
    %v5905 = vand.u32 %v5904, 4294901760
    %5906 = vmatpush1.msra.mxu0 %v5905
    %5907 = vmatprep.subr.mxu0 0.0
    %v5908 = vand.u32 %v3535, 4294901760
    %v5909 = vsub.f32 %v3535, %v5908
    %v5910 = vand.u32 %v5909, 4294901760
    %v5911 = vsub.f32 %v5909, %v5910
    %v5912 = vand.u32 %v5911, 4294901760
    %5913 = vmatpush2.msra.mxu0 %v5912
    %5914 = vmatprep.subr.mxu0 0.0
    %v5915 = vand.u32 %v3534, 4294901760
    %v5916 = vsub.f32 %v3534, %v5915
    %v5917 = vand.u32 %v5916, 4294901760
    %v5918 = vsub.f32 %v5916, %v5917
    %v5919 = vand.u32 %v5918, 4294901760
    %5920 = vmatpush2.msra.mxu0 %v5919
    %5921 = vmatprep.subr.mxu0 0.0
    %v5922 = vand.u32 %v3533, 4294901760
    %v5923 = vsub.f32 %v3533, %v5922
    %v5924 = vand.u32 %v5923, 4294901760
    %v5925 = vsub.f32 %v5923, %v5924
    %v5926 = vand.u32 %v5925, 4294901760
    %5927 = vmatpush2.msra.mxu0 %v5926
    %5928 = vmatprep.subr.mxu0 0.0
    %v5929 = vand.u32 %v3532, 4294901760
    %v5930 = vsub.f32 %v3532, %v5929
    %v5931 = vand.u32 %v5930, 4294901760
    %v5932 = vsub.f32 %v5930, %v5931
    %v5933 = vand.u32 %v5932, 4294901760
    %5934 = vmatpush2.msra.mxu0 %v5933
    %5935 = vmatprep.subr.mxu0 0.0
    %v5936 = vand.u32 %v3531, 4294901760
    %v5937 = vsub.f32 %v3531, %v5936
    %v5938 = vand.u32 %v5937, 4294901760
    %v5939 = vsub.f32 %v5937, %v5938
    %v5940 = vand.u32 %v5939, 4294901760
    %5941 = vmatpush2.msra.mxu0 %v5940
    %5942 = vmatprep.subr.mxu0 0.0
    %v5943 = vand.u32 %v3530, 4294901760
    %v5944 = vsub.f32 %v3530, %v5943
    %v5945 = vand.u32 %v5944, 4294901760
    %v5946 = vsub.f32 %v5944, %v5945
    %v5947 = vand.u32 %v5946, 4294901760
    %5948 = vmatpush2.msra.mxu0 %v5947
    %5949 = vmatprep.subr.mxu0 0.0
    %v5950 = vand.u32 %v3529, 4294901760
    %v5951 = vsub.f32 %v3529, %v5950
    %v5952 = vand.u32 %v5951, 4294901760
    %v5953 = vsub.f32 %v5951, %v5952
    %v5954 = vand.u32 %v5953, 4294901760
    %5955 = vmatpush2.msra.mxu0 %v5954
    %5956 = vmatprep.subr.mxu0 0.0
    %v5957 = vand.u32 %v3528, 4294901760
    %v5958 = vsub.f32 %v3528, %v5957
    %v5959 = vand.u32 %v5958, 4294901760
    %v5960 = vsub.f32 %v5958, %v5959
    %v5961 = vand.u32 %v5960, 4294901760
    %5962 = vmatpush2.msra.mxu0 %v5961
    %5963 = vmatprep.subr.mxu0 0.0
    %v5964 = vand.u32 %v3527, 4294901760
    %v5965 = vsub.f32 %v3527, %v5964
    %v5966 = vand.u32 %v5965, 4294901760
    %v5967 = vsub.f32 %v5965, %v5966
    %v5968 = vand.u32 %v5967, 4294901760
    %5969 = vmatpush2.msra.mxu0 %v5968
    %5970 = vmatprep.subr.mxu0 0.0
    %v5971 = vand.u32 %v3526, 4294901760
    %v5972 = vsub.f32 %v3526, %v5971
    %v5973 = vand.u32 %v5972, 4294901760
    %v5974 = vsub.f32 %v5972, %v5973
    %v5975 = vand.u32 %v5974, 4294901760
    %5976 = vmatpush2.msra.mxu0 %v5975
    %5977 = vmatprep.subr.mxu0 0.0
    %v5978 = vand.u32 %v3525, 4294901760
    %v5979 = vsub.f32 %v3525, %v5978
    %v5980 = vand.u32 %v5979, 4294901760
    %v5981 = vsub.f32 %v5979, %v5980
    %v5982 = vand.u32 %v5981, 4294901760
    %5983 = vmatpush2.msra.mxu0 %v5982
    %5984 = vmatprep.subr.mxu0 0.0
    %v5985 = vand.u32 %v3524, 4294901760
    %v5986 = vsub.f32 %v3524, %v5985
    %v5987 = vand.u32 %v5986, 4294901760
    %v5988 = vsub.f32 %v5986, %v5987
    %v5989 = vand.u32 %v5988, 4294901760
    %5990 = vmatpush2.msra.mxu0 %v5989
    %5991 = vmatprep.subr.mxu0 0.0
    %v5992 = vand.u32 %v3523, 4294901760
    %v5993 = vsub.f32 %v3523, %v5992
    %v5994 = vand.u32 %v5993, 4294901760
    %v5995 = vsub.f32 %v5993, %v5994
    %v5996 = vand.u32 %v5995, 4294901760
    %5997 = vmatpush2.msra.mxu0 %v5996
    %5998 = vmatprep.subr.mxu0 0.0
    %v5999 = vand.u32 %v3522, 4294901760
    %v6000 = vsub.f32 %v3522, %v5999
    %v6001 = vand.u32 %v6000, 4294901760
    %v6002 = vsub.f32 %v6000, %v6001
    %v6003 = vand.u32 %v6002, 4294901760
    %6004 = vmatpush2.msra.mxu0 %v6003
    %6005 = vmatprep.subr.mxu0 0.0
    %v6006 = vand.u32 %v3521, 4294901760
    %v6007 = vsub.f32 %v3521, %v6006
    %v6008 = vand.u32 %v6007, 4294901760
    %v6009 = vsub.f32 %v6007, %v6008
    %v6010 = vand.u32 %v6009, 4294901760
    %6011 = vmatpush2.msra.mxu0 %v6010
    %6012 = vmatprep.subr.mxu0 0.0
    %v6013 = vand.u32 %v3520, 4294901760
    %v6014 = vsub.f32 %v3520, %v6013
    %v6015 = vand.u32 %v6014, 4294901760
    %v6016 = vsub.f32 %v6014, %v6015
    %v6017 = vand.u32 %v6016, 4294901760
    %6018 = vmatpush2.msra.mxu0 %v6017
    %v6019 = vand.u32 %v3413, 4294901760
    %6020 = vmatprep.mubr.f32.mxu0 %v6019
    %v6021 = vand.u32 %v3412, 4294901760
    %6022 = vmatmul.mubr.f32.gmra.mxu0 %v6021
    %v6023 = vpop.f32.mrf.mxu0
    %v6024 = vadd.f32 %v5747, %v6023
    %v6025 = vpop.f32.mrf.mxu0
    %v6026 = vand.u32 %v3421, 4294901760
    %6027 = vmatprep.mubr.f32.mxu0 %v6026
    %v6028 = vand.u32 %v3420, 4294901760
    %6029 = vmatmul.mubr.f32.gmra.mxu0 %v6028
    %v6030 = vpop.f32.mrf.mxu0
    %v6031 = vadd.f32 %v5762, %v6030
    %v6032 = vpop.f32.mrf.mxu0
    %v6033 = vand.u32 %v3429, 4294901760
    %6034 = vmatprep.mubr.f32.mxu0 %v6033
    %v6035 = vand.u32 %v3428, 4294901760
    %6036 = vmatmul.mubr.f32.gmra.mxu0 %v6035
    %v6037 = vpop.f32.mrf.mxu0
    %v6038 = vadd.f32 %v5777, %v6037
    %v6039 = vpop.f32.mrf.mxu0
    %v6040 = vand.u32 %v3437, 4294901760
    %6041 = vmatprep.mubr.f32.mxu0 %v6040
    %v6042 = vand.u32 %v3436, 4294901760
    %6043 = vmatmul.mubr.f32.gmra.mxu0 %v6042
    %v6044 = vpop.f32.mrf.mxu0
    %v6045 = vadd.f32 %v5792, %v6044
    %v6046 = vpop.f32.mrf.mxu0
    %6047 = vdwg.mxu0
    %6048 = vmatprep.subr.mxu0 0.0
    %v6049 = vand.u32 %v3519, 4294901760
    %v6050 = vsub.f32 %v3519, %v6049
    %6051 = vmatpush1.msra.mxu0 %v6050
    %6052 = vmatprep.subr.mxu0 0.0
    %v6053 = vand.u32 %v3518, 4294901760
    %v6054 = vsub.f32 %v3518, %v6053
    %6055 = vmatpush1.msra.mxu0 %v6054
    %6056 = vmatprep.subr.mxu0 0.0
    %v6057 = vand.u32 %v3517, 4294901760
    %v6058 = vsub.f32 %v3517, %v6057
    %6059 = vmatpush1.msra.mxu0 %v6058
    %6060 = vmatprep.subr.mxu0 0.0
    %v6061 = vand.u32 %v3516, 4294901760
    %v6062 = vsub.f32 %v3516, %v6061
    %6063 = vmatpush1.msra.mxu0 %v6062
    %6064 = vmatprep.subr.mxu0 0.0
    %v6065 = vand.u32 %v3515, 4294901760
    %v6066 = vsub.f32 %v3515, %v6065
    %6067 = vmatpush1.msra.mxu0 %v6066
    %6068 = vmatprep.subr.mxu0 0.0
    %v6069 = vand.u32 %v3514, 4294901760
    %v6070 = vsub.f32 %v3514, %v6069
    %6071 = vmatpush1.msra.mxu0 %v6070
    %6072 = vmatprep.subr.mxu0 0.0
    %v6073 = vand.u32 %v3513, 4294901760
    %v6074 = vsub.f32 %v3513, %v6073
    %6075 = vmatpush1.msra.mxu0 %v6074
    %6076 = vmatprep.subr.mxu0 0.0
    %v6077 = vand.u32 %v3512, 4294901760
    %v6078 = vsub.f32 %v3512, %v6077
    %6079 = vmatpush1.msra.mxu0 %v6078
    %6080 = vmatprep.subr.mxu0 0.0
    %v6081 = vand.u32 %v3511, 4294901760
    %v6082 = vsub.f32 %v3511, %v6081
    %6083 = vmatpush1.msra.mxu0 %v6082
    %6084 = vmatprep.subr.mxu0 0.0
    %v6085 = vand.u32 %v3510, 4294901760
    %v6086 = vsub.f32 %v3510, %v6085
    %6087 = vmatpush1.msra.mxu0 %v6086
    %6088 = vmatprep.subr.mxu0 0.0
    %v6089 = vand.u32 %v3509, 4294901760
    %v6090 = vsub.f32 %v3509, %v6089
    %6091 = vmatpush1.msra.mxu0 %v6090
    %6092 = vmatprep.subr.mxu0 0.0
    %v6093 = vand.u32 %v3508, 4294901760
    %v6094 = vsub.f32 %v3508, %v6093
    %6095 = vmatpush1.msra.mxu0 %v6094
    %6096 = vmatprep.subr.mxu0 0.0
    %v6097 = vand.u32 %v3507, 4294901760
    %v6098 = vsub.f32 %v3507, %v6097
    %6099 = vmatpush1.msra.mxu0 %v6098
    %6100 = vmatprep.subr.mxu0 0.0
    %v6101 = vand.u32 %v3506, 4294901760
    %v6102 = vsub.f32 %v3506, %v6101
    %6103 = vmatpush1.msra.mxu0 %v6102
    %6104 = vmatprep.subr.mxu0 0.0
    %v6105 = vand.u32 %v3505, 4294901760
    %v6106 = vsub.f32 %v3505, %v6105
    %6107 = vmatpush1.msra.mxu0 %v6106
    %6108 = vmatprep.subr.mxu0 0.0
    %v6109 = vand.u32 %v3504, 4294901760
    %v6110 = vsub.f32 %v3504, %v6109
    %6111 = vmatpush1.msra.mxu0 %v6110
    %6112 = vmatprep.subr.mxu0 0.0
    %v6113 = vand.u32 %v3535, 4294901760
    %v6114 = vsub.f32 %v3535, %v6113
    %6115 = vmatpush2.msra.mxu0 %v6114
    %6116 = vmatprep.subr.mxu0 0.0
    %v6117 = vand.u32 %v3534, 4294901760
    %v6118 = vsub.f32 %v3534, %v6117
    %6119 = vmatpush2.msra.mxu0 %v6118
    %6120 = vmatprep.subr.mxu0 0.0
    %v6121 = vand.u32 %v3533, 4294901760
    %v6122 = vsub.f32 %v3533, %v6121
    %6123 = vmatpush2.msra.mxu0 %v6122
    %6124 = vmatprep.subr.mxu0 0.0
    %v6125 = vand.u32 %v3532, 4294901760
    %v6126 = vsub.f32 %v3532, %v6125
    %6127 = vmatpush2.msra.mxu0 %v6126
    %6128 = vmatprep.subr.mxu0 0.0
    %v6129 = vand.u32 %v3531, 4294901760
    %v6130 = vsub.f32 %v3531, %v6129
    %6131 = vmatpush2.msra.mxu0 %v6130
    %6132 = vmatprep.subr.mxu0 0.0
    %v6133 = vand.u32 %v3530, 4294901760
    %v6134 = vsub.f32 %v3530, %v6133
    %6135 = vmatpush2.msra.mxu0 %v6134
    %6136 = vmatprep.subr.mxu0 0.0
    %v6137 = vand.u32 %v3529, 4294901760
    %v6138 = vsub.f32 %v3529, %v6137
    %6139 = vmatpush2.msra.mxu0 %v6138
    %6140 = vmatprep.subr.mxu0 0.0
    %v6141 = vand.u32 %v3528, 4294901760
    %v6142 = vsub.f32 %v3528, %v6141
    %6143 = vmatpush2.msra.mxu0 %v6142
    %6144 = vmatprep.subr.mxu0 0.0
    %v6145 = vand.u32 %v3527, 4294901760
    %v6146 = vsub.f32 %v3527, %v6145
    %6147 = vmatpush2.msra.mxu0 %v6146
    %6148 = vmatprep.subr.mxu0 0.0
    %v6149 = vand.u32 %v3526, 4294901760
    %v6150 = vsub.f32 %v3526, %v6149
    %6151 = vmatpush2.msra.mxu0 %v6150
    %6152 = vmatprep.subr.mxu0 0.0
    %v6153 = vand.u32 %v3525, 4294901760
    %v6154 = vsub.f32 %v3525, %v6153
    %6155 = vmatpush2.msra.mxu0 %v6154
    %6156 = vmatprep.subr.mxu0 0.0
    %v6157 = vand.u32 %v3524, 4294901760
    %v6158 = vsub.f32 %v3524, %v6157
    %6159 = vmatpush2.msra.mxu0 %v6158
    %6160 = vmatprep.subr.mxu0 0.0
    %v6161 = vand.u32 %v3523, 4294901760
    %v6162 = vsub.f32 %v3523, %v6161
    %6163 = vmatpush2.msra.mxu0 %v6162
    %6164 = vmatprep.subr.mxu0 0.0
    %v6165 = vand.u32 %v3522, 4294901760
    %v6166 = vsub.f32 %v3522, %v6165
    %6167 = vmatpush2.msra.mxu0 %v6166
    %6168 = vmatprep.subr.mxu0 0.0
    %v6169 = vand.u32 %v3521, 4294901760
    %v6170 = vsub.f32 %v3521, %v6169
    %6171 = vmatpush2.msra.mxu0 %v6170
    %6172 = vmatprep.subr.mxu0 0.0
    %v6173 = vand.u32 %v3520, 4294901760
    %v6174 = vsub.f32 %v3520, %v6173
    %6175 = vmatpush2.msra.mxu0 %v6174
    %v6176 = vand.u32 %v3413, 4294901760
    %v6177 = vsub.f32 %v3413, %v6176
    %6178 = vmatprep.mubr.f32.mxu0 %v6177
    %v6179 = vand.u32 %v3412, 4294901760
    %v6180 = vsub.f32 %v3412, %v6179
    %6181 = vmatmul.mubr.f32.gmra.mxu0 %v6180
    %v6182 = vpop.f32.mrf.mxu0
    %v6183 = vadd.f32 %v6024, %v6182
    %v6184 = vpop.f32.mrf.mxu0
    %v6185 = vand.u32 %v3421, 4294901760
    %v6186 = vsub.f32 %v3421, %v6185
    %6187 = vmatprep.mubr.f32.mxu0 %v6186
    %v6188 = vand.u32 %v3420, 4294901760
    %v6189 = vsub.f32 %v3420, %v6188
    %6190 = vmatmul.mubr.f32.gmra.mxu0 %v6189
    %v6191 = vpop.f32.mrf.mxu0
    %v6192 = vadd.f32 %v6031, %v6191
    %v6193 = vpop.f32.mrf.mxu0
    %v6194 = vand.u32 %v3429, 4294901760
    %v6195 = vsub.f32 %v3429, %v6194
    %6196 = vmatprep.mubr.f32.mxu0 %v6195
    %v6197 = vand.u32 %v3428, 4294901760
    %v6198 = vsub.f32 %v3428, %v6197
    %6199 = vmatmul.mubr.f32.gmra.mxu0 %v6198
    %v6200 = vpop.f32.mrf.mxu0
    %v6201 = vadd.f32 %v6038, %v6200
    %v6202 = vpop.f32.mrf.mxu0
    %v6203 = vand.u32 %v3437, 4294901760
    %v6204 = vsub.f32 %v3437, %v6203
    %6205 = vmatprep.mubr.f32.mxu0 %v6204
    %v6206 = vand.u32 %v3436, 4294901760
    %v6207 = vsub.f32 %v3436, %v6206
    %6208 = vmatmul.mubr.f32.gmra.mxu0 %v6207
    %v6209 = vpop.f32.mrf.mxu0
    %v6210 = vadd.f32 %v6045, %v6209
    %v6211 = vpop.f32.mrf.mxu0
    %6212 = vdwg.mxu0
    %6213 = vmatprep.subr.mxu0 0.0
    %v6214 = vand.u32 %v3519, 4294901760
    %6215 = vmatpush1.msra.mxu0 %v6214
    %6216 = vmatprep.subr.mxu0 0.0
    %v6217 = vand.u32 %v3518, 4294901760
    %6218 = vmatpush1.msra.mxu0 %v6217
    %6219 = vmatprep.subr.mxu0 0.0
    %v6220 = vand.u32 %v3517, 4294901760
    %6221 = vmatpush1.msra.mxu0 %v6220
    %6222 = vmatprep.subr.mxu0 0.0
    %v6223 = vand.u32 %v3516, 4294901760
    %6224 = vmatpush1.msra.mxu0 %v6223
    %6225 = vmatprep.subr.mxu0 0.0
    %v6226 = vand.u32 %v3515, 4294901760
    %6227 = vmatpush1.msra.mxu0 %v6226
    %6228 = vmatprep.subr.mxu0 0.0
    %v6229 = vand.u32 %v3514, 4294901760
    %6230 = vmatpush1.msra.mxu0 %v6229
    %6231 = vmatprep.subr.mxu0 0.0
    %v6232 = vand.u32 %v3513, 4294901760
    %6233 = vmatpush1.msra.mxu0 %v6232
    %6234 = vmatprep.subr.mxu0 0.0
    %v6235 = vand.u32 %v3512, 4294901760
    %6236 = vmatpush1.msra.mxu0 %v6235
    %6237 = vmatprep.subr.mxu0 0.0
    %v6238 = vand.u32 %v3511, 4294901760
    %6239 = vmatpush1.msra.mxu0 %v6238
    %6240 = vmatprep.subr.mxu0 0.0
    %v6241 = vand.u32 %v3510, 4294901760
    %6242 = vmatpush1.msra.mxu0 %v6241
    %6243 = vmatprep.subr.mxu0 0.0
    %v6244 = vand.u32 %v3509, 4294901760
    %6245 = vmatpush1.msra.mxu0 %v6244
    %6246 = vmatprep.subr.mxu0 0.0
    %v6247 = vand.u32 %v3508, 4294901760
    %6248 = vmatpush1.msra.mxu0 %v6247
    %6249 = vmatprep.subr.mxu0 0.0
    %v6250 = vand.u32 %v3507, 4294901760
    %6251 = vmatpush1.msra.mxu0 %v6250
    %6252 = vmatprep.subr.mxu0 0.0
    %v6253 = vand.u32 %v3506, 4294901760
    %6254 = vmatpush1.msra.mxu0 %v6253
    %6255 = vmatprep.subr.mxu0 0.0
    %v6256 = vand.u32 %v3505, 4294901760
    %6257 = vmatpush1.msra.mxu0 %v6256
    %6258 = vmatprep.subr.mxu0 0.0
    %v6259 = vand.u32 %v3504, 4294901760
    %6260 = vmatpush1.msra.mxu0 %v6259
    %6261 = vmatprep.subr.mxu0 0.0
    %v6262 = vand.u32 %v3535, 4294901760
    %6263 = vmatpush2.msra.mxu0 %v6262
    %6264 = vmatprep.subr.mxu0 0.0
    %v6265 = vand.u32 %v3534, 4294901760
    %6266 = vmatpush2.msra.mxu0 %v6265
    %6267 = vmatprep.subr.mxu0 0.0
    %v6268 = vand.u32 %v3533, 4294901760
    %6269 = vmatpush2.msra.mxu0 %v6268
    %6270 = vmatprep.subr.mxu0 0.0
    %v6271 = vand.u32 %v3532, 4294901760
    %6272 = vmatpush2.msra.mxu0 %v6271
    %6273 = vmatprep.subr.mxu0 0.0
    %v6274 = vand.u32 %v3531, 4294901760
    %6275 = vmatpush2.msra.mxu0 %v6274
    %6276 = vmatprep.subr.mxu0 0.0
    %v6277 = vand.u32 %v3530, 4294901760
    %6278 = vmatpush2.msra.mxu0 %v6277
    %6279 = vmatprep.subr.mxu0 0.0
    %v6280 = vand.u32 %v3529, 4294901760
    %6281 = vmatpush2.msra.mxu0 %v6280
    %6282 = vmatprep.subr.mxu0 0.0
    %v6283 = vand.u32 %v3528, 4294901760
    %6284 = vmatpush2.msra.mxu0 %v6283
    %6285 = vmatprep.subr.mxu0 0.0
    %v6286 = vand.u32 %v3527, 4294901760
    %6287 = vmatpush2.msra.mxu0 %v6286
    %6288 = vmatprep.subr.mxu0 0.0
    %v6289 = vand.u32 %v3526, 4294901760
    %6290 = vmatpush2.msra.mxu0 %v6289
    %6291 = vmatprep.subr.mxu0 0.0
    %v6292 = vand.u32 %v3525, 4294901760
    %6293 = vmatpush2.msra.mxu0 %v6292
    %6294 = vmatprep.subr.mxu0 0.0
    %v6295 = vand.u32 %v3524, 4294901760
    %6296 = vmatpush2.msra.mxu0 %v6295
    %6297 = vmatprep.subr.mxu0 0.0
    %v6298 = vand.u32 %v3523, 4294901760
    %6299 = vmatpush2.msra.mxu0 %v6298
    %6300 = vmatprep.subr.mxu0 0.0
    %v6301 = vand.u32 %v3522, 4294901760
    %6302 = vmatpush2.msra.mxu0 %v6301
    %6303 = vmatprep.subr.mxu0 0.0
    %v6304 = vand.u32 %v3521, 4294901760
    %6305 = vmatpush2.msra.mxu0 %v6304
    %6306 = vmatprep.subr.mxu0 0.0
    %v6307 = vand.u32 %v3520, 4294901760
    %6308 = vmatpush2.msra.mxu0 %v6307
    %v6309 = vand.u32 %v3413, 4294901760
    %v6310 = vsub.f32 %v3413, %v6309
    %v6311 = vand.u32 %v6310, 4294901760
    %6312 = vmatprep.mubr.f32.mxu0 %v6311
    %v6313 = vand.u32 %v3412, 4294901760
    %v6314 = vsub.f32 %v3412, %v6313
    %v6315 = vand.u32 %v6314, 4294901760
    %6316 = vmatmul.mubr.f32.gmra.mxu0 %v6315
    %v6317 = vpop.f32.mrf.mxu0
    %v6318 = vadd.f32 %v6183, %v6317
    %v6319 = vpop.f32.mrf.mxu0
    %v6320 = vand.u32 %v3421, 4294901760
    %v6321 = vsub.f32 %v3421, %v6320
    %v6322 = vand.u32 %v6321, 4294901760
    %6323 = vmatprep.mubr.f32.mxu0 %v6322
    %v6324 = vand.u32 %v3420, 4294901760
    %v6325 = vsub.f32 %v3420, %v6324
    %v6326 = vand.u32 %v6325, 4294901760
    %6327 = vmatmul.mubr.f32.gmra.mxu0 %v6326
    %v6328 = vpop.f32.mrf.mxu0
    %v6329 = vadd.f32 %v6192, %v6328
    %v6330 = vpop.f32.mrf.mxu0
    %v6331 = vand.u32 %v3429, 4294901760
    %v6332 = vsub.f32 %v3429, %v6331
    %v6333 = vand.u32 %v6332, 4294901760
    %6334 = vmatprep.mubr.f32.mxu0 %v6333
    %v6335 = vand.u32 %v3428, 4294901760
    %v6336 = vsub.f32 %v3428, %v6335
    %v6337 = vand.u32 %v6336, 4294901760
    %6338 = vmatmul.mubr.f32.gmra.mxu0 %v6337
    %v6339 = vpop.f32.mrf.mxu0
    %v6340 = vadd.f32 %v6201, %v6339
    %v6341 = vpop.f32.mrf.mxu0
    %v6342 = vand.u32 %v3437, 4294901760
    %v6343 = vsub.f32 %v3437, %v6342
    %v6344 = vand.u32 %v6343, 4294901760
    %6345 = vmatprep.mubr.f32.mxu0 %v6344
    %v6346 = vand.u32 %v3436, 4294901760
    %v6347 = vsub.f32 %v3436, %v6346
    %v6348 = vand.u32 %v6347, 4294901760
    %6349 = vmatmul.mubr.f32.gmra.mxu0 %v6348
    %v6350 = vpop.f32.mrf.mxu0
    %v6351 = vadd.f32 %v6210, %v6350
    %v6352 = vpop.f32.mrf.mxu0
    %6353 = vdwg.mxu0
    %6354 = vmatprep.subr.mxu0 0.0
    %v6355 = vand.u32 %v3519, 4294901760
    %v6356 = vsub.f32 %v3519, %v6355
    %v6357 = vand.u32 %v6356, 4294901760
    %6358 = vmatpush1.msra.mxu0 %v6357
    %6359 = vmatprep.subr.mxu0 0.0
    %v6360 = vand.u32 %v3518, 4294901760
    %v6361 = vsub.f32 %v3518, %v6360
    %v6362 = vand.u32 %v6361, 4294901760
    %6363 = vmatpush1.msra.mxu0 %v6362
    %6364 = vmatprep.subr.mxu0 0.0
    %v6365 = vand.u32 %v3517, 4294901760
    %v6366 = vsub.f32 %v3517, %v6365
    %v6367 = vand.u32 %v6366, 4294901760
    %6368 = vmatpush1.msra.mxu0 %v6367
    %6369 = vmatprep.subr.mxu0 0.0
    %v6370 = vand.u32 %v3516, 4294901760
    %v6371 = vsub.f32 %v3516, %v6370
    %v6372 = vand.u32 %v6371, 4294901760
    %6373 = vmatpush1.msra.mxu0 %v6372
    %6374 = vmatprep.subr.mxu0 0.0
    %v6375 = vand.u32 %v3515, 4294901760
    %v6376 = vsub.f32 %v3515, %v6375
    %v6377 = vand.u32 %v6376, 4294901760
    %6378 = vmatpush1.msra.mxu0 %v6377
    %6379 = vmatprep.subr.mxu0 0.0
    %v6380 = vand.u32 %v3514, 4294901760
    %v6381 = vsub.f32 %v3514, %v6380
    %v6382 = vand.u32 %v6381, 4294901760
    %6383 = vmatpush1.msra.mxu0 %v6382
    %6384 = vmatprep.subr.mxu0 0.0
    %v6385 = vand.u32 %v3513, 4294901760
    %v6386 = vsub.f32 %v3513, %v6385
    %v6387 = vand.u32 %v6386, 4294901760
    %6388 = vmatpush1.msra.mxu0 %v6387
    %6389 = vmatprep.subr.mxu0 0.0
    %v6390 = vand.u32 %v3512, 4294901760
    %v6391 = vsub.f32 %v3512, %v6390
    %v6392 = vand.u32 %v6391, 4294901760
    %6393 = vmatpush1.msra.mxu0 %v6392
    %6394 = vmatprep.subr.mxu0 0.0
    %v6395 = vand.u32 %v3511, 4294901760
    %v6396 = vsub.f32 %v3511, %v6395
    %v6397 = vand.u32 %v6396, 4294901760
    %6398 = vmatpush1.msra.mxu0 %v6397
    %6399 = vmatprep.subr.mxu0 0.0
    %v6400 = vand.u32 %v3510, 4294901760
    %v6401 = vsub.f32 %v3510, %v6400
    %v6402 = vand.u32 %v6401, 4294901760
    %6403 = vmatpush1.msra.mxu0 %v6402
    %6404 = vmatprep.subr.mxu0 0.0
    %v6405 = vand.u32 %v3509, 4294901760
    %v6406 = vsub.f32 %v3509, %v6405
    %v6407 = vand.u32 %v6406, 4294901760
    %6408 = vmatpush1.msra.mxu0 %v6407
    %6409 = vmatprep.subr.mxu0 0.0
    %v6410 = vand.u32 %v3508, 4294901760
    %v6411 = vsub.f32 %v3508, %v6410
    %v6412 = vand.u32 %v6411, 4294901760
    %6413 = vmatpush1.msra.mxu0 %v6412
    %6414 = vmatprep.subr.mxu0 0.0
    %v6415 = vand.u32 %v3507, 4294901760
    %v6416 = vsub.f32 %v3507, %v6415
    %v6417 = vand.u32 %v6416, 4294901760
    %6418 = vmatpush1.msra.mxu0 %v6417
    %6419 = vmatprep.subr.mxu0 0.0
    %v6420 = vand.u32 %v3506, 4294901760
    %v6421 = vsub.f32 %v3506, %v6420
    %v6422 = vand.u32 %v6421, 4294901760
    %6423 = vmatpush1.msra.mxu0 %v6422
    %6424 = vmatprep.subr.mxu0 0.0
    %v6425 = vand.u32 %v3505, 4294901760
    %v6426 = vsub.f32 %v3505, %v6425
    %v6427 = vand.u32 %v6426, 4294901760
    %6428 = vmatpush1.msra.mxu0 %v6427
    %6429 = vmatprep.subr.mxu0 0.0
    %v6430 = vand.u32 %v3504, 4294901760
    %v6431 = vsub.f32 %v3504, %v6430
    %v6432 = vand.u32 %v6431, 4294901760
    %6433 = vmatpush1.msra.mxu0 %v6432
    %6434 = vmatprep.subr.mxu0 0.0
    %v6435 = vand.u32 %v3535, 4294901760
    %v6436 = vsub.f32 %v3535, %v6435
    %v6437 = vand.u32 %v6436, 4294901760
    %6438 = vmatpush2.msra.mxu0 %v6437
    %6439 = vmatprep.subr.mxu0 0.0
    %v6440 = vand.u32 %v3534, 4294901760
    %v6441 = vsub.f32 %v3534, %v6440
    %v6442 = vand.u32 %v6441, 4294901760
    %6443 = vmatpush2.msra.mxu0 %v6442
    %6444 = vmatprep.subr.mxu0 0.0
    %v6445 = vand.u32 %v3533, 4294901760
    %v6446 = vsub.f32 %v3533, %v6445
    %v6447 = vand.u32 %v6446, 4294901760
    %6448 = vmatpush2.msra.mxu0 %v6447
    %6449 = vmatprep.subr.mxu0 0.0
    %v6450 = vand.u32 %v3532, 4294901760
    %v6451 = vsub.f32 %v3532, %v6450
    %v6452 = vand.u32 %v6451, 4294901760
    %6453 = vmatpush2.msra.mxu0 %v6452
    %6454 = vmatprep.subr.mxu0 0.0
    %v6455 = vand.u32 %v3531, 4294901760
    %v6456 = vsub.f32 %v3531, %v6455
    %v6457 = vand.u32 %v6456, 4294901760
    %6458 = vmatpush2.msra.mxu0 %v6457
    %6459 = vmatprep.subr.mxu0 0.0
    %v6460 = vand.u32 %v3530, 4294901760
    %v6461 = vsub.f32 %v3530, %v6460
    %v6462 = vand.u32 %v6461, 4294901760
    %6463 = vmatpush2.msra.mxu0 %v6462
    %6464 = vmatprep.subr.mxu0 0.0
    %v6465 = vand.u32 %v3529, 4294901760
    %v6466 = vsub.f32 %v3529, %v6465
    %v6467 = vand.u32 %v6466, 4294901760
    %6468 = vmatpush2.msra.mxu0 %v6467
    %6469 = vmatprep.subr.mxu0 0.0
    %v6470 = vand.u32 %v3528, 4294901760
    %v6471 = vsub.f32 %v3528, %v6470
    %v6472 = vand.u32 %v6471, 4294901760
    %6473 = vmatpush2.msra.mxu0 %v6472
    %6474 = vmatprep.subr.mxu0 0.0
    %v6475 = vand.u32 %v3527, 4294901760
    %v6476 = vsub.f32 %v3527, %v6475
    %v6477 = vand.u32 %v6476, 4294901760
    %6478 = vmatpush2.msra.mxu0 %v6477
    %6479 = vmatprep.subr.mxu0 0.0
    %v6480 = vand.u32 %v3526, 4294901760
    %v6481 = vsub.f32 %v3526, %v6480
    %v6482 = vand.u32 %v6481, 4294901760
    %6483 = vmatpush2.msra.mxu0 %v6482
    %6484 = vmatprep.subr.mxu0 0.0
    %v6485 = vand.u32 %v3525, 4294901760
    %v6486 = vsub.f32 %v3525, %v6485
    %v6487 = vand.u32 %v6486, 4294901760
    %6488 = vmatpush2.msra.mxu0 %v6487
    %6489 = vmatprep.subr.mxu0 0.0
    %v6490 = vand.u32 %v3524, 4294901760
    %v6491 = vsub.f32 %v3524, %v6490
    %v6492 = vand.u32 %v6491, 4294901760
    %6493 = vmatpush2.msra.mxu0 %v6492
    %6494 = vmatprep.subr.mxu0 0.0
    %v6495 = vand.u32 %v3523, 4294901760
    %v6496 = vsub.f32 %v3523, %v6495
    %v6497 = vand.u32 %v6496, 4294901760
    %6498 = vmatpush2.msra.mxu0 %v6497
    %6499 = vmatprep.subr.mxu0 0.0
    %v6500 = vand.u32 %v3522, 4294901760
    %v6501 = vsub.f32 %v3522, %v6500
    %v6502 = vand.u32 %v6501, 4294901760
    %6503 = vmatpush2.msra.mxu0 %v6502
    %6504 = vmatprep.subr.mxu0 0.0
    %v6505 = vand.u32 %v3521, 4294901760
    %v6506 = vsub.f32 %v3521, %v6505
    %v6507 = vand.u32 %v6506, 4294901760
    %6508 = vmatpush2.msra.mxu0 %v6507
    %6509 = vmatprep.subr.mxu0 0.0
    %v6510 = vand.u32 %v3520, 4294901760
    %v6511 = vsub.f32 %v3520, %v6510
    %v6512 = vand.u32 %v6511, 4294901760
    %6513 = vmatpush2.msra.mxu0 %v6512
    %v6514 = vand.u32 %v3413, 4294901760
    %6515 = vmatprep.mubr.f32.mxu0 %v6514
    %v6516 = vand.u32 %v3412, 4294901760
    %6517 = vmatmul.mubr.f32.gmra.mxu0 %v6516
    %v6518 = vpop.f32.mrf.mxu0
    %v6519 = vadd.f32 %v6318, %v6518
    %v6520 = vpop.f32.mrf.mxu0
    %v6521 = vand.u32 %v3421, 4294901760
    %6522 = vmatprep.mubr.f32.mxu0 %v6521
    %v6523 = vand.u32 %v3420, 4294901760
    %6524 = vmatmul.mubr.f32.gmra.mxu0 %v6523
    %v6525 = vpop.f32.mrf.mxu0
    %v6526 = vadd.f32 %v6329, %v6525
    %v6527 = vpop.f32.mrf.mxu0
    %v6528 = vand.u32 %v3429, 4294901760
    %6529 = vmatprep.mubr.f32.mxu0 %v6528
    %v6530 = vand.u32 %v3428, 4294901760
    %6531 = vmatmul.mubr.f32.gmra.mxu0 %v6530
    %v6532 = vpop.f32.mrf.mxu0
    %v6533 = vadd.f32 %v6340, %v6532
    %v6534 = vpop.f32.mrf.mxu0
    %v6535 = vand.u32 %v3437, 4294901760
    %6536 = vmatprep.mubr.f32.mxu0 %v6535
    %v6537 = vand.u32 %v3436, 4294901760
    %6538 = vmatmul.mubr.f32.gmra.mxu0 %v6537
    %v6539 = vpop.f32.mrf.mxu0
    %v6540 = vadd.f32 %v6351, %v6539
    %v6541 = vpop.f32.mrf.mxu0
    %6542 = vdwg.mxu0
    %6543 = vmatprep.subr.mxu0 0.0
    %v6544 = vand.u32 %v3519, 4294901760
    %6545 = vmatpush1.msra.mxu0 %v6544
    %6546 = vmatprep.subr.mxu0 0.0
    %v6547 = vand.u32 %v3518, 4294901760
    %6548 = vmatpush1.msra.mxu0 %v6547
    %6549 = vmatprep.subr.mxu0 0.0
    %v6550 = vand.u32 %v3517, 4294901760
    %6551 = vmatpush1.msra.mxu0 %v6550
    %6552 = vmatprep.subr.mxu0 0.0
    %v6553 = vand.u32 %v3516, 4294901760
    %6554 = vmatpush1.msra.mxu0 %v6553
    %6555 = vmatprep.subr.mxu0 0.0
    %v6556 = vand.u32 %v3515, 4294901760
    %6557 = vmatpush1.msra.mxu0 %v6556
    %6558 = vmatprep.subr.mxu0 0.0
    %v6559 = vand.u32 %v3514, 4294901760
    %6560 = vmatpush1.msra.mxu0 %v6559
    %6561 = vmatprep.subr.mxu0 0.0
    %v6562 = vand.u32 %v3513, 4294901760
    %6563 = vmatpush1.msra.mxu0 %v6562
    %6564 = vmatprep.subr.mxu0 0.0
    %v6565 = vand.u32 %v3512, 4294901760
    %6566 = vmatpush1.msra.mxu0 %v6565
    %6567 = vmatprep.subr.mxu0 0.0
    %v6568 = vand.u32 %v3511, 4294901760
    %6569 = vmatpush1.msra.mxu0 %v6568
    %6570 = vmatprep.subr.mxu0 0.0
    %v6571 = vand.u32 %v3510, 4294901760
    %6572 = vmatpush1.msra.mxu0 %v6571
    %6573 = vmatprep.subr.mxu0 0.0
    %v6574 = vand.u32 %v3509, 4294901760
    %6575 = vmatpush1.msra.mxu0 %v6574
    %6576 = vmatprep.subr.mxu0 0.0
    %v6577 = vand.u32 %v3508, 4294901760
    %6578 = vmatpush1.msra.mxu0 %v6577
    %6579 = vmatprep.subr.mxu0 0.0
    %v6580 = vand.u32 %v3507, 4294901760
    %6581 = vmatpush1.msra.mxu0 %v6580
    %6582 = vmatprep.subr.mxu0 0.0
    %v6583 = vand.u32 %v3506, 4294901760
    %6584 = vmatpush1.msra.mxu0 %v6583
    %6585 = vmatprep.subr.mxu0 0.0
    %v6586 = vand.u32 %v3505, 4294901760
    %6587 = vmatpush1.msra.mxu0 %v6586
    %6588 = vmatprep.subr.mxu0 0.0
    %v6589 = vand.u32 %v3504, 4294901760
    %6590 = vmatpush1.msra.mxu0 %v6589
    %6591 = vmatprep.subr.mxu0 0.0
    %v6592 = vand.u32 %v3535, 4294901760
    %6593 = vmatpush2.msra.mxu0 %v6592
    %6594 = vmatprep.subr.mxu0 0.0
    %v6595 = vand.u32 %v3534, 4294901760
    %6596 = vmatpush2.msra.mxu0 %v6595
    %6597 = vmatprep.subr.mxu0 0.0
    %v6598 = vand.u32 %v3533, 4294901760
    %6599 = vmatpush2.msra.mxu0 %v6598
    %6600 = vmatprep.subr.mxu0 0.0
    %v6601 = vand.u32 %v3532, 4294901760
    %6602 = vmatpush2.msra.mxu0 %v6601
    %6603 = vmatprep.subr.mxu0 0.0
    %v6604 = vand.u32 %v3531, 4294901760
    %6605 = vmatpush2.msra.mxu0 %v6604
    %6606 = vmatprep.subr.mxu0 0.0
    %v6607 = vand.u32 %v3530, 4294901760
    %6608 = vmatpush2.msra.mxu0 %v6607
    %6609 = vmatprep.subr.mxu0 0.0
    %v6610 = vand.u32 %v3529, 4294901760
    %6611 = vmatpush2.msra.mxu0 %v6610
    %6612 = vmatprep.subr.mxu0 0.0
    %v6613 = vand.u32 %v3528, 4294901760
    %6614 = vmatpush2.msra.mxu0 %v6613
    %6615 = vmatprep.subr.mxu0 0.0
    %v6616 = vand.u32 %v3527, 4294901760
    %6617 = vmatpush2.msra.mxu0 %v6616
    %6618 = vmatprep.subr.mxu0 0.0
    %v6619 = vand.u32 %v3526, 4294901760
    %6620 = vmatpush2.msra.mxu0 %v6619
    %6621 = vmatprep.subr.mxu0 0.0
    %v6622 = vand.u32 %v3525, 4294901760
    %6623 = vmatpush2.msra.mxu0 %v6622
    %6624 = vmatprep.subr.mxu0 0.0
    %v6625 = vand.u32 %v3524, 4294901760
    %6626 = vmatpush2.msra.mxu0 %v6625
    %6627 = vmatprep.subr.mxu0 0.0
    %v6628 = vand.u32 %v3523, 4294901760
    %6629 = vmatpush2.msra.mxu0 %v6628
    %6630 = vmatprep.subr.mxu0 0.0
    %v6631 = vand.u32 %v3522, 4294901760
    %6632 = vmatpush2.msra.mxu0 %v6631
    %6633 = vmatprep.subr.mxu0 0.0
    %v6634 = vand.u32 %v3521, 4294901760
    %6635 = vmatpush2.msra.mxu0 %v6634
    %6636 = vmatprep.subr.mxu0 0.0
    %v6637 = vand.u32 %v3520, 4294901760
    %6638 = vmatpush2.msra.mxu0 %v6637
    %v6639 = vand.u32 %v3413, 4294901760
    %6640 = vmatprep.mubr.f32.mxu0 %v6639
    %v6641 = vand.u32 %v3412, 4294901760
    %6642 = vmatmul.mubr.f32.gmra.mxu0 %v6641
    %v6643 = vpop.f32.mrf.mxu0
    %v6644 = vadd.f32 %v6519, %v6643
    %v6645 = vpop.f32.mrf.mxu0
    %v6646 = vand.u32 %v3421, 4294901760
    %6647 = vmatprep.mubr.f32.mxu0 %v6646
    %v6648 = vand.u32 %v3420, 4294901760
    %6649 = vmatmul.mubr.f32.gmra.mxu0 %v6648
    %v6650 = vpop.f32.mrf.mxu0
    %v6651 = vadd.f32 %v6526, %v6650
    %v6652 = vpop.f32.mrf.mxu0
    %v6653 = vand.u32 %v3429, 4294901760
    %6654 = vmatprep.mubr.f32.mxu0 %v6653
    %v6655 = vand.u32 %v3428, 4294901760
    %6656 = vmatmul.mubr.f32.gmra.mxu0 %v6655
    %v6657 = vpop.f32.mrf.mxu0
    %v6658 = vadd.f32 %v6533, %v6657
    %v6659 = vpop.f32.mrf.mxu0
    %v6660 = vand.u32 %v3437, 4294901760
    %6661 = vmatprep.mubr.f32.mxu0 %v6660
    %v6662 = vand.u32 %v3436, 4294901760
    %6663 = vmatmul.mubr.f32.gmra.mxu0 %v6662
    %v6664 = vpop.f32.mrf.mxu0
    %v6665 = vadd.f32 %v6540, %v6664
    %v6666 = vpop.f32.mrf.mxu0
    %6667 = vdwg.mxu0
    %6668 = vmatprep.subr.mxu0 0.0
    %v6669 = vand.u32 %v3551, 4294901760
    %6670 = vmatpush1.msra.mxu0 %v6669
    %6671 = vmatprep.subr.mxu0 0.0
    %v6672 = vand.u32 %v3550, 4294901760
    %6673 = vmatpush1.msra.mxu0 %v6672
    %6674 = vmatprep.subr.mxu0 0.0
    %v6675 = vand.u32 %v3549, 4294901760
    %6676 = vmatpush1.msra.mxu0 %v6675
    %6677 = vmatprep.subr.mxu0 0.0
    %v6678 = vand.u32 %v3548, 4294901760
    %6679 = vmatpush1.msra.mxu0 %v6678
    %6680 = vmatprep.subr.mxu0 0.0
    %v6681 = vand.u32 %v3547, 4294901760
    %6682 = vmatpush1.msra.mxu0 %v6681
    %6683 = vmatprep.subr.mxu0 0.0
    %v6684 = vand.u32 %v3546, 4294901760
    %6685 = vmatpush1.msra.mxu0 %v6684
    %6686 = vmatprep.subr.mxu0 0.0
    %v6687 = vand.u32 %v3545, 4294901760
    %6688 = vmatpush1.msra.mxu0 %v6687
    %6689 = vmatprep.subr.mxu0 0.0
    %v6690 = vand.u32 %v3544, 4294901760
    %6691 = vmatpush1.msra.mxu0 %v6690
    %6692 = vmatprep.subr.mxu0 0.0
    %v6693 = vand.u32 %v3543, 4294901760
    %6694 = vmatpush1.msra.mxu0 %v6693
    %6695 = vmatprep.subr.mxu0 0.0
    %v6696 = vand.u32 %v3542, 4294901760
    %6697 = vmatpush1.msra.mxu0 %v6696
    %6698 = vmatprep.subr.mxu0 0.0
    %v6699 = vand.u32 %v3541, 4294901760
    %6700 = vmatpush1.msra.mxu0 %v6699
    %6701 = vmatprep.subr.mxu0 0.0
    %v6702 = vand.u32 %v3540, 4294901760
    %6703 = vmatpush1.msra.mxu0 %v6702
    %6704 = vmatprep.subr.mxu0 0.0
    %v6705 = vand.u32 %v3539, 4294901760
    %6706 = vmatpush1.msra.mxu0 %v6705
    %6707 = vmatprep.subr.mxu0 0.0
    %v6708 = vand.u32 %v3538, 4294901760
    %6709 = vmatpush1.msra.mxu0 %v6708
    %6710 = vmatprep.subr.mxu0 0.0
    %v6711 = vand.u32 %v3537, 4294901760
    %6712 = vmatpush1.msra.mxu0 %v6711
    %6713 = vmatprep.subr.mxu0 0.0
    %v6714 = vand.u32 %v3536, 4294901760
    %6715 = vmatpush1.msra.mxu0 %v6714
    %6716 = vmatprep.subr.mxu0 0.0
    %6717 = vmatpush2.msra.mxu0 0.0
    %6718 = vmatprep.subr.mxu0 0.0
    %6719 = vmatpush2.msra.mxu0 0.0
    %6720 = vmatprep.subr.mxu0 0.0
    %6721 = vmatpush2.msra.mxu0 0.0
    %6722 = vmatprep.subr.mxu0 0.0
    %v6723 = vand.u32 %v3564, 4294901760
    %6724 = vmatpush2.msra.mxu0 %v6723
    %6725 = vmatprep.subr.mxu0 0.0
    %v6726 = vand.u32 %v3563, 4294901760
    %6727 = vmatpush2.msra.mxu0 %v6726
    %6728 = vmatprep.subr.mxu0 0.0
    %v6729 = vand.u32 %v3562, 4294901760
    %6730 = vmatpush2.msra.mxu0 %v6729
    %6731 = vmatprep.subr.mxu0 0.0
    %v6732 = vand.u32 %v3561, 4294901760
    %6733 = vmatpush2.msra.mxu0 %v6732
    %6734 = vmatprep.subr.mxu0 0.0
    %v6735 = vand.u32 %v3560, 4294901760
    %6736 = vmatpush2.msra.mxu0 %v6735
    %6737 = vmatprep.subr.mxu0 0.0
    %v6738 = vand.u32 %v3559, 4294901760
    %6739 = vmatpush2.msra.mxu0 %v6738
    %6740 = vmatprep.subr.mxu0 0.0
    %v6741 = vand.u32 %v3558, 4294901760
    %6742 = vmatpush2.msra.mxu0 %v6741
    %6743 = vmatprep.subr.mxu0 0.0
    %v6744 = vand.u32 %v3557, 4294901760
    %6745 = vmatpush2.msra.mxu0 %v6744
    %6746 = vmatprep.subr.mxu0 0.0
    %v6747 = vand.u32 %v3556, 4294901760
    %6748 = vmatpush2.msra.mxu0 %v6747
    %6749 = vmatprep.subr.mxu0 0.0
    %v6750 = vand.u32 %v3555, 4294901760
    %6751 = vmatpush2.msra.mxu0 %v6750
    %6752 = vmatprep.subr.mxu0 0.0
    %v6753 = vand.u32 %v3554, 4294901760
    %6754 = vmatpush2.msra.mxu0 %v6753
    %6755 = vmatprep.subr.mxu0 0.0
    %v6756 = vand.u32 %v3553, 4294901760
    %6757 = vmatpush2.msra.mxu0 %v6756
    %6758 = vmatprep.subr.mxu0 0.0
    %v6759 = vand.u32 %v3552, 4294901760
    %6760 = vmatpush2.msra.mxu0 %v6759
    %v6761 = vand.u32 %v3567, 4294901760
    %v6762 = vsub.f32 %v3567, %v6761
    %v6763 = vand.u32 %v6762, 4294901760
    %v6764 = vsub.f32 %v6762, %v6763
    %v6765 = vand.u32 %v6764, 4294901760
    %6766 = vmatprep.mubr.f32.mxu0 %v6765
    %v6767 = vand.u32 %v3414, 4294901760
    %v6768 = vsub.f32 %v3414, %v6767
    %v6769 = vand.u32 %v6768, 4294901760
    %v6770 = vsub.f32 %v6768, %v6769
    %v6771 = vand.u32 %v6770, 4294901760
    %6772 = vmatmul.mubr.f32.gmra.mxu0 %v6771
    %v6773 = vpop.f32.mrf.mxu0
    %v6774 = vadd.f32 %v6644, %v6773
    %v6775 = vpop.f32.mrf.mxu0
    %v6776 = vand.u32 %v3570, 4294901760
    %v6777 = vsub.f32 %v3570, %v6776
    %v6778 = vand.u32 %v6777, 4294901760
    %v6779 = vsub.f32 %v6777, %v6778
    %v6780 = vand.u32 %v6779, 4294901760
    %6781 = vmatprep.mubr.f32.mxu0 %v6780
    %v6782 = vand.u32 %v3422, 4294901760
    %v6783 = vsub.f32 %v3422, %v6782
    %v6784 = vand.u32 %v6783, 4294901760
    %v6785 = vsub.f32 %v6783, %v6784
    %v6786 = vand.u32 %v6785, 4294901760
    %6787 = vmatmul.mubr.f32.gmra.mxu0 %v6786
    %v6788 = vpop.f32.mrf.mxu0
    %v6789 = vadd.f32 %v6651, %v6788
    %v6790 = vpop.f32.mrf.mxu0
    %v6791 = vand.u32 %v3573, 4294901760
    %v6792 = vsub.f32 %v3573, %v6791
    %v6793 = vand.u32 %v6792, 4294901760
    %v6794 = vsub.f32 %v6792, %v6793
    %v6795 = vand.u32 %v6794, 4294901760
    %6796 = vmatprep.mubr.f32.mxu0 %v6795
    %v6797 = vand.u32 %v3430, 4294901760
    %v6798 = vsub.f32 %v3430, %v6797
    %v6799 = vand.u32 %v6798, 4294901760
    %v6800 = vsub.f32 %v6798, %v6799
    %v6801 = vand.u32 %v6800, 4294901760
    %6802 = vmatmul.mubr.f32.gmra.mxu0 %v6801
    %v6803 = vpop.f32.mrf.mxu0
    %v6804 = vadd.f32 %v6658, %v6803
    %v6805 = vpop.f32.mrf.mxu0
    %v6806 = vand.u32 %v3576, 4294901760
    %v6807 = vsub.f32 %v3576, %v6806
    %v6808 = vand.u32 %v6807, 4294901760
    %v6809 = vsub.f32 %v6807, %v6808
    %v6810 = vand.u32 %v6809, 4294901760
    %6811 = vmatprep.mubr.f32.mxu0 %v6810
    %v6812 = vand.u32 %v3438, 4294901760
    %v6813 = vsub.f32 %v3438, %v6812
    %v6814 = vand.u32 %v6813, 4294901760
    %v6815 = vsub.f32 %v6813, %v6814
    %v6816 = vand.u32 %v6815, 4294901760
    %6817 = vmatmul.mubr.f32.gmra.mxu0 %v6816
    %v6818 = vpop.f32.mrf.mxu0
    %v6819 = vadd.f32 %v6665, %v6818
    %v6820 = vpop.f32.mrf.mxu0
    %6821 = vdwg.mxu0
    %6822 = vmatprep.subr.mxu0 0.0
    %v6823 = vand.u32 %v3551, 4294901760
    %v6824 = vsub.f32 %v3551, %v6823
    %v6825 = vand.u32 %v6824, 4294901760
    %v6826 = vsub.f32 %v6824, %v6825
    %v6827 = vand.u32 %v6826, 4294901760
    %6828 = vmatpush1.msra.mxu0 %v6827
    %6829 = vmatprep.subr.mxu0 0.0
    %v6830 = vand.u32 %v3550, 4294901760
    %v6831 = vsub.f32 %v3550, %v6830
    %v6832 = vand.u32 %v6831, 4294901760
    %v6833 = vsub.f32 %v6831, %v6832
    %v6834 = vand.u32 %v6833, 4294901760
    %6835 = vmatpush1.msra.mxu0 %v6834
    %6836 = vmatprep.subr.mxu0 0.0
    %v6837 = vand.u32 %v3549, 4294901760
    %v6838 = vsub.f32 %v3549, %v6837
    %v6839 = vand.u32 %v6838, 4294901760
    %v6840 = vsub.f32 %v6838, %v6839
    %v6841 = vand.u32 %v6840, 4294901760
    %6842 = vmatpush1.msra.mxu0 %v6841
    %6843 = vmatprep.subr.mxu0 0.0
    %v6844 = vand.u32 %v3548, 4294901760
    %v6845 = vsub.f32 %v3548, %v6844
    %v6846 = vand.u32 %v6845, 4294901760
    %v6847 = vsub.f32 %v6845, %v6846
    %v6848 = vand.u32 %v6847, 4294901760
    %6849 = vmatpush1.msra.mxu0 %v6848
    %6850 = vmatprep.subr.mxu0 0.0
    %v6851 = vand.u32 %v3547, 4294901760
    %v6852 = vsub.f32 %v3547, %v6851
    %v6853 = vand.u32 %v6852, 4294901760
    %v6854 = vsub.f32 %v6852, %v6853
    %v6855 = vand.u32 %v6854, 4294901760
    %6856 = vmatpush1.msra.mxu0 %v6855
    %6857 = vmatprep.subr.mxu0 0.0
    %v6858 = vand.u32 %v3546, 4294901760
    %v6859 = vsub.f32 %v3546, %v6858
    %v6860 = vand.u32 %v6859, 4294901760
    %v6861 = vsub.f32 %v6859, %v6860
    %v6862 = vand.u32 %v6861, 4294901760
    %6863 = vmatpush1.msra.mxu0 %v6862
    %6864 = vmatprep.subr.mxu0 0.0
    %v6865 = vand.u32 %v3545, 4294901760
    %v6866 = vsub.f32 %v3545, %v6865
    %v6867 = vand.u32 %v6866, 4294901760
    %v6868 = vsub.f32 %v6866, %v6867
    %v6869 = vand.u32 %v6868, 4294901760
    %6870 = vmatpush1.msra.mxu0 %v6869
    %6871 = vmatprep.subr.mxu0 0.0
    %v6872 = vand.u32 %v3544, 4294901760
    %v6873 = vsub.f32 %v3544, %v6872
    %v6874 = vand.u32 %v6873, 4294901760
    %v6875 = vsub.f32 %v6873, %v6874
    %v6876 = vand.u32 %v6875, 4294901760
    %6877 = vmatpush1.msra.mxu0 %v6876
    %6878 = vmatprep.subr.mxu0 0.0
    %v6879 = vand.u32 %v3543, 4294901760
    %v6880 = vsub.f32 %v3543, %v6879
    %v6881 = vand.u32 %v6880, 4294901760
    %v6882 = vsub.f32 %v6880, %v6881
    %v6883 = vand.u32 %v6882, 4294901760
    %6884 = vmatpush1.msra.mxu0 %v6883
    %6885 = vmatprep.subr.mxu0 0.0
    %v6886 = vand.u32 %v3542, 4294901760
    %v6887 = vsub.f32 %v3542, %v6886
    %v6888 = vand.u32 %v6887, 4294901760
    %v6889 = vsub.f32 %v6887, %v6888
    %v6890 = vand.u32 %v6889, 4294901760
    %6891 = vmatpush1.msra.mxu0 %v6890
    %6892 = vmatprep.subr.mxu0 0.0
    %v6893 = vand.u32 %v3541, 4294901760
    %v6894 = vsub.f32 %v3541, %v6893
    %v6895 = vand.u32 %v6894, 4294901760
    %v6896 = vsub.f32 %v6894, %v6895
    %v6897 = vand.u32 %v6896, 4294901760
    %6898 = vmatpush1.msra.mxu0 %v6897
    %6899 = vmatprep.subr.mxu0 0.0
    %v6900 = vand.u32 %v3540, 4294901760
    %v6901 = vsub.f32 %v3540, %v6900
    %v6902 = vand.u32 %v6901, 4294901760
    %v6903 = vsub.f32 %v6901, %v6902
    %v6904 = vand.u32 %v6903, 4294901760
    %6905 = vmatpush1.msra.mxu0 %v6904
    %6906 = vmatprep.subr.mxu0 0.0
    %v6907 = vand.u32 %v3539, 4294901760
    %v6908 = vsub.f32 %v3539, %v6907
    %v6909 = vand.u32 %v6908, 4294901760
    %v6910 = vsub.f32 %v6908, %v6909
    %v6911 = vand.u32 %v6910, 4294901760
    %6912 = vmatpush1.msra.mxu0 %v6911
    %6913 = vmatprep.subr.mxu0 0.0
    %v6914 = vand.u32 %v3538, 4294901760
    %v6915 = vsub.f32 %v3538, %v6914
    %v6916 = vand.u32 %v6915, 4294901760
    %v6917 = vsub.f32 %v6915, %v6916
    %v6918 = vand.u32 %v6917, 4294901760
    %6919 = vmatpush1.msra.mxu0 %v6918
    %6920 = vmatprep.subr.mxu0 0.0
    %v6921 = vand.u32 %v3537, 4294901760
    %v6922 = vsub.f32 %v3537, %v6921
    %v6923 = vand.u32 %v6922, 4294901760
    %v6924 = vsub.f32 %v6922, %v6923
    %v6925 = vand.u32 %v6924, 4294901760
    %6926 = vmatpush1.msra.mxu0 %v6925
    %6927 = vmatprep.subr.mxu0 0.0
    %v6928 = vand.u32 %v3536, 4294901760
    %v6929 = vsub.f32 %v3536, %v6928
    %v6930 = vand.u32 %v6929, 4294901760
    %v6931 = vsub.f32 %v6929, %v6930
    %v6932 = vand.u32 %v6931, 4294901760
    %6933 = vmatpush1.msra.mxu0 %v6932
    %6934 = vmatprep.subr.mxu0 0.0
    %6935 = vmatpush2.msra.mxu0 0.0
    %6936 = vmatprep.subr.mxu0 0.0
    %6937 = vmatpush2.msra.mxu0 0.0
    %6938 = vmatprep.subr.mxu0 0.0
    %6939 = vmatpush2.msra.mxu0 0.0
    %6940 = vmatprep.subr.mxu0 0.0
    %v6941 = vand.u32 %v3564, 4294901760
    %v6942 = vsub.f32 %v3564, %v6941
    %v6943 = vand.u32 %v6942, 4294901760
    %v6944 = vsub.f32 %v6942, %v6943
    %v6945 = vand.u32 %v6944, 4294901760
    %6946 = vmatpush2.msra.mxu0 %v6945
    %6947 = vmatprep.subr.mxu0 0.0
    %v6948 = vand.u32 %v3563, 4294901760
    %v6949 = vsub.f32 %v3563, %v6948
    %v6950 = vand.u32 %v6949, 4294901760
    %v6951 = vsub.f32 %v6949, %v6950
    %v6952 = vand.u32 %v6951, 4294901760
    %6953 = vmatpush2.msra.mxu0 %v6952
    %6954 = vmatprep.subr.mxu0 0.0
    %v6955 = vand.u32 %v3562, 4294901760
    %v6956 = vsub.f32 %v3562, %v6955
    %v6957 = vand.u32 %v6956, 4294901760
    %v6958 = vsub.f32 %v6956, %v6957
    %v6959 = vand.u32 %v6958, 4294901760
    %6960 = vmatpush2.msra.mxu0 %v6959
    %6961 = vmatprep.subr.mxu0 0.0
    %v6962 = vand.u32 %v3561, 4294901760
    %v6963 = vsub.f32 %v3561, %v6962
    %v6964 = vand.u32 %v6963, 4294901760
    %v6965 = vsub.f32 %v6963, %v6964
    %v6966 = vand.u32 %v6965, 4294901760
    %6967 = vmatpush2.msra.mxu0 %v6966
    %6968 = vmatprep.subr.mxu0 0.0
    %v6969 = vand.u32 %v3560, 4294901760
    %v6970 = vsub.f32 %v3560, %v6969
    %v6971 = vand.u32 %v6970, 4294901760
    %v6972 = vsub.f32 %v6970, %v6971
    %v6973 = vand.u32 %v6972, 4294901760
    %6974 = vmatpush2.msra.mxu0 %v6973
    %6975 = vmatprep.subr.mxu0 0.0
    %v6976 = vand.u32 %v3559, 4294901760
    %v6977 = vsub.f32 %v3559, %v6976
    %v6978 = vand.u32 %v6977, 4294901760
    %v6979 = vsub.f32 %v6977, %v6978
    %v6980 = vand.u32 %v6979, 4294901760
    %6981 = vmatpush2.msra.mxu0 %v6980
    %6982 = vmatprep.subr.mxu0 0.0
    %v6983 = vand.u32 %v3558, 4294901760
    %v6984 = vsub.f32 %v3558, %v6983
    %v6985 = vand.u32 %v6984, 4294901760
    %v6986 = vsub.f32 %v6984, %v6985
    %v6987 = vand.u32 %v6986, 4294901760
    %6988 = vmatpush2.msra.mxu0 %v6987
    %6989 = vmatprep.subr.mxu0 0.0
    %v6990 = vand.u32 %v3557, 4294901760
    %v6991 = vsub.f32 %v3557, %v6990
    %v6992 = vand.u32 %v6991, 4294901760
    %v6993 = vsub.f32 %v6991, %v6992
    %v6994 = vand.u32 %v6993, 4294901760
    %6995 = vmatpush2.msra.mxu0 %v6994
    %6996 = vmatprep.subr.mxu0 0.0
    %v6997 = vand.u32 %v3556, 4294901760
    %v6998 = vsub.f32 %v3556, %v6997
    %v6999 = vand.u32 %v6998, 4294901760
    %v7000 = vsub.f32 %v6998, %v6999
    %v7001 = vand.u32 %v7000, 4294901760
    %7002 = vmatpush2.msra.mxu0 %v7001
    %7003 = vmatprep.subr.mxu0 0.0
    %v7004 = vand.u32 %v3555, 4294901760
    %v7005 = vsub.f32 %v3555, %v7004
    %v7006 = vand.u32 %v7005, 4294901760
    %v7007 = vsub.f32 %v7005, %v7006
    %v7008 = vand.u32 %v7007, 4294901760
    %7009 = vmatpush2.msra.mxu0 %v7008
    %7010 = vmatprep.subr.mxu0 0.0
    %v7011 = vand.u32 %v3554, 4294901760
    %v7012 = vsub.f32 %v3554, %v7011
    %v7013 = vand.u32 %v7012, 4294901760
    %v7014 = vsub.f32 %v7012, %v7013
    %v7015 = vand.u32 %v7014, 4294901760
    %7016 = vmatpush2.msra.mxu0 %v7015
    %7017 = vmatprep.subr.mxu0 0.0
    %v7018 = vand.u32 %v3553, 4294901760
    %v7019 = vsub.f32 %v3553, %v7018
    %v7020 = vand.u32 %v7019, 4294901760
    %v7021 = vsub.f32 %v7019, %v7020
    %v7022 = vand.u32 %v7021, 4294901760
    %7023 = vmatpush2.msra.mxu0 %v7022
    %7024 = vmatprep.subr.mxu0 0.0
    %v7025 = vand.u32 %v3552, 4294901760
    %v7026 = vsub.f32 %v3552, %v7025
    %v7027 = vand.u32 %v7026, 4294901760
    %v7028 = vsub.f32 %v7026, %v7027
    %v7029 = vand.u32 %v7028, 4294901760
    %7030 = vmatpush2.msra.mxu0 %v7029
    %v7031 = vand.u32 %v3567, 4294901760
    %7032 = vmatprep.mubr.f32.mxu0 %v7031
    %v7033 = vand.u32 %v3414, 4294901760
    %7034 = vmatmul.mubr.f32.gmra.mxu0 %v7033
    %v7035 = vpop.f32.mrf.mxu0
    %v7036 = vadd.f32 %v6774, %v7035
    %v7037 = vpop.f32.mrf.mxu0
    %v7038 = vand.u32 %v3570, 4294901760
    %7039 = vmatprep.mubr.f32.mxu0 %v7038
    %v7040 = vand.u32 %v3422, 4294901760
    %7041 = vmatmul.mubr.f32.gmra.mxu0 %v7040
    %v7042 = vpop.f32.mrf.mxu0
    %v7043 = vadd.f32 %v6789, %v7042
    %v7044 = vpop.f32.mrf.mxu0
    %v7045 = vand.u32 %v3573, 4294901760
    %7046 = vmatprep.mubr.f32.mxu0 %v7045
    %v7047 = vand.u32 %v3430, 4294901760
    %7048 = vmatmul.mubr.f32.gmra.mxu0 %v7047
    %v7049 = vpop.f32.mrf.mxu0
    %v7050 = vadd.f32 %v6804, %v7049
    %v7051 = vpop.f32.mrf.mxu0
    %v7052 = vand.u32 %v3576, 4294901760
    %7053 = vmatprep.mubr.f32.mxu0 %v7052
    %v7054 = vand.u32 %v3438, 4294901760
    %7055 = vmatmul.mubr.f32.gmra.mxu0 %v7054
    %v7056 = vpop.f32.mrf.mxu0
    %v7057 = vadd.f32 %v6819, %v7056
    %v7058 = vpop.f32.mrf.mxu0
    %7059 = vdwg.mxu0
    %7060 = vmatprep.subr.mxu0 0.0
    %v7061 = vand.u32 %v3551, 4294901760
    %v7062 = vsub.f32 %v3551, %v7061
    %7063 = vmatpush1.msra.mxu0 %v7062
    %7064 = vmatprep.subr.mxu0 0.0
    %v7065 = vand.u32 %v3550, 4294901760
    %v7066 = vsub.f32 %v3550, %v7065
    %7067 = vmatpush1.msra.mxu0 %v7066
    %7068 = vmatprep.subr.mxu0 0.0
    %v7069 = vand.u32 %v3549, 4294901760
    %v7070 = vsub.f32 %v3549, %v7069
    %7071 = vmatpush1.msra.mxu0 %v7070
    %7072 = vmatprep.subr.mxu0 0.0
    %v7073 = vand.u32 %v3548, 4294901760
    %v7074 = vsub.f32 %v3548, %v7073
    %7075 = vmatpush1.msra.mxu0 %v7074
    %7076 = vmatprep.subr.mxu0 0.0
    %v7077 = vand.u32 %v3547, 4294901760
    %v7078 = vsub.f32 %v3547, %v7077
    %7079 = vmatpush1.msra.mxu0 %v7078
    %7080 = vmatprep.subr.mxu0 0.0
    %v7081 = vand.u32 %v3546, 4294901760
    %v7082 = vsub.f32 %v3546, %v7081
    %7083 = vmatpush1.msra.mxu0 %v7082
    %7084 = vmatprep.subr.mxu0 0.0
    %v7085 = vand.u32 %v3545, 4294901760
    %v7086 = vsub.f32 %v3545, %v7085
    %7087 = vmatpush1.msra.mxu0 %v7086
    %7088 = vmatprep.subr.mxu0 0.0
    %v7089 = vand.u32 %v3544, 4294901760
    %v7090 = vsub.f32 %v3544, %v7089
    %7091 = vmatpush1.msra.mxu0 %v7090
    %7092 = vmatprep.subr.mxu0 0.0
    %v7093 = vand.u32 %v3543, 4294901760
    %v7094 = vsub.f32 %v3543, %v7093
    %7095 = vmatpush1.msra.mxu0 %v7094
    %7096 = vmatprep.subr.mxu0 0.0
    %v7097 = vand.u32 %v3542, 4294901760
    %v7098 = vsub.f32 %v3542, %v7097
    %7099 = vmatpush1.msra.mxu0 %v7098
    %7100 = vmatprep.subr.mxu0 0.0
    %v7101 = vand.u32 %v3541, 4294901760
    %v7102 = vsub.f32 %v3541, %v7101
    %7103 = vmatpush1.msra.mxu0 %v7102
    %7104 = vmatprep.subr.mxu0 0.0
    %v7105 = vand.u32 %v3540, 4294901760
    %v7106 = vsub.f32 %v3540, %v7105
    %7107 = vmatpush1.msra.mxu0 %v7106
    %7108 = vmatprep.subr.mxu0 0.0
    %v7109 = vand.u32 %v3539, 4294901760
    %v7110 = vsub.f32 %v3539, %v7109
    %7111 = vmatpush1.msra.mxu0 %v7110
    %7112 = vmatprep.subr.mxu0 0.0
    %v7113 = vand.u32 %v3538, 4294901760
    %v7114 = vsub.f32 %v3538, %v7113
    %7115 = vmatpush1.msra.mxu0 %v7114
    %7116 = vmatprep.subr.mxu0 0.0
    %v7117 = vand.u32 %v3537, 4294901760
    %v7118 = vsub.f32 %v3537, %v7117
    %7119 = vmatpush1.msra.mxu0 %v7118
    %7120 = vmatprep.subr.mxu0 0.0
    %v7121 = vand.u32 %v3536, 4294901760
    %v7122 = vsub.f32 %v3536, %v7121
    %7123 = vmatpush1.msra.mxu0 %v7122
    %7124 = vmatprep.subr.mxu0 0.0
    %7125 = vmatpush2.msra.mxu0 0.0
    %7126 = vmatprep.subr.mxu0 0.0
    %7127 = vmatpush2.msra.mxu0 0.0
    %7128 = vmatprep.subr.mxu0 0.0
    %7129 = vmatpush2.msra.mxu0 0.0
    %7130 = vmatprep.subr.mxu0 0.0
    %v7131 = vand.u32 %v3564, 4294901760
    %v7132 = vsub.f32 %v3564, %v7131
    %7133 = vmatpush2.msra.mxu0 %v7132
    %7134 = vmatprep.subr.mxu0 0.0
    %v7135 = vand.u32 %v3563, 4294901760
    %v7136 = vsub.f32 %v3563, %v7135
    %7137 = vmatpush2.msra.mxu0 %v7136
    %7138 = vmatprep.subr.mxu0 0.0
    %v7139 = vand.u32 %v3562, 4294901760
    %v7140 = vsub.f32 %v3562, %v7139
    %7141 = vmatpush2.msra.mxu0 %v7140
    %7142 = vmatprep.subr.mxu0 0.0
    %v7143 = vand.u32 %v3561, 4294901760
    %v7144 = vsub.f32 %v3561, %v7143
    %7145 = vmatpush2.msra.mxu0 %v7144
    %7146 = vmatprep.subr.mxu0 0.0
    %v7147 = vand.u32 %v3560, 4294901760
    %v7148 = vsub.f32 %v3560, %v7147
    %7149 = vmatpush2.msra.mxu0 %v7148
    %7150 = vmatprep.subr.mxu0 0.0
    %v7151 = vand.u32 %v3559, 4294901760
    %v7152 = vsub.f32 %v3559, %v7151
    %7153 = vmatpush2.msra.mxu0 %v7152
    %7154 = vmatprep.subr.mxu0 0.0
    %v7155 = vand.u32 %v3558, 4294901760
    %v7156 = vsub.f32 %v3558, %v7155
    %7157 = vmatpush2.msra.mxu0 %v7156
    %7158 = vmatprep.subr.mxu0 0.0
    %v7159 = vand.u32 %v3557, 4294901760
    %v7160 = vsub.f32 %v3557, %v7159
    %7161 = vmatpush2.msra.mxu0 %v7160
    %7162 = vmatprep.subr.mxu0 0.0
    %v7163 = vand.u32 %v3556, 4294901760
    %v7164 = vsub.f32 %v3556, %v7163
    %7165 = vmatpush2.msra.mxu0 %v7164
    %7166 = vmatprep.subr.mxu0 0.0
    %v7167 = vand.u32 %v3555, 4294901760
    %v7168 = vsub.f32 %v3555, %v7167
    %7169 = vmatpush2.msra.mxu0 %v7168
    %7170 = vmatprep.subr.mxu0 0.0
    %v7171 = vand.u32 %v3554, 4294901760
    %v7172 = vsub.f32 %v3554, %v7171
    %7173 = vmatpush2.msra.mxu0 %v7172
    %7174 = vmatprep.subr.mxu0 0.0
    %v7175 = vand.u32 %v3553, 4294901760
    %v7176 = vsub.f32 %v3553, %v7175
    %7177 = vmatpush2.msra.mxu0 %v7176
    %7178 = vmatprep.subr.mxu0 0.0
    %v7179 = vand.u32 %v3552, 4294901760
    %v7180 = vsub.f32 %v3552, %v7179
    %7181 = vmatpush2.msra.mxu0 %v7180
    %v7182 = vand.u32 %v3567, 4294901760
    %v7183 = vsub.f32 %v3567, %v7182
    %7184 = vmatprep.mubr.f32.mxu0 %v7183
    %v7185 = vand.u32 %v3414, 4294901760
    %v7186 = vsub.f32 %v3414, %v7185
    %7187 = vmatmul.mubr.f32.gmra.mxu0 %v7186
    %v7188 = vpop.f32.mrf.mxu0
    %v7189 = vadd.f32 %v7036, %v7188
    %v7190 = vpop.f32.mrf.mxu0
    %v7191 = vand.u32 %v3570, 4294901760
    %v7192 = vsub.f32 %v3570, %v7191
    %7193 = vmatprep.mubr.f32.mxu0 %v7192
    %v7194 = vand.u32 %v3422, 4294901760
    %v7195 = vsub.f32 %v3422, %v7194
    %7196 = vmatmul.mubr.f32.gmra.mxu0 %v7195
    %v7197 = vpop.f32.mrf.mxu0
    %v7198 = vadd.f32 %v7043, %v7197
    %v7199 = vpop.f32.mrf.mxu0
    %v7200 = vand.u32 %v3573, 4294901760
    %v7201 = vsub.f32 %v3573, %v7200
    %7202 = vmatprep.mubr.f32.mxu0 %v7201
    %v7203 = vand.u32 %v3430, 4294901760
    %v7204 = vsub.f32 %v3430, %v7203
    %7205 = vmatmul.mubr.f32.gmra.mxu0 %v7204
    %v7206 = vpop.f32.mrf.mxu0
    %v7207 = vadd.f32 %v7050, %v7206
    %v7208 = vpop.f32.mrf.mxu0
    %v7209 = vand.u32 %v3576, 4294901760
    %v7210 = vsub.f32 %v3576, %v7209
    %7211 = vmatprep.mubr.f32.mxu0 %v7210
    %v7212 = vand.u32 %v3438, 4294901760
    %v7213 = vsub.f32 %v3438, %v7212
    %7214 = vmatmul.mubr.f32.gmra.mxu0 %v7213
    %v7215 = vpop.f32.mrf.mxu0
    %v7216 = vadd.f32 %v7057, %v7215
    %v7217 = vpop.f32.mrf.mxu0
    %7218 = vdwg.mxu0
    %7219 = vmatprep.subr.mxu0 0.0
    %v7220 = vand.u32 %v3551, 4294901760
    %7221 = vmatpush1.msra.mxu0 %v7220
    %7222 = vmatprep.subr.mxu0 0.0
    %v7223 = vand.u32 %v3550, 4294901760
    %7224 = vmatpush1.msra.mxu0 %v7223
    %7225 = vmatprep.subr.mxu0 0.0
    %v7226 = vand.u32 %v3549, 4294901760
    %7227 = vmatpush1.msra.mxu0 %v7226
    %7228 = vmatprep.subr.mxu0 0.0
    %v7229 = vand.u32 %v3548, 4294901760
    %7230 = vmatpush1.msra.mxu0 %v7229
    %7231 = vmatprep.subr.mxu0 0.0
    %v7232 = vand.u32 %v3547, 4294901760
    %7233 = vmatpush1.msra.mxu0 %v7232
    %7234 = vmatprep.subr.mxu0 0.0
    %v7235 = vand.u32 %v3546, 4294901760
    %7236 = vmatpush1.msra.mxu0 %v7235
    %7237 = vmatprep.subr.mxu0 0.0
    %v7238 = vand.u32 %v3545, 4294901760
    %7239 = vmatpush1.msra.mxu0 %v7238
    %7240 = vmatprep.subr.mxu0 0.0
    %v7241 = vand.u32 %v3544, 4294901760
    %7242 = vmatpush1.msra.mxu0 %v7241
    %7243 = vmatprep.subr.mxu0 0.0
    %v7244 = vand.u32 %v3543, 4294901760
    %7245 = vmatpush1.msra.mxu0 %v7244
    %7246 = vmatprep.subr.mxu0 0.0
    %v7247 = vand.u32 %v3542, 4294901760
    %7248 = vmatpush1.msra.mxu0 %v7247
    %7249 = vmatprep.subr.mxu0 0.0
    %v7250 = vand.u32 %v3541, 4294901760
    %7251 = vmatpush1.msra.mxu0 %v7250
    %7252 = vmatprep.subr.mxu0 0.0
    %v7253 = vand.u32 %v3540, 4294901760
    %7254 = vmatpush1.msra.mxu0 %v7253
    %7255 = vmatprep.subr.mxu0 0.0
    %v7256 = vand.u32 %v3539, 4294901760
    %7257 = vmatpush1.msra.mxu0 %v7256
    %7258 = vmatprep.subr.mxu0 0.0
    %v7259 = vand.u32 %v3538, 4294901760
    %7260 = vmatpush1.msra.mxu0 %v7259
    %7261 = vmatprep.subr.mxu0 0.0
    %v7262 = vand.u32 %v3537, 4294901760
    %7263 = vmatpush1.msra.mxu0 %v7262
    %7264 = vmatprep.subr.mxu0 0.0
    %v7265 = vand.u32 %v3536, 4294901760
    %7266 = vmatpush1.msra.mxu0 %v7265
    %7267 = vmatprep.subr.mxu0 0.0
    %7268 = vmatpush2.msra.mxu0 0.0
    %7269 = vmatprep.subr.mxu0 0.0
    %7270 = vmatpush2.msra.mxu0 0.0
    %7271 = vmatprep.subr.mxu0 0.0
    %7272 = vmatpush2.msra.mxu0 0.0
    %7273 = vmatprep.subr.mxu0 0.0
    %v7274 = vand.u32 %v3564, 4294901760
    %7275 = vmatpush2.msra.mxu0 %v7274
    %7276 = vmatprep.subr.mxu0 0.0
    %v7277 = vand.u32 %v3563, 4294901760
    %7278 = vmatpush2.msra.mxu0 %v7277
    %7279 = vmatprep.subr.mxu0 0.0
    %v7280 = vand.u32 %v3562, 4294901760
    %7281 = vmatpush2.msra.mxu0 %v7280
    %7282 = vmatprep.subr.mxu0 0.0
    %v7283 = vand.u32 %v3561, 4294901760
    %7284 = vmatpush2.msra.mxu0 %v7283
    %7285 = vmatprep.subr.mxu0 0.0
    %v7286 = vand.u32 %v3560, 4294901760
    %7287 = vmatpush2.msra.mxu0 %v7286
    %7288 = vmatprep.subr.mxu0 0.0
    %v7289 = vand.u32 %v3559, 4294901760
    %7290 = vmatpush2.msra.mxu0 %v7289
    %7291 = vmatprep.subr.mxu0 0.0
    %v7292 = vand.u32 %v3558, 4294901760
    %7293 = vmatpush2.msra.mxu0 %v7292
    %7294 = vmatprep.subr.mxu0 0.0
    %v7295 = vand.u32 %v3557, 4294901760
    %7296 = vmatpush2.msra.mxu0 %v7295
    %7297 = vmatprep.subr.mxu0 0.0
    %v7298 = vand.u32 %v3556, 4294901760
    %7299 = vmatpush2.msra.mxu0 %v7298
    %7300 = vmatprep.subr.mxu0 0.0
    %v7301 = vand.u32 %v3555, 4294901760
    %7302 = vmatpush2.msra.mxu0 %v7301
    %7303 = vmatprep.subr.mxu0 0.0
    %v7304 = vand.u32 %v3554, 4294901760
    %7305 = vmatpush2.msra.mxu0 %v7304
    %7306 = vmatprep.subr.mxu0 0.0
    %v7307 = vand.u32 %v3553, 4294901760
    %7308 = vmatpush2.msra.mxu0 %v7307
    %7309 = vmatprep.subr.mxu0 0.0
    %v7310 = vand.u32 %v3552, 4294901760
    %7311 = vmatpush2.msra.mxu0 %v7310
    %v7312 = vand.u32 %v3567, 4294901760
    %v7313 = vsub.f32 %v3567, %v7312
    %v7314 = vand.u32 %v7313, 4294901760
    %7315 = vmatprep.mubr.f32.mxu0 %v7314
    %v7316 = vand.u32 %v3414, 4294901760
    %v7317 = vsub.f32 %v3414, %v7316
    %v7318 = vand.u32 %v7317, 4294901760
    %7319 = vmatmul.mubr.f32.gmra.mxu0 %v7318
    %v7320 = vpop.f32.mrf.mxu0
    %v7321 = vadd.f32 %v7189, %v7320
    %v7322 = vpop.f32.mrf.mxu0
    %v7323 = vand.u32 %v3570, 4294901760
    %v7324 = vsub.f32 %v3570, %v7323
    %v7325 = vand.u32 %v7324, 4294901760
    %7326 = vmatprep.mubr.f32.mxu0 %v7325
    %v7327 = vand.u32 %v3422, 4294901760
    %v7328 = vsub.f32 %v3422, %v7327
    %v7329 = vand.u32 %v7328, 4294901760
    %7330 = vmatmul.mubr.f32.gmra.mxu0 %v7329
    %v7331 = vpop.f32.mrf.mxu0
    %v7332 = vadd.f32 %v7198, %v7331
    %v7333 = vpop.f32.mrf.mxu0
    %v7334 = vand.u32 %v3573, 4294901760
    %v7335 = vsub.f32 %v3573, %v7334
    %v7336 = vand.u32 %v7335, 4294901760
    %7337 = vmatprep.mubr.f32.mxu0 %v7336
    %v7338 = vand.u32 %v3430, 4294901760
    %v7339 = vsub.f32 %v3430, %v7338
    %v7340 = vand.u32 %v7339, 4294901760
    %7341 = vmatmul.mubr.f32.gmra.mxu0 %v7340
    %v7342 = vpop.f32.mrf.mxu0
    %v7343 = vadd.f32 %v7207, %v7342
    %v7344 = vpop.f32.mrf.mxu0
    %v7345 = vand.u32 %v3576, 4294901760
    %v7346 = vsub.f32 %v3576, %v7345
    %v7347 = vand.u32 %v7346, 4294901760
    %7348 = vmatprep.mubr.f32.mxu0 %v7347
    %v7349 = vand.u32 %v3438, 4294901760
    %v7350 = vsub.f32 %v3438, %v7349
    %v7351 = vand.u32 %v7350, 4294901760
    %7352 = vmatmul.mubr.f32.gmra.mxu0 %v7351
    %v7353 = vpop.f32.mrf.mxu0
    %v7354 = vadd.f32 %v7216, %v7353
    %v7355 = vpop.f32.mrf.mxu0
    %7356 = vdwg.mxu0
    %7357 = vmatprep.subr.mxu0 0.0
    %v7358 = vand.u32 %v3551, 4294901760
    %v7359 = vsub.f32 %v3551, %v7358
    %v7360 = vand.u32 %v7359, 4294901760
    %7361 = vmatpush1.msra.mxu0 %v7360
    %7362 = vmatprep.subr.mxu0 0.0
    %v7363 = vand.u32 %v3550, 4294901760
    %v7364 = vsub.f32 %v3550, %v7363
    %v7365 = vand.u32 %v7364, 4294901760
    %7366 = vmatpush1.msra.mxu0 %v7365
    %7367 = vmatprep.subr.mxu0 0.0
    %v7368 = vand.u32 %v3549, 4294901760
    %v7369 = vsub.f32 %v3549, %v7368
    %v7370 = vand.u32 %v7369, 4294901760
    %7371 = vmatpush1.msra.mxu0 %v7370
    %7372 = vmatprep.subr.mxu0 0.0
    %v7373 = vand.u32 %v3548, 4294901760
    %v7374 = vsub.f32 %v3548, %v7373
    %v7375 = vand.u32 %v7374, 4294901760
    %7376 = vmatpush1.msra.mxu0 %v7375
    %7377 = vmatprep.subr.mxu0 0.0
    %v7378 = vand.u32 %v3547, 4294901760
    %v7379 = vsub.f32 %v3547, %v7378
    %v7380 = vand.u32 %v7379, 4294901760
    %7381 = vmatpush1.msra.mxu0 %v7380
    %7382 = vmatprep.subr.mxu0 0.0
    %v7383 = vand.u32 %v3546, 4294901760
    %v7384 = vsub.f32 %v3546, %v7383
    %v7385 = vand.u32 %v7384, 4294901760
    %7386 = vmatpush1.msra.mxu0 %v7385
    %7387 = vmatprep.subr.mxu0 0.0
    %v7388 = vand.u32 %v3545, 4294901760
    %v7389 = vsub.f32 %v3545, %v7388
    %v7390 = vand.u32 %v7389, 4294901760
    %7391 = vmatpush1.msra.mxu0 %v7390
    %7392 = vmatprep.subr.mxu0 0.0
    %v7393 = vand.u32 %v3544, 4294901760
    %v7394 = vsub.f32 %v3544, %v7393
    %v7395 = vand.u32 %v7394, 4294901760
    %7396 = vmatpush1.msra.mxu0 %v7395
    %7397 = vmatprep.subr.mxu0 0.0
    %v7398 = vand.u32 %v3543, 4294901760
    %v7399 = vsub.f32 %v3543, %v7398
    %v7400 = vand.u32 %v7399, 4294901760
    %7401 = vmatpush1.msra.mxu0 %v7400
    %7402 = vmatprep.subr.mxu0 0.0
    %v7403 = vand.u32 %v3542, 4294901760
    %v7404 = vsub.f32 %v3542, %v7403
    %v7405 = vand.u32 %v7404, 4294901760
    %7406 = vmatpush1.msra.mxu0 %v7405
    %7407 = vmatprep.subr.mxu0 0.0
    %v7408 = vand.u32 %v3541, 4294901760
    %v7409 = vsub.f32 %v3541, %v7408
    %v7410 = vand.u32 %v7409, 4294901760
    %7411 = vmatpush1.msra.mxu0 %v7410
    %7412 = vmatprep.subr.mxu0 0.0
    %v7413 = vand.u32 %v3540, 4294901760
    %v7414 = vsub.f32 %v3540, %v7413
    %v7415 = vand.u32 %v7414, 4294901760
    %7416 = vmatpush1.msra.mxu0 %v7415
    %7417 = vmatprep.subr.mxu0 0.0
    %v7418 = vand.u32 %v3539, 4294901760
    %v7419 = vsub.f32 %v3539, %v7418
    %v7420 = vand.u32 %v7419, 4294901760
    %7421 = vmatpush1.msra.mxu0 %v7420
    %7422 = vmatprep.subr.mxu0 0.0
    %v7423 = vand.u32 %v3538, 4294901760
    %v7424 = vsub.f32 %v3538, %v7423
    %v7425 = vand.u32 %v7424, 4294901760
    %7426 = vmatpush1.msra.mxu0 %v7425
    %7427 = vmatprep.subr.mxu0 0.0
    %v7428 = vand.u32 %v3537, 4294901760
    %v7429 = vsub.f32 %v3537, %v7428
    %v7430 = vand.u32 %v7429, 4294901760
    %7431 = vmatpush1.msra.mxu0 %v7430
    %7432 = vmatprep.subr.mxu0 0.0
    %v7433 = vand.u32 %v3536, 4294901760
    %v7434 = vsub.f32 %v3536, %v7433
    %v7435 = vand.u32 %v7434, 4294901760
    %7436 = vmatpush1.msra.mxu0 %v7435
    %7437 = vmatprep.subr.mxu0 0.0
    %7438 = vmatpush2.msra.mxu0 0.0
    %7439 = vmatprep.subr.mxu0 0.0
    %7440 = vmatpush2.msra.mxu0 0.0
    %7441 = vmatprep.subr.mxu0 0.0
    %7442 = vmatpush2.msra.mxu0 0.0
    %7443 = vmatprep.subr.mxu0 0.0
    %v7444 = vand.u32 %v3564, 4294901760
    %v7445 = vsub.f32 %v3564, %v7444
    %v7446 = vand.u32 %v7445, 4294901760
    %7447 = vmatpush2.msra.mxu0 %v7446
    %7448 = vmatprep.subr.mxu0 0.0
    %v7449 = vand.u32 %v3563, 4294901760
    %v7450 = vsub.f32 %v3563, %v7449
    %v7451 = vand.u32 %v7450, 4294901760
    %7452 = vmatpush2.msra.mxu0 %v7451
    %7453 = vmatprep.subr.mxu0 0.0
    %v7454 = vand.u32 %v3562, 4294901760
    %v7455 = vsub.f32 %v3562, %v7454
    %v7456 = vand.u32 %v7455, 4294901760
    %7457 = vmatpush2.msra.mxu0 %v7456
    %7458 = vmatprep.subr.mxu0 0.0
    %v7459 = vand.u32 %v3561, 4294901760
    %v7460 = vsub.f32 %v3561, %v7459
    %v7461 = vand.u32 %v7460, 4294901760
    %7462 = vmatpush2.msra.mxu0 %v7461
    %7463 = vmatprep.subr.mxu0 0.0
    %v7464 = vand.u32 %v3560, 4294901760
    %v7465 = vsub.f32 %v3560, %v7464
    %v7466 = vand.u32 %v7465, 4294901760
    %7467 = vmatpush2.msra.mxu0 %v7466
    %7468 = vmatprep.subr.mxu0 0.0
    %v7469 = vand.u32 %v3559, 4294901760
    %v7470 = vsub.f32 %v3559, %v7469
    %v7471 = vand.u32 %v7470, 4294901760
    %7472 = vmatpush2.msra.mxu0 %v7471
    %7473 = vmatprep.subr.mxu0 0.0
    %v7474 = vand.u32 %v3558, 4294901760
    %v7475 = vsub.f32 %v3558, %v7474
    %v7476 = vand.u32 %v7475, 4294901760
    %7477 = vmatpush2.msra.mxu0 %v7476
    %7478 = vmatprep.subr.mxu0 0.0
    %v7479 = vand.u32 %v3557, 4294901760
    %v7480 = vsub.f32 %v3557, %v7479
    %v7481 = vand.u32 %v7480, 4294901760
    %7482 = vmatpush2.msra.mxu0 %v7481
    %7483 = vmatprep.subr.mxu0 0.0
    %v7484 = vand.u32 %v3556, 4294901760
    %v7485 = vsub.f32 %v3556, %v7484
    %v7486 = vand.u32 %v7485, 4294901760
    %7487 = vmatpush2.msra.mxu0 %v7486
    %7488 = vmatprep.subr.mxu0 0.0
    %v7489 = vand.u32 %v3555, 4294901760
    %v7490 = vsub.f32 %v3555, %v7489
    %v7491 = vand.u32 %v7490, 4294901760
    %7492 = vmatpush2.msra.mxu0 %v7491
    %7493 = vmatprep.subr.mxu0 0.0
    %v7494 = vand.u32 %v3554, 4294901760
    %v7495 = vsub.f32 %v3554, %v7494
    %v7496 = vand.u32 %v7495, 4294901760
    %7497 = vmatpush2.msra.mxu0 %v7496
    %7498 = vmatprep.subr.mxu0 0.0
    %v7499 = vand.u32 %v3553, 4294901760
    %v7500 = vsub.f32 %v3553, %v7499
    %v7501 = vand.u32 %v7500, 4294901760
    %7502 = vmatpush2.msra.mxu0 %v7501
    %7503 = vmatprep.subr.mxu0 0.0
    %v7504 = vand.u32 %v3552, 4294901760
    %v7505 = vsub.f32 %v3552, %v7504
    %v7506 = vand.u32 %v7505, 4294901760
    %7507 = vmatpush2.msra.mxu0 %v7506
    %v7508 = vand.u32 %v3567, 4294901760
    %7509 = vmatprep.mubr.f32.mxu0 %v7508
    %v7510 = vand.u32 %v3414, 4294901760
    %7511 = vmatmul.mubr.f32.gmra.mxu0 %v7510
    %v7512 = vpop.f32.mrf.mxu0
    %v7513 = vadd.f32 %v7321, %v7512
    %v7514 = vpop.f32.mrf.mxu0
    %v7515 = vand.u32 %v3570, 4294901760
    %7516 = vmatprep.mubr.f32.mxu0 %v7515
    %v7517 = vand.u32 %v3422, 4294901760
    %7518 = vmatmul.mubr.f32.gmra.mxu0 %v7517
    %v7519 = vpop.f32.mrf.mxu0
    %v7520 = vadd.f32 %v7332, %v7519
    %v7521 = vpop.f32.mrf.mxu0
    %v7522 = vand.u32 %v3573, 4294901760
    %7523 = vmatprep.mubr.f32.mxu0 %v7522
    %v7524 = vand.u32 %v3430, 4294901760
    %7525 = vmatmul.mubr.f32.gmra.mxu0 %v7524
    %v7526 = vpop.f32.mrf.mxu0
    %v7527 = vadd.f32 %v7343, %v7526
    %v7528 = vpop.f32.mrf.mxu0
    %v7529 = vand.u32 %v3576, 4294901760
    %7530 = vmatprep.mubr.f32.mxu0 %v7529
    %v7531 = vand.u32 %v3438, 4294901760
    %7532 = vmatmul.mubr.f32.gmra.mxu0 %v7531
    %v7533 = vpop.f32.mrf.mxu0
    %v7534 = vadd.f32 %v7354, %v7533
    %v7535 = vpop.f32.mrf.mxu0
    %7536 = vdwg.mxu0
    %7537 = vmatprep.subr.mxu0 0.0
    %v7538 = vand.u32 %v3551, 4294901760
    %7539 = vmatpush1.msra.mxu0 %v7538
    %7540 = vmatprep.subr.mxu0 0.0
    %v7541 = vand.u32 %v3550, 4294901760
    %7542 = vmatpush1.msra.mxu0 %v7541
    %7543 = vmatprep.subr.mxu0 0.0
    %v7544 = vand.u32 %v3549, 4294901760
    %7545 = vmatpush1.msra.mxu0 %v7544
    %7546 = vmatprep.subr.mxu0 0.0
    %v7547 = vand.u32 %v3548, 4294901760
    %7548 = vmatpush1.msra.mxu0 %v7547
    %7549 = vmatprep.subr.mxu0 0.0
    %v7550 = vand.u32 %v3547, 4294901760
    %7551 = vmatpush1.msra.mxu0 %v7550
    %7552 = vmatprep.subr.mxu0 0.0
    %v7553 = vand.u32 %v3546, 4294901760
    %7554 = vmatpush1.msra.mxu0 %v7553
    %7555 = vmatprep.subr.mxu0 0.0
    %v7556 = vand.u32 %v3545, 4294901760
    %7557 = vmatpush1.msra.mxu0 %v7556
    %7558 = vmatprep.subr.mxu0 0.0
    %v7559 = vand.u32 %v3544, 4294901760
    %7560 = vmatpush1.msra.mxu0 %v7559
    %7561 = vmatprep.subr.mxu0 0.0
    %v7562 = vand.u32 %v3543, 4294901760
    %7563 = vmatpush1.msra.mxu0 %v7562
    %7564 = vmatprep.subr.mxu0 0.0
    %v7565 = vand.u32 %v3542, 4294901760
    %7566 = vmatpush1.msra.mxu0 %v7565
    %7567 = vmatprep.subr.mxu0 0.0
    %v7568 = vand.u32 %v3541, 4294901760
    %7569 = vmatpush1.msra.mxu0 %v7568
    %7570 = vmatprep.subr.mxu0 0.0
    %v7571 = vand.u32 %v3540, 4294901760
    %7572 = vmatpush1.msra.mxu0 %v7571
    %7573 = vmatprep.subr.mxu0 0.0
    %v7574 = vand.u32 %v3539, 4294901760
    %7575 = vmatpush1.msra.mxu0 %v7574
    %7576 = vmatprep.subr.mxu0 0.0
    %v7577 = vand.u32 %v3538, 4294901760
    %7578 = vmatpush1.msra.mxu0 %v7577
    %7579 = vmatprep.subr.mxu0 0.0
    %v7580 = vand.u32 %v3537, 4294901760
    %7581 = vmatpush1.msra.mxu0 %v7580
    %7582 = vmatprep.subr.mxu0 0.0
    %v7583 = vand.u32 %v3536, 4294901760
    %7584 = vmatpush1.msra.mxu0 %v7583
    %7585 = vmatprep.subr.mxu0 0.0
    %7586 = vmatpush2.msra.mxu0 0.0
    %7587 = vmatprep.subr.mxu0 0.0
    %7588 = vmatpush2.msra.mxu0 0.0
    %7589 = vmatprep.subr.mxu0 0.0
    %7590 = vmatpush2.msra.mxu0 0.0
    %7591 = vmatprep.subr.mxu0 0.0
    %v7592 = vand.u32 %v3564, 4294901760
    %7593 = vmatpush2.msra.mxu0 %v7592
    %7594 = vmatprep.subr.mxu0 0.0
    %v7595 = vand.u32 %v3563, 4294901760
    %7596 = vmatpush2.msra.mxu0 %v7595
    %7597 = vmatprep.subr.mxu0 0.0
    %v7598 = vand.u32 %v3562, 4294901760
    %7599 = vmatpush2.msra.mxu0 %v7598
    %7600 = vmatprep.subr.mxu0 0.0
    %v7601 = vand.u32 %v3561, 4294901760
    %7602 = vmatpush2.msra.mxu0 %v7601
    %7603 = vmatprep.subr.mxu0 0.0
    %v7604 = vand.u32 %v3560, 4294901760
    %7605 = vmatpush2.msra.mxu0 %v7604
    %7606 = vmatprep.subr.mxu0 0.0
    %v7607 = vand.u32 %v3559, 4294901760
    %7608 = vmatpush2.msra.mxu0 %v7607
    %7609 = vmatprep.subr.mxu0 0.0
    %v7610 = vand.u32 %v3558, 4294901760
    %7611 = vmatpush2.msra.mxu0 %v7610
    %7612 = vmatprep.subr.mxu0 0.0
    %v7613 = vand.u32 %v3557, 4294901760
    %7614 = vmatpush2.msra.mxu0 %v7613
    %7615 = vmatprep.subr.mxu0 0.0
    %v7616 = vand.u32 %v3556, 4294901760
    %7617 = vmatpush2.msra.mxu0 %v7616
    %7618 = vmatprep.subr.mxu0 0.0
    %v7619 = vand.u32 %v3555, 4294901760
    %7620 = vmatpush2.msra.mxu0 %v7619
    %7621 = vmatprep.subr.mxu0 0.0
    %v7622 = vand.u32 %v3554, 4294901760
    %7623 = vmatpush2.msra.mxu0 %v7622
    %7624 = vmatprep.subr.mxu0 0.0
    %v7625 = vand.u32 %v3553, 4294901760
    %7626 = vmatpush2.msra.mxu0 %v7625
    %7627 = vmatprep.subr.mxu0 0.0
    %v7628 = vand.u32 %v3552, 4294901760
    %7629 = vmatpush2.msra.mxu0 %v7628
    %v7630 = vand.u32 %v3567, 4294901760
    %7631 = vmatprep.mubr.f32.mxu0 %v7630
    %v7632 = vand.u32 %v3414, 4294901760
    %7633 = vmatmul.mubr.f32.gmra.mxu0 %v7632
    %v7634 = vpop.f32.mrf.mxu0
    %v7635 = vadd.f32 %v7513, %v7634
    %v7636 = vpop.f32.mrf.mxu0
    %v7637 = vand.u32 %v3570, 4294901760
    %7638 = vmatprep.mubr.f32.mxu0 %v7637
    %v7639 = vand.u32 %v3422, 4294901760
    %7640 = vmatmul.mubr.f32.gmra.mxu0 %v7639
    %v7641 = vpop.f32.mrf.mxu0
    %v7642 = vadd.f32 %v7520, %v7641
    %v7643 = vpop.f32.mrf.mxu0
    %v7644 = vand.u32 %v3573, 4294901760
    %7645 = vmatprep.mubr.f32.mxu0 %v7644
    %v7646 = vand.u32 %v3430, 4294901760
    %7647 = vmatmul.mubr.f32.gmra.mxu0 %v7646
    %v7648 = vpop.f32.mrf.mxu0
    %v7649 = vadd.f32 %v7527, %v7648
    %v7650 = vpop.f32.mrf.mxu0
    %v7651 = vand.u32 %v3576, 4294901760
    %7652 = vmatprep.mubr.f32.mxu0 %v7651
    %v7653 = vand.u32 %v3438, 4294901760
    %7654 = vmatmul.mubr.f32.gmra.mxu0 %v7653
    %v7655 = vpop.f32.mrf.mxu0
    %v7656 = vadd.f32 %v7534, %v7655
    %v7657 = vpop.f32.mrf.mxu0
    %7658 = vdwg.mxu0
    %v7659 = vadd.f32 %v3404, %v7635
    %v7660 = vadd.f32 %v3405, %v7642
    %v7661 = vadd.f32 %v3406, %v7649
    %v7662 = vadd.f32 %v3407, %v7656
    %v7663 = vld [vmem:[%s15] sm:$0x1]
    %v7665 = vlaneseq
    %v7666 = vshrl.u32 %v7665, 7
    %v7667 = vsub.s32 0, %v7666
    %v7668 = vrot.slane %v7663, %v7667
    %v7670 = vadd.f32 %v7659, %v7668
    %v7671 = vadd.f32 %v7660, %v7668
    %v7672 = vadd.f32 %v7661, %v7668
    %v7673 = vadd.f32 %v7662, %v7668
    %v7674 = vld [vmem:[%s0] sm:$0xff]
    %v7675 = vld [vmem:[%s0 + $0x8] sm:$0xff]
    %v7676 = vld [vmem:[%s0 + $0x10] sm:$0xff]
    %v7677 = vld [vmem:[%s0 + $0x18] sm:$0xff]
    %v7678 = vld [vmem:[%s1] sm:$0xff]
    %v7679 = vld [vmem:[%s1 + $0x8] sm:$0xff]
    %v7680 = vld [vmem:[%s1 + $0x10] sm:$0xff]
    %v7681 = vld [vmem:[%s1 + $0x18] sm:$0xff]
    %7686 = vrot.lane.b32.xlu0 %v2310, 32
    %v7687 = vpop.permute.xlu0 %7686
    %7688 = vrot.lane.b32.xlu0 %v2311, 32
    %v7689 = vpop.permute.xlu0 %7688
    %7690 = vrot.lane.b32.xlu0 %v2312, 32
    %v7691 = vpop.permute.xlu0 %7690
    %7692 = vrot.lane.b32.xlu0 %v2313, 32
    %v7693 = vpop.permute.xlu0 %7692
    %7702 = vrot.lane.b32.xlu0 %v7678, 69
    %v7703 = vpop.permute.xlu0 %7702
    %7704 = vrot.lane.b32.xlu0 %v7679, 69
    %v7705 = vpop.permute.xlu0 %7704
    %7706 = vrot.lane.b32.xlu0 %v7680, 69
    %v7707 = vpop.permute.xlu0 %7706
    %7708 = vrot.lane.b32.xlu0 %v7681, 69
    %v7709 = vpop.permute.xlu0 %7708
    %7718 = vrot.lane.b32.xlu0 %v7670, 101
    %v7719 = vpop.permute.xlu0 %7718
    %7720 = vrot.lane.b32.xlu0 %v7671, 101
    %v7721 = vpop.permute.xlu0 %7720
    %7722 = vrot.lane.b32.xlu0 %v7672, 101
    %v7723 = vpop.permute.xlu0 %7722
    %7724 = vrot.lane.b32.xlu0 %v7673, 101
    %v7725 = vpop.permute.xlu0 %7724
    %7734 = vrot.lane.b32.xlu0 %v3400, 5
    %v7735 = vpop.permute.xlu0 %7734
    %7736 = vrot.lane.b32.xlu0 %v3401, 5
    %v7737 = vpop.permute.xlu0 %7736
    %7738 = vrot.lane.b32.xlu0 %v3402, 5
    %v7739 = vpop.permute.xlu0 %7738
    %7740 = vrot.lane.b32.xlu0 %v3403, 5
    %v7741 = vpop.permute.xlu0 %7740
    %vm7746 = vcmask 261120
    %v7747 = vsel %vm7746, %v7674, %v7687
    %v7748 = vsel %vm7746, %v7675, %v7689
    %v7749 = vsel %vm7746, %v7676, %v7691
    %v7750 = vsel %vm7746, %v7677, %v7693
    %vm7751 = vcmask 564224
    %v7752 = vsel %vm7751, %v7747, %v7703
    %v7753 = vsel %vm7751, %v7748, %v7705
    %v7754 = vsel %vm7751, %v7749, %v7707
    %v7755 = vsel %vm7751, %v7750, %v7709
    %vm7756 = vcmask 826368
    %v7757 = vsel %vm7756, %v7752, %v7719
    %v7758 = vsel %vm7756, %v7753, %v7721
    %v7759 = vsel %vm7756, %v7754, %v7723
    %v7760 = vsel %vm7756, %v7755, %v7725
    %vm7761 = vcmask 39936
    %v7762 = vsel %vm7761, %v7719, %v7735
    %v7763 = vsel %vm7761, %v7721, %v7737
    %v7764 = vsel %vm7761, %v7723, %v7739
    %v7765 = vsel %vm7761, %v7725, %v7741
    %v7766 = vld [vmem:[%s16] sm:$0xff]
    %v7767 = vld [vmem:[%s16 + $0x8] sm:$0xff]
    %v7768 = vld [vmem:[%s16 + $0x10] sm:$0xff]
    %v7769 = vld [vmem:[%s16 + $0x18] sm:$0xff]
    %v7770 = vld [vmem:[%s16 + $0x20] sm:$0xff]
    %v7771 = vld [vmem:[%s16 + $0x28] sm:$0xff]
    %v7772 = vld [vmem:[%s16 + $0x30] sm:$0xff]
    %v7773 = vld [vmem:[%s16 + $0x38] sm:$0xff]
    %v7774 = vld [vmem:[%s16 + $0x40] sm:$0xff]
    %v7775 = vld [vmem:[%s16 + $0x48] sm:$0xff]
    %v7776 = vld [vmem:[%s16 + $0x50] sm:$0xff]
    %v7777 = vld [vmem:[%s16 + $0x58] sm:$0xff]
    %v7778 = vld [vmem:[%s16 + $0x60] sm:$0xff]
    %v7779 = vld [vmem:[%s16 + $0x68] sm:$0xff]
    %v7780 = vld [vmem:[%s16 + $0x70] sm:$0xff]
    %v7781 = vld [vmem:[%s16 + $0x78] sm:$0xff]
    %v7782 = vld [vmem:[%s16 + $0x80] sm:$0xff]
    %v7783 = vld [vmem:[%s16 + $0x88] sm:$0xff]
    %v7784 = vld [vmem:[%s16 + $0x90] sm:$0xff]
    %v7785 = vld [vmem:[%s16 + $0x98] sm:$0xff]
    %v7786 = vld [vmem:[%s16 + $0xa0] sm:$0xff]
    %v7787 = vld [vmem:[%s16 + $0xa8] sm:$0xff]
    %v7788 = vld [vmem:[%s16 + $0xb0] sm:$0xff]
    %v7789 = vld [vmem:[%s16 + $0xb8] sm:$0xff]
    %v7790 = vld [vmem:[%s16 + $0xc0] sm:$0xff]
    %v7791 = vld [vmem:[%s16 + $0xc8] sm:$0xff]
    %v7792 = vld [vmem:[%s16 + $0xd0] sm:$0xff]
    %v7793 = vld [vmem:[%s16 + $0xd8] sm:$0xff]
    %v7794 = vld [vmem:[%s16 + $0xe0] sm:$0xff]
    %v7795 = vld [vmem:[%s16 + $0xe8] sm:$0xff]
    %v7796 = vld [vmem:[%s16 + $0xf0] sm:$0xff]
    %v7797 = vld [vmem:[%s16 + $0xf8] sm:$0xff]
    %v7798 = vld [vmem:[%s16 + $0x100] sm:$0xff]
    %v7799 = vld [vmem:[%s16 + $0x108] sm:$0xff]
    %v7800 = vld [vmem:[%s16 + $0x110] sm:$0xff]
    %v7801 = vld [vmem:[%s16 + $0x118] sm:$0xff]
    %v7802 = vld [vmem:[%s16 + $0x120] sm:$0xff]
    %v7803 = vld [vmem:[%s16 + $0x128] sm:$0xff]
    %v7804 = vld [vmem:[%s16 + $0x130] sm:$0xff]
    %v7805 = vld [vmem:[%s16 + $0x138] sm:$0xff]
    %v7806 = vld [vmem:[%s16 + $0x140] sm:$0x1f]
    %v7807 = vld [vmem:[%s16 + $0x148] sm:$0x1f]
    %v7808 = vld [vmem:[%s17] sm:$0x3]
    %v7810 = vlaneseq
    %v7811 = vshrl.u32 %v7810, 7
    %v7812 = vsub.s32 0, %v7811
    %v7813 = vrot.slane %v7808, %v7812
    %v7814 = vlaneseq
    %v7815 = vshrl.u32 %v7814, 7
    %v7816 = vsub.s32 1, %v7815
    %v7817 = vrot.slane %v7808, %v7816
    %v7821 = vsel %vm104, %v7762, 0
    %v7824 = vsel %vm104, %v7763, 0
    %v7827 = vsel %vm104, %v7764, 0
    %v7830 = vsel %vm104, %v7765, 0
    %v7833 = vsel %vm141, %v7806, 0
    %v7836 = vsel %vm141, %v7807, 0
    %v7838 = vand.u32 %v7797, 4294901760
    %7839 = vmatprep.subr.mxu0 %v7838
    %v7840 = vand.u32 %v7796, 4294901760
    %7841 = vmatpush1.msra.mxu0 %v7840
    %v7842 = vand.u32 %v7795, 4294901760
    %7843 = vmatprep.subr.mxu0 %v7842
    %v7844 = vand.u32 %v7794, 4294901760
    %7845 = vmatpush1.msra.mxu0 %v7844
    %v7846 = vand.u32 %v7793, 4294901760
    %7847 = vmatprep.subr.mxu0 %v7846
    %v7848 = vand.u32 %v7792, 4294901760
    %7849 = vmatpush1.msra.mxu0 %v7848
    %v7850 = vand.u32 %v7791, 4294901760
    %7851 = vmatprep.subr.mxu0 %v7850
    %v7852 = vand.u32 %v7790, 4294901760
    %7853 = vmatpush1.msra.mxu0 %v7852
    %v7854 = vand.u32 %v7789, 4294901760
    %7855 = vmatprep.subr.mxu0 %v7854
    %v7856 = vand.u32 %v7788, 4294901760
    %7857 = vmatpush1.msra.mxu0 %v7856
    %v7858 = vand.u32 %v7787, 4294901760
    %7859 = vmatprep.subr.mxu0 %v7858
    %v7860 = vand.u32 %v7786, 4294901760
    %7861 = vmatpush1.msra.mxu0 %v7860
    %v7862 = vand.u32 %v7785, 4294901760
    %7863 = vmatprep.subr.mxu0 %v7862
    %v7864 = vand.u32 %v7784, 4294901760
    %7865 = vmatpush1.msra.mxu0 %v7864
    %v7866 = vand.u32 %v7783, 4294901760
    %7867 = vmatprep.subr.mxu0 %v7866
    %v7868 = vand.u32 %v7782, 4294901760
    %7869 = vmatpush1.msra.mxu0 %v7868
    %v7870 = vand.u32 %v7781, 4294901760
    %7871 = vmatprep.subr.mxu0 %v7870
    %v7872 = vand.u32 %v7780, 4294901760
    %7873 = vmatpush1.msra.mxu0 %v7872
    %v7874 = vand.u32 %v7779, 4294901760
    %7875 = vmatprep.subr.mxu0 %v7874
    %v7876 = vand.u32 %v7778, 4294901760
    %7877 = vmatpush1.msra.mxu0 %v7876
    %v7878 = vand.u32 %v7777, 4294901760
    %7879 = vmatprep.subr.mxu0 %v7878
    %v7880 = vand.u32 %v7776, 4294901760
    %7881 = vmatpush1.msra.mxu0 %v7880
    %v7882 = vand.u32 %v7775, 4294901760
    %7883 = vmatprep.subr.mxu0 %v7882
    %v7884 = vand.u32 %v7774, 4294901760
    %7885 = vmatpush1.msra.mxu0 %v7884
    %v7886 = vand.u32 %v7773, 4294901760
    %7887 = vmatprep.subr.mxu0 %v7886
    %v7888 = vand.u32 %v7772, 4294901760
    %7889 = vmatpush1.msra.mxu0 %v7888
    %v7890 = vand.u32 %v7771, 4294901760
    %7891 = vmatprep.subr.mxu0 %v7890
    %v7892 = vand.u32 %v7770, 4294901760
    %7893 = vmatpush1.msra.mxu0 %v7892
    %v7894 = vand.u32 %v7769, 4294901760
    %7895 = vmatprep.subr.mxu0 %v7894
    %v7896 = vand.u32 %v7768, 4294901760
    %7897 = vmatpush1.msra.mxu0 %v7896
    %v7898 = vand.u32 %v7767, 4294901760
    %7899 = vmatprep.subr.mxu0 %v7898
    %v7900 = vand.u32 %v7766, 4294901760
    %7901 = vmatpush1.msra.mxu0 %v7900
    %7902 = vmatprep.subr.mxu0 0.0
    %7903 = vmatpush2.msra.mxu0 0.0
    %7904 = vmatprep.subr.mxu0 0.0
    %7905 = vmatpush2.msra.mxu0 0.0
    %7906 = vmatprep.subr.mxu0 0.0
    %7907 = vmatpush2.msra.mxu0 0.0
    %7908 = vmatprep.subr.mxu0 0.0
    %7909 = vmatpush2.msra.mxu0 0.0
    %7910 = vmatprep.subr.mxu0 0.0
    %7911 = vmatpush2.msra.mxu0 0.0
    %7912 = vmatprep.subr.mxu0 0.0
    %7913 = vmatpush2.msra.mxu0 0.0
    %7914 = vmatprep.subr.mxu0 0.0
    %7915 = vmatpush2.msra.mxu0 0.0
    %7916 = vmatprep.subr.mxu0 0.0
    %7917 = vmatpush2.msra.mxu0 0.0
    %7918 = vmatprep.subr.mxu0 0.0
    %7919 = vmatpush2.msra.mxu0 0.0
    %7920 = vmatprep.subr.mxu0 0.0
    %7921 = vmatpush2.msra.mxu0 0.0
    %7922 = vmatprep.subr.mxu0 0.0
    %7923 = vmatpush2.msra.mxu0 0.0
    %v7924 = vand.u32 %v7836, 4294901760
    %7925 = vmatprep.subr.mxu0 %v7924
    %v7926 = vand.u32 %v7833, 4294901760
    %7927 = vmatpush2.msra.mxu0 %v7926
    %v7928 = vand.u32 %v7805, 4294901760
    %7929 = vmatprep.subr.mxu0 %v7928
    %v7930 = vand.u32 %v7804, 4294901760
    %7931 = vmatpush2.msra.mxu0 %v7930
    %v7932 = vand.u32 %v7803, 4294901760
    %7933 = vmatprep.subr.mxu0 %v7932
    %v7934 = vand.u32 %v7802, 4294901760
    %7935 = vmatpush2.msra.mxu0 %v7934
    %v7936 = vand.u32 %v7801, 4294901760
    %7937 = vmatprep.subr.mxu0 %v7936
    %v7938 = vand.u32 %v7800, 4294901760
    %7939 = vmatpush2.msra.mxu0 %v7938
    %v7940 = vand.u32 %v7799, 4294901760
    %7941 = vmatprep.subr.mxu0 %v7940
    %v7942 = vand.u32 %v7798, 4294901760
    %7943 = vmatpush2.msra.mxu0 %v7942
    %v7944 = vand.u32 %v7821, 4294901760
    %v7945 = vsub.f32 %v7821, %v7944
    %v7946 = vand.u32 %v7945, 4294901760
    %v7947 = vsub.f32 %v7945, %v7946
    %v7948 = vand.u32 %v7947, 4294901760
    %7949 = vmatprep.mubr.f32.mxu0 %v7948
    %v7950 = vand.u32 %v7757, 4294901760
    %v7951 = vsub.f32 %v7757, %v7950
    %v7952 = vand.u32 %v7951, 4294901760
    %v7953 = vsub.f32 %v7951, %v7952
    %v7954 = vand.u32 %v7953, 4294901760
    %7955 = vmatmul.mubr.f32.gmra.mxu0 %v7954
    %v7956 = vpop.f32.mrf.mxu0
    %v7957 = vadd.f32 %v7813, %v7956
    %v7958 = vpop.f32.mrf.mxu0
    %v7959 = vadd.f32 %v7817, %v7958
    %v7960 = vand.u32 %v7824, 4294901760
    %v7961 = vsub.f32 %v7824, %v7960
    %v7962 = vand.u32 %v7961, 4294901760
    %v7963 = vsub.f32 %v7961, %v7962
    %v7964 = vand.u32 %v7963, 4294901760
    %7965 = vmatprep.mubr.f32.mxu0 %v7964
    %v7966 = vand.u32 %v7758, 4294901760
    %v7967 = vsub.f32 %v7758, %v7966
    %v7968 = vand.u32 %v7967, 4294901760
    %v7969 = vsub.f32 %v7967, %v7968
    %v7970 = vand.u32 %v7969, 4294901760
    %7971 = vmatmul.mubr.f32.gmra.mxu0 %v7970
    %v7972 = vpop.f32.mrf.mxu0
    %v7973 = vadd.f32 %v7813, %v7972
    %v7974 = vpop.f32.mrf.mxu0
    %v7975 = vadd.f32 %v7817, %v7974
    %v7976 = vand.u32 %v7827, 4294901760
    %v7977 = vsub.f32 %v7827, %v7976
    %v7978 = vand.u32 %v7977, 4294901760
    %v7979 = vsub.f32 %v7977, %v7978
    %v7980 = vand.u32 %v7979, 4294901760
    %7981 = vmatprep.mubr.f32.mxu0 %v7980
    %v7982 = vand.u32 %v7759, 4294901760
    %v7983 = vsub.f32 %v7759, %v7982
    %v7984 = vand.u32 %v7983, 4294901760
    %v7985 = vsub.f32 %v7983, %v7984
    %v7986 = vand.u32 %v7985, 4294901760
    %7987 = vmatmul.mubr.f32.gmra.mxu0 %v7986
    %v7988 = vpop.f32.mrf.mxu0
    %v7989 = vadd.f32 %v7813, %v7988
    %v7990 = vpop.f32.mrf.mxu0
    %v7991 = vadd.f32 %v7817, %v7990
    %v7992 = vand.u32 %v7830, 4294901760
    %v7993 = vsub.f32 %v7830, %v7992
    %v7994 = vand.u32 %v7993, 4294901760
    %v7995 = vsub.f32 %v7993, %v7994
    %v7996 = vand.u32 %v7995, 4294901760
    %7997 = vmatprep.mubr.f32.mxu0 %v7996
    %v7998 = vand.u32 %v7760, 4294901760
    %v7999 = vsub.f32 %v7760, %v7998
    %v8000 = vand.u32 %v7999, 4294901760
    %v8001 = vsub.f32 %v7999, %v8000
    %v8002 = vand.u32 %v8001, 4294901760
    %8003 = vmatmul.mubr.f32.gmra.mxu0 %v8002
    %v8004 = vpop.f32.mrf.mxu0
    %v8005 = vadd.f32 %v7813, %v8004
    %v8006 = vpop.f32.mrf.mxu0
    %v8007 = vadd.f32 %v7817, %v8006
    %8008 = vdwg.mxu0
    %v8009 = vand.u32 %v7797, 4294901760
    %v8010 = vsub.f32 %v7797, %v8009
    %v8011 = vand.u32 %v8010, 4294901760
    %v8012 = vsub.f32 %v8010, %v8011
    %v8013 = vand.u32 %v8012, 4294901760
    %8014 = vmatprep.subr.mxu0 %v8013
    %v8015 = vand.u32 %v7796, 4294901760
    %v8016 = vsub.f32 %v7796, %v8015
    %v8017 = vand.u32 %v8016, 4294901760
    %v8018 = vsub.f32 %v8016, %v8017
    %v8019 = vand.u32 %v8018, 4294901760
    %8020 = vmatpush1.msra.mxu0 %v8019
    %v8021 = vand.u32 %v7795, 4294901760
    %v8022 = vsub.f32 %v7795, %v8021
    %v8023 = vand.u32 %v8022, 4294901760
    %v8024 = vsub.f32 %v8022, %v8023
    %v8025 = vand.u32 %v8024, 4294901760
    %8026 = vmatprep.subr.mxu0 %v8025
    %v8027 = vand.u32 %v7794, 4294901760
    %v8028 = vsub.f32 %v7794, %v8027
    %v8029 = vand.u32 %v8028, 4294901760
    %v8030 = vsub.f32 %v8028, %v8029
    %v8031 = vand.u32 %v8030, 4294901760
    %8032 = vmatpush1.msra.mxu0 %v8031
    %v8033 = vand.u32 %v7793, 4294901760
    %v8034 = vsub.f32 %v7793, %v8033
    %v8035 = vand.u32 %v8034, 4294901760
    %v8036 = vsub.f32 %v8034, %v8035
    %v8037 = vand.u32 %v8036, 4294901760
    %8038 = vmatprep.subr.mxu0 %v8037
    %v8039 = vand.u32 %v7792, 4294901760
    %v8040 = vsub.f32 %v7792, %v8039
    %v8041 = vand.u32 %v8040, 4294901760
    %v8042 = vsub.f32 %v8040, %v8041
    %v8043 = vand.u32 %v8042, 4294901760
    %8044 = vmatpush1.msra.mxu0 %v8043
    %v8045 = vand.u32 %v7791, 4294901760
    %v8046 = vsub.f32 %v7791, %v8045
    %v8047 = vand.u32 %v8046, 4294901760
    %v8048 = vsub.f32 %v8046, %v8047
    %v8049 = vand.u32 %v8048, 4294901760
    %8050 = vmatprep.subr.mxu0 %v8049
    %v8051 = vand.u32 %v7790, 4294901760
    %v8052 = vsub.f32 %v7790, %v8051
    %v8053 = vand.u32 %v8052, 4294901760
    %v8054 = vsub.f32 %v8052, %v8053
    %v8055 = vand.u32 %v8054, 4294901760
    %8056 = vmatpush1.msra.mxu0 %v8055
    %v8057 = vand.u32 %v7789, 4294901760
    %v8058 = vsub.f32 %v7789, %v8057
    %v8059 = vand.u32 %v8058, 4294901760
    %v8060 = vsub.f32 %v8058, %v8059
    %v8061 = vand.u32 %v8060, 4294901760
    %8062 = vmatprep.subr.mxu0 %v8061
    %v8063 = vand.u32 %v7788, 4294901760
    %v8064 = vsub.f32 %v7788, %v8063
    %v8065 = vand.u32 %v8064, 4294901760
    %v8066 = vsub.f32 %v8064, %v8065
    %v8067 = vand.u32 %v8066, 4294901760
    %8068 = vmatpush1.msra.mxu0 %v8067
    %v8069 = vand.u32 %v7787, 4294901760
    %v8070 = vsub.f32 %v7787, %v8069
    %v8071 = vand.u32 %v8070, 4294901760
    %v8072 = vsub.f32 %v8070, %v8071
    %v8073 = vand.u32 %v8072, 4294901760
    %8074 = vmatprep.subr.mxu0 %v8073
    %v8075 = vand.u32 %v7786, 4294901760
    %v8076 = vsub.f32 %v7786, %v8075
    %v8077 = vand.u32 %v8076, 4294901760
    %v8078 = vsub.f32 %v8076, %v8077
    %v8079 = vand.u32 %v8078, 4294901760
    %8080 = vmatpush1.msra.mxu0 %v8079
    %v8081 = vand.u32 %v7785, 4294901760
    %v8082 = vsub.f32 %v7785, %v8081
    %v8083 = vand.u32 %v8082, 4294901760
    %v8084 = vsub.f32 %v8082, %v8083
    %v8085 = vand.u32 %v8084, 4294901760
    %8086 = vmatprep.subr.mxu0 %v8085
    %v8087 = vand.u32 %v7784, 4294901760
    %v8088 = vsub.f32 %v7784, %v8087
    %v8089 = vand.u32 %v8088, 4294901760
    %v8090 = vsub.f32 %v8088, %v8089
    %v8091 = vand.u32 %v8090, 4294901760
    %8092 = vmatpush1.msra.mxu0 %v8091
    %v8093 = vand.u32 %v7783, 4294901760
    %v8094 = vsub.f32 %v7783, %v8093
    %v8095 = vand.u32 %v8094, 4294901760
    %v8096 = vsub.f32 %v8094, %v8095
    %v8097 = vand.u32 %v8096, 4294901760
    %8098 = vmatprep.subr.mxu0 %v8097
    %v8099 = vand.u32 %v7782, 4294901760
    %v8100 = vsub.f32 %v7782, %v8099
    %v8101 = vand.u32 %v8100, 4294901760
    %v8102 = vsub.f32 %v8100, %v8101
    %v8103 = vand.u32 %v8102, 4294901760
    %8104 = vmatpush1.msra.mxu0 %v8103
    %v8105 = vand.u32 %v7781, 4294901760
    %v8106 = vsub.f32 %v7781, %v8105
    %v8107 = vand.u32 %v8106, 4294901760
    %v8108 = vsub.f32 %v8106, %v8107
    %v8109 = vand.u32 %v8108, 4294901760
    %8110 = vmatprep.subr.mxu0 %v8109
    %v8111 = vand.u32 %v7780, 4294901760
    %v8112 = vsub.f32 %v7780, %v8111
    %v8113 = vand.u32 %v8112, 4294901760
    %v8114 = vsub.f32 %v8112, %v8113
    %v8115 = vand.u32 %v8114, 4294901760
    %8116 = vmatpush1.msra.mxu0 %v8115
    %v8117 = vand.u32 %v7779, 4294901760
    %v8118 = vsub.f32 %v7779, %v8117
    %v8119 = vand.u32 %v8118, 4294901760
    %v8120 = vsub.f32 %v8118, %v8119
    %v8121 = vand.u32 %v8120, 4294901760
    %8122 = vmatprep.subr.mxu0 %v8121
    %v8123 = vand.u32 %v7778, 4294901760
    %v8124 = vsub.f32 %v7778, %v8123
    %v8125 = vand.u32 %v8124, 4294901760
    %v8126 = vsub.f32 %v8124, %v8125
    %v8127 = vand.u32 %v8126, 4294901760
    %8128 = vmatpush1.msra.mxu0 %v8127
    %v8129 = vand.u32 %v7777, 4294901760
    %v8130 = vsub.f32 %v7777, %v8129
    %v8131 = vand.u32 %v8130, 4294901760
    %v8132 = vsub.f32 %v8130, %v8131
    %v8133 = vand.u32 %v8132, 4294901760
    %8134 = vmatprep.subr.mxu0 %v8133
    %v8135 = vand.u32 %v7776, 4294901760
    %v8136 = vsub.f32 %v7776, %v8135
    %v8137 = vand.u32 %v8136, 4294901760
    %v8138 = vsub.f32 %v8136, %v8137
    %v8139 = vand.u32 %v8138, 4294901760
    %8140 = vmatpush1.msra.mxu0 %v8139
    %v8141 = vand.u32 %v7775, 4294901760
    %v8142 = vsub.f32 %v7775, %v8141
    %v8143 = vand.u32 %v8142, 4294901760
    %v8144 = vsub.f32 %v8142, %v8143
    %v8145 = vand.u32 %v8144, 4294901760
    %8146 = vmatprep.subr.mxu0 %v8145
    %v8147 = vand.u32 %v7774, 4294901760
    %v8148 = vsub.f32 %v7774, %v8147
    %v8149 = vand.u32 %v8148, 4294901760
    %v8150 = vsub.f32 %v8148, %v8149
    %v8151 = vand.u32 %v8150, 4294901760
    %8152 = vmatpush1.msra.mxu0 %v8151
    %v8153 = vand.u32 %v7773, 4294901760
    %v8154 = vsub.f32 %v7773, %v8153
    %v8155 = vand.u32 %v8154, 4294901760
    %v8156 = vsub.f32 %v8154, %v8155
    %v8157 = vand.u32 %v8156, 4294901760
    %8158 = vmatprep.subr.mxu0 %v8157
    %v8159 = vand.u32 %v7772, 4294901760
    %v8160 = vsub.f32 %v7772, %v8159
    %v8161 = vand.u32 %v8160, 4294901760
    %v8162 = vsub.f32 %v8160, %v8161
    %v8163 = vand.u32 %v8162, 4294901760
    %8164 = vmatpush1.msra.mxu0 %v8163
    %v8165 = vand.u32 %v7771, 4294901760
    %v8166 = vsub.f32 %v7771, %v8165
    %v8167 = vand.u32 %v8166, 4294901760
    %v8168 = vsub.f32 %v8166, %v8167
    %v8169 = vand.u32 %v8168, 4294901760
    %8170 = vmatprep.subr.mxu0 %v8169
    %v8171 = vand.u32 %v7770, 4294901760
    %v8172 = vsub.f32 %v7770, %v8171
    %v8173 = vand.u32 %v8172, 4294901760
    %v8174 = vsub.f32 %v8172, %v8173
    %v8175 = vand.u32 %v8174, 4294901760
    %8176 = vmatpush1.msra.mxu0 %v8175
    %v8177 = vand.u32 %v7769, 4294901760
    %v8178 = vsub.f32 %v7769, %v8177
    %v8179 = vand.u32 %v8178, 4294901760
    %v8180 = vsub.f32 %v8178, %v8179
    %v8181 = vand.u32 %v8180, 4294901760
    %8182 = vmatprep.subr.mxu0 %v8181
    %v8183 = vand.u32 %v7768, 4294901760
    %v8184 = vsub.f32 %v7768, %v8183
    %v8185 = vand.u32 %v8184, 4294901760
    %v8186 = vsub.f32 %v8184, %v8185
    %v8187 = vand.u32 %v8186, 4294901760
    %8188 = vmatpush1.msra.mxu0 %v8187
    %v8189 = vand.u32 %v7767, 4294901760
    %v8190 = vsub.f32 %v7767, %v8189
    %v8191 = vand.u32 %v8190, 4294901760
    %v8192 = vsub.f32 %v8190, %v8191
    %v8193 = vand.u32 %v8192, 4294901760
    %8194 = vmatprep.subr.mxu0 %v8193
    %v8195 = vand.u32 %v7766, 4294901760
    %v8196 = vsub.f32 %v7766, %v8195
    %v8197 = vand.u32 %v8196, 4294901760
    %v8198 = vsub.f32 %v8196, %v8197
    %v8199 = vand.u32 %v8198, 4294901760
    %8200 = vmatpush1.msra.mxu0 %v8199
    %8201 = vmatprep.subr.mxu0 0.0
    %8202 = vmatpush2.msra.mxu0 0.0
    %8203 = vmatprep.subr.mxu0 0.0
    %8204 = vmatpush2.msra.mxu0 0.0
    %8205 = vmatprep.subr.mxu0 0.0
    %8206 = vmatpush2.msra.mxu0 0.0
    %8207 = vmatprep.subr.mxu0 0.0
    %8208 = vmatpush2.msra.mxu0 0.0
    %8209 = vmatprep.subr.mxu0 0.0
    %8210 = vmatpush2.msra.mxu0 0.0
    %8211 = vmatprep.subr.mxu0 0.0
    %8212 = vmatpush2.msra.mxu0 0.0
    %8213 = vmatprep.subr.mxu0 0.0
    %8214 = vmatpush2.msra.mxu0 0.0
    %8215 = vmatprep.subr.mxu0 0.0
    %8216 = vmatpush2.msra.mxu0 0.0
    %8217 = vmatprep.subr.mxu0 0.0
    %8218 = vmatpush2.msra.mxu0 0.0
    %8219 = vmatprep.subr.mxu0 0.0
    %8220 = vmatpush2.msra.mxu0 0.0
    %8221 = vmatprep.subr.mxu0 0.0
    %8222 = vmatpush2.msra.mxu0 0.0
    %v8223 = vand.u32 %v7836, 4294901760
    %v8224 = vsub.f32 %v7836, %v8223
    %v8225 = vand.u32 %v8224, 4294901760
    %v8226 = vsub.f32 %v8224, %v8225
    %v8227 = vand.u32 %v8226, 4294901760
    %8228 = vmatprep.subr.mxu0 %v8227
    %v8229 = vand.u32 %v7833, 4294901760
    %v8230 = vsub.f32 %v7833, %v8229
    %v8231 = vand.u32 %v8230, 4294901760
    %v8232 = vsub.f32 %v8230, %v8231
    %v8233 = vand.u32 %v8232, 4294901760
    %8234 = vmatpush2.msra.mxu0 %v8233
    %v8235 = vand.u32 %v7805, 4294901760
    %v8236 = vsub.f32 %v7805, %v8235
    %v8237 = vand.u32 %v8236, 4294901760
    %v8238 = vsub.f32 %v8236, %v8237
    %v8239 = vand.u32 %v8238, 4294901760
    %8240 = vmatprep.subr.mxu0 %v8239
    %v8241 = vand.u32 %v7804, 4294901760
    %v8242 = vsub.f32 %v7804, %v8241
    %v8243 = vand.u32 %v8242, 4294901760
    %v8244 = vsub.f32 %v8242, %v8243
    %v8245 = vand.u32 %v8244, 4294901760
    %8246 = vmatpush2.msra.mxu0 %v8245
    %v8247 = vand.u32 %v7803, 4294901760
    %v8248 = vsub.f32 %v7803, %v8247
    %v8249 = vand.u32 %v8248, 4294901760
    %v8250 = vsub.f32 %v8248, %v8249
    %v8251 = vand.u32 %v8250, 4294901760
    %8252 = vmatprep.subr.mxu0 %v8251
    %v8253 = vand.u32 %v7802, 4294901760
    %v8254 = vsub.f32 %v7802, %v8253
    %v8255 = vand.u32 %v8254, 4294901760
    %v8256 = vsub.f32 %v8254, %v8255
    %v8257 = vand.u32 %v8256, 4294901760
    %8258 = vmatpush2.msra.mxu0 %v8257
    %v8259 = vand.u32 %v7801, 4294901760
    %v8260 = vsub.f32 %v7801, %v8259
    %v8261 = vand.u32 %v8260, 4294901760
    %v8262 = vsub.f32 %v8260, %v8261
    %v8263 = vand.u32 %v8262, 4294901760
    %8264 = vmatprep.subr.mxu0 %v8263
    %v8265 = vand.u32 %v7800, 4294901760
    %v8266 = vsub.f32 %v7800, %v8265
    %v8267 = vand.u32 %v8266, 4294901760
    %v8268 = vsub.f32 %v8266, %v8267
    %v8269 = vand.u32 %v8268, 4294901760
    %8270 = vmatpush2.msra.mxu0 %v8269
    %v8271 = vand.u32 %v7799, 4294901760
    %v8272 = vsub.f32 %v7799, %v8271
    %v8273 = vand.u32 %v8272, 4294901760
    %v8274 = vsub.f32 %v8272, %v8273
    %v8275 = vand.u32 %v8274, 4294901760
    %8276 = vmatprep.subr.mxu0 %v8275
    %v8277 = vand.u32 %v7798, 4294901760
    %v8278 = vsub.f32 %v7798, %v8277
    %v8279 = vand.u32 %v8278, 4294901760
    %v8280 = vsub.f32 %v8278, %v8279
    %v8281 = vand.u32 %v8280, 4294901760
    %8282 = vmatpush2.msra.mxu0 %v8281
    %v8283 = vand.u32 %v7821, 4294901760
    %8284 = vmatprep.mubr.f32.mxu0 %v8283
    %v8285 = vand.u32 %v7757, 4294901760
    %8286 = vmatmul.mubr.f32.gmra.mxu0 %v8285
    %v8287 = vpop.f32.mrf.mxu0
    %v8288 = vadd.f32 %v7957, %v8287
    %v8289 = vpop.f32.mrf.mxu0
    %v8290 = vadd.f32 %v7959, %v8289
    %v8291 = vand.u32 %v7824, 4294901760
    %8292 = vmatprep.mubr.f32.mxu0 %v8291
    %v8293 = vand.u32 %v7758, 4294901760
    %8294 = vmatmul.mubr.f32.gmra.mxu0 %v8293
    %v8295 = vpop.f32.mrf.mxu0
    %v8296 = vadd.f32 %v7973, %v8295
    %v8297 = vpop.f32.mrf.mxu0
    %v8298 = vadd.f32 %v7975, %v8297
    %v8299 = vand.u32 %v7827, 4294901760
    %8300 = vmatprep.mubr.f32.mxu0 %v8299
    %v8301 = vand.u32 %v7759, 4294901760
    %8302 = vmatmul.mubr.f32.gmra.mxu0 %v8301
    %v8303 = vpop.f32.mrf.mxu0
    %v8304 = vadd.f32 %v7989, %v8303
    %v8305 = vpop.f32.mrf.mxu0
    %v8306 = vadd.f32 %v7991, %v8305
    %v8307 = vand.u32 %v7830, 4294901760
    %8308 = vmatprep.mubr.f32.mxu0 %v8307
    %v8309 = vand.u32 %v7760, 4294901760
    %8310 = vmatmul.mubr.f32.gmra.mxu0 %v8309
    %v8311 = vpop.f32.mrf.mxu0
    %v8312 = vadd.f32 %v8005, %v8311
    %v8313 = vpop.f32.mrf.mxu0
    %v8314 = vadd.f32 %v8007, %v8313
    %8315 = vdwg.mxu0
    %v8316 = vand.u32 %v7797, 4294901760
    %v8317 = vsub.f32 %v7797, %v8316
    %8318 = vmatprep.subr.mxu0 %v8317
    %v8319 = vand.u32 %v7796, 4294901760
    %v8320 = vsub.f32 %v7796, %v8319
    %8321 = vmatpush1.msra.mxu0 %v8320
    %v8322 = vand.u32 %v7795, 4294901760
    %v8323 = vsub.f32 %v7795, %v8322
    %8324 = vmatprep.subr.mxu0 %v8323
    %v8325 = vand.u32 %v7794, 4294901760
    %v8326 = vsub.f32 %v7794, %v8325
    %8327 = vmatpush1.msra.mxu0 %v8326
    %v8328 = vand.u32 %v7793, 4294901760
    %v8329 = vsub.f32 %v7793, %v8328
    %8330 = vmatprep.subr.mxu0 %v8329
    %v8331 = vand.u32 %v7792, 4294901760
    %v8332 = vsub.f32 %v7792, %v8331
    %8333 = vmatpush1.msra.mxu0 %v8332
    %v8334 = vand.u32 %v7791, 4294901760
    %v8335 = vsub.f32 %v7791, %v8334
    %8336 = vmatprep.subr.mxu0 %v8335
    %v8337 = vand.u32 %v7790, 4294901760
    %v8338 = vsub.f32 %v7790, %v8337
    %8339 = vmatpush1.msra.mxu0 %v8338
    %v8340 = vand.u32 %v7789, 4294901760
    %v8341 = vsub.f32 %v7789, %v8340
    %8342 = vmatprep.subr.mxu0 %v8341
    %v8343 = vand.u32 %v7788, 4294901760
    %v8344 = vsub.f32 %v7788, %v8343
    %8345 = vmatpush1.msra.mxu0 %v8344
    %v8346 = vand.u32 %v7787, 4294901760
    %v8347 = vsub.f32 %v7787, %v8346
    %8348 = vmatprep.subr.mxu0 %v8347
    %v8349 = vand.u32 %v7786, 4294901760
    %v8350 = vsub.f32 %v7786, %v8349
    %8351 = vmatpush1.msra.mxu0 %v8350
    %v8352 = vand.u32 %v7785, 4294901760
    %v8353 = vsub.f32 %v7785, %v8352
    %8354 = vmatprep.subr.mxu0 %v8353
    %v8355 = vand.u32 %v7784, 4294901760
    %v8356 = vsub.f32 %v7784, %v8355
    %8357 = vmatpush1.msra.mxu0 %v8356
    %v8358 = vand.u32 %v7783, 4294901760
    %v8359 = vsub.f32 %v7783, %v8358
    %8360 = vmatprep.subr.mxu0 %v8359
    %v8361 = vand.u32 %v7782, 4294901760
    %v8362 = vsub.f32 %v7782, %v8361
    %8363 = vmatpush1.msra.mxu0 %v8362
    %v8364 = vand.u32 %v7781, 4294901760
    %v8365 = vsub.f32 %v7781, %v8364
    %8366 = vmatprep.subr.mxu0 %v8365
    %v8367 = vand.u32 %v7780, 4294901760
    %v8368 = vsub.f32 %v7780, %v8367
    %8369 = vmatpush1.msra.mxu0 %v8368
    %v8370 = vand.u32 %v7779, 4294901760
    %v8371 = vsub.f32 %v7779, %v8370
    %8372 = vmatprep.subr.mxu0 %v8371
    %v8373 = vand.u32 %v7778, 4294901760
    %v8374 = vsub.f32 %v7778, %v8373
    %8375 = vmatpush1.msra.mxu0 %v8374
    %v8376 = vand.u32 %v7777, 4294901760
    %v8377 = vsub.f32 %v7777, %v8376
    %8378 = vmatprep.subr.mxu0 %v8377
    %v8379 = vand.u32 %v7776, 4294901760
    %v8380 = vsub.f32 %v7776, %v8379
    %8381 = vmatpush1.msra.mxu0 %v8380
    %v8382 = vand.u32 %v7775, 4294901760
    %v8383 = vsub.f32 %v7775, %v8382
    %8384 = vmatprep.subr.mxu0 %v8383
    %v8385 = vand.u32 %v7774, 4294901760
    %v8386 = vsub.f32 %v7774, %v8385
    %8387 = vmatpush1.msra.mxu0 %v8386
    %v8388 = vand.u32 %v7773, 4294901760
    %v8389 = vsub.f32 %v7773, %v8388
    %8390 = vmatprep.subr.mxu0 %v8389
    %v8391 = vand.u32 %v7772, 4294901760
    %v8392 = vsub.f32 %v7772, %v8391
    %8393 = vmatpush1.msra.mxu0 %v8392
    %v8394 = vand.u32 %v7771, 4294901760
    %v8395 = vsub.f32 %v7771, %v8394
    %8396 = vmatprep.subr.mxu0 %v8395
    %v8397 = vand.u32 %v7770, 4294901760
    %v8398 = vsub.f32 %v7770, %v8397
    %8399 = vmatpush1.msra.mxu0 %v8398
    %v8400 = vand.u32 %v7769, 4294901760
    %v8401 = vsub.f32 %v7769, %v8400
    %8402 = vmatprep.subr.mxu0 %v8401
    %v8403 = vand.u32 %v7768, 4294901760
    %v8404 = vsub.f32 %v7768, %v8403
    %8405 = vmatpush1.msra.mxu0 %v8404
    %v8406 = vand.u32 %v7767, 4294901760
    %v8407 = vsub.f32 %v7767, %v8406
    %8408 = vmatprep.subr.mxu0 %v8407
    %v8409 = vand.u32 %v7766, 4294901760
    %v8410 = vsub.f32 %v7766, %v8409
    %8411 = vmatpush1.msra.mxu0 %v8410
    %8412 = vmatprep.subr.mxu0 0.0
    %8413 = vmatpush2.msra.mxu0 0.0
    %8414 = vmatprep.subr.mxu0 0.0
    %8415 = vmatpush2.msra.mxu0 0.0
    %8416 = vmatprep.subr.mxu0 0.0
    %8417 = vmatpush2.msra.mxu0 0.0
    %8418 = vmatprep.subr.mxu0 0.0
    %8419 = vmatpush2.msra.mxu0 0.0
    %8420 = vmatprep.subr.mxu0 0.0
    %8421 = vmatpush2.msra.mxu0 0.0
    %8422 = vmatprep.subr.mxu0 0.0
    %8423 = vmatpush2.msra.mxu0 0.0
    %8424 = vmatprep.subr.mxu0 0.0
    %8425 = vmatpush2.msra.mxu0 0.0
    %8426 = vmatprep.subr.mxu0 0.0
    %8427 = vmatpush2.msra.mxu0 0.0
    %8428 = vmatprep.subr.mxu0 0.0
    %8429 = vmatpush2.msra.mxu0 0.0
    %8430 = vmatprep.subr.mxu0 0.0
    %8431 = vmatpush2.msra.mxu0 0.0
    %8432 = vmatprep.subr.mxu0 0.0
    %8433 = vmatpush2.msra.mxu0 0.0
    %v8434 = vand.u32 %v7836, 4294901760
    %v8435 = vsub.f32 %v7836, %v8434
    %8436 = vmatprep.subr.mxu0 %v8435
    %v8437 = vand.u32 %v7833, 4294901760
    %v8438 = vsub.f32 %v7833, %v8437
    %8439 = vmatpush2.msra.mxu0 %v8438
    %v8440 = vand.u32 %v7805, 4294901760
    %v8441 = vsub.f32 %v7805, %v8440
    %8442 = vmatprep.subr.mxu0 %v8441
    %v8443 = vand.u32 %v7804, 4294901760
    %v8444 = vsub.f32 %v7804, %v8443
    %8445 = vmatpush2.msra.mxu0 %v8444
    %v8446 = vand.u32 %v7803, 4294901760
    %v8447 = vsub.f32 %v7803, %v8446
    %8448 = vmatprep.subr.mxu0 %v8447
    %v8449 = vand.u32 %v7802, 4294901760
    %v8450 = vsub.f32 %v7802, %v8449
    %8451 = vmatpush2.msra.mxu0 %v8450
    %v8452 = vand.u32 %v7801, 4294901760
    %v8453 = vsub.f32 %v7801, %v8452
    %8454 = vmatprep.subr.mxu0 %v8453
    %v8455 = vand.u32 %v7800, 4294901760
    %v8456 = vsub.f32 %v7800, %v8455
    %8457 = vmatpush2.msra.mxu0 %v8456
    %v8458 = vand.u32 %v7799, 4294901760
    %v8459 = vsub.f32 %v7799, %v8458
    %8460 = vmatprep.subr.mxu0 %v8459
    %v8461 = vand.u32 %v7798, 4294901760
    %v8462 = vsub.f32 %v7798, %v8461
    %8463 = vmatpush2.msra.mxu0 %v8462
    %v8464 = vand.u32 %v7821, 4294901760
    %v8465 = vsub.f32 %v7821, %v8464
    %8466 = vmatprep.mubr.f32.mxu0 %v8465
    %v8467 = vand.u32 %v7757, 4294901760
    %v8468 = vsub.f32 %v7757, %v8467
    %8469 = vmatmul.mubr.f32.gmra.mxu0 %v8468
    %v8470 = vpop.f32.mrf.mxu0
    %v8471 = vadd.f32 %v8288, %v8470
    %v8472 = vpop.f32.mrf.mxu0
    %v8473 = vadd.f32 %v8290, %v8472
    %v8474 = vand.u32 %v7824, 4294901760
    %v8475 = vsub.f32 %v7824, %v8474
    %8476 = vmatprep.mubr.f32.mxu0 %v8475
    %v8477 = vand.u32 %v7758, 4294901760
    %v8478 = vsub.f32 %v7758, %v8477
    %8479 = vmatmul.mubr.f32.gmra.mxu0 %v8478
    %v8480 = vpop.f32.mrf.mxu0
    %v8481 = vadd.f32 %v8296, %v8480
    %v8482 = vpop.f32.mrf.mxu0
    %v8483 = vadd.f32 %v8298, %v8482
    %v8484 = vand.u32 %v7827, 4294901760
    %v8485 = vsub.f32 %v7827, %v8484
    %8486 = vmatprep.mubr.f32.mxu0 %v8485
    %v8487 = vand.u32 %v7759, 4294901760
    %v8488 = vsub.f32 %v7759, %v8487
    %8489 = vmatmul.mubr.f32.gmra.mxu0 %v8488
    %v8490 = vpop.f32.mrf.mxu0
    %v8491 = vadd.f32 %v8304, %v8490
    %v8492 = vpop.f32.mrf.mxu0
    %v8493 = vadd.f32 %v8306, %v8492
    %v8494 = vand.u32 %v7830, 4294901760
    %v8495 = vsub.f32 %v7830, %v8494
    %8496 = vmatprep.mubr.f32.mxu0 %v8495
    %v8497 = vand.u32 %v7760, 4294901760
    %v8498 = vsub.f32 %v7760, %v8497
    %8499 = vmatmul.mubr.f32.gmra.mxu0 %v8498
    %v8500 = vpop.f32.mrf.mxu0
    %v8501 = vadd.f32 %v8312, %v8500
    %v8502 = vpop.f32.mrf.mxu0
    %v8503 = vadd.f32 %v8314, %v8502
    %8504 = vdwg.mxu0
    %v8505 = vand.u32 %v7797, 4294901760
    %8506 = vmatprep.subr.mxu0 %v8505
    %v8507 = vand.u32 %v7796, 4294901760
    %8508 = vmatpush1.msra.mxu0 %v8507
    %v8509 = vand.u32 %v7795, 4294901760
    %8510 = vmatprep.subr.mxu0 %v8509
    %v8511 = vand.u32 %v7794, 4294901760
    %8512 = vmatpush1.msra.mxu0 %v8511
    %v8513 = vand.u32 %v7793, 4294901760
    %8514 = vmatprep.subr.mxu0 %v8513
    %v8515 = vand.u32 %v7792, 4294901760
    %8516 = vmatpush1.msra.mxu0 %v8515
    %v8517 = vand.u32 %v7791, 4294901760
    %8518 = vmatprep.subr.mxu0 %v8517
    %v8519 = vand.u32 %v7790, 4294901760
    %8520 = vmatpush1.msra.mxu0 %v8519
    %v8521 = vand.u32 %v7789, 4294901760
    %8522 = vmatprep.subr.mxu0 %v8521
    %v8523 = vand.u32 %v7788, 4294901760
    %8524 = vmatpush1.msra.mxu0 %v8523
    %v8525 = vand.u32 %v7787, 4294901760
    %8526 = vmatprep.subr.mxu0 %v8525
    %v8527 = vand.u32 %v7786, 4294901760
    %8528 = vmatpush1.msra.mxu0 %v8527
    %v8529 = vand.u32 %v7785, 4294901760
    %8530 = vmatprep.subr.mxu0 %v8529
    %v8531 = vand.u32 %v7784, 4294901760
    %8532 = vmatpush1.msra.mxu0 %v8531
    %v8533 = vand.u32 %v7783, 4294901760
    %8534 = vmatprep.subr.mxu0 %v8533
    %v8535 = vand.u32 %v7782, 4294901760
    %8536 = vmatpush1.msra.mxu0 %v8535
    %v8537 = vand.u32 %v7781, 4294901760
    %8538 = vmatprep.subr.mxu0 %v8537
    %v8539 = vand.u32 %v7780, 4294901760
    %8540 = vmatpush1.msra.mxu0 %v8539
    %v8541 = vand.u32 %v7779, 4294901760
    %8542 = vmatprep.subr.mxu0 %v8541
    %v8543 = vand.u32 %v7778, 4294901760
    %8544 = vmatpush1.msra.mxu0 %v8543
    %v8545 = vand.u32 %v7777, 4294901760
    %8546 = vmatprep.subr.mxu0 %v8545
    %v8547 = vand.u32 %v7776, 4294901760
    %8548 = vmatpush1.msra.mxu0 %v8547
    %v8549 = vand.u32 %v7775, 4294901760
    %8550 = vmatprep.subr.mxu0 %v8549
    %v8551 = vand.u32 %v7774, 4294901760
    %8552 = vmatpush1.msra.mxu0 %v8551
    %v8553 = vand.u32 %v7773, 4294901760
    %8554 = vmatprep.subr.mxu0 %v8553
    %v8555 = vand.u32 %v7772, 4294901760
    %8556 = vmatpush1.msra.mxu0 %v8555
    %v8557 = vand.u32 %v7771, 4294901760
    %8558 = vmatprep.subr.mxu0 %v8557
    %v8559 = vand.u32 %v7770, 4294901760
    %8560 = vmatpush1.msra.mxu0 %v8559
    %v8561 = vand.u32 %v7769, 4294901760
    %8562 = vmatprep.subr.mxu0 %v8561
    %v8563 = vand.u32 %v7768, 4294901760
    %8564 = vmatpush1.msra.mxu0 %v8563
    %v8565 = vand.u32 %v7767, 4294901760
    %8566 = vmatprep.subr.mxu0 %v8565
    %v8567 = vand.u32 %v7766, 4294901760
    %8568 = vmatpush1.msra.mxu0 %v8567
    %8569 = vmatprep.subr.mxu0 0.0
    %8570 = vmatpush2.msra.mxu0 0.0
    %8571 = vmatprep.subr.mxu0 0.0
    %8572 = vmatpush2.msra.mxu0 0.0
    %8573 = vmatprep.subr.mxu0 0.0
    %8574 = vmatpush2.msra.mxu0 0.0
    %8575 = vmatprep.subr.mxu0 0.0
    %8576 = vmatpush2.msra.mxu0 0.0
    %8577 = vmatprep.subr.mxu0 0.0
    %8578 = vmatpush2.msra.mxu0 0.0
    %8579 = vmatprep.subr.mxu0 0.0
    %8580 = vmatpush2.msra.mxu0 0.0
    %8581 = vmatprep.subr.mxu0 0.0
    %8582 = vmatpush2.msra.mxu0 0.0
    %8583 = vmatprep.subr.mxu0 0.0
    %8584 = vmatpush2.msra.mxu0 0.0
    %8585 = vmatprep.subr.mxu0 0.0
    %8586 = vmatpush2.msra.mxu0 0.0
    %8587 = vmatprep.subr.mxu0 0.0
    %8588 = vmatpush2.msra.mxu0 0.0
    %8589 = vmatprep.subr.mxu0 0.0
    %8590 = vmatpush2.msra.mxu0 0.0
    %v8591 = vand.u32 %v7836, 4294901760
    %8592 = vmatprep.subr.mxu0 %v8591
    %v8593 = vand.u32 %v7833, 4294901760
    %8594 = vmatpush2.msra.mxu0 %v8593
    %v8595 = vand.u32 %v7805, 4294901760
    %8596 = vmatprep.subr.mxu0 %v8595
    %v8597 = vand.u32 %v7804, 4294901760
    %8598 = vmatpush2.msra.mxu0 %v8597
    %v8599 = vand.u32 %v7803, 4294901760
    %8600 = vmatprep.subr.mxu0 %v8599
    %v8601 = vand.u32 %v7802, 4294901760
    %8602 = vmatpush2.msra.mxu0 %v8601
    %v8603 = vand.u32 %v7801, 4294901760
    %8604 = vmatprep.subr.mxu0 %v8603
    %v8605 = vand.u32 %v7800, 4294901760
    %8606 = vmatpush2.msra.mxu0 %v8605
    %v8607 = vand.u32 %v7799, 4294901760
    %8608 = vmatprep.subr.mxu0 %v8607
    %v8609 = vand.u32 %v7798, 4294901760
    %8610 = vmatpush2.msra.mxu0 %v8609
    %v8611 = vand.u32 %v7821, 4294901760
    %v8612 = vsub.f32 %v7821, %v8611
    %v8613 = vand.u32 %v8612, 4294901760
    %8614 = vmatprep.mubr.f32.mxu0 %v8613
    %v8615 = vand.u32 %v7757, 4294901760
    %v8616 = vsub.f32 %v7757, %v8615
    %v8617 = vand.u32 %v8616, 4294901760
    %8618 = vmatmul.mubr.f32.gmra.mxu0 %v8617
    %v8619 = vpop.f32.mrf.mxu0
    %v8620 = vadd.f32 %v8471, %v8619
    %v8621 = vpop.f32.mrf.mxu0
    %v8622 = vadd.f32 %v8473, %v8621
    %v8623 = vand.u32 %v7824, 4294901760
    %v8624 = vsub.f32 %v7824, %v8623
    %v8625 = vand.u32 %v8624, 4294901760
    %8626 = vmatprep.mubr.f32.mxu0 %v8625
    %v8627 = vand.u32 %v7758, 4294901760
    %v8628 = vsub.f32 %v7758, %v8627
    %v8629 = vand.u32 %v8628, 4294901760
    %8630 = vmatmul.mubr.f32.gmra.mxu0 %v8629
    %v8631 = vpop.f32.mrf.mxu0
    %v8632 = vadd.f32 %v8481, %v8631
    %v8633 = vpop.f32.mrf.mxu0
    %v8634 = vadd.f32 %v8483, %v8633
    %v8635 = vand.u32 %v7827, 4294901760
    %v8636 = vsub.f32 %v7827, %v8635
    %v8637 = vand.u32 %v8636, 4294901760
    %8638 = vmatprep.mubr.f32.mxu0 %v8637
    %v8639 = vand.u32 %v7759, 4294901760
    %v8640 = vsub.f32 %v7759, %v8639
    %v8641 = vand.u32 %v8640, 4294901760
    %8642 = vmatmul.mubr.f32.gmra.mxu0 %v8641
    %v8643 = vpop.f32.mrf.mxu0
    %v8644 = vadd.f32 %v8491, %v8643
    %v8645 = vpop.f32.mrf.mxu0
    %v8646 = vadd.f32 %v8493, %v8645
    %v8647 = vand.u32 %v7830, 4294901760
    %v8648 = vsub.f32 %v7830, %v8647
    %v8649 = vand.u32 %v8648, 4294901760
    %8650 = vmatprep.mubr.f32.mxu0 %v8649
    %v8651 = vand.u32 %v7760, 4294901760
    %v8652 = vsub.f32 %v7760, %v8651
    %v8653 = vand.u32 %v8652, 4294901760
    %8654 = vmatmul.mubr.f32.gmra.mxu0 %v8653
    %v8655 = vpop.f32.mrf.mxu0
    %v8656 = vadd.f32 %v8501, %v8655
    %v8657 = vpop.f32.mrf.mxu0
    %v8658 = vadd.f32 %v8503, %v8657
    %8659 = vdwg.mxu0
    %v8660 = vand.u32 %v7797, 4294901760
    %v8661 = vsub.f32 %v7797, %v8660
    %v8662 = vand.u32 %v8661, 4294901760
    %8663 = vmatprep.subr.mxu0 %v8662
    %v8664 = vand.u32 %v7796, 4294901760
    %v8665 = vsub.f32 %v7796, %v8664
    %v8666 = vand.u32 %v8665, 4294901760
    %8667 = vmatpush1.msra.mxu0 %v8666
    %v8668 = vand.u32 %v7795, 4294901760
    %v8669 = vsub.f32 %v7795, %v8668
    %v8670 = vand.u32 %v8669, 4294901760
    %8671 = vmatprep.subr.mxu0 %v8670
    %v8672 = vand.u32 %v7794, 4294901760
    %v8673 = vsub.f32 %v7794, %v8672
    %v8674 = vand.u32 %v8673, 4294901760
    %8675 = vmatpush1.msra.mxu0 %v8674
    %v8676 = vand.u32 %v7793, 4294901760
    %v8677 = vsub.f32 %v7793, %v8676
    %v8678 = vand.u32 %v8677, 4294901760
    %8679 = vmatprep.subr.mxu0 %v8678
    %v8680 = vand.u32 %v7792, 4294901760
    %v8681 = vsub.f32 %v7792, %v8680
    %v8682 = vand.u32 %v8681, 4294901760
    %8683 = vmatpush1.msra.mxu0 %v8682
    %v8684 = vand.u32 %v7791, 4294901760
    %v8685 = vsub.f32 %v7791, %v8684
    %v8686 = vand.u32 %v8685, 4294901760
    %8687 = vmatprep.subr.mxu0 %v8686
    %v8688 = vand.u32 %v7790, 4294901760
    %v8689 = vsub.f32 %v7790, %v8688
    %v8690 = vand.u32 %v8689, 4294901760
    %8691 = vmatpush1.msra.mxu0 %v8690
    %v8692 = vand.u32 %v7789, 4294901760
    %v8693 = vsub.f32 %v7789, %v8692
    %v8694 = vand.u32 %v8693, 4294901760
    %8695 = vmatprep.subr.mxu0 %v8694
    %v8696 = vand.u32 %v7788, 4294901760
    %v8697 = vsub.f32 %v7788, %v8696
    %v8698 = vand.u32 %v8697, 4294901760
    %8699 = vmatpush1.msra.mxu0 %v8698
    %v8700 = vand.u32 %v7787, 4294901760
    %v8701 = vsub.f32 %v7787, %v8700
    %v8702 = vand.u32 %v8701, 4294901760
    %8703 = vmatprep.subr.mxu0 %v8702
    %v8704 = vand.u32 %v7786, 4294901760
    %v8705 = vsub.f32 %v7786, %v8704
    %v8706 = vand.u32 %v8705, 4294901760
    %8707 = vmatpush1.msra.mxu0 %v8706
    %v8708 = vand.u32 %v7785, 4294901760
    %v8709 = vsub.f32 %v7785, %v8708
    %v8710 = vand.u32 %v8709, 4294901760
    %8711 = vmatprep.subr.mxu0 %v8710
    %v8712 = vand.u32 %v7784, 4294901760
    %v8713 = vsub.f32 %v7784, %v8712
    %v8714 = vand.u32 %v8713, 4294901760
    %8715 = vmatpush1.msra.mxu0 %v8714
    %v8716 = vand.u32 %v7783, 4294901760
    %v8717 = vsub.f32 %v7783, %v8716
    %v8718 = vand.u32 %v8717, 4294901760
    %8719 = vmatprep.subr.mxu0 %v8718
    %v8720 = vand.u32 %v7782, 4294901760
    %v8721 = vsub.f32 %v7782, %v8720
    %v8722 = vand.u32 %v8721, 4294901760
    %8723 = vmatpush1.msra.mxu0 %v8722
    %v8724 = vand.u32 %v7781, 4294901760
    %v8725 = vsub.f32 %v7781, %v8724
    %v8726 = vand.u32 %v8725, 4294901760
    %8727 = vmatprep.subr.mxu0 %v8726
    %v8728 = vand.u32 %v7780, 4294901760
    %v8729 = vsub.f32 %v7780, %v8728
    %v8730 = vand.u32 %v8729, 4294901760
    %8731 = vmatpush1.msra.mxu0 %v8730
    %v8732 = vand.u32 %v7779, 4294901760
    %v8733 = vsub.f32 %v7779, %v8732
    %v8734 = vand.u32 %v8733, 4294901760
    %8735 = vmatprep.subr.mxu0 %v8734
    %v8736 = vand.u32 %v7778, 4294901760
    %v8737 = vsub.f32 %v7778, %v8736
    %v8738 = vand.u32 %v8737, 4294901760
    %8739 = vmatpush1.msra.mxu0 %v8738
    %v8740 = vand.u32 %v7777, 4294901760
    %v8741 = vsub.f32 %v7777, %v8740
    %v8742 = vand.u32 %v8741, 4294901760
    %8743 = vmatprep.subr.mxu0 %v8742
    %v8744 = vand.u32 %v7776, 4294901760
    %v8745 = vsub.f32 %v7776, %v8744
    %v8746 = vand.u32 %v8745, 4294901760
    %8747 = vmatpush1.msra.mxu0 %v8746
    %v8748 = vand.u32 %v7775, 4294901760
    %v8749 = vsub.f32 %v7775, %v8748
    %v8750 = vand.u32 %v8749, 4294901760
    %8751 = vmatprep.subr.mxu0 %v8750
    %v8752 = vand.u32 %v7774, 4294901760
    %v8753 = vsub.f32 %v7774, %v8752
    %v8754 = vand.u32 %v8753, 4294901760
    %8755 = vmatpush1.msra.mxu0 %v8754
    %v8756 = vand.u32 %v7773, 4294901760
    %v8757 = vsub.f32 %v7773, %v8756
    %v8758 = vand.u32 %v8757, 4294901760
    %8759 = vmatprep.subr.mxu0 %v8758
    %v8760 = vand.u32 %v7772, 4294901760
    %v8761 = vsub.f32 %v7772, %v8760
    %v8762 = vand.u32 %v8761, 4294901760
    %8763 = vmatpush1.msra.mxu0 %v8762
    %v8764 = vand.u32 %v7771, 4294901760
    %v8765 = vsub.f32 %v7771, %v8764
    %v8766 = vand.u32 %v8765, 4294901760
    %8767 = vmatprep.subr.mxu0 %v8766
    %v8768 = vand.u32 %v7770, 4294901760
    %v8769 = vsub.f32 %v7770, %v8768
    %v8770 = vand.u32 %v8769, 4294901760
    %8771 = vmatpush1.msra.mxu0 %v8770
    %v8772 = vand.u32 %v7769, 4294901760
    %v8773 = vsub.f32 %v7769, %v8772
    %v8774 = vand.u32 %v8773, 4294901760
    %8775 = vmatprep.subr.mxu0 %v8774
    %v8776 = vand.u32 %v7768, 4294901760
    %v8777 = vsub.f32 %v7768, %v8776
    %v8778 = vand.u32 %v8777, 4294901760
    %8779 = vmatpush1.msra.mxu0 %v8778
    %v8780 = vand.u32 %v7767, 4294901760
    %v8781 = vsub.f32 %v7767, %v8780
    %v8782 = vand.u32 %v8781, 4294901760
    %8783 = vmatprep.subr.mxu0 %v8782
    %v8784 = vand.u32 %v7766, 4294901760
    %v8785 = vsub.f32 %v7766, %v8784
    %v8786 = vand.u32 %v8785, 4294901760
    %8787 = vmatpush1.msra.mxu0 %v8786
    %8788 = vmatprep.subr.mxu0 0.0
    %8789 = vmatpush2.msra.mxu0 0.0
    %8790 = vmatprep.subr.mxu0 0.0
    %8791 = vmatpush2.msra.mxu0 0.0
    %8792 = vmatprep.subr.mxu0 0.0
    %8793 = vmatpush2.msra.mxu0 0.0
    %8794 = vmatprep.subr.mxu0 0.0
    %8795 = vmatpush2.msra.mxu0 0.0
    %8796 = vmatprep.subr.mxu0 0.0
    %8797 = vmatpush2.msra.mxu0 0.0
    %8798 = vmatprep.subr.mxu0 0.0
    %8799 = vmatpush2.msra.mxu0 0.0
    %8800 = vmatprep.subr.mxu0 0.0
    %8801 = vmatpush2.msra.mxu0 0.0
    %8802 = vmatprep.subr.mxu0 0.0
    %8803 = vmatpush2.msra.mxu0 0.0
    %8804 = vmatprep.subr.mxu0 0.0
    %8805 = vmatpush2.msra.mxu0 0.0
    %8806 = vmatprep.subr.mxu0 0.0
    %8807 = vmatpush2.msra.mxu0 0.0
    %8808 = vmatprep.subr.mxu0 0.0
    %8809 = vmatpush2.msra.mxu0 0.0
    %v8810 = vand.u32 %v7836, 4294901760
    %v8811 = vsub.f32 %v7836, %v8810
    %v8812 = vand.u32 %v8811, 4294901760
    %8813 = vmatprep.subr.mxu0 %v8812
    %v8814 = vand.u32 %v7833, 4294901760
    %v8815 = vsub.f32 %v7833, %v8814
    %v8816 = vand.u32 %v8815, 4294901760
    %8817 = vmatpush2.msra.mxu0 %v8816
    %v8818 = vand.u32 %v7805, 4294901760
    %v8819 = vsub.f32 %v7805, %v8818
    %v8820 = vand.u32 %v8819, 4294901760
    %8821 = vmatprep.subr.mxu0 %v8820
    %v8822 = vand.u32 %v7804, 4294901760
    %v8823 = vsub.f32 %v7804, %v8822
    %v8824 = vand.u32 %v8823, 4294901760
    %8825 = vmatpush2.msra.mxu0 %v8824
    %v8826 = vand.u32 %v7803, 4294901760
    %v8827 = vsub.f32 %v7803, %v8826
    %v8828 = vand.u32 %v8827, 4294901760
    %8829 = vmatprep.subr.mxu0 %v8828
    %v8830 = vand.u32 %v7802, 4294901760
    %v8831 = vsub.f32 %v7802, %v8830
    %v8832 = vand.u32 %v8831, 4294901760
    %8833 = vmatpush2.msra.mxu0 %v8832
    %v8834 = vand.u32 %v7801, 4294901760
    %v8835 = vsub.f32 %v7801, %v8834
    %v8836 = vand.u32 %v8835, 4294901760
    %8837 = vmatprep.subr.mxu0 %v8836
    %v8838 = vand.u32 %v7800, 4294901760
    %v8839 = vsub.f32 %v7800, %v8838
    %v8840 = vand.u32 %v8839, 4294901760
    %8841 = vmatpush2.msra.mxu0 %v8840
    %v8842 = vand.u32 %v7799, 4294901760
    %v8843 = vsub.f32 %v7799, %v8842
    %v8844 = vand.u32 %v8843, 4294901760
    %8845 = vmatprep.subr.mxu0 %v8844
    %v8846 = vand.u32 %v7798, 4294901760
    %v8847 = vsub.f32 %v7798, %v8846
    %v8848 = vand.u32 %v8847, 4294901760
    %8849 = vmatpush2.msra.mxu0 %v8848
    %v8850 = vand.u32 %v7821, 4294901760
    %8851 = vmatprep.mubr.f32.mxu0 %v8850
    %v8852 = vand.u32 %v7757, 4294901760
    %8853 = vmatmul.mubr.f32.gmra.mxu0 %v8852
    %v8854 = vpop.f32.mrf.mxu0
    %v8855 = vadd.f32 %v8620, %v8854
    %v8856 = vpop.f32.mrf.mxu0
    %v8857 = vadd.f32 %v8622, %v8856
    %v8858 = vand.u32 %v7824, 4294901760
    %8859 = vmatprep.mubr.f32.mxu0 %v8858
    %v8860 = vand.u32 %v7758, 4294901760
    %8861 = vmatmul.mubr.f32.gmra.mxu0 %v8860
    %v8862 = vpop.f32.mrf.mxu0
    %v8863 = vadd.f32 %v8632, %v8862
    %v8864 = vpop.f32.mrf.mxu0
    %v8865 = vadd.f32 %v8634, %v8864
    %v8866 = vand.u32 %v7827, 4294901760
    %8867 = vmatprep.mubr.f32.mxu0 %v8866
    %v8868 = vand.u32 %v7759, 4294901760
    %8869 = vmatmul.mubr.f32.gmra.mxu0 %v8868
    %v8870 = vpop.f32.mrf.mxu0
    %v8871 = vadd.f32 %v8644, %v8870
    %v8872 = vpop.f32.mrf.mxu0
    %v8873 = vadd.f32 %v8646, %v8872
    %v8874 = vand.u32 %v7830, 4294901760
    %8875 = vmatprep.mubr.f32.mxu0 %v8874
    %v8876 = vand.u32 %v7760, 4294901760
    %8877 = vmatmul.mubr.f32.gmra.mxu0 %v8876
    %v8878 = vpop.f32.mrf.mxu0
    %v8879 = vadd.f32 %v8656, %v8878
    %v8880 = vpop.f32.mrf.mxu0
    %v8881 = vadd.f32 %v8658, %v8880
    %8882 = vdwg.mxu0
    %v8883 = vand.u32 %v7797, 4294901760
    %8884 = vmatprep.subr.mxu0 %v8883
    %v8885 = vand.u32 %v7796, 4294901760
    %8886 = vmatpush1.msra.mxu0 %v8885
    %v8887 = vand.u32 %v7795, 4294901760
    %8888 = vmatprep.subr.mxu0 %v8887
    %v8889 = vand.u32 %v7794, 4294901760
    %8890 = vmatpush1.msra.mxu0 %v8889
    %v8891 = vand.u32 %v7793, 4294901760
    %8892 = vmatprep.subr.mxu0 %v8891
    %v8893 = vand.u32 %v7792, 4294901760
    %8894 = vmatpush1.msra.mxu0 %v8893
    %v8895 = vand.u32 %v7791, 4294901760
    %8896 = vmatprep.subr.mxu0 %v8895
    %v8897 = vand.u32 %v7790, 4294901760
    %8898 = vmatpush1.msra.mxu0 %v8897
    %v8899 = vand.u32 %v7789, 4294901760
    %8900 = vmatprep.subr.mxu0 %v8899
    %v8901 = vand.u32 %v7788, 4294901760
    %8902 = vmatpush1.msra.mxu0 %v8901
    %v8903 = vand.u32 %v7787, 4294901760
    %8904 = vmatprep.subr.mxu0 %v8903
    %v8905 = vand.u32 %v7786, 4294901760
    %8906 = vmatpush1.msra.mxu0 %v8905
    %v8907 = vand.u32 %v7785, 4294901760
    %8908 = vmatprep.subr.mxu0 %v8907
    %v8909 = vand.u32 %v7784, 4294901760
    %8910 = vmatpush1.msra.mxu0 %v8909
    %v8911 = vand.u32 %v7783, 4294901760
    %8912 = vmatprep.subr.mxu0 %v8911
    %v8913 = vand.u32 %v7782, 4294901760
    %8914 = vmatpush1.msra.mxu0 %v8913
    %v8915 = vand.u32 %v7781, 4294901760
    %8916 = vmatprep.subr.mxu0 %v8915
    %v8917 = vand.u32 %v7780, 4294901760
    %8918 = vmatpush1.msra.mxu0 %v8917
    %v8919 = vand.u32 %v7779, 4294901760
    %8920 = vmatprep.subr.mxu0 %v8919
    %v8921 = vand.u32 %v7778, 4294901760
    %8922 = vmatpush1.msra.mxu0 %v8921
    %v8923 = vand.u32 %v7777, 4294901760
    %8924 = vmatprep.subr.mxu0 %v8923
    %v8925 = vand.u32 %v7776, 4294901760
    %8926 = vmatpush1.msra.mxu0 %v8925
    %v8927 = vand.u32 %v7775, 4294901760
    %8928 = vmatprep.subr.mxu0 %v8927
    %v8929 = vand.u32 %v7774, 4294901760
    %8930 = vmatpush1.msra.mxu0 %v8929
    %v8931 = vand.u32 %v7773, 4294901760
    %8932 = vmatprep.subr.mxu0 %v8931
    %v8933 = vand.u32 %v7772, 4294901760
    %8934 = vmatpush1.msra.mxu0 %v8933
    %v8935 = vand.u32 %v7771, 4294901760
    %8936 = vmatprep.subr.mxu0 %v8935
    %v8937 = vand.u32 %v7770, 4294901760
    %8938 = vmatpush1.msra.mxu0 %v8937
    %v8939 = vand.u32 %v7769, 4294901760
    %8940 = vmatprep.subr.mxu0 %v8939
    %v8941 = vand.u32 %v7768, 4294901760
    %8942 = vmatpush1.msra.mxu0 %v8941
    %v8943 = vand.u32 %v7767, 4294901760
    %8944 = vmatprep.subr.mxu0 %v8943
    %v8945 = vand.u32 %v7766, 4294901760
    %8946 = vmatpush1.msra.mxu0 %v8945
    %8947 = vmatprep.subr.mxu0 0.0
    %8948 = vmatpush2.msra.mxu0 0.0
    %8949 = vmatprep.subr.mxu0 0.0
    %8950 = vmatpush2.msra.mxu0 0.0
    %8951 = vmatprep.subr.mxu0 0.0
    %8952 = vmatpush2.msra.mxu0 0.0
    %8953 = vmatprep.subr.mxu0 0.0
    %8954 = vmatpush2.msra.mxu0 0.0
    %8955 = vmatprep.subr.mxu0 0.0
    %8956 = vmatpush2.msra.mxu0 0.0
    %8957 = vmatprep.subr.mxu0 0.0
    %8958 = vmatpush2.msra.mxu0 0.0
    %8959 = vmatprep.subr.mxu0 0.0
    %8960 = vmatpush2.msra.mxu0 0.0
    %8961 = vmatprep.subr.mxu0 0.0
    %8962 = vmatpush2.msra.mxu0 0.0
    %8963 = vmatprep.subr.mxu0 0.0
    %8964 = vmatpush2.msra.mxu0 0.0
    %8965 = vmatprep.subr.mxu0 0.0
    %8966 = vmatpush2.msra.mxu0 0.0
    %8967 = vmatprep.subr.mxu0 0.0
    %8968 = vmatpush2.msra.mxu0 0.0
    %v8969 = vand.u32 %v7836, 4294901760
    %8970 = vmatprep.subr.mxu0 %v8969
    %v8971 = vand.u32 %v7833, 4294901760
    %8972 = vmatpush2.msra.mxu0 %v8971
    %v8973 = vand.u32 %v7805, 4294901760
    %8974 = vmatprep.subr.mxu0 %v8973
    %v8975 = vand.u32 %v7804, 4294901760
    %8976 = vmatpush2.msra.mxu0 %v8975
    %v8977 = vand.u32 %v7803, 4294901760
    %8978 = vmatprep.subr.mxu0 %v8977
    %v8979 = vand.u32 %v7802, 4294901760
    %8980 = vmatpush2.msra.mxu0 %v8979
    %v8981 = vand.u32 %v7801, 4294901760
    %8982 = vmatprep.subr.mxu0 %v8981
    %v8983 = vand.u32 %v7800, 4294901760
    %8984 = vmatpush2.msra.mxu0 %v8983
    %v8985 = vand.u32 %v7799, 4294901760
    %8986 = vmatprep.subr.mxu0 %v8985
    %v8987 = vand.u32 %v7798, 4294901760
    %8988 = vmatpush2.msra.mxu0 %v8987
    %v8989 = vand.u32 %v7821, 4294901760
    %8990 = vmatprep.mubr.f32.mxu0 %v8989
    %v8991 = vand.u32 %v7757, 4294901760
    %8992 = vmatmul.mubr.f32.gmra.mxu0 %v8991
    %v8993 = vpop.f32.mrf.mxu0
    %v8994 = vadd.f32 %v8855, %v8993
    %v8995 = vpop.f32.mrf.mxu0
    %v8996 = vadd.f32 %v8857, %v8995
    %v8997 = vand.u32 %v7824, 4294901760
    %8998 = vmatprep.mubr.f32.mxu0 %v8997
    %v8999 = vand.u32 %v7758, 4294901760
    %9000 = vmatmul.mubr.f32.gmra.mxu0 %v8999
    %v9001 = vpop.f32.mrf.mxu0
    %v9002 = vadd.f32 %v8863, %v9001
    %v9003 = vpop.f32.mrf.mxu0
    %v9004 = vadd.f32 %v8865, %v9003
    %v9005 = vand.u32 %v7827, 4294901760
    %9006 = vmatprep.mubr.f32.mxu0 %v9005
    %v9007 = vand.u32 %v7759, 4294901760
    %9008 = vmatmul.mubr.f32.gmra.mxu0 %v9007
    %v9009 = vpop.f32.mrf.mxu0
    %v9010 = vadd.f32 %v8871, %v9009
    %v9011 = vpop.f32.mrf.mxu0
    %v9012 = vadd.f32 %v8873, %v9011
    %v9013 = vand.u32 %v7830, 4294901760
    %9014 = vmatprep.mubr.f32.mxu0 %v9013
    %v9015 = vand.u32 %v7760, 4294901760
    %9016 = vmatmul.mubr.f32.gmra.mxu0 %v9015
    %v9017 = vpop.f32.mrf.mxu0
    %v9018 = vadd.f32 %v8879, %v9017
    %v9019 = vpop.f32.mrf.mxu0
    %v9020 = vadd.f32 %v8881, %v9019
    %9021 = vdwg.mxu0
    %vm9022 = vcmp.ge.f32.partialorder %v8994, 0.0
    %vm9023 = vcmp.ge.f32.partialorder %v8996, 0.0
    %vm9024 = vcmp.ge.f32.partialorder %v9002, 0.0
    %vm9025 = vcmp.ge.f32.partialorder %v9004, 0.0
    %vm9026 = vcmp.ge.f32.partialorder %v9010, 0.0
    %vm9027 = vcmp.ge.f32.partialorder %v9012, 0.0
    %vm9028 = vcmp.ge.f32.partialorder %v9018, 0.0
    %vm9029 = vcmp.ge.f32.partialorder %v9020, 0.0
    %v9030 = vmul.f32 %v8994, 0.01
    %v9031 = vmul.f32 %v8996, 0.01
    %v9032 = vmul.f32 %v9002, 0.01
    %v9033 = vmul.f32 %v9004, 0.01
    %v9034 = vmul.f32 %v9010, 0.01
    %v9035 = vmul.f32 %v9012, 0.01
    %v9036 = vmul.f32 %v9018, 0.01
    %v9037 = vmul.f32 %v9020, 0.01
    %v9038 = vsel %vm9022, %v8994, %v9030
    %v9039 = vsel %vm9023, %v8996, %v9031
    %v9040 = vsel %vm9024, %v9002, %v9032
    %v9041 = vsel %vm9025, %v9004, %v9033
    %v9042 = vsel %vm9026, %v9010, %v9034
    %v9043 = vsel %vm9027, %v9012, %v9035
    %v9044 = vsel %vm9028, %v9018, %v9036
    %v9045 = vsel %vm9029, %v9020, %v9037
    %9046 = vst [vmem:[#allocation2] sm:$0xff] %v9038
    %9047 = vst [vmem:[#allocation2 + $0x8] sm:$0xff] %v9039
    %9048 = vst [vmem:[#allocation2 + $0x10] sm:$0xff] %v9040
    %9049 = vst [vmem:[#allocation2 + $0x18] sm:$0xff] %v9041
    %9050 = vst [vmem:[#allocation2 + $0x20] sm:$0xff] %v9042
    %9051 = vst [vmem:[#allocation2 + $0x28] sm:$0xff] %v9043
    %9052 = vst [vmem:[#allocation2 + $0x30] sm:$0xff] %v9044
    %9053 = vst [vmem:[#allocation2 + $0x38] sm:$0xff] %v9045
    // Predicated region
    $region74: #{tpu_custom_call.1} parent=1 // pred_check
      _
    $region75: #{tpu_custom_call.1} parent=1 // pred_check_branch
      %9055 = sbr.rel (0) target = $region77
    $region76: #{tpu_custom_call.1} parent=1 // pred_region
      %s9057 = ssub.s32 1024, 1024
      %9058 = vsyncadd [#allocation3], %s9057
      %s9059 = sshll.u32 [#allocation2], 4
      %s9060 = int_to_ptr.vmem [resolvable:$true] %s9059
      %9065 = dma.vmem_to_hbm [thread:$0]  %s9060, 1024, %s18, [#allocation3], 256, 256, 16
    $region77: #{tpu_custom_call.1} parent=1 // pred_fallthru
      _
    // Predicated region
    $region78: #{tpu_custom_call.1} parent=1 // pred_check
      _
    $region79: #{tpu_custom_call.1} parent=1 // pred_check_branch
      %9067 = sbr.rel (0) target = $region81
    $region80: #{tpu_custom_call.1} parent=1 // pred_region
      %9068 = dma.done [#allocation3], 1024
    $region81: #{tpu_custom_call.1} parent=1 // pred_fallthru
      _
    %9069 = vsyncpa [#allocation3], 1

</llo_original>
